<compile_context>
chip_gen: v7x
topology: tpu7x:2x2x1
jax: 0.10.0
libtpu: 0.0.40
codegen_flags: <defaults>
</compile_context>

<pallas_src>
import functools

import jax
import jax.numpy as jnp
from jax import lax
from jax.experimental import pallas as pl
from jax.experimental.pallas import tpu as pltpu

EPS = 1e-5


def _round_up(v, m):
    return (v + m - 1) // m * m


# ------------------------------ Pallas kernel -------------------------------

def _dbb_kernel(xp_ref, ws1_ref, bs1_ref, w1_ref, w4_ref, scale3_ref, bias_ref,
                o_ref, *, k, H, W_out, pad, Cout_p, Cmid_p):
    """Full DiverseBranchBlock forward for one batch image, entirely in VMEM."""
    Hp = H + 2 * pad
    Wp = xp_ref.shape[2]
    Cin_p = xp_ref.shape[3]

    x3 = xp_ref[0]                                   # (Hp, Wp, Cin_p) bf16

    # ---- stage A: fused 1x1 convs of branches 3 & 4 (BN + border pad folded in) ----
    xflat = x3.reshape(Hp * Wp, Cin_p)
    y = jnp.dot(xflat, ws1_ref[...], preferred_element_type=jnp.float32)
    y = y + bs1_ref[...]                             # (Hp*Wp, Cout_p + Cmid_p) f32
    # zero-padded border x contributes 0, so "+ bias" realises the BNAndPad pad values.
    y3 = y[:, :Cout_p].reshape(Hp, Wp, Cout_p)                       # f32 (avg branch)
    y4 = y[:, Cout_p:].astype(jnp.bfloat16).reshape(Hp, Wp, Cmid_p)  # bf16 (1x1-kxk)

    # ---- stage B: per-tap shifted windows -> MXU matmuls, f32 accumulation ----
    M = H * W_out
    acc = jnp.zeros((M, Cout_p), jnp.float32)
    s3 = jnp.zeros((M, Cout_p), jnp.float32)
    for t in range(k * k):
        dh, dw = t // k, t % k
        # branch 1 (kxk conv + BN) with branch 2 (1x1 conv + BN) folded into centre tap
        p1 = x3[dh:dh + H, dw:dw + W_out, :].reshape(M, Cin_p)
        acc = acc + jnp.dot(p1, w1_ref[t], preferred_element_type=jnp.float32)
        # branch 4 stage 2: kxk conv (+ BN) on the BN-and-padded idconv output
        p4 = y4[dh:dh + H, dw:dw + W_out, :].reshape(M, Cmid_p)
        acc = acc + jnp.dot(p4, w4_ref[t], preferred_element_type=jnp.float32)
        # branch 3 stage 2: kxk average pool (+ BN) -> elementwise tap sum
        s3 = s3 + y3[dh:dh + H, dw:dw + W_out, :].reshape(M, Cout_p)

    acc = acc + s3 * scale3_ref[...] + bias_ref[...]
    o_ref[0] = acc.reshape(H, W_out, Cout_p)


# ------------------------------ glue helpers --------------------------------

def _bn_scale_shift(p):
    gamma, beta, rm, rv = p
    scale = gamma / jnp.sqrt(rv + EPS)
    shift = beta - rm * scale
    return scale, shift


def _tap_weights(w_oihw, cin_p, cout_p):
    # (Cout, Cin, k, k) -> (k*k, Cin_p, Cout_p), tap-major (t = dh*k + dw)
    cout, cin, kh, kw = w_oihw.shape
    w = jnp.transpose(w_oihw, (2, 3, 1, 0)).reshape(kh * kw, cin, cout)
    return jnp.pad(w, ((0, 0), (0, cin_p - cin), (0, cout_p - cout)))


def _mat_1x1(w_oi11, scale, cin_p, cout_p):
    # (Cout, Cin, 1, 1) * scale[Cout] -> padded (Cin_p, Cout_p)
    m = jnp.transpose(w_oi11[:, :, 0, 0] * scale[:, None], (1, 0))
    cin, cout = m.shape
    return jnp.pad(m, ((0, cin_p - cin), (0, cout_p - cout)))


# ------------------------ DiverseBranchBlock forward -------------------------

def diverse_branch_block_forward(x_nchw, params, k=3):
    N, Cin, H, W = x_nchw.shape
    Cout = params['origin_w'].shape[0]
    Cmid = params['kxk_conv2_w'].shape[1]
    pad = k // 2

    # lane-dense channels (128) + 8-aligned W dims -> tile-aligned in-kernel reshapes
    Cin_p, Cmid_p, Cout_p = (_round_up(c, 128) for c in (Cin, Cmid, Cout))
    W_out = _round_up(W, 8)
    Wp = _round_up(W_out + 2 * pad, 8)
    Hp = H + 2 * pad

    # NCHW -> NHWC; conv zero-pad + alignment pad + channel pad; bf16 activations
    x_nhwc = jnp.transpose(x_nchw, (0, 2, 3, 1)).astype(jnp.float32)
    xp = jnp.pad(x_nhwc, ((0, 0), (pad, pad), (pad, Wp - W - pad), (0, Cin_p - Cin)))
    xp = xp.astype(jnp.bfloat16)

    # ---- fold eval-mode BN into conv weights / biases (exact, done in f32) ----
    # branch 1: kxk conv + BN
    s1, b1 = _bn_scale_shift(params['origin_bn'])
    w1_taps = _tap_weights(params['origin_w'] * s1[:, None, None, None], Cin_p, Cout_p)
    # branch 2: 1x1 conv + BN -> folded into branch 1's centre tap (exact)
    s2, b2 = _bn_scale_shift(params['b1x1_bn'])
    w1_taps = w1_taps.at[pad * k + pad].add(_mat_1x1(params['b1x1_w'], s2, Cin_p, Cout_p))
    # branch 3 stage 1: 1x1 conv + BNAndPad (pad value == BN shift, via bias on zero border)
    s3a, b3a = _bn_scale_shift(params['avg_bn1'])
    w3a = _mat_1x1(params['avg_conv_w'], s3a, Cin_p, Cout_p)
    # branch 3 stage 2: AvgPool(kxk) + BN -> per-channel scale s3b/k^2 on the tap sum
    s3b, b3b = _bn_scale_shift(params['avg_bn2'])
    scale3 = jnp.pad(s3b / (k * k), (0, Cout_p - Cout)).reshape(1, Cout_p)
    # branch 4 stage 1: identity-based 1x1 conv + BNAndPad
    s4a, b4a = _bn_scale_shift(params['kxk_bn1'])
    id_k = jnp.eye(Cin, dtype=jnp.float32)[:, :, None, None]
    w4a = _mat_1x1(params['kxk_idconv_w'] + id_k, s4a, Cin_p, Cmid_p)
    # branch 4 stage 2: kxk conv + BN
    s4b, b4b = _bn_scale_shift(params['kxk_bn2'])
    w4_taps = _tap_weights(params['kxk_conv2_w'] * s4b[:, None, None, None], Cmid_p, Cout_p)

    w_stage1 = jnp.concatenate([w3a, w4a], axis=1).astype(jnp.bfloat16)
    b_stage1 = jnp.concatenate([jnp.pad(b3a, (0, Cout_p - Cout)),
                                jnp.pad(b4a, (0, Cmid_p - Cmid))]).reshape(1, -1)
    bias_total = jnp.pad(b1 + b2 + b3b + b4b, (0, Cout_p - Cout)).reshape(1, Cout_p)
    w1_taps = w1_taps.astype(jnp.bfloat16)
    w4_taps = w4_taps.astype(jnp.bfloat16)

    # ---- VMEM budget per grid step (double-buffered I/O + weights + temporaries) ----
    step_bytes = (
        2 * Hp * Wp * Cin_p * 2
        + 2 * H * W_out * Cout_p * 4
        + 4 * (w_stage1.size + w1_taps.size + w4_taps.size)
        + 2 * Hp * Wp * (Cout_p + Cmid_p) * 4
        + 6 * H * W_out * Cout_p * 4
    )
    vmem_limit = int(min(48 * 1024 * 1024, max(32 * 1024 * 1024, 2 * step_bytes)))

    kernel = functools.partial(_dbb_kernel, k=k, H=H, W_out=W_out, pad=pad,
                               Cout_p=Cout_p, Cmid_p=Cmid_p)

    def full(shape):
        nd = len(shape)
        return pl.BlockSpec(shape, lambda n, _nd=nd: (0,) * _nd)

    out_full = pl.pallas_call(
        kernel,
        out_shape=jax.ShapeDtypeStruct((N, H, W_out, Cout_p), jnp.float32),
        grid_spec=pltpu.PrefetchScalarGridSpec(
            num_scalar_prefetch=0,
            grid=(N,),
            in_specs=[
                pl.BlockSpec((1, Hp, Wp, Cin_p), lambda n: (n, 0, 0, 0)),
                full((Cin_p, Cout_p + Cmid_p)),       # fused 1x1 weights (branches 3, 4)
                full((1, Cout_p + Cmid_p)),           # fused 1x1 biases / pad values
                full((k * k, Cin_p, Cout_p)),         # branch 1 (+2) tap weights
                full((k * k, Cmid_p, Cout_p)),        # branch 4 tap weights
                full((1, Cout_p)),                    # branch 3 avg scale
                full((1, Cout_p)),                    # total bias
            ],
            out_specs=pl.BlockSpec((1, H, W_out, Cout_p), lambda n: (n, 0, 0, 0)),
        ),
        compiler_params=pltpu.CompilerParams(
            dimension_semantics=("parallel",),
            vmem_limit_bytes=vmem_limit,
        ),
    )(xp, w_stage1, b_stage1, w1_taps, w4_taps, scale3, bias_total)

    out = out_full[:, :, :W, :Cout]
    return jnp.transpose(out, (0, 3, 1, 2))          # back to NCHW


# ----------------------------- reference (JAX) -------------------------------

def reference_forward(x, params, k=3):
    def conv(x, w, pad):
        return lax.conv_general_dilated(
            x, w, (1, 1), [(pad, pad), (pad, pad)],
            dimension_numbers=('NCHW', 'OIHW', 'NCHW'))

    def bn(x, p):
        gamma, beta, rm, rv = p
        s = gamma / jnp.sqrt(rv + EPS)
        return x * s[None, :, None, None] + (beta - rm * s)[None, :, None, None]

    def bn_and_pad(x, p, pad):
        gamma, beta, rm, rv = p
        y = bn(x, p)
        pad_val = beta - rm * gamma / jnp.sqrt(rv + EPS)
        y = jnp.pad(y, ((0, 0), (0, 0), (pad, pad), (pad, pad)))
        pv = pad_val[None, :, None, None]
        y = y.at[:, :, 0:pad, :].set(pv)
        y = y.at[:, :, -pad:, :].set(pv)
        y = y.at[:, :, :, 0:pad].set(pv)
        y = y.at[:, :, :, -pad:].set(pv)
        return y

    out = bn(conv(x, params['origin_w'], k // 2), params['origin_bn'])
    out = out + bn(conv(x, params['b1x1_w'], 0), params['b1x1_bn'])
    # avg branch
    z = conv(x, params['avg_conv_w'], 0)
    z = bn_and_pad(z, params['avg_bn1'], k // 2)
    z = lax.reduce_window(z, 0.0, lax.add, (1, 1, k, k), (1, 1, 1, 1), 'VALID') / (k * k)
    out = out + bn(z, params['avg_bn2'])
    # 1x1-kxk branch
    Cin = x.shape[1]
    k_id = params['kxk_idconv_w'] + jnp.eye(Cin, dtype=jnp.float32)[:, :, None, None]
    z = conv(x, k_id, 0)
    z = bn_and_pad(z, params['kxk_bn1'], k // 2)
    z = conv(z, params['kxk_conv2_w'], 0)
    out = out + bn(z, params['kxk_bn2'])
    return out


# --------------------------------- params ------------------------------------

def init_params(key, Cin, Cout, k):
    Cmid = Cin  # internal_channels_1x1_3x3 = None -> in_channels (idconv path)
    keys = iter(jax.random.split(key, 32))

    def bn_params(c):
        g = jax.random.uniform(next(keys), (c,), jnp.float32, 0.5, 1.5)
        b = 0.1 * jax.random.normal(next(keys), (c,), jnp.float32)
        rm = 0.1 * jax.random.normal(next(keys), (c,), jnp.float32)
        rv = jax.random.uniform(next(keys), (c,), jnp.float32, 0.5, 1.5)
        return (g, b, rm, rv)

    def w(shape):
        return 0.2 * jax.random.normal(next(keys), shape, jnp.float32)

    return {
        'origin_w': w((Cout, Cin, k, k)),      'origin_bn': bn_params(Cout),
        'b1x1_w': w((Cout, Cin, 1, 1)),        'b1x1_bn': bn_params(Cout),
        'avg_conv_w': w((Cout, Cin, 1, 1)),    'avg_bn1': bn_params(Cout),
        'avg_bn2': bn_params(Cout),
        # IdentityBasedConv1x1.weight is zero-initialized by the module.
        'kxk_idconv_w': jnp.zeros((Cin, Cin, 1, 1), jnp.float32),
        'kxk_bn1': bn_params(Cmid),
        'kxk_conv2_w': w((Cout, Cmid, k, k)),  'kxk_bn2': bn_params(Cout),
    }


if __name__ == "__main__":
    N, Cin, Cout, H, W, k = 2, 4, 4, 16, 16, 3
    key = jax.random.PRNGKey(0)
    kx, kp = jax.random.split(key)
    x = jax.random.normal(kx, (N, Cin, H, W), jnp.float32)
    params = init_params(kp, Cin, Cout, k)

    out = diverse_branch_block_forward(x, params, k=k)
    out = jax.block_until_ready(out)

    ref = reference_forward(x, params, k=k)
    assert out.shape == (N, Cout, H, W)
    # bf16 matmul operands with f32 accumulation -> loose-ish tolerance vs f32 reference
    assert jnp.allclose(out, ref, atol=1e-1, rtol=1e-1), (
        float(jnp.max(jnp.abs(out - ref))))
    print("KERNEL_OK")
</pallas_src>

<mosaic_0001>
module attributes {stable_mosaic.version = 11 : i64} {
  func.func @_dbb_kernel(%arg0: i32, %arg1: memref<1x18x24x128xbf16, #tpu.memory_space<vmem>>, %arg2: memref<128x256xbf16, #tpu.memory_space<vmem>>, %arg3: memref<1x256xf32, #tpu.memory_space<vmem>>, %arg4: memref<9x128x128xbf16, #tpu.memory_space<vmem>>, %arg5: memref<9x128x128xbf16, #tpu.memory_space<vmem>>, %arg6: memref<1x128xf32, #tpu.memory_space<vmem>>, %arg7: memref<1x128xf32, #tpu.memory_space<vmem>>, %arg8: memref<1x16x16x128xf32, #tpu.memory_space<vmem>>) attributes {dimension_semantics = [#tpu.dimension_semantics<parallel>], iteration_bounds = array<i64: 2>, scalar_prefetch = 0 : i64, scratch_operands = 0 : i64, tpu.core_type = #tpu.core_type<tc>, window_params = [{transform_indices = @transform_0, window_bounds = array<i64: 1, 18, 24, 128>}, {pipeline_mode = #tpu.pipeline_mode<synchronous>, transform_indices = @transform_1, window_bounds = array<i64: 128, 256>}, {pipeline_mode = #tpu.pipeline_mode<synchronous>, transform_indices = @transform_2, window_bounds = array<i64: 1, 256>}, {pipeline_mode = #tpu.pipeline_mode<synchronous>, transform_indices = @transform_3, window_bounds = array<i64: 9, 128, 128>}, {pipeline_mode = #tpu.pipeline_mode<synchronous>, transform_indices = @transform_4, window_bounds = array<i64: 9, 128, 128>}, {pipeline_mode = #tpu.pipeline_mode<synchronous>, transform_indices = @transform_5, window_bounds = array<i64: 1, 128>}, {pipeline_mode = #tpu.pipeline_mode<synchronous>, transform_indices = @transform_6, window_bounds = array<i64: 1, 128>}, {transform_indices = @transform_7, window_bounds = array<i64: 1, 16, 16, 128>}]} {
    %c0 = arith.constant 0 : index
    %c0_0 = arith.constant 0 : index
    %c0_1 = arith.constant 0 : index
    %c0_2 = arith.constant 0 : index
    %0 = vector.load %arg1[%c0, %c0_0, %c0_1, %c0_2] : memref<1x18x24x128xbf16, #tpu.memory_space<vmem>>, vector<1x18x24x128xbf16>
    %1 = vector.shape_cast %0 : vector<1x18x24x128xbf16> to vector<18x24x128xbf16>
    %2 = vector.shape_cast %1 : vector<18x24x128xbf16> to vector<432x128xbf16>
    %c0_3 = arith.constant 0 : index
    %c0_4 = arith.constant 0 : index
    %3 = vector.load %arg2[%c0_3, %c0_4] : memref<128x256xbf16, #tpu.memory_space<vmem>>, vector<128x256xbf16>
    %cst = arith.constant dense<0.000000e+00> : vector<432x256xf32>
    %4 = tpu.matmul %2, %3, %cst {dimension_numbers = #tpu.dot_dimension_numbers<[1], [0], [0], [1], [0, 0, 1, 1], [], []>} : vector<432x128xbf16>, vector<128x256xbf16>, vector<432x256xf32> -> vector<432x256xf32>
    %c0_5 = arith.constant 0 : index
    %c0_6 = arith.constant 0 : index
    %5 = vector.load %arg3[%c0_5, %c0_6] : memref<1x256xf32, #tpu.memory_space<vmem>>, vector<1x256xf32>
    %6 = vector.broadcast %5 : vector<1x256xf32> to vector<432x256xf32>
    %7 = arith.addf %4, %6 : vector<432x256xf32>
    %8 = vector.extract_strided_slice %7 {offsets = [0, 0], sizes = [432, 128], strides = [1, 1]} : vector<432x256xf32> to vector<432x128xf32>
    %9 = vector.shape_cast %8 : vector<432x128xf32> to vector<18x24x128xf32>
    %10 = vector.extract_strided_slice %7 {offsets = [0, 128], sizes = [432, 128], strides = [1, 1]} : vector<432x256xf32> to vector<432x128xf32>
    %11 = arith.truncf %10 : vector<432x128xf32> to vector<432x128xbf16>
    %12 = vector.shape_cast %11 : vector<432x128xbf16> to vector<18x24x128xbf16>
    %cst_7 = arith.constant 0.000000e+00 : f32
    %13 = vector.broadcast %cst_7 : f32 to vector<256x128xf32>
    %cst_8 = arith.constant 0.000000e+00 : f32
    %14 = vector.broadcast %cst_8 : f32 to vector<256x128xf32>
    %15 = vector.extract_strided_slice %1 {offsets = [0, 0, 0], sizes = [16, 16, 128], strides = [1, 1, 1]} : vector<18x24x128xbf16> to vector<16x16x128xbf16>
    %16 = vector.shape_cast %15 : vector<16x16x128xbf16> to vector<256x128xbf16>
    %c0_9 = arith.constant 0 : index
    %c0_10 = arith.constant 0 : index
    %c0_11 = arith.constant 0 : index
    %17 = vector.load %arg4[%c0_9, %c0_10, %c0_11] : memref<9x128x128xbf16, #tpu.memory_space<vmem>>, vector<1x128x128xbf16>
    %18 = vector.shape_cast %17 : vector<1x128x128xbf16> to vector<128x128xbf16>
    %cst_12 = arith.constant dense<0.000000e+00> : vector<256x128xf32>
    %19 = tpu.matmul %16, %18, %cst_12 {dimension_numbers = #tpu.dot_dimension_numbers<[1], [0], [0], [1], [0, 0, 1, 1], [], []>} : vector<256x128xbf16>, vector<128x128xbf16>, vector<256x128xf32> -> vector<256x128xf32>
    %20 = arith.addf %13, %19 : vector<256x128xf32>
    %21 = vector.extract_strided_slice %12 {offsets = [0, 0, 0], sizes = [16, 16, 128], strides = [1, 1, 1]} : vector<18x24x128xbf16> to vector<16x16x128xbf16>
    %22 = vector.shape_cast %21 : vector<16x16x128xbf16> to vector<256x128xbf16>
    %c0_13 = arith.constant 0 : index
    %c0_14 = arith.constant 0 : index
    %c0_15 = arith.constant 0 : index
    %23 = vector.load %arg5[%c0_13, %c0_14, %c0_15] : memref<9x128x128xbf16, #tpu.memory_space<vmem>>, vector<1x128x128xbf16>
    %24 = vector.shape_cast %23 : vector<1x128x128xbf16> to vector<128x128xbf16>
    %cst_16 = arith.constant dense<0.000000e+00> : vector<256x128xf32>
    %25 = tpu.matmul %22, %24, %cst_16 {dimension_numbers = #tpu.dot_dimension_numbers<[1], [0], [0], [1], [0, 0, 1, 1], [], []>} : vector<256x128xbf16>, vector<128x128xbf16>, vector<256x128xf32> -> vector<256x128xf32>
    %26 = arith.addf %20, %25 : vector<256x128xf32>
    %27 = vector.extract_strided_slice %9 {offsets = [0, 0, 0], sizes = [16, 16, 128], strides = [1, 1, 1]} : vector<18x24x128xf32> to vector<16x16x128xf32>
    %28 = vector.shape_cast %27 : vector<16x16x128xf32> to vector<256x128xf32>
    %29 = arith.addf %14, %28 : vector<256x128xf32>
    %30 = vector.extract_strided_slice %1 {offsets = [0, 1, 0], sizes = [16, 16, 128], strides = [1, 1, 1]} : vector<18x24x128xbf16> to vector<16x16x128xbf16>
    %31 = vector.shape_cast %30 : vector<16x16x128xbf16> to vector<256x128xbf16>
    %c1 = arith.constant 1 : index
    %c0_17 = arith.constant 0 : index
    %c0_18 = arith.constant 0 : index
    %32 = vector.load %arg4[%c1, %c0_17, %c0_18] : memref<9x128x128xbf16, #tpu.memory_space<vmem>>, vector<1x128x128xbf16>
    %33 = vector.shape_cast %32 : vector<1x128x128xbf16> to vector<128x128xbf16>
    %cst_19 = arith.constant dense<0.000000e+00> : vector<256x128xf32>
    %34 = tpu.matmul %31, %33, %cst_19 {dimension_numbers = #tpu.dot_dimension_numbers<[1], [0], [0], [1], [0, 0, 1, 1], [], []>} : vector<256x128xbf16>, vector<128x128xbf16>, vector<256x128xf32> -> vector<256x128xf32>
    %35 = arith.addf %26, %34 : vector<256x128xf32>
    %36 = vector.extract_strided_slice %12 {offsets = [0, 1, 0], sizes = [16, 16, 128], strides = [1, 1, 1]} : vector<18x24x128xbf16> to vector<16x16x128xbf16>
    %37 = vector.shape_cast %36 : vector<16x16x128xbf16> to vector<256x128xbf16>
    %c1_20 = arith.constant 1 : index
    %c0_21 = arith.constant 0 : index
    %c0_22 = arith.constant 0 : index
    %38 = vector.load %arg5[%c1_20, %c0_21, %c0_22] : memref<9x128x128xbf16, #tpu.memory_space<vmem>>, vector<1x128x128xbf16>
    %39 = vector.shape_cast %38 : vector<1x128x128xbf16> to vector<128x128xbf16>
    %cst_23 = arith.constant dense<0.000000e+00> : vector<256x128xf32>
    %40 = tpu.matmul %37, %39, %cst_23 {dimension_numbers = #tpu.dot_dimension_numbers<[1], [0], [0], [1], [0, 0, 1, 1], [], []>} : vector<256x128xbf16>, vector<128x128xbf16>, vector<256x128xf32> -> vector<256x128xf32>
    %41 = arith.addf %35, %40 : vector<256x128xf32>
    %42 = vector.extract_strided_slice %9 {offsets = [0, 1, 0], sizes = [16, 16, 128], strides = [1, 1, 1]} : vector<18x24x128xf32> to vector<16x16x128xf32>
    %43 = vector.shape_cast %42 : vector<16x16x128xf32> to vector<256x128xf32>
    %44 = arith.addf %29, %43 : vector<256x128xf32>
    %45 = vector.extract_strided_slice %1 {offsets = [0, 2, 0], sizes = [16, 16, 128], strides = [1, 1, 1]} : vector<18x24x128xbf16> to vector<16x16x128xbf16>
    %46 = vector.shape_cast %45 : vector<16x16x128xbf16> to vector<256x128xbf16>
    %c2 = arith.constant 2 : index
    %c0_24 = arith.constant 0 : index
    %c0_25 = arith.constant 0 : index
    %47 = vector.load %arg4[%c2, %c0_24, %c0_25] : memref<9x128x128xbf16, #tpu.memory_space<vmem>>, vector<1x128x128xbf16>
    %48 = vector.shape_cast %47 : vector<1x128x128xbf16> to vector<128x128xbf16>
    %cst_26 = arith.constant dense<0.000000e+00> : vector<256x128xf32>
    %49 = tpu.matmul %46, %48, %cst_26 {dimension_numbers = #tpu.dot_dimension_numbers<[1], [0], [0], [1], [0, 0, 1, 1], [], []>} : vector<256x128xbf16>, vector<128x128xbf16>, vector<256x128xf32> -> vector<256x128xf32>
    %50 = arith.addf %41, %49 : vector<256x128xf32>
    %51 = vector.extract_strided_slice %12 {offsets = [0, 2, 0], sizes = [16, 16, 128], strides = [1, 1, 1]} : vector<18x24x128xbf16> to vector<16x16x128xbf16>
    %52 = vector.shape_cast %51 : vector<16x16x128xbf16> to vector<256x128xbf16>
    %c2_27 = arith.constant 2 : index
    %c0_28 = arith.constant 0 : index
    %c0_29 = arith.constant 0 : index
    %53 = vector.load %arg5[%c2_27, %c0_28, %c0_29] : memref<9x128x128xbf16, #tpu.memory_space<vmem>>, vector<1x128x128xbf16>
    %54 = vector.shape_cast %53 : vector<1x128x128xbf16> to vector<128x128xbf16>
    %cst_30 = arith.constant dense<0.000000e+00> : vector<256x128xf32>
    %55 = tpu.matmul %52, %54, %cst_30 {dimension_numbers = #tpu.dot_dimension_numbers<[1], [0], [0], [1], [0, 0, 1, 1], [], []>} : vector<256x128xbf16>, vector<128x128xbf16>, vector<256x128xf32> -> vector<256x128xf32>
    %56 = arith.addf %50, %55 : vector<256x128xf32>
    %57 = vector.extract_strided_slice %9 {offsets = [0, 2, 0], sizes = [16, 16, 128], strides = [1, 1, 1]} : vector<18x24x128xf32> to vector<16x16x128xf32>
    %58 = vector.shape_cast %57 : vector<16x16x128xf32> to vector<256x128xf32>
    %59 = arith.addf %44, %58 : vector<256x128xf32>
    %60 = vector.extract_strided_slice %1 {offsets = [1, 0, 0], sizes = [16, 16, 128], strides = [1, 1, 1]} : vector<18x24x128xbf16> to vector<16x16x128xbf16>
    %61 = vector.shape_cast %60 : vector<16x16x128xbf16> to vector<256x128xbf16>
    %c3 = arith.constant 3 : index
    %c0_31 = arith.constant 0 : index
    %c0_32 = arith.constant 0 : index
    %62 = vector.load %arg4[%c3, %c0_31, %c0_32] : memref<9x128x128xbf16, #tpu.memory_space<vmem>>, vector<1x128x128xbf16>
    %63 = vector.shape_cast %62 : vector<1x128x128xbf16> to vector<128x128xbf16>
    %cst_33 = arith.constant dense<0.000000e+00> : vector<256x128xf32>
    %64 = tpu.matmul %61, %63, %cst_33 {dimension_numbers = #tpu.dot_dimension_numbers<[1], [0], [0], [1], [0, 0, 1, 1], [], []>} : vector<256x128xbf16>, vector<128x128xbf16>, vector<256x128xf32> -> vector<256x128xf32>
    %65 = arith.addf %56, %64 : vector<256x128xf32>
    %66 = vector.extract_strided_slice %12 {offsets = [1, 0, 0], sizes = [16, 16, 128], strides = [1, 1, 1]} : vector<18x24x128xbf16> to vector<16x16x128xbf16>
    %67 = vector.shape_cast %66 : vector<16x16x128xbf16> to vector<256x128xbf16>
    %c3_34 = arith.constant 3 : index
    %c0_35 = arith.constant 0 : index
    %c0_36 = arith.constant 0 : index
    %68 = vector.load %arg5[%c3_34, %c0_35, %c0_36] : memref<9x128x128xbf16, #tpu.memory_space<vmem>>, vector<1x128x128xbf16>
    %69 = vector.shape_cast %68 : vector<1x128x128xbf16> to vector<128x128xbf16>
    %cst_37 = arith.constant dense<0.000000e+00> : vector<256x128xf32>
    %70 = tpu.matmul %67, %69, %cst_37 {dimension_numbers = #tpu.dot_dimension_numbers<[1], [0], [0], [1], [0, 0, 1, 1], [], []>} : vector<256x128xbf16>, vector<128x128xbf16>, vector<256x128xf32> -> vector<256x128xf32>
    %71 = arith.addf %65, %70 : vector<256x128xf32>
    %72 = vector.extract_strided_slice %9 {offsets = [1, 0, 0], sizes = [16, 16, 128], strides = [1, 1, 1]} : vector<18x24x128xf32> to vector<16x16x128xf32>
    %73 = vector.shape_cast %72 : vector<16x16x128xf32> to vector<256x128xf32>
    %74 = arith.addf %59, %73 : vector<256x128xf32>
    %75 = vector.extract_strided_slice %1 {offsets = [1, 1, 0], sizes = [16, 16, 128], strides = [1, 1, 1]} : vector<18x24x128xbf16> to vector<16x16x128xbf16>
    %76 = vector.shape_cast %75 : vector<16x16x128xbf16> to vector<256x128xbf16>
    %c4 = arith.constant 4 : index
    %c0_38 = arith.constant 0 : index
    %c0_39 = arith.constant 0 : index
    %77 = vector.load %arg4[%c4, %c0_38, %c0_39] : memref<9x128x128xbf16, #tpu.memory_space<vmem>>, vector<1x128x128xbf16>
    %78 = vector.shape_cast %77 : vector<1x128x128xbf16> to vector<128x128xbf16>
    %cst_40 = arith.constant dense<0.000000e+00> : vector<256x128xf32>
    %79 = tpu.matmul %76, %78, %cst_40 {dimension_numbers = #tpu.dot_dimension_numbers<[1], [0], [0], [1], [0, 0, 1, 1], [], []>} : vector<256x128xbf16>, vector<128x128xbf16>, vector<256x128xf32> -> vector<256x128xf32>
    %80 = arith.addf %71, %79 : vector<256x128xf32>
    %81 = vector.extract_strided_slice %12 {offsets = [1, 1, 0], sizes = [16, 16, 128], strides = [1, 1, 1]} : vector<18x24x128xbf16> to vector<16x16x128xbf16>
    %82 = vector.shape_cast %81 : vector<16x16x128xbf16> to vector<256x128xbf16>
    %c4_41 = arith.constant 4 : index
    %c0_42 = arith.constant 0 : index
    %c0_43 = arith.constant 0 : index
    %83 = vector.load %arg5[%c4_41, %c0_42, %c0_43] : memref<9x128x128xbf16, #tpu.memory_space<vmem>>, vector<1x128x128xbf16>
    %84 = vector.shape_cast %83 : vector<1x128x128xbf16> to vector<128x128xbf16>
    %cst_44 = arith.constant dense<0.000000e+00> : vector<256x128xf32>
    %85 = tpu.matmul %82, %84, %cst_44 {dimension_numbers = #tpu.dot_dimension_numbers<[1], [0], [0], [1], [0, 0, 1, 1], [], []>} : vector<256x128xbf16>, vector<128x128xbf16>, vector<256x128xf32> -> vector<256x128xf32>
    %86 = arith.addf %80, %85 : vector<256x128xf32>
    %87 = vector.extract_strided_slice %9 {offsets = [1, 1, 0], sizes = [16, 16, 128], strides = [1, 1, 1]} : vector<18x24x128xf32> to vector<16x16x128xf32>
    %88 = vector.shape_cast %87 : vector<16x16x128xf32> to vector<256x128xf32>
    %89 = arith.addf %74, %88 : vector<256x128xf32>
    %90 = vector.extract_strided_slice %1 {offsets = [1, 2, 0], sizes = [16, 16, 128], strides = [1, 1, 1]} : vector<18x24x128xbf16> to vector<16x16x128xbf16>
    %91 = vector.shape_cast %90 : vector<16x16x128xbf16> to vector<256x128xbf16>
    %c5 = arith.constant 5 : index
    %c0_45 = arith.constant 0 : index
    %c0_46 = arith.constant 0 : index
    %92 = vector.load %arg4[%c5, %c0_45, %c0_46] : memref<9x128x128xbf16, #tpu.memory_space<vmem>>, vector<1x128x128xbf16>
    %93 = vector.shape_cast %92 : vector<1x128x128xbf16> to vector<128x128xbf16>
    %cst_47 = arith.constant dense<0.000000e+00> : vector<256x128xf32>
    %94 = tpu.matmul %91, %93, %cst_47 {dimension_numbers = #tpu.dot_dimension_numbers<[1], [0], [0], [1], [0, 0, 1, 1], [], []>} : vector<256x128xbf16>, vector<128x128xbf16>, vector<256x128xf32> -> vector<256x128xf32>
    %95 = arith.addf %86, %94 : vector<256x128xf32>
    %96 = vector.extract_strided_slice %12 {offsets = [1, 2, 0], sizes = [16, 16, 128], strides = [1, 1, 1]} : vector<18x24x128xbf16> to vector<16x16x128xbf16>
    %97 = vector.shape_cast %96 : vector<16x16x128xbf16> to vector<256x128xbf16>
    %c5_48 = arith.constant 5 : index
    %c0_49 = arith.constant 0 : index
    %c0_50 = arith.constant 0 : index
    %98 = vector.load %arg5[%c5_48, %c0_49, %c0_50] : memref<9x128x128xbf16, #tpu.memory_space<vmem>>, vector<1x128x128xbf16>
    %99 = vector.shape_cast %98 : vector<1x128x128xbf16> to vector<128x128xbf16>
    %cst_51 = arith.constant dense<0.000000e+00> : vector<256x128xf32>
    %100 = tpu.matmul %97, %99, %cst_51 {dimension_numbers = #tpu.dot_dimension_numbers<[1], [0], [0], [1], [0, 0, 1, 1], [], []>} : vector<256x128xbf16>, vector<128x128xbf16>, vector<256x128xf32> -> vector<256x128xf32>
    %101 = arith.addf %95, %100 : vector<256x128xf32>
    %102 = vector.extract_strided_slice %9 {offsets = [1, 2, 0], sizes = [16, 16, 128], strides = [1, 1, 1]} : vector<18x24x128xf32> to vector<16x16x128xf32>
    %103 = vector.shape_cast %102 : vector<16x16x128xf32> to vector<256x128xf32>
    %104 = arith.addf %89, %103 : vector<256x128xf32>
    %105 = vector.extract_strided_slice %1 {offsets = [2, 0, 0], sizes = [16, 16, 128], strides = [1, 1, 1]} : vector<18x24x128xbf16> to vector<16x16x128xbf16>
    %106 = vector.shape_cast %105 : vector<16x16x128xbf16> to vector<256x128xbf16>
    %c6 = arith.constant 6 : index
    %c0_52 = arith.constant 0 : index
    %c0_53 = arith.constant 0 : index
    %107 = vector.load %arg4[%c6, %c0_52, %c0_53] : memref<9x128x128xbf16, #tpu.memory_space<vmem>>, vector<1x128x128xbf16>
    %108 = vector.shape_cast %107 : vector<1x128x128xbf16> to vector<128x128xbf16>
    %cst_54 = arith.constant dense<0.000000e+00> : vector<256x128xf32>
    %109 = tpu.matmul %106, %108, %cst_54 {dimension_numbers = #tpu.dot_dimension_numbers<[1], [0], [0], [1], [0, 0, 1, 1], [], []>} : vector<256x128xbf16>, vector<128x128xbf16>, vector<256x128xf32> -> vector<256x128xf32>
    %110 = arith.addf %101, %109 : vector<256x128xf32>
    %111 = vector.extract_strided_slice %12 {offsets = [2, 0, 0], sizes = [16, 16, 128], strides = [1, 1, 1]} : vector<18x24x128xbf16> to vector<16x16x128xbf16>
    %112 = vector.shape_cast %111 : vector<16x16x128xbf16> to vector<256x128xbf16>
    %c6_55 = arith.constant 6 : index
    %c0_56 = arith.constant 0 : index
    %c0_57 = arith.constant 0 : index
    %113 = vector.load %arg5[%c6_55, %c0_56, %c0_57] : memref<9x128x128xbf16, #tpu.memory_space<vmem>>, vector<1x128x128xbf16>
    %114 = vector.shape_cast %113 : vector<1x128x128xbf16> to vector<128x128xbf16>
    %cst_58 = arith.constant dense<0.000000e+00> : vector<256x128xf32>
    %115 = tpu.matmul %112, %114, %cst_58 {dimension_numbers = #tpu.dot_dimension_numbers<[1], [0], [0], [1], [0, 0, 1, 1], [], []>} : vector<256x128xbf16>, vector<128x128xbf16>, vector<256x128xf32> -> vector<256x128xf32>
    %116 = arith.addf %110, %115 : vector<256x128xf32>
    %117 = vector.extract_strided_slice %9 {offsets = [2, 0, 0], sizes = [16, 16, 128], strides = [1, 1, 1]} : vector<18x24x128xf32> to vector<16x16x128xf32>
    %118 = vector.shape_cast %117 : vector<16x16x128xf32> to vector<256x128xf32>
    %119 = arith.addf %104, %118 : vector<256x128xf32>
    %120 = vector.extract_strided_slice %1 {offsets = [2, 1, 0], sizes = [16, 16, 128], strides = [1, 1, 1]} : vector<18x24x128xbf16> to vector<16x16x128xbf16>
    %121 = vector.shape_cast %120 : vector<16x16x128xbf16> to vector<256x128xbf16>
    %c7 = arith.constant 7 : index
    %c0_59 = arith.constant 0 : index
    %c0_60 = arith.constant 0 : index
    %122 = vector.load %arg4[%c7, %c0_59, %c0_60] : memref<9x128x128xbf16, #tpu.memory_space<vmem>>, vector<1x128x128xbf16>
    %123 = vector.shape_cast %122 : vector<1x128x128xbf16> to vector<128x128xbf16>
    %cst_61 = arith.constant dense<0.000000e+00> : vector<256x128xf32>
    %124 = tpu.matmul %121, %123, %cst_61 {dimension_numbers = #tpu.dot_dimension_numbers<[1], [0], [0], [1], [0, 0, 1, 1], [], []>} : vector<256x128xbf16>, vector<128x128xbf16>, vector<256x128xf32> -> vector<256x128xf32>
    %125 = arith.addf %116, %124 : vector<256x128xf32>
    %126 = vector.extract_strided_slice %12 {offsets = [2, 1, 0], sizes = [16, 16, 128], strides = [1, 1, 1]} : vector<18x24x128xbf16> to vector<16x16x128xbf16>
    %127 = vector.shape_cast %126 : vector<16x16x128xbf16> to vector<256x128xbf16>
    %c7_62 = arith.constant 7 : index
    %c0_63 = arith.constant 0 : index
    %c0_64 = arith.constant 0 : index
    %128 = vector.load %arg5[%c7_62, %c0_63, %c0_64] : memref<9x128x128xbf16, #tpu.memory_space<vmem>>, vector<1x128x128xbf16>
    %129 = vector.shape_cast %128 : vector<1x128x128xbf16> to vector<128x128xbf16>
    %cst_65 = arith.constant dense<0.000000e+00> : vector<256x128xf32>
    %130 = tpu.matmul %127, %129, %cst_65 {dimension_numbers = #tpu.dot_dimension_numbers<[1], [0], [0], [1], [0, 0, 1, 1], [], []>} : vector<256x128xbf16>, vector<128x128xbf16>, vector<256x128xf32> -> vector<256x128xf32>
    %131 = arith.addf %125, %130 : vector<256x128xf32>
    %132 = vector.extract_strided_slice %9 {offsets = [2, 1, 0], sizes = [16, 16, 128], strides = [1, 1, 1]} : vector<18x24x128xf32> to vector<16x16x128xf32>
    %133 = vector.shape_cast %132 : vector<16x16x128xf32> to vector<256x128xf32>
    %134 = arith.addf %119, %133 : vector<256x128xf32>
    %135 = vector.extract_strided_slice %1 {offsets = [2, 2, 0], sizes = [16, 16, 128], strides = [1, 1, 1]} : vector<18x24x128xbf16> to vector<16x16x128xbf16>
    %136 = vector.shape_cast %135 : vector<16x16x128xbf16> to vector<256x128xbf16>
    %c8 = arith.constant 8 : index
    %c0_66 = arith.constant 0 : index
    %c0_67 = arith.constant 0 : index
    %137 = vector.load %arg4[%c8, %c0_66, %c0_67] : memref<9x128x128xbf16, #tpu.memory_space<vmem>>, vector<1x128x128xbf16>
    %138 = vector.shape_cast %137 : vector<1x128x128xbf16> to vector<128x128xbf16>
    %cst_68 = arith.constant dense<0.000000e+00> : vector<256x128xf32>
    %139 = tpu.matmul %136, %138, %cst_68 {dimension_numbers = #tpu.dot_dimension_numbers<[1], [0], [0], [1], [0, 0, 1, 1], [], []>} : vector<256x128xbf16>, vector<128x128xbf16>, vector<256x128xf32> -> vector<256x128xf32>
    %140 = arith.addf %131, %139 : vector<256x128xf32>
    %141 = vector.extract_strided_slice %12 {offsets = [2, 2, 0], sizes = [16, 16, 128], strides = [1, 1, 1]} : vector<18x24x128xbf16> to vector<16x16x128xbf16>
    %142 = vector.shape_cast %141 : vector<16x16x128xbf16> to vector<256x128xbf16>
    %c8_69 = arith.constant 8 : index
    %c0_70 = arith.constant 0 : index
    %c0_71 = arith.constant 0 : index
    %143 = vector.load %arg5[%c8_69, %c0_70, %c0_71] : memref<9x128x128xbf16, #tpu.memory_space<vmem>>, vector<1x128x128xbf16>
    %144 = vector.shape_cast %143 : vector<1x128x128xbf16> to vector<128x128xbf16>
    %cst_72 = arith.constant dense<0.000000e+00> : vector<256x128xf32>
    %145 = tpu.matmul %142, %144, %cst_72 {dimension_numbers = #tpu.dot_dimension_numbers<[1], [0], [0], [1], [0, 0, 1, 1], [], []>} : vector<256x128xbf16>, vector<128x128xbf16>, vector<256x128xf32> -> vector<256x128xf32>
    %146 = arith.addf %140, %145 : vector<256x128xf32>
    %147 = vector.extract_strided_slice %9 {offsets = [2, 2, 0], sizes = [16, 16, 128], strides = [1, 1, 1]} : vector<18x24x128xf32> to vector<16x16x128xf32>
    %148 = vector.shape_cast %147 : vector<16x16x128xf32> to vector<256x128xf32>
    %149 = arith.addf %134, %148 : vector<256x128xf32>
    %c0_73 = arith.constant 0 : index
    %c0_74 = arith.constant 0 : index
    %150 = vector.load %arg6[%c0_73, %c0_74] : memref<1x128xf32, #tpu.memory_space<vmem>>, vector<1x128xf32>
    %151 = vector.broadcast %150 : vector<1x128xf32> to vector<256x128xf32>
    %152 = arith.mulf %149, %151 : vector<256x128xf32>
    %153 = arith.addf %146, %152 : vector<256x128xf32>
    %c0_75 = arith.constant 0 : index
    %c0_76 = arith.constant 0 : index
    %154 = vector.load %arg7[%c0_75, %c0_76] : memref<1x128xf32, #tpu.memory_space<vmem>>, vector<1x128xf32>
    %155 = vector.broadcast %154 : vector<1x128xf32> to vector<256x128xf32>
    %156 = arith.addf %153, %155 : vector<256x128xf32>
    %157 = vector.shape_cast %156 : vector<256x128xf32> to vector<16x16x128xf32>
    %c0_77 = arith.constant 0 : index
    %c0_78 = arith.constant 0 : index
    %c0_79 = arith.constant 0 : index
    %c0_80 = arith.constant 0 : index
    %158 = vector.load %arg8[%c0_77, %c0_78, %c0_79, %c0_80] : memref<1x16x16x128xf32, #tpu.memory_space<vmem>>, vector<1x16x16x128xf32>
    %159 = vector.shape_cast %158 : vector<1x16x16x128xf32> to vector<16x16x128xf32>
    %160 = vector.shape_cast %157 : vector<16x16x128xf32> to vector<1x16x16x128xf32>
    tpu.vector_store %arg8[%c0_77, %c0_78, %c0_79, %c0_80], %160 {strides = array<i32>} : memref<1x16x16x128xf32, #tpu.memory_space<vmem>>, vector<1x16x16x128xf32>,
    return
  }
  func.func @transform_0(%arg0: i32) -> (i32, i32, i32, i32) {
    %c0_i32 = arith.constant 0 : i32
    %c0_i32_0 = arith.constant 0 : i32
    %c0_i32_1 = arith.constant 0 : i32
    %c0_i32_2 = arith.constant 0 : i32
    return %arg0, %c0_i32, %c0_i32_0, %c0_i32_1 : i32, i32, i32, i32
  }
  func.func @transform_1(%arg0: i32) -> (i32, i32) {
    %c0_i32 = arith.constant 0 : i32
    %c0_i32_0 = arith.constant 0 : i32
    %c0_i32_1 = arith.constant 0 : i32
    return %c0_i32, %c0_i32_0 : i32, i32
  }
  func.func @transform_2(%arg0: i32) -> (i32, i32) {
    %c0_i32 = arith.constant 0 : i32
    %c0_i32_0 = arith.constant 0 : i32
    %c0_i32_1 = arith.constant 0 : i32
    return %c0_i32, %c0_i32_0 : i32, i32
  }
  func.func @transform_3(%arg0: i32) -> (i32, i32, i32) {
    %c0_i32 = arith.constant 0 : i32
    %c0_i32_0 = arith.constant 0 : i32
    %c0_i32_1 = arith.constant 0 : i32
    %c0_i32_2 = arith.constant 0 : i32
    return %c0_i32, %c0_i32_0, %c0_i32_1 : i32, i32, i32
  }
  func.func @transform_4(%arg0: i32) -> (i32, i32, i32) {
    %c0_i32 = arith.constant 0 : i32
    %c0_i32_0 = arith.constant 0 : i32
    %c0_i32_1 = arith.constant 0 : i32
    %c0_i32_2 = arith.constant 0 : i32
    return %c0_i32, %c0_i32_0, %c0_i32_1 : i32, i32, i32
  }
  func.func @transform_5(%arg0: i32) -> (i32, i32) {
    %c0_i32 = arith.constant 0 : i32
    %c0_i32_0 = arith.constant 0 : i32
    %c0_i32_1 = arith.constant 0 : i32
    return %c0_i32, %c0_i32_0 : i32, i32
  }
  func.func @transform_6(%arg0: i32) -> (i32, i32) {
    %c0_i32 = arith.constant 0 : i32
    %c0_i32_0 = arith.constant 0 : i32
    %c0_i32_1 = arith.constant 0 : i32
    return %c0_i32, %c0_i32_0 : i32, i32
  }
  func.func @transform_7(%arg0: i32) -> (i32, i32, i32, i32) {
    %c0_i32 = arith.constant 0 : i32
    %c0_i32_0 = arith.constant 0 : i32
    %c0_i32_1 = arith.constant 0 : i32
    %c0_i32_2 = arith.constant 0 : i32
    return %arg0, %c0_i32, %c0_i32_0, %c0_i32_1 : i32, i32, i32, i32
  }
}

</mosaic_0001>

<llo_original>
// kernel: tpu_custom_call.1
$region0: #{tpu_custom_call.1}
  #allocation0 [shape = 'u32[]', space=smem, size = 0x4, offset = 0x4, fixed_abs, tag = 'smem constant byte address 0x4 - core index']
  #allocation1 [shape = 'u32[144,128]{1,0:T(1,128)}', space=vmem, size = 0x12000, scoped, tag = 'internal scratch']
  %s0 = inlined_call_operand.hbm [shape: bf16[2,18,24,128], index: 0, kind: input, shape index: {}]
  %s1 = inlined_call_operand.hbm [shape: bf16[128,256], index: 1, kind: input, shape index: {}]
  %s2 = inlined_call_operand.vmem [shape: f32[1,256], index: 2, kind: input, shape index: {}]
  %s3 = inlined_call_operand.hbm [shape: bf16[9,128,128], index: 3, kind: input, shape index: {}]
  %s4 = inlined_call_operand.hbm [shape: bf16[9,128,128], index: 4, kind: input, shape index: {}]
  %s5 = inlined_call_operand.vmem [shape: f32[1,128], index: 5, kind: input, shape index: {}]
  %s6 = inlined_call_operand.vmem [shape: f32[1,128], index: 6, kind: input, shape index: {}]
  %s7 = inlined_call_operand.hbm [shape: f32[2,16,16,128], index: 7, kind: output, shape index: {}]
  %s8 = sld [smem:[#allocation0]]
  $region77: #{tpu_custom_call.1} parent=0
    _
  %s10 = ssub.s32 1, %s8
  %s11 = scalar_select 0, %s10, %s8
  $region1: #{tpu_custom_call.1} parent=0
    #allocation2 [shape = 'u8[221184]{0}', space=vmem, size = 0x36000, scoped, tag = 'input window, operand 0']
    #allocation3 [shape = 's32[2]{0}', space=sflag, size = 0x8, scoped, tag = 'scoped memory for tpu_custom_call.1']
    #allocation4 [shape = 's32[2]{0}', space=sflag, size = 0x8, scoped, tag = 'scoped memory for tpu_custom_call.1']
    #allocation5 [shape = 'u8[65536]{0}', space=vmem, size = 0x10000, scoped, tag = 'input window, operand 1, single buffered']
    #allocation6 [shape = 's32[1]{0}', space=sflag, size = 0x4, scoped, tag = 'scoped memory for tpu_custom_call.1']
    #allocation7 [shape = 'u8[294912]{0}', space=vmem, size = 0x48000, scoped, tag = 'input window, operand 3, single buffered']
    #allocation8 [shape = 'u8[294912]{0}', space=vmem, size = 0x48000, scoped, tag = 'input window, operand 4, single buffered']
    #allocation9 [shape = 's32[1]{0}', space=sflag, size = 0x4, scoped, tag = 'scoped memory for tpu_custom_call.1']
    #allocation10 [shape = 'u8[262144]{0}', space=vmem, size = 0x40000, scoped, tag = 'output window, operand 0']
    %12 = vsyncpa [#allocation3], 0
    %s13 = scalar_lea.sflag [#allocation3], 1
    %14 = vsyncpa %s13, 0
    %15 = vsyncpa [#allocation6], 0
    %16 = vsyncpa [#allocation9], 0
    %17 = vsyncpa [#allocation4], 0
    %s18 = scalar_lea.sflag [#allocation4], 1
    %19 = vsyncpa %s18, 0
    loop: start=0, step=1, limit=4
    $region2: #{tpu_custom_call.1} parent=1 // loop_pre_header
      _
    $region3: #{tpu_custom_call.1} parent=1 // loop_header
      %s21 = sphi 0, %s25
      %p22 = scmp.ge.s32.totalorder %s21, 4
      %s31 = sphi 0, %s33
      %s34 = sphi 0, %s31
      %s35 = sphi 0, %s34
      %s51 = sphi 0, %s35
      %s55 = sphi 0, %s55
      %s57 = sphi 0, %s55
      %s58 = sphi 0, %s57
      %s72 = sphi 0, %s58
      %s76 = sphi 0, %s76
      %s78 = sphi 0, %s76
      %s79 = sphi 0, %s78
      %s93 = sphi 0, %s79
      %s97 = sphi 0, %s97
      %s99 = sphi 0, %s97
      %s100 = sphi 0, %s99
      %s114 = sphi 0, %s100
      %s118 = sphi 0, %s118
      %s120 = sphi 0, %s118
      %s121 = sphi 0, %s120
      %s135 = sphi 0, %s121
      %s139 = sphi 0, %s139
      %s141 = sphi 0, %s139
      %s142 = sphi 0, %s141
      %s156 = sphi 0, %s142
      %s160 = sphi 0, %s160
      %s162 = sphi 0, %s160
      %s163 = sphi 0, %s162
      %s177 = sphi 0, %s163
      %s183 = sphi 0, %s185
      %s186 = sphi 0, %s183
      %s187 = sphi 0, %s186
      %s203 = sphi 0, %s187
    $region4: #{tpu_custom_call.1} parent=1 // loop_header_branch
      %24 = sbr.rel (%p22) target = $region8
    $region5: #{tpu_custom_call.1} parent=1 // loop_body
      %s26 = ssub.s32 %s21, 1
      %s27 = ssub.s32 %s21, 2
      %s28 = sadd.s32 %s21, 1
      %s29 = ssub.s32 %s21, %s28
      %p30 = scmp.eq.s32.totalorder %s29, 0
      %s32 = sadd.s32 %s31, 1
      %s33 = scalar_select %p30, %s31, %s32
      %p36 = pneg %p30
      %p37 = scmp.eq.s32.totalorder %s21, 1
      %p38 = por %p36, %p37
      %p39 = scmp.ne.s32.totalorder %s31, %s34
      %p40 = scmp.eq.s32.totalorder %s21, 0
      %p41 = por %p39, %p40
      %p42 = scmp.ne.s32.totalorder %s31, %s34
      %p43 = scmp.eq.s32.totalorder %s26, 1
      %p44 = por %p42, %p43
      %p45 = scmp.ne.s32.totalorder %s34, %s35
      %p46 = scmp.eq.s32.totalorder %s26, 0
      %p47 = por %p45, %p46
      %p48 = scmp.ne.s32.totalorder %s34, %s35
      %p49 = scmp.eq.s32.totalorder %s27, 1
      %p50 = por %p48, %p49
      %p52 = scmp.ne.s32.totalorder %s35, %s51
      %p53 = scmp.eq.s32.totalorder %s27, 0
      %p54 = por %p52, %p53
      %s56 = sadd.s32 %s55, 1
      %p59 = scmp.eq.s32.totalorder %s21, 1
      %p60 = scmp.ne.s32.totalorder %s55, %s57
      %p61 = scmp.eq.s32.totalorder %s21, 0
      %p62 = por %p60, %p61
      %p63 = scmp.ne.s32.totalorder %s55, %s57
      %p64 = scmp.eq.s32.totalorder %s26, 1
      %p65 = por %p63, %p64
      %p66 = scmp.ne.s32.totalorder %s57, %s58
      %p67 = scmp.eq.s32.totalorder %s26, 0
      %p68 = por %p66, %p67
      %p69 = scmp.ne.s32.totalorder %s57, %s58
      %p70 = scmp.eq.s32.totalorder %s27, 1
      %p71 = por %p69, %p70
      %p73 = scmp.ne.s32.totalorder %s58, %s72
      %p74 = scmp.eq.s32.totalorder %s27, 0
      %p75 = por %p73, %p74
      %s77 = sadd.s32 %s76, 1
      %p80 = scmp.eq.s32.totalorder %s21, 1
      %p81 = scmp.ne.s32.totalorder %s76, %s78
      %p82 = scmp.eq.s32.totalorder %s21, 0
      %p83 = por %p81, %p82
      %p84 = scmp.ne.s32.totalorder %s76, %s78
      %p85 = scmp.eq.s32.totalorder %s26, 1
      %p86 = por %p84, %p85
      %p87 = scmp.ne.s32.totalorder %s78, %s79
      %p88 = scmp.eq.s32.totalorder %s26, 0
      %p89 = por %p87, %p88
      %p90 = scmp.ne.s32.totalorder %s78, %s79
      %p91 = scmp.eq.s32.totalorder %s27, 1
      %p92 = por %p90, %p91
      %p94 = scmp.ne.s32.totalorder %s79, %s93
      %p95 = scmp.eq.s32.totalorder %s27, 0
      %p96 = por %p94, %p95
      %s98 = sadd.s32 %s97, 1
      %p101 = scmp.eq.s32.totalorder %s21, 1
      %p102 = scmp.ne.s32.totalorder %s97, %s99
      %p103 = scmp.eq.s32.totalorder %s21, 0
      %p104 = por %p102, %p103
      %p105 = scmp.ne.s32.totalorder %s97, %s99
      %p106 = scmp.eq.s32.totalorder %s26, 1
      %p107 = por %p105, %p106
      %p108 = scmp.ne.s32.totalorder %s99, %s100
      %p109 = scmp.eq.s32.totalorder %s26, 0
      %p110 = por %p108, %p109
      %p111 = scmp.ne.s32.totalorder %s99, %s100
      %p112 = scmp.eq.s32.totalorder %s27, 1
      %p113 = por %p111, %p112
      %p115 = scmp.ne.s32.totalorder %s100, %s114
      %p116 = scmp.eq.s32.totalorder %s27, 0
      %p117 = por %p115, %p116
      %s119 = sadd.s32 %s118, 1
      %p122 = scmp.eq.s32.totalorder %s21, 1
      %p123 = scmp.ne.s32.totalorder %s118, %s120
      %p124 = scmp.eq.s32.totalorder %s21, 0
      %p125 = por %p123, %p124
      %p126 = scmp.ne.s32.totalorder %s118, %s120
      %p127 = scmp.eq.s32.totalorder %s26, 1
      %p128 = por %p126, %p127
      %p129 = scmp.ne.s32.totalorder %s120, %s121
      %p130 = scmp.eq.s32.totalorder %s26, 0
      %p131 = por %p129, %p130
      %p132 = scmp.ne.s32.totalorder %s120, %s121
      %p133 = scmp.eq.s32.totalorder %s27, 1
      %p134 = por %p132, %p133
      %p136 = scmp.ne.s32.totalorder %s121, %s135
      %p137 = scmp.eq.s32.totalorder %s27, 0
      %p138 = por %p136, %p137
      %s140 = sadd.s32 %s139, 1
      %p143 = scmp.eq.s32.totalorder %s21, 1
      %p144 = scmp.ne.s32.totalorder %s139, %s141
      %p145 = scmp.eq.s32.totalorder %s21, 0
      %p146 = por %p144, %p145
      %p147 = scmp.ne.s32.totalorder %s139, %s141
      %p148 = scmp.eq.s32.totalorder %s26, 1
      %p149 = por %p147, %p148
      %p150 = scmp.ne.s32.totalorder %s141, %s142
      %p151 = scmp.eq.s32.totalorder %s26, 0
      %p152 = por %p150, %p151
      %p153 = scmp.ne.s32.totalorder %s141, %s142
      %p154 = scmp.eq.s32.totalorder %s27, 1
      %p155 = por %p153, %p154
      %p157 = scmp.ne.s32.totalorder %s142, %s156
      %p158 = scmp.eq.s32.totalorder %s27, 0
      %p159 = por %p157, %p158
      %s161 = sadd.s32 %s160, 1
      %p164 = scmp.eq.s32.totalorder %s21, 1
      %p165 = scmp.ne.s32.totalorder %s160, %s162
      %p166 = scmp.eq.s32.totalorder %s21, 0
      %p167 = por %p165, %p166
      %p168 = scmp.ne.s32.totalorder %s160, %s162
      %p169 = scmp.eq.s32.totalorder %s26, 1
      %p170 = por %p168, %p169
      %p171 = scmp.ne.s32.totalorder %s162, %s163
      %p172 = scmp.eq.s32.totalorder %s26, 0
      %p173 = por %p171, %p172
      %p174 = scmp.ne.s32.totalorder %s162, %s163
      %p175 = scmp.eq.s32.totalorder %s27, 1
      %p176 = por %p174, %p175
      %p178 = scmp.ne.s32.totalorder %s163, %s177
      %p179 = scmp.eq.s32.totalorder %s27, 0
      %p180 = por %p178, %p179
      %s181 = ssub.s32 %s21, %s28
      %p182 = scmp.eq.s32.totalorder %s181, 0
      %s184 = sadd.s32 %s183, 1
      %s185 = scalar_select %p182, %s183, %s184
      %p188 = pneg %p182
      %p189 = scmp.eq.s32.totalorder %s21, 1
      %p190 = por %p188, %p189
      %p191 = scmp.ne.s32.totalorder %s183, %s186
      %p192 = scmp.eq.s32.totalorder %s21, 0
      %p193 = por %p191, %p192
      %p194 = scmp.ne.s32.totalorder %s183, %s186
      %p195 = scmp.eq.s32.totalorder %s26, 1
      %p196 = por %p194, %p195
      %p197 = scmp.ne.s32.totalorder %s186, %s187
      %p198 = scmp.eq.s32.totalorder %s26, 0
      %p199 = por %p197, %p198
      %p200 = scmp.ne.s32.totalorder %s186, %s187
      %p201 = scmp.eq.s32.totalorder %s27, 1
      %p202 = por %p200, %p201
      %p204 = scmp.ne.s32.totalorder %s187, %s203
      %p205 = scmp.eq.s32.totalorder %s27, 0
      %p206 = por %p204, %p205
      %p207 = scmp.le.s32.totalorder 1, %s21
      %p208 = scmp.lt.s32.totalorder %s21, 3
      %p209 = pnand %p207, %p208
      %p210 = pneg %p209
      // Predicated region
      $region9: #{tpu_custom_call.1} parent=5 // pred_check
        _
      $region10: #{tpu_custom_call.1} parent=5 // pred_check_branch
        %212 = sbr.rel (%p209) target = $region12
      $region11: #{tpu_custom_call.1} parent=5 // pred_region
        %s213 = ssub.s32 %s21, 1
        // Predicated region
        $region13: #{tpu_custom_call.1} parent=11 // pred_check
          %p214 = pneg %p68
        $region14: #{tpu_custom_call.1} parent=11 // pred_check_branch
          %216 = sbr.rel (%p214) target = $region16
        $region15: #{tpu_custom_call.1} parent=11 // pred_region
          %s218 = ssub.s32 2048, 2048
          %219 = vsyncadd [#allocation6], %s218
          %s220 = sshll.u32 [#allocation5], 4
          %s221 = int_to_ptr.vmem [resolvable:$true] %s220
          %226 = dma.hbm_to_vmem [thread:$0]  %s1, 2048, %s221, [#allocation6], 128, 128, 8
        $region16: #{tpu_custom_call.1} parent=11 // pred_fallthru
          _
        // Predicated region
        $region17: #{tpu_custom_call.1} parent=11 // pred_check
          %p227 = pneg %p89
        $region18: #{tpu_custom_call.1} parent=11 // pred_check_branch
          %229 = sbr.rel (%p227) target = $region20
        $region19: #{tpu_custom_call.1} parent=11 // pred_region
          _
        $region20: #{tpu_custom_call.1} parent=11 // pred_fallthru
          _
        // Predicated region
        $region21: #{tpu_custom_call.1} parent=11 // pred_check
          %p230 = pneg %p110
        $region22: #{tpu_custom_call.1} parent=11 // pred_check_branch
          %232 = sbr.rel (%p230) target = $region24
        $region23: #{tpu_custom_call.1} parent=11 // pred_region
          %s234 = ssub.s32 9216, 9216
          %235 = vsyncadd [#allocation6], %s234
          %s236 = sshll.u32 [#allocation7], 4
          %s237 = int_to_ptr.vmem [resolvable:$true] %s236
          %242 = dma.hbm_to_vmem [thread:$0]  %s3, 9216, %s237, [#allocation6], 64, 64, 4
        $region24: #{tpu_custom_call.1} parent=11 // pred_fallthru
          _
        // Predicated region
        $region25: #{tpu_custom_call.1} parent=11 // pred_check
          %p243 = pneg %p131
        $region26: #{tpu_custom_call.1} parent=11 // pred_check_branch
          %245 = sbr.rel (%p243) target = $region28
        $region27: #{tpu_custom_call.1} parent=11 // pred_region
          %s247 = ssub.s32 9216, 9216
          %248 = vsyncadd [#allocation9], %s247
          %s249 = sshll.u32 [#allocation8], 4
          %s250 = int_to_ptr.vmem [resolvable:$true] %s249
          %255 = dma.hbm_to_vmem [thread:$0]  %s4, 9216, %s250, [#allocation9], 64, 64, 4
        $region28: #{tpu_custom_call.1} parent=11 // pred_fallthru
          _
        // Predicated region
        $region29: #{tpu_custom_call.1} parent=11 // pred_check
          %p256 = pneg %p152
        $region30: #{tpu_custom_call.1} parent=11 // pred_check_branch
          %258 = sbr.rel (%p256) target = $region32
        $region31: #{tpu_custom_call.1} parent=11 // pred_region
          _
        $region32: #{tpu_custom_call.1} parent=11 // pred_fallthru
          _
        // Predicated region
        $region33: #{tpu_custom_call.1} parent=11 // pred_check
          %p259 = pneg %p173
        $region34: #{tpu_custom_call.1} parent=11 // pred_check_branch
          %261 = sbr.rel (%p259) target = $region36
        $region35: #{tpu_custom_call.1} parent=11 // pred_region
          _
        $region36: #{tpu_custom_call.1} parent=11 // pred_fallthru
          _
      $region12: #{tpu_custom_call.1} parent=5 // pred_fallthru
        _
      %p262 = scmp.lt.s32.totalorder %s21, 2
      // Predicated region
      $region37: #{tpu_custom_call.1} parent=5 // pred_check
        %p263 = pneg %p262
      $region38: #{tpu_custom_call.1} parent=5 // pred_check_branch
        %265 = sbr.rel (%p263) target = $region40
      $region39: #{tpu_custom_call.1} parent=5 // pred_region
        // Predicated region
        $region41: #{tpu_custom_call.1} parent=39 // pred_check
          %p266 = pneg %p41
        $region42: #{tpu_custom_call.1} parent=39 // pred_check_branch
          %268 = sbr.rel (%p266) target = $region44
        $region43: #{tpu_custom_call.1} parent=39 // pred_region
          %s269 = sand.u32 %s31, 1
          %s270 = scalar_lea.sflag [#allocation3], %s269
          %s271 = sand.u32 %s31, 1
          %s272 = smul.addr %s271, 216
          %s273 = scalar_lea.vmem [#allocation2], %s272
          %s275 = ssub.s32 3456, 3456
          %276 = vsyncadd %s270, %s275
          %s277 = smul.addr %s21, 54
          %s278 = smul.addr %s277, 64
          %s279 = scalar_lea.hbm %s0, %s278
          %s280 = sshll.u32 %s273, 4
          %s281 = int_to_ptr.vmem [resolvable:$true] %s280
          %286 = dma.hbm_to_vmem [thread:$0]  %s279, 3456, %s281, %s270, 64, 64, 4
        $region44: #{tpu_custom_call.1} parent=39 // pred_fallthru
          _
      $region40: #{tpu_custom_call.1} parent=5 // pred_fallthru
        _
      %p287 = scmp.le.s32.totalorder 1, %s21
      %p288 = scmp.lt.s32.totalorder %s21, 3
      %p289 = pnand %p287, %p288
      %p290 = pneg %p289
      // Predicated region
      $region45: #{tpu_custom_call.1} parent=5 // pred_check
        _
      $region46: #{tpu_custom_call.1} parent=5 // pred_check_branch
        %292 = sbr.rel (%p289) target = $region48
      $region47: #{tpu_custom_call.1} parent=5 // pred_region
        %s293 = ssub.s32 %s21, 1
        %s294 = sand.u32 %s34, 1
        %s295 = scalar_lea.sflag [#allocation3], %s294
        %s296 = sand.u32 %s34, 1
        %s297 = smul.addr %s296, 216
        %s298 = scalar_lea.vmem [#allocation2], %s297
        // Predicated region
        $region49: #{tpu_custom_call.1} parent=47 // pred_check
          %p299 = pneg %p47
        $region50: #{tpu_custom_call.1} parent=47 // pred_check_branch
          %301 = sbr.rel (%p299) target = $region52
        $region51: #{tpu_custom_call.1} parent=47 // pred_region
          %302 = dma.done %s295, 3456
        $region52: #{tpu_custom_call.1} parent=47 // pred_fallthru
          _
        // Predicated region
        $region53: #{tpu_custom_call.1} parent=47 // pred_check
          %p303 = pneg %p68
        $region54: #{tpu_custom_call.1} parent=47 // pred_check_branch
          %305 = sbr.rel (%p303) target = $region56
        $region55: #{tpu_custom_call.1} parent=47 // pred_region
          %306 = dma.done [#allocation6], 2048
        $region56: #{tpu_custom_call.1} parent=47 // pred_fallthru
          _
        // Predicated region
        $region57: #{tpu_custom_call.1} parent=47 // pred_check
          %p307 = pneg %p110
        $region58: #{tpu_custom_call.1} parent=47 // pred_check_branch
          %309 = sbr.rel (%p307) target = $region60
        $region59: #{tpu_custom_call.1} parent=47 // pred_region
          %310 = dma.done [#allocation6], 9216
        $region60: #{tpu_custom_call.1} parent=47 // pred_fallthru
          _
        // Predicated region
        $region61: #{tpu_custom_call.1} parent=47 // pred_check
          %p311 = pneg %p131
        $region62: #{tpu_custom_call.1} parent=47 // pred_check_branch
          %313 = sbr.rel (%p311) target = $region64
        $region63: #{tpu_custom_call.1} parent=47 // pred_region
          %314 = dma.done [#allocation9], 9216
        $region64: #{tpu_custom_call.1} parent=47 // pred_fallthru
          _
        %s315 = sand.u32 %s34, 1
        %s316 = scalar_lea.sflag [#allocation3], %s315
        %s317 = sand.u32 %s34, 1
        %s318 = smul.addr %s317, 216
        %s319 = scalar_lea.vmem [#allocation2], %s318
        %p320 = pneg %p47
        %p321 = pneg %p44
        %p322 = pneg %p68
        %p323 = pneg %p65
        %p324 = pneg %p89
        %p325 = pneg %p86
        %p326 = pneg %p110
        %p327 = pneg %p107
        %p328 = pneg %p131
        %p329 = pneg %p128
        %p330 = pneg %p152
        %p331 = pneg %p149
        %p332 = pneg %p173
        %p333 = pneg %p170
        %p334 = pneg %p199
        %p335 = pneg %p196
        %s336 = sand.u32 %s186, 1
        %s337 = scalar_lea.sflag [#allocation4], %s336
        %s338 = sand.u32 %s186, 1
        %s339 = smul.addr %s338, 256
        %s340 = scalar_lea.vmem [#allocation10], %s339
        %v342 = vld [vmem:[%s298] sm:$0xf]
        %v343 = vld [vmem:[%s298 + $0x4] sm:$0xf]
        %v344 = vld [vmem:[%s298 + $0x8] sm:$0xf]
        %v345 = vld [vmem:[%s298 + $0xc] sm:$0xf]
        %v346 = vld [vmem:[%s298 + $0x10] sm:$0xf]
        %v347 = vld [vmem:[%s298 + $0x14] sm:$0xf]
        %v348 = vld [vmem:[%s298 + $0x18] sm:$0xf]
        %v349 = vld [vmem:[%s298 + $0x1c] sm:$0xf]
        %v350 = vld [vmem:[%s298 + $0x20] sm:$0xf]
        %v351 = vld [vmem:[%s298 + $0x24] sm:$0xf]
        %v352 = vld [vmem:[%s298 + $0x28] sm:$0xf]
        %v353 = vld [vmem:[%s298 + $0x2c] sm:$0xf]
        %v354 = vld [vmem:[%s298 + $0x30] sm:$0xf]
        %v355 = vld [vmem:[%s298 + $0x34] sm:$0xf]
        %v356 = vld [vmem:[%s298 + $0x38] sm:$0xf]
        %v357 = vld [vmem:[%s298 + $0x3c] sm:$0xf]
        %v358 = vld [vmem:[%s298 + $0x40] sm:$0xf]
        %v359 = vld [vmem:[%s298 + $0x44] sm:$0xf]
        %v360 = vld [vmem:[%s298 + $0x48] sm:$0xf]
        %v361 = vld [vmem:[%s298 + $0x4c] sm:$0xf]
        %v362 = vld [vmem:[%s298 + $0x50] sm:$0xf]
        %v363 = vld [vmem:[%s298 + $0x54] sm:$0xf]
        %v364 = vld [vmem:[%s298 + $0x58] sm:$0xf]
        %v365 = vld [vmem:[%s298 + $0x5c] sm:$0xf]
        %v366 = vld [vmem:[%s298 + $0x60] sm:$0xf]
        %v367 = vld [vmem:[%s298 + $0x64] sm:$0xf]
        %v368 = vld [vmem:[%s298 + $0x68] sm:$0xf]
        %v369 = vld [vmem:[%s298 + $0x6c] sm:$0xf]
        %v370 = vld [vmem:[%s298 + $0x70] sm:$0xf]
        %v371 = vld [vmem:[%s298 + $0x74] sm:$0xf]
        %v372 = vld [vmem:[%s298 + $0x78] sm:$0xf]
        %v373 = vld [vmem:[%s298 + $0x7c] sm:$0xf]
        %v374 = vld [vmem:[%s298 + $0x80] sm:$0xf]
        %v375 = vld [vmem:[%s298 + $0x84] sm:$0xf]
        %v376 = vld [vmem:[%s298 + $0x88] sm:$0xf]
        %v377 = vld [vmem:[%s298 + $0x8c] sm:$0xf]
        %v378 = vld [vmem:[%s298 + $0x90] sm:$0xf]
        %v379 = vld [vmem:[%s298 + $0x94] sm:$0xf]
        %v380 = vld [vmem:[%s298 + $0x98] sm:$0xf]
        %v381 = vld [vmem:[%s298 + $0x9c] sm:$0xf]
        %v382 = vld [vmem:[%s298 + $0xa0] sm:$0xf]
        %v383 = vld [vmem:[%s298 + $0xa4] sm:$0xf]
        %v384 = vld [vmem:[%s298 + $0xa8] sm:$0xf]
        %v385 = vld [vmem:[%s298 + $0xac] sm:$0xf]
        %v386 = vld [vmem:[%s298 + $0xb0] sm:$0xf]
        %v387 = vld [vmem:[%s298 + $0xb4] sm:$0xf]
        %v388 = vld [vmem:[%s298 + $0xb8] sm:$0xf]
        %v389 = vld [vmem:[%s298 + $0xbc] sm:$0xf]
        %v390 = vld [vmem:[%s298 + $0xc0] sm:$0xf]
        %v391 = vld [vmem:[%s298 + $0xc4] sm:$0xf]
        %v392 = vld [vmem:[%s298 + $0xc8] sm:$0xf]
        %v393 = vld [vmem:[%s298 + $0xcc] sm:$0xf]
        %v394 = vld [vmem:[%s298 + $0xd0] sm:$0xf]
        %v395 = vld [vmem:[%s298 + $0xd4] sm:$0xf]
        %v396 = vld [vmem:[#allocation5] sm:$0xff]
        %v397 = vld [vmem:[#allocation5 + $0x8] sm:$0xff]
        %v398 = vld [vmem:[#allocation5 + $0x10] sm:$0xff]
        %v399 = vld [vmem:[#allocation5 + $0x18] sm:$0xff]
        %v400 = vld [vmem:[#allocation5 + $0x20] sm:$0xff]
        %v401 = vld [vmem:[#allocation5 + $0x28] sm:$0xff]
        %v402 = vld [vmem:[#allocation5 + $0x30] sm:$0xff]
        %v403 = vld [vmem:[#allocation5 + $0x38] sm:$0xff]
        %v404 = vld [vmem:[#allocation5 + $0x40] sm:$0xff]
        %v405 = vld [vmem:[#allocation5 + $0x48] sm:$0xff]
        %v406 = vld [vmem:[#allocation5 + $0x50] sm:$0xff]
        %v407 = vld [vmem:[#allocation5 + $0x58] sm:$0xff]
        %v408 = vld [vmem:[#allocation5 + $0x60] sm:$0xff]
        %v409 = vld [vmem:[#allocation5 + $0x68] sm:$0xff]
        %v410 = vld [vmem:[#allocation5 + $0x70] sm:$0xff]
        %v411 = vld [vmem:[#allocation5 + $0x78] sm:$0xff]
        %v412 = vld [vmem:[%s2] sm:$0x3]
        %v414 = vlaneseq
        %v415 = vshrl.u32 %v414, 7
        %v416 = vsub.s32 0, %v415
        %v417 = vrot.slane %v412, %v416
        %v418 = vlaneseq
        %v419 = vshrl.u32 %v418, 7
        %v420 = vsub.s32 1, %v419
        %v421 = vrot.slane %v412, %v420
        %v478 = vunpack.c.l.b16 %v342
        %v479 = vunpack.c.l.b16 %v343
        %v480 = vunpack.c.l.b16 %v344
        %v481 = vunpack.c.l.b16 %v345
        %v482 = vunpack.c.l.b16 %v346
        %v483 = vunpack.c.l.b16 %v347
        %v484 = vunpack.c.l.b16 %v348
        %v485 = vunpack.c.l.b16 %v349
        %v486 = vunpack.c.l.b16 %v350
        %v487 = vunpack.c.l.b16 %v351
        %v488 = vunpack.c.l.b16 %v352
        %v489 = vunpack.c.l.b16 %v353
        %v490 = vunpack.c.l.b16 %v354
        %v491 = vunpack.c.l.b16 %v355
        %v492 = vunpack.c.l.b16 %v356
        %v493 = vunpack.c.l.b16 %v357
        %v494 = vunpack.c.l.b16 %v358
        %v495 = vunpack.c.l.b16 %v359
        %v496 = vunpack.c.l.b16 %v360
        %v497 = vunpack.c.l.b16 %v361
        %v498 = vunpack.c.l.b16 %v362
        %v499 = vunpack.c.l.b16 %v363
        %v500 = vunpack.c.l.b16 %v364
        %v501 = vunpack.c.l.b16 %v365
        %v502 = vunpack.c.l.b16 %v366
        %v503 = vunpack.c.l.b16 %v367
        %v504 = vunpack.c.l.b16 %v368
        %v505 = vunpack.c.l.b16 %v369
        %v506 = vunpack.c.l.b16 %v370
        %v507 = vunpack.c.l.b16 %v371
        %v508 = vunpack.c.l.b16 %v372
        %v509 = vunpack.c.l.b16 %v373
        %v510 = vunpack.c.l.b16 %v374
        %v511 = vunpack.c.l.b16 %v375
        %v512 = vunpack.c.l.b16 %v376
        %v513 = vunpack.c.l.b16 %v377
        %v514 = vunpack.c.l.b16 %v378
        %v515 = vunpack.c.l.b16 %v379
        %v516 = vunpack.c.l.b16 %v380
        %v517 = vunpack.c.l.b16 %v381
        %v518 = vunpack.c.l.b16 %v382
        %v519 = vunpack.c.l.b16 %v383
        %v520 = vunpack.c.l.b16 %v384
        %v521 = vunpack.c.l.b16 %v385
        %v522 = vunpack.c.l.b16 %v386
        %v523 = vunpack.c.l.b16 %v387
        %v524 = vunpack.c.l.b16 %v388
        %v525 = vunpack.c.l.b16 %v389
        %v526 = vunpack.c.l.b16 %v390
        %v527 = vunpack.c.l.b16 %v391
        %v528 = vunpack.c.l.b16 %v392
        %v529 = vunpack.c.l.b16 %v393
        %v530 = vunpack.c.l.b16 %v394
        %v531 = vunpack.c.l.b16 %v395
        %v532 = vpack.c.b16 %v479, %v478
        %v533 = vpack.c.b16 %v481, %v480
        %v534 = vpack.c.b16 %v483, %v482
        %v535 = vpack.c.b16 %v485, %v484
        %v536 = vpack.c.b16 %v487, %v486
        %v537 = vpack.c.b16 %v489, %v488
        %v538 = vpack.c.b16 %v491, %v490
        %v539 = vpack.c.b16 %v493, %v492
        %v540 = vpack.c.b16 %v495, %v494
        %v541 = vpack.c.b16 %v497, %v496
        %v542 = vpack.c.b16 %v499, %v498
        %v543 = vpack.c.b16 %v501, %v500
        %v544 = vpack.c.b16 %v503, %v502
        %v545 = vpack.c.b16 %v505, %v504
        %v546 = vpack.c.b16 %v507, %v506
        %v547 = vpack.c.b16 %v509, %v508
        %v548 = vpack.c.b16 %v511, %v510
        %v549 = vpack.c.b16 %v513, %v512
        %v550 = vpack.c.b16 %v515, %v514
        %v551 = vpack.c.b16 %v517, %v516
        %v552 = vpack.c.b16 %v519, %v518
        %v553 = vpack.c.b16 %v521, %v520
        %v554 = vpack.c.b16 %v523, %v522
        %v555 = vpack.c.b16 %v525, %v524
        %v556 = vpack.c.b16 %v527, %v526
        %v557 = vpack.c.b16 %v529, %v528
        %v558 = vpack.c.b16 %v531, %v530
        %v602 = vunpack.c.l.b16 %v396
        %v603 = vunpack.c.h.b16 %v396
        %v604 = vunpack.c.l.b16 %v397
        %v605 = vunpack.c.h.b16 %v397
        %v606 = vunpack.c.l.b16 %v398
        %v607 = vunpack.c.h.b16 %v398
        %v608 = vunpack.c.l.b16 %v399
        %v609 = vunpack.c.h.b16 %v399
        %v610 = vunpack.c.l.b16 %v400
        %v611 = vunpack.c.h.b16 %v400
        %v612 = vunpack.c.l.b16 %v401
        %v613 = vunpack.c.h.b16 %v401
        %v614 = vunpack.c.l.b16 %v402
        %v615 = vunpack.c.h.b16 %v402
        %v616 = vunpack.c.l.b16 %v403
        %v617 = vunpack.c.h.b16 %v403
        %v618 = vunpack.c.l.b16 %v404
        %v619 = vunpack.c.h.b16 %v404
        %v620 = vunpack.c.l.b16 %v405
        %v621 = vunpack.c.h.b16 %v405
        %v622 = vunpack.c.l.b16 %v406
        %v623 = vunpack.c.h.b16 %v406
        %v624 = vunpack.c.l.b16 %v407
        %v625 = vunpack.c.h.b16 %v407
        %v626 = vunpack.c.l.b16 %v408
        %v627 = vunpack.c.h.b16 %v408
        %v628 = vunpack.c.l.b16 %v409
        %v629 = vunpack.c.h.b16 %v409
        %v630 = vunpack.c.l.b16 %v410
        %v631 = vunpack.c.h.b16 %v410
        %v632 = vunpack.c.l.b16 %v411
        %v633 = vunpack.c.h.b16 %v411
        %v634 = vpack.c.b16 %v604, %v602
        %v635 = vpack.c.b16 %v605, %v603
        %v636 = vpack.c.b16 %v608, %v606
        %v637 = vpack.c.b16 %v609, %v607
        %v638 = vpack.c.b16 %v612, %v610
        %v639 = vpack.c.b16 %v613, %v611
        %v640 = vpack.c.b16 %v616, %v614
        %v641 = vpack.c.b16 %v617, %v615
        %v642 = vpack.c.b16 %v620, %v618
        %v643 = vpack.c.b16 %v621, %v619
        %v644 = vpack.c.b16 %v624, %v622
        %v645 = vpack.c.b16 %v625, %v623
        %v646 = vpack.c.b16 %v628, %v626
        %v647 = vpack.c.b16 %v629, %v627
        %v648 = vpack.c.b16 %v632, %v630
        %v649 = vpack.c.b16 %v633, %v631
        %666 = vmatprep.subr.bf16.mxu0 %v635
        %667 = vmatpush1.bf16.msra.mxu0 %v634
        %668 = vmatprep.subr.bf16.mxu0 %v637
        %669 = vmatpush1.bf16.msra.mxu0 %v636
        %670 = vmatprep.subr.bf16.mxu0 %v639
        %671 = vmatpush1.bf16.msra.mxu0 %v638
        %672 = vmatprep.subr.bf16.mxu0 %v641
        %673 = vmatpush1.bf16.msra.mxu0 %v640
        %674 = vmatprep.subr.bf16.mxu0 %v643
        %675 = vmatpush1.bf16.msra.mxu0 %v642
        %676 = vmatprep.subr.bf16.mxu0 %v645
        %677 = vmatpush1.bf16.msra.mxu0 %v644
        %678 = vmatprep.subr.bf16.mxu0 %v647
        %679 = vmatpush1.bf16.msra.mxu0 %v646
        %680 = vmatprep.subr.bf16.mxu0 %v649
        %681 = vmatpush1.bf16.msra.mxu0 %v648
        %682 = vmatprep.subr.bf16.mxu0 0
        %683 = vmatpush1.bf16.msra.mxu0 0
        %684 = vmatprep.subr.bf16.mxu0 0
        %685 = vmatpush1.bf16.msra.mxu0 0
        %686 = vmatprep.subr.bf16.mxu0 0
        %687 = vmatpush1.bf16.msra.mxu0 0
        %688 = vmatprep.subr.bf16.mxu0 0
        %689 = vmatpush1.bf16.msra.mxu0 0
        %690 = vmatprep.subr.bf16.mxu0 0
        %691 = vmatpush1.bf16.msra.mxu0 0
        %692 = vmatprep.subr.bf16.mxu0 0
        %693 = vmatpush1.bf16.msra.mxu0 0
        %694 = vmatprep.subr.bf16.mxu0 0
        %695 = vmatpush1.bf16.msra.mxu0 0
        %696 = vmatprep.subr.bf16.mxu0 0
        %697 = vmatpush1.bf16.msra.mxu0 0
        %698 = vmatprep.mubr.bf16.mxu0 0
        %699 = vmatmul.mubr.bf16.gmra.mrb[0].mxu0 %v532
        %v700 = vpop.f32.mrb[0].mxu0
        %v701 = vadd.f32 %v417, %v700
        %v702 = vpop.f32.mrb[0].mxu0
        %v703 = vadd.f32 %v421, %v702
        %v704 = vpop.f32.mrb[0].mxu0
        %v705 = vadd.f32 %v417, %v704
        %v706 = vpop.f32.mrb[0].mxu0
        %v707 = vadd.f32 %v421, %v706
        %708 = vmatprep.mubr.bf16.mxu0 0
        %709 = vmatmul.mubr.bf16.gmra.mrb[0].mxu0 %v533
        %v710 = vpop.f32.mrb[0].mxu0
        %v711 = vadd.f32 %v417, %v710
        %v712 = vpop.f32.mrb[0].mxu0
        %v713 = vadd.f32 %v421, %v712
        %v714 = vpop.f32.mrb[0].mxu0
        %v715 = vadd.f32 %v417, %v714
        %v716 = vpop.f32.mrb[0].mxu0
        %v717 = vadd.f32 %v421, %v716
        %718 = vmatprep.mubr.bf16.mxu0 0
        %719 = vmatmul.mubr.bf16.gmra.mrb[0].mxu0 %v534
        %v720 = vpop.f32.mrb[0].mxu0
        %v721 = vadd.f32 %v417, %v720
        %v722 = vpop.f32.mrb[0].mxu0
        %v723 = vadd.f32 %v421, %v722
        %v724 = vpop.f32.mrb[0].mxu0
        %v725 = vadd.f32 %v417, %v724
        %v726 = vpop.f32.mrb[0].mxu0
        %v727 = vadd.f32 %v421, %v726
        %728 = vmatprep.mubr.bf16.mxu0 0
        %729 = vmatmul.mubr.bf16.gmra.mrb[0].mxu0 %v535
        %v730 = vpop.f32.mrb[0].mxu0
        %v731 = vadd.f32 %v417, %v730
        %v732 = vpop.f32.mrb[0].mxu0
        %v733 = vadd.f32 %v421, %v732
        %v734 = vpop.f32.mrb[0].mxu0
        %v735 = vadd.f32 %v417, %v734
        %v736 = vpop.f32.mrb[0].mxu0
        %v737 = vadd.f32 %v421, %v736
        %738 = vmatprep.mubr.bf16.mxu0 0
        %739 = vmatmul.mubr.bf16.gmra.mrb[0].mxu0 %v536
        %v740 = vpop.f32.mrb[0].mxu0
        %v741 = vadd.f32 %v417, %v740
        %v742 = vpop.f32.mrb[0].mxu0
        %v743 = vadd.f32 %v421, %v742
        %v744 = vpop.f32.mrb[0].mxu0
        %v745 = vadd.f32 %v417, %v744
        %v746 = vpop.f32.mrb[0].mxu0
        %v747 = vadd.f32 %v421, %v746
        %748 = vmatprep.mubr.bf16.mxu0 0
        %749 = vmatmul.mubr.bf16.gmra.mrb[0].mxu0 %v537
        %v750 = vpop.f32.mrb[0].mxu0
        %v751 = vadd.f32 %v417, %v750
        %v752 = vpop.f32.mrb[0].mxu0
        %v753 = vadd.f32 %v421, %v752
        %v754 = vpop.f32.mrb[0].mxu0
        %v755 = vadd.f32 %v417, %v754
        %v756 = vpop.f32.mrb[0].mxu0
        %v757 = vadd.f32 %v421, %v756
        %758 = vmatprep.mubr.bf16.mxu0 0
        %759 = vmatmul.mubr.bf16.gmra.mrb[0].mxu0 %v538
        %v760 = vpop.f32.mrb[0].mxu0
        %v761 = vadd.f32 %v417, %v760
        %v762 = vpop.f32.mrb[0].mxu0
        %v763 = vadd.f32 %v421, %v762
        %v764 = vpop.f32.mrb[0].mxu0
        %v765 = vadd.f32 %v417, %v764
        %v766 = vpop.f32.mrb[0].mxu0
        %v767 = vadd.f32 %v421, %v766
        %768 = vmatprep.mubr.bf16.mxu0 0
        %769 = vmatmul.mubr.bf16.gmra.mrb[0].mxu0 %v539
        %v770 = vpop.f32.mrb[0].mxu0
        %v771 = vadd.f32 %v417, %v770
        %v772 = vpop.f32.mrb[0].mxu0
        %v773 = vadd.f32 %v421, %v772
        %v774 = vpop.f32.mrb[0].mxu0
        %v775 = vadd.f32 %v417, %v774
        %v776 = vpop.f32.mrb[0].mxu0
        %v777 = vadd.f32 %v421, %v776
        %778 = vmatprep.mubr.bf16.mxu0 0
        %779 = vmatmul.mubr.bf16.gmra.mrb[0].mxu0 %v540
        %v780 = vpop.f32.mrb[0].mxu0
        %v781 = vadd.f32 %v417, %v780
        %v782 = vpop.f32.mrb[0].mxu0
        %v783 = vadd.f32 %v421, %v782
        %v784 = vpop.f32.mrb[0].mxu0
        %v785 = vadd.f32 %v417, %v784
        %v786 = vpop.f32.mrb[0].mxu0
        %v787 = vadd.f32 %v421, %v786
        %788 = vmatprep.mubr.bf16.mxu0 0
        %789 = vmatmul.mubr.bf16.gmra.mrb[0].mxu0 %v541
        %v790 = vpop.f32.mrb[0].mxu0
        %v791 = vadd.f32 %v417, %v790
        %v792 = vpop.f32.mrb[0].mxu0
        %v793 = vadd.f32 %v421, %v792
        %v794 = vpop.f32.mrb[0].mxu0
        %v795 = vadd.f32 %v417, %v794
        %v796 = vpop.f32.mrb[0].mxu0
        %v797 = vadd.f32 %v421, %v796
        %798 = vmatprep.mubr.bf16.mxu0 0
        %799 = vmatmul.mubr.bf16.gmra.mrb[0].mxu0 %v542
        %v800 = vpop.f32.mrb[0].mxu0
        %v801 = vadd.f32 %v417, %v800
        %v802 = vpop.f32.mrb[0].mxu0
        %v803 = vadd.f32 %v421, %v802
        %v804 = vpop.f32.mrb[0].mxu0
        %v805 = vadd.f32 %v417, %v804
        %v806 = vpop.f32.mrb[0].mxu0
        %v807 = vadd.f32 %v421, %v806
        %808 = vmatprep.mubr.bf16.mxu0 0
        %809 = vmatmul.mubr.bf16.gmra.mrb[0].mxu0 %v543
        %v810 = vpop.f32.mrb[0].mxu0
        %v811 = vadd.f32 %v417, %v810
        %v812 = vpop.f32.mrb[0].mxu0
        %v813 = vadd.f32 %v421, %v812
        %v814 = vpop.f32.mrb[0].mxu0
        %v815 = vadd.f32 %v417, %v814
        %v816 = vpop.f32.mrb[0].mxu0
        %v817 = vadd.f32 %v421, %v816
        %818 = vmatprep.mubr.bf16.mxu0 0
        %819 = vmatmul.mubr.bf16.gmra.mrb[0].mxu0 %v544
        %v820 = vpop.f32.mrb[0].mxu0
        %v821 = vadd.f32 %v417, %v820
        %v822 = vpop.f32.mrb[0].mxu0
        %v823 = vadd.f32 %v421, %v822
        %v824 = vpop.f32.mrb[0].mxu0
        %v825 = vadd.f32 %v417, %v824
        %v826 = vpop.f32.mrb[0].mxu0
        %v827 = vadd.f32 %v421, %v826
        %828 = vmatprep.mubr.bf16.mxu0 0
        %829 = vmatmul.mubr.bf16.gmra.mrb[0].mxu0 %v545
        %v830 = vpop.f32.mrb[0].mxu0
        %v831 = vadd.f32 %v417, %v830
        %v832 = vpop.f32.mrb[0].mxu0
        %v833 = vadd.f32 %v421, %v832
        %v834 = vpop.f32.mrb[0].mxu0
        %v835 = vadd.f32 %v417, %v834
        %v836 = vpop.f32.mrb[0].mxu0
        %v837 = vadd.f32 %v421, %v836
        %838 = vmatprep.mubr.bf16.mxu0 0
        %839 = vmatmul.mubr.bf16.gmra.mrb[0].mxu0 %v546
        %v840 = vpop.f32.mrb[0].mxu0
        %v841 = vadd.f32 %v417, %v840
        %v842 = vpop.f32.mrb[0].mxu0
        %v843 = vadd.f32 %v421, %v842
        %v844 = vpop.f32.mrb[0].mxu0
        %v845 = vadd.f32 %v417, %v844
        %v846 = vpop.f32.mrb[0].mxu0
        %v847 = vadd.f32 %v421, %v846
        %848 = vmatprep.mubr.bf16.mxu0 0
        %849 = vmatmul.mubr.bf16.gmra.mrb[0].mxu0 %v547
        %v850 = vpop.f32.mrb[0].mxu0
        %v851 = vadd.f32 %v417, %v850
        %v852 = vpop.f32.mrb[0].mxu0
        %v853 = vadd.f32 %v421, %v852
        %v854 = vpop.f32.mrb[0].mxu0
        %v855 = vadd.f32 %v417, %v854
        %v856 = vpop.f32.mrb[0].mxu0
        %v857 = vadd.f32 %v421, %v856
        %858 = vmatprep.mubr.bf16.mxu0 0
        %859 = vmatmul.mubr.bf16.gmra.mrb[0].mxu0 %v548
        %v860 = vpop.f32.mrb[0].mxu0
        %v861 = vadd.f32 %v417, %v860
        %v862 = vpop.f32.mrb[0].mxu0
        %v863 = vadd.f32 %v421, %v862
        %v864 = vpop.f32.mrb[0].mxu0
        %v865 = vadd.f32 %v417, %v864
        %v866 = vpop.f32.mrb[0].mxu0
        %v867 = vadd.f32 %v421, %v866
        %868 = vmatprep.mubr.bf16.mxu0 0
        %869 = vmatmul.mubr.bf16.gmra.mrb[0].mxu0 %v549
        %v870 = vpop.f32.mrb[0].mxu0
        %v871 = vadd.f32 %v417, %v870
        %v872 = vpop.f32.mrb[0].mxu0
        %v873 = vadd.f32 %v421, %v872
        %v874 = vpop.f32.mrb[0].mxu0
        %v875 = vadd.f32 %v417, %v874
        %v876 = vpop.f32.mrb[0].mxu0
        %v877 = vadd.f32 %v421, %v876
        %878 = vmatprep.mubr.bf16.mxu0 0
        %879 = vmatmul.mubr.bf16.gmra.mrb[0].mxu0 %v550
        %v880 = vpop.f32.mrb[0].mxu0
        %v881 = vadd.f32 %v417, %v880
        %v882 = vpop.f32.mrb[0].mxu0
        %v883 = vadd.f32 %v421, %v882
        %v884 = vpop.f32.mrb[0].mxu0
        %v885 = vadd.f32 %v417, %v884
        %v886 = vpop.f32.mrb[0].mxu0
        %v887 = vadd.f32 %v421, %v886
        %888 = vmatprep.mubr.bf16.mxu0 0
        %889 = vmatmul.mubr.bf16.gmra.mrb[0].mxu0 %v551
        %v890 = vpop.f32.mrb[0].mxu0
        %v891 = vadd.f32 %v417, %v890
        %v892 = vpop.f32.mrb[0].mxu0
        %v893 = vadd.f32 %v421, %v892
        %v894 = vpop.f32.mrb[0].mxu0
        %v895 = vadd.f32 %v417, %v894
        %v896 = vpop.f32.mrb[0].mxu0
        %v897 = vadd.f32 %v421, %v896
        %898 = vmatprep.mubr.bf16.mxu0 0
        %899 = vmatmul.mubr.bf16.gmra.mrb[0].mxu0 %v552
        %v900 = vpop.f32.mrb[0].mxu0
        %v901 = vadd.f32 %v417, %v900
        %v902 = vpop.f32.mrb[0].mxu0
        %v903 = vadd.f32 %v421, %v902
        %v904 = vpop.f32.mrb[0].mxu0
        %v905 = vadd.f32 %v417, %v904
        %v906 = vpop.f32.mrb[0].mxu0
        %v907 = vadd.f32 %v421, %v906
        %908 = vmatprep.mubr.bf16.mxu0 0
        %909 = vmatmul.mubr.bf16.gmra.mrb[0].mxu0 %v553
        %v910 = vpop.f32.mrb[0].mxu0
        %v911 = vadd.f32 %v417, %v910
        %v912 = vpop.f32.mrb[0].mxu0
        %v913 = vadd.f32 %v421, %v912
        %v914 = vpop.f32.mrb[0].mxu0
        %v915 = vadd.f32 %v417, %v914
        %v916 = vpop.f32.mrb[0].mxu0
        %v917 = vadd.f32 %v421, %v916
        %918 = vmatprep.mubr.bf16.mxu0 0
        %919 = vmatmul.mubr.bf16.gmra.mrb[0].mxu0 %v554
        %v920 = vpop.f32.mrb[0].mxu0
        %v921 = vadd.f32 %v417, %v920
        %v922 = vpop.f32.mrb[0].mxu0
        %v923 = vadd.f32 %v421, %v922
        %v924 = vpop.f32.mrb[0].mxu0
        %v925 = vadd.f32 %v417, %v924
        %v926 = vpop.f32.mrb[0].mxu0
        %v927 = vadd.f32 %v421, %v926
        %928 = vmatprep.mubr.bf16.mxu0 0
        %929 = vmatmul.mubr.bf16.gmra.mrb[0].mxu0 %v555
        %v930 = vpop.f32.mrb[0].mxu0
        %v931 = vadd.f32 %v417, %v930
        %v932 = vpop.f32.mrb[0].mxu0
        %v933 = vadd.f32 %v421, %v932
        %v934 = vpop.f32.mrb[0].mxu0
        %v935 = vadd.f32 %v417, %v934
        %v936 = vpop.f32.mrb[0].mxu0
        %v937 = vadd.f32 %v421, %v936
        %938 = vmatprep.mubr.bf16.mxu0 0
        %939 = vmatmul.mubr.bf16.gmra.mrb[0].mxu0 %v556
        %v940 = vpop.f32.mrb[0].mxu0
        %v941 = vadd.f32 %v417, %v940
        %v942 = vpop.f32.mrb[0].mxu0
        %v943 = vadd.f32 %v421, %v942
        %v944 = vpop.f32.mrb[0].mxu0
        %v945 = vadd.f32 %v417, %v944
        %v946 = vpop.f32.mrb[0].mxu0
        %v947 = vadd.f32 %v421, %v946
        %948 = vmatprep.mubr.bf16.mxu0 0
        %949 = vmatmul.mubr.bf16.gmra.mrb[0].mxu0 %v557
        %v950 = vpop.f32.mrb[0].mxu0
        %v951 = vadd.f32 %v417, %v950
        %v952 = vpop.f32.mrb[0].mxu0
        %v953 = vadd.f32 %v421, %v952
        %v954 = vpop.f32.mrb[0].mxu0
        %v955 = vadd.f32 %v417, %v954
        %v956 = vpop.f32.mrb[0].mxu0
        %v957 = vadd.f32 %v421, %v956
        %958 = vmatprep.mubr.bf16.mxu0 0
        %959 = vmatmul.mubr.bf16.gmra.mrb[0].mxu0 %v558
        %v960 = vpop.f32.mrb[0].mxu0
        %v961 = vadd.f32 %v417, %v960
        %v962 = vpop.f32.mrb[0].mxu0
        %v963 = vadd.f32 %v421, %v962
        %v964 = vpop.f32.mrb[0].mxu0
        %v965 = vadd.f32 %v417, %v964
        %v966 = vpop.f32.mrb[0].mxu0
        %v967 = vadd.f32 %v421, %v966
        %968 = vdwg.mxu0
        %v969 = vpack.c.bf16 %v707, %v703
        %v970 = vpack.c.bf16 %v717, %v713
        %v971 = vpack.c.bf16 %v727, %v723
        %v972 = vpack.c.bf16 %v737, %v733
        %v973 = vpack.c.bf16 %v747, %v743
        %v974 = vpack.c.bf16 %v757, %v753
        %v975 = vpack.c.bf16 %v767, %v763
        %v976 = vpack.c.bf16 %v777, %v773
        %v977 = vpack.c.bf16 %v787, %v783
        %v978 = vpack.c.bf16 %v797, %v793
        %v979 = vpack.c.bf16 %v807, %v803
        %v980 = vpack.c.bf16 %v817, %v813
        %v981 = vpack.c.bf16 %v827, %v823
        %v982 = vpack.c.bf16 %v837, %v833
        %v983 = vpack.c.bf16 %v847, %v843
        %v984 = vpack.c.bf16 %v857, %v853
        %v985 = vpack.c.bf16 %v867, %v863
        %v986 = vpack.c.bf16 %v877, %v873
        %v987 = vpack.c.bf16 %v887, %v883
        %v988 = vpack.c.bf16 %v897, %v893
        %v989 = vpack.c.bf16 %v907, %v903
        %v990 = vpack.c.bf16 %v917, %v913
        %v991 = vpack.c.bf16 %v927, %v923
        %v992 = vpack.c.bf16 %v937, %v933
        %v993 = vpack.c.bf16 %v947, %v943
        %v994 = vpack.c.bf16 %v957, %v953
        %v995 = vpack.c.bf16 %v967, %v963
        %v1023 = vunpack.c.l.b16 %v969
        %v1024 = vunpack.c.h.b16 %v969
        %v1025 = vunpack.c.l.b16 %v970
        %v1026 = vunpack.c.h.b16 %v970
        %v1027 = vunpack.c.l.b16 %v971
        %v1028 = vunpack.c.h.b16 %v971
        %v1029 = vunpack.c.l.b16 %v972
        %v1030 = vunpack.c.h.b16 %v972
        %v1031 = vunpack.c.l.b16 %v973
        %v1032 = vunpack.c.h.b16 %v973
        %v1033 = vunpack.c.l.b16 %v974
        %v1034 = vunpack.c.h.b16 %v974
        %v1035 = vunpack.c.l.b16 %v975
        %v1036 = vunpack.c.h.b16 %v975
        %v1037 = vunpack.c.l.b16 %v976
        %v1038 = vunpack.c.h.b16 %v976
        %v1039 = vunpack.c.l.b16 %v977
        %v1040 = vunpack.c.h.b16 %v977
        %v1041 = vunpack.c.l.b16 %v978
        %v1042 = vunpack.c.h.b16 %v978
        %v1043 = vunpack.c.l.b16 %v979
        %v1044 = vunpack.c.h.b16 %v979
        %v1045 = vunpack.c.l.b16 %v980
        %v1046 = vunpack.c.h.b16 %v980
        %v1047 = vunpack.c.l.b16 %v981
        %v1048 = vunpack.c.h.b16 %v981
        %v1049 = vunpack.c.l.b16 %v982
        %v1050 = vunpack.c.h.b16 %v982
        %v1051 = vunpack.c.l.b16 %v983
        %v1052 = vunpack.c.h.b16 %v983
        %v1053 = vunpack.c.l.b16 %v984
        %v1054 = vunpack.c.h.b16 %v984
        %v1055 = vunpack.c.l.b16 %v985
        %v1056 = vunpack.c.h.b16 %v985
        %v1057 = vunpack.c.l.b16 %v986
        %v1058 = vunpack.c.h.b16 %v986
        %v1059 = vunpack.c.l.b16 %v987
        %v1060 = vunpack.c.h.b16 %v987
        %v1061 = vunpack.c.l.b16 %v988
        %v1062 = vunpack.c.h.b16 %v988
        %v1063 = vunpack.c.l.b16 %v989
        %v1064 = vunpack.c.h.b16 %v989
        %v1065 = vunpack.c.l.b16 %v990
        %v1066 = vunpack.c.h.b16 %v990
        %v1067 = vunpack.c.l.b16 %v991
        %v1068 = vunpack.c.h.b16 %v991
        %v1069 = vunpack.c.l.b16 %v992
        %v1070 = vunpack.c.h.b16 %v992
        %v1071 = vunpack.c.l.b16 %v993
        %v1072 = vunpack.c.h.b16 %v993
        %v1073 = vunpack.c.l.b16 %v994
        %v1074 = vunpack.c.h.b16 %v994
        %v1075 = vunpack.c.l.b16 %v995
        %v1076 = vunpack.c.h.b16 %v995
        %v1077 = vpack.c.b16 %v1023, %v1023
        %v1078 = vpack.c.b16 %v1024, %v1024
        %v1079 = vpack.c.b16 %v1025, %v1025
        %v1080 = vpack.c.b16 %v1026, %v1026
        %v1081 = vpack.c.b16 %v1027, %v1027
        %v1082 = vpack.c.b16 %v1028, %v1028
        %v1083 = vpack.c.b16 %v1029, %v1029
        %v1084 = vpack.c.b16 %v1030, %v1030
        %v1085 = vpack.c.b16 %v1031, %v1031
        %v1086 = vpack.c.b16 %v1032, %v1032
        %v1087 = vpack.c.b16 %v1033, %v1033
        %v1088 = vpack.c.b16 %v1034, %v1034
        %v1089 = vpack.c.b16 %v1035, %v1035
        %v1090 = vpack.c.b16 %v1036, %v1036
        %v1091 = vpack.c.b16 %v1037, %v1037
        %v1092 = vpack.c.b16 %v1038, %v1038
        %v1093 = vpack.c.b16 %v1039, %v1039
        %v1094 = vpack.c.b16 %v1040, %v1040
        %v1095 = vpack.c.b16 %v1041, %v1041
        %v1096 = vpack.c.b16 %v1042, %v1042
        %v1097 = vpack.c.b16 %v1043, %v1043
        %v1098 = vpack.c.b16 %v1044, %v1044
        %v1099 = vpack.c.b16 %v1045, %v1045
        %v1100 = vpack.c.b16 %v1046, %v1046
        %v1101 = vpack.c.b16 %v1047, %v1047
        %v1102 = vpack.c.b16 %v1048, %v1048
        %v1103 = vpack.c.b16 %v1049, %v1049
        %v1104 = vpack.c.b16 %v1050, %v1050
        %v1105 = vpack.c.b16 %v1051, %v1051
        %v1106 = vpack.c.b16 %v1052, %v1052
        %v1107 = vpack.c.b16 %v1053, %v1053
        %v1108 = vpack.c.b16 %v1054, %v1054
        %v1109 = vpack.c.b16 %v1055, %v1055
        %v1110 = vpack.c.b16 %v1056, %v1056
        %v1111 = vpack.c.b16 %v1057, %v1057
        %v1112 = vpack.c.b16 %v1058, %v1058
        %v1113 = vpack.c.b16 %v1059, %v1059
        %v1114 = vpack.c.b16 %v1060, %v1060
        %v1115 = vpack.c.b16 %v1061, %v1061
        %v1116 = vpack.c.b16 %v1062, %v1062
        %v1117 = vpack.c.b16 %v1063, %v1063
        %v1118 = vpack.c.b16 %v1064, %v1064
        %v1119 = vpack.c.b16 %v1065, %v1065
        %v1120 = vpack.c.b16 %v1066, %v1066
        %v1121 = vpack.c.b16 %v1067, %v1067
        %v1122 = vpack.c.b16 %v1068, %v1068
        %v1123 = vpack.c.b16 %v1069, %v1069
        %v1124 = vpack.c.b16 %v1070, %v1070
        %v1125 = vpack.c.b16 %v1071, %v1071
        %v1126 = vpack.c.b16 %v1072, %v1072
        %v1127 = vpack.c.b16 %v1073, %v1073
        %v1128 = vpack.c.b16 %v1074, %v1074
        %v1129 = vpack.c.b16 %v1075, %v1075
        %v1130 = vpack.c.b16 %v1076, %v1076
        %v1131 = vld [vmem:[#allocation7] sm:$0xf]
        %v1132 = vld [vmem:[#allocation7 + $0x4] sm:$0xf]
        %v1133 = vld [vmem:[#allocation7 + $0x8] sm:$0xf]
        %v1134 = vld [vmem:[#allocation7 + $0xc] sm:$0xf]
        %v1135 = vld [vmem:[#allocation7 + $0x10] sm:$0xf]
        %v1136 = vld [vmem:[#allocation7 + $0x14] sm:$0xf]
        %v1137 = vld [vmem:[#allocation7 + $0x18] sm:$0xf]
        %v1138 = vld [vmem:[#allocation7 + $0x1c] sm:$0xf]
        %v1139 = vld [vmem:[#allocation7 + $0x20] sm:$0xf]
        %v1140 = vld [vmem:[#allocation7 + $0x24] sm:$0xf]
        %v1141 = vld [vmem:[#allocation7 + $0x28] sm:$0xf]
        %v1142 = vld [vmem:[#allocation7 + $0x2c] sm:$0xf]
        %v1143 = vld [vmem:[#allocation7 + $0x30] sm:$0xf]
        %v1144 = vld [vmem:[#allocation7 + $0x34] sm:$0xf]
        %v1145 = vld [vmem:[#allocation7 + $0x38] sm:$0xf]
        %v1146 = vld [vmem:[#allocation7 + $0x3c] sm:$0xf]
        %v1147 = vld [vmem:[#allocation8] sm:$0xf]
        %v1148 = vld [vmem:[#allocation8 + $0x4] sm:$0xf]
        %v1149 = vld [vmem:[#allocation8 + $0x8] sm:$0xf]
        %v1150 = vld [vmem:[#allocation8 + $0xc] sm:$0xf]
        %v1151 = vld [vmem:[#allocation8 + $0x10] sm:$0xf]
        %v1152 = vld [vmem:[#allocation8 + $0x14] sm:$0xf]
        %v1153 = vld [vmem:[#allocation8 + $0x18] sm:$0xf]
        %v1154 = vld [vmem:[#allocation8 + $0x1c] sm:$0xf]
        %v1155 = vld [vmem:[#allocation8 + $0x20] sm:$0xf]
        %v1156 = vld [vmem:[#allocation8 + $0x24] sm:$0xf]
        %v1157 = vld [vmem:[#allocation8 + $0x28] sm:$0xf]
        %v1158 = vld [vmem:[#allocation8 + $0x2c] sm:$0xf]
        %v1159 = vld [vmem:[#allocation8 + $0x30] sm:$0xf]
        %v1160 = vld [vmem:[#allocation8 + $0x34] sm:$0xf]
        %v1161 = vld [vmem:[#allocation8 + $0x38] sm:$0xf]
        %v1162 = vld [vmem:[#allocation8 + $0x3c] sm:$0xf]
        %v1163 = vpack.c.b16 %v1024, %v1023
        %v1164 = vpack.c.b16 %v1027, %v1026
        %v1165 = vpack.c.b16 %v1030, %v1029
        %v1166 = vpack.c.b16 %v1033, %v1032
        %v1167 = vpack.c.b16 %v1036, %v1035
        %v1168 = vpack.c.b16 %v1039, %v1038
        %v1169 = vpack.c.b16 %v1042, %v1041
        %v1170 = vpack.c.b16 %v1045, %v1044
        %v1171 = vpack.c.b16 %v1048, %v1047
        %v1172 = vpack.c.b16 %v1051, %v1050
        %v1173 = vpack.c.b16 %v1054, %v1053
        %v1174 = vpack.c.b16 %v1057, %v1056
        %v1175 = vpack.c.b16 %v1060, %v1059
        %v1176 = vpack.c.b16 %v1063, %v1062
        %v1177 = vpack.c.b16 %v1066, %v1065
        %v1178 = vpack.c.b16 %v1069, %v1068
        %v1211 = vunpack.c.l.b16 %v1147
        %v1212 = vunpack.c.l.b16 %v1148
        %v1213 = vunpack.c.l.b16 %v1149
        %v1214 = vunpack.c.l.b16 %v1150
        %v1215 = vunpack.c.l.b16 %v1151
        %v1216 = vunpack.c.l.b16 %v1152
        %v1217 = vunpack.c.l.b16 %v1153
        %v1218 = vunpack.c.l.b16 %v1154
        %v1219 = vunpack.c.l.b16 %v1155
        %v1220 = vunpack.c.l.b16 %v1156
        %v1221 = vunpack.c.l.b16 %v1157
        %v1222 = vunpack.c.l.b16 %v1158
        %v1223 = vunpack.c.l.b16 %v1159
        %v1224 = vunpack.c.l.b16 %v1160
        %v1225 = vunpack.c.l.b16 %v1161
        %v1226 = vunpack.c.l.b16 %v1162
        %v1227 = vpack.c.b16 %v1212, %v1211
        %v1228 = vpack.c.b16 %v1214, %v1213
        %v1229 = vpack.c.b16 %v1216, %v1215
        %v1230 = vpack.c.b16 %v1218, %v1217
        %v1231 = vpack.c.b16 %v1220, %v1219
        %v1232 = vpack.c.b16 %v1222, %v1221
        %v1233 = vpack.c.b16 %v1224, %v1223
        %v1234 = vpack.c.b16 %v1226, %v1225
        %1243 = vmatprep.subr.bf16.mxu0 0
        %1244 = vmatpush1.bf16.msra.mxu0 %v1227
        %1245 = vmatprep.subr.bf16.mxu0 0
        %1246 = vmatpush1.bf16.msra.mxu0 %v1228
        %1247 = vmatprep.subr.bf16.mxu0 0
        %1248 = vmatpush1.bf16.msra.mxu0 %v1229
        %1249 = vmatprep.subr.bf16.mxu0 0
        %1250 = vmatpush1.bf16.msra.mxu0 %v1230
        %1251 = vmatprep.subr.bf16.mxu0 0
        %1252 = vmatpush1.bf16.msra.mxu0 %v1231
        %1253 = vmatprep.subr.bf16.mxu0 0
        %1254 = vmatpush1.bf16.msra.mxu0 %v1232
        %1255 = vmatprep.subr.bf16.mxu0 0
        %1256 = vmatpush1.bf16.msra.mxu0 %v1233
        %1257 = vmatprep.subr.bf16.mxu0 0
        %1258 = vmatpush1.bf16.msra.mxu0 %v1234
        %1259 = vmatprep.subr.bf16.mxu0 0
        %1260 = vmatpush1.bf16.msra.mxu0 0
        %1261 = vmatprep.subr.bf16.mxu0 0
        %1262 = vmatpush1.bf16.msra.mxu0 0
        %1263 = vmatprep.subr.bf16.mxu0 0
        %1264 = vmatpush1.bf16.msra.mxu0 0
        %1265 = vmatprep.subr.bf16.mxu0 0
        %1266 = vmatpush1.bf16.msra.mxu0 0
        %1267 = vmatprep.subr.bf16.mxu0 0
        %1268 = vmatpush1.bf16.msra.mxu0 0
        %1269 = vmatprep.subr.bf16.mxu0 0
        %1270 = vmatpush1.bf16.msra.mxu0 0
        %1271 = vmatprep.subr.bf16.mxu0 0
        %1272 = vmatpush1.bf16.msra.mxu0 0
        %1273 = vmatprep.subr.bf16.mxu0 0
        %1274 = vmatpush1.bf16.msra.mxu0 0
        %1275 = vmatprep.mubr.bf16.mxu0 0
        %1276 = vmatmul.mubr.bf16.gmra.mrb[0].mxu0 %v1163
        %v1277 = vpop.f32.mrb[0].mxu0
        %v1278 = vadd.f32 0.0, %v1277
        %v1279 = vpop.f32.mrb[0].mxu0
        %v1280 = vpop.f32.mrb[0].mxu0
        %v1281 = vadd.f32 0.0, %v1280
        %v1282 = vpop.f32.mrb[0].mxu0
        %1283 = vmatprep.mubr.bf16.mxu0 0
        %1284 = vmatmul.mubr.bf16.gmra.mrb[0].mxu0 %v1164
        %v1285 = vpop.f32.mrb[0].mxu0
        %v1286 = vadd.f32 0.0, %v1285
        %v1287 = vpop.f32.mrb[0].mxu0
        %v1288 = vpop.f32.mrb[0].mxu0
        %v1289 = vadd.f32 0.0, %v1288
        %v1290 = vpop.f32.mrb[0].mxu0
        %1291 = vmatprep.mubr.bf16.mxu0 0
        %1292 = vmatmul.mubr.bf16.gmra.mrb[0].mxu0 %v1165
        %v1293 = vpop.f32.mrb[0].mxu0
        %v1294 = vadd.f32 0.0, %v1293
        %v1295 = vpop.f32.mrb[0].mxu0
        %v1296 = vpop.f32.mrb[0].mxu0
        %v1297 = vadd.f32 0.0, %v1296
        %v1298 = vpop.f32.mrb[0].mxu0
        %1299 = vmatprep.mubr.bf16.mxu0 0
        %1300 = vmatmul.mubr.bf16.gmra.mrb[0].mxu0 %v1166
        %v1301 = vpop.f32.mrb[0].mxu0
        %v1302 = vadd.f32 0.0, %v1301
        %v1303 = vpop.f32.mrb[0].mxu0
        %v1304 = vpop.f32.mrb[0].mxu0
        %v1305 = vadd.f32 0.0, %v1304
        %v1306 = vpop.f32.mrb[0].mxu0
        %1307 = vmatprep.mubr.bf16.mxu0 0
        %1308 = vmatmul.mubr.bf16.gmra.mrb[0].mxu0 %v1167
        %v1309 = vpop.f32.mrb[0].mxu0
        %v1310 = vadd.f32 0.0, %v1309
        %v1311 = vpop.f32.mrb[0].mxu0
        %v1312 = vpop.f32.mrb[0].mxu0
        %v1313 = vadd.f32 0.0, %v1312
        %v1314 = vpop.f32.mrb[0].mxu0
        %1315 = vmatprep.mubr.bf16.mxu0 0
        %1316 = vmatmul.mubr.bf16.gmra.mrb[0].mxu0 %v1168
        %v1317 = vpop.f32.mrb[0].mxu0
        %v1318 = vadd.f32 0.0, %v1317
        %v1319 = vpop.f32.mrb[0].mxu0
        %v1320 = vpop.f32.mrb[0].mxu0
        %v1321 = vadd.f32 0.0, %v1320
        %v1322 = vpop.f32.mrb[0].mxu0
        %1323 = vmatprep.mubr.bf16.mxu0 0
        %1324 = vmatmul.mubr.bf16.gmra.mrb[0].mxu0 %v1169
        %v1325 = vpop.f32.mrb[0].mxu0
        %v1326 = vadd.f32 0.0, %v1325
        %v1327 = vpop.f32.mrb[0].mxu0
        %v1328 = vpop.f32.mrb[0].mxu0
        %v1329 = vadd.f32 0.0, %v1328
        %v1330 = vpop.f32.mrb[0].mxu0
        %1331 = vmatprep.mubr.bf16.mxu0 0
        %1332 = vmatmul.mubr.bf16.gmra.mrb[0].mxu0 %v1170
        %v1333 = vpop.f32.mrb[0].mxu0
        %v1334 = vadd.f32 0.0, %v1333
        %v1335 = vpop.f32.mrb[0].mxu0
        %v1336 = vpop.f32.mrb[0].mxu0
        %v1337 = vadd.f32 0.0, %v1336
        %v1338 = vpop.f32.mrb[0].mxu0
        %1339 = vmatprep.mubr.bf16.mxu0 0
        %1340 = vmatmul.mubr.bf16.gmra.mrb[0].mxu0 %v1171
        %v1341 = vpop.f32.mrb[0].mxu0
        %v1342 = vadd.f32 0.0, %v1341
        %v1343 = vpop.f32.mrb[0].mxu0
        %v1344 = vpop.f32.mrb[0].mxu0
        %v1345 = vadd.f32 0.0, %v1344
        %v1346 = vpop.f32.mrb[0].mxu0
        %1347 = vmatprep.mubr.bf16.mxu0 0
        %1348 = vmatmul.mubr.bf16.gmra.mrb[0].mxu0 %v1172
        %v1349 = vpop.f32.mrb[0].mxu0
        %v1350 = vadd.f32 0.0, %v1349
        %v1351 = vpop.f32.mrb[0].mxu0
        %v1352 = vpop.f32.mrb[0].mxu0
        %v1353 = vadd.f32 0.0, %v1352
        %v1354 = vpop.f32.mrb[0].mxu0
        %1355 = vmatprep.mubr.bf16.mxu0 0
        %1356 = vmatmul.mubr.bf16.gmra.mrb[0].mxu0 %v1173
        %v1357 = vpop.f32.mrb[0].mxu0
        %v1358 = vadd.f32 0.0, %v1357
        %v1359 = vpop.f32.mrb[0].mxu0
        %v1360 = vpop.f32.mrb[0].mxu0
        %v1361 = vadd.f32 0.0, %v1360
        %v1362 = vpop.f32.mrb[0].mxu0
        %1363 = vmatprep.mubr.bf16.mxu0 0
        %1364 = vmatmul.mubr.bf16.gmra.mrb[0].mxu0 %v1174
        %v1365 = vpop.f32.mrb[0].mxu0
        %v1366 = vadd.f32 0.0, %v1365
        %v1367 = vpop.f32.mrb[0].mxu0
        %v1368 = vpop.f32.mrb[0].mxu0
        %v1369 = vadd.f32 0.0, %v1368
        %v1370 = vpop.f32.mrb[0].mxu0
        %1371 = vmatprep.mubr.bf16.mxu0 0
        %1372 = vmatmul.mubr.bf16.gmra.mrb[0].mxu0 %v1175
        %v1373 = vpop.f32.mrb[0].mxu0
        %v1374 = vadd.f32 0.0, %v1373
        %v1375 = vpop.f32.mrb[0].mxu0
        %v1376 = vpop.f32.mrb[0].mxu0
        %v1377 = vadd.f32 0.0, %v1376
        %v1378 = vpop.f32.mrb[0].mxu0
        %1379 = vmatprep.mubr.bf16.mxu0 0
        %1380 = vmatmul.mubr.bf16.gmra.mrb[0].mxu0 %v1176
        %v1381 = vpop.f32.mrb[0].mxu0
        %v1382 = vadd.f32 0.0, %v1381
        %v1383 = vpop.f32.mrb[0].mxu0
        %v1384 = vpop.f32.mrb[0].mxu0
        %v1385 = vadd.f32 0.0, %v1384
        %v1386 = vpop.f32.mrb[0].mxu0
        %1387 = vmatprep.mubr.bf16.mxu0 0
        %1388 = vmatmul.mubr.bf16.gmra.mrb[0].mxu0 %v1177
        %v1389 = vpop.f32.mrb[0].mxu0
        %v1390 = vadd.f32 0.0, %v1389
        %v1391 = vpop.f32.mrb[0].mxu0
        %v1392 = vpop.f32.mrb[0].mxu0
        %v1393 = vadd.f32 0.0, %v1392
        %v1394 = vpop.f32.mrb[0].mxu0
        %1395 = vmatprep.mubr.bf16.mxu0 0
        %1396 = vmatmul.mubr.bf16.gmra.mrb[0].mxu0 %v1178
        %v1397 = vpop.f32.mrb[0].mxu0
        %v1398 = vadd.f32 0.0, %v1397
        %v1399 = vpop.f32.mrb[0].mxu0
        %v1400 = vpop.f32.mrb[0].mxu0
        %v1401 = vadd.f32 0.0, %v1400
        %v1402 = vpop.f32.mrb[0].mxu0
        %1403 = vdwg.mxu0
        %v1404 = vpack.c.b16 %v482, %v481
        %v1405 = vpack.c.b16 %v488, %v487
        %v1406 = vpack.c.b16 %v494, %v493
        %v1407 = vpack.c.b16 %v500, %v499
        %v1408 = vpack.c.b16 %v506, %v505
        %v1409 = vpack.c.b16 %v512, %v511
        %v1410 = vpack.c.b16 %v518, %v517
        %v1411 = vpack.c.b16 %v524, %v523
        %v1436 = vunpack.c.l.b16 %v1131
        %v1437 = vunpack.c.l.b16 %v1132
        %v1438 = vunpack.c.l.b16 %v1133
        %v1439 = vunpack.c.l.b16 %v1134
        %v1440 = vunpack.c.l.b16 %v1135
        %v1441 = vunpack.c.l.b16 %v1136
        %v1442 = vunpack.c.l.b16 %v1137
        %v1443 = vunpack.c.l.b16 %v1138
        %v1444 = vunpack.c.l.b16 %v1139
        %v1445 = vunpack.c.l.b16 %v1140
        %v1446 = vunpack.c.l.b16 %v1141
        %v1447 = vunpack.c.l.b16 %v1142
        %v1448 = vunpack.c.l.b16 %v1143
        %v1449 = vunpack.c.l.b16 %v1144
        %v1450 = vunpack.c.l.b16 %v1145
        %v1451 = vunpack.c.l.b16 %v1146
        %v1452 = vpack.c.b16 %v1437, %v1436
        %v1453 = vpack.c.b16 %v1439, %v1438
        %v1454 = vpack.c.b16 %v1441, %v1440
        %v1455 = vpack.c.b16 %v1443, %v1442
        %v1456 = vpack.c.b16 %v1445, %v1444
        %v1457 = vpack.c.b16 %v1447, %v1446
        %v1458 = vpack.c.b16 %v1449, %v1448
        %v1459 = vpack.c.b16 %v1451, %v1450
        %1468 = vmatprep.subr.bf16.mxu0 0
        %1469 = vmatpush1.bf16.msra.mxu0 %v1452
        %1470 = vmatprep.subr.bf16.mxu0 0
        %1471 = vmatpush1.bf16.msra.mxu0 %v1453
        %1472 = vmatprep.subr.bf16.mxu0 0
        %1473 = vmatpush1.bf16.msra.mxu0 %v1454
        %1474 = vmatprep.subr.bf16.mxu0 0
        %1475 = vmatpush1.bf16.msra.mxu0 %v1455
        %1476 = vmatprep.subr.bf16.mxu0 0
        %1477 = vmatpush1.bf16.msra.mxu0 %v1456
        %1478 = vmatprep.subr.bf16.mxu0 0
        %1479 = vmatpush1.bf16.msra.mxu0 %v1457
        %1480 = vmatprep.subr.bf16.mxu0 0
        %1481 = vmatpush1.bf16.msra.mxu0 %v1458
        %1482 = vmatprep.subr.bf16.mxu0 0
        %1483 = vmatpush1.bf16.msra.mxu0 %v1459
        %1484 = vmatprep.subr.bf16.mxu0 0
        %1485 = vmatpush1.bf16.msra.mxu0 0
        %1486 = vmatprep.subr.bf16.mxu0 0
        %1487 = vmatpush1.bf16.msra.mxu0 0
        %1488 = vmatprep.subr.bf16.mxu0 0
        %1489 = vmatpush1.bf16.msra.mxu0 0
        %1490 = vmatprep.subr.bf16.mxu0 0
        %1491 = vmatpush1.bf16.msra.mxu0 0
        %1492 = vmatprep.subr.bf16.mxu0 0
        %1493 = vmatpush1.bf16.msra.mxu0 0
        %1494 = vmatprep.subr.bf16.mxu0 0
        %1495 = vmatpush1.bf16.msra.mxu0 0
        %1496 = vmatprep.subr.bf16.mxu0 0
        %1497 = vmatpush1.bf16.msra.mxu0 0
        %1498 = vmatprep.subr.bf16.mxu0 0
        %1499 = vmatpush1.bf16.msra.mxu0 0
        %1500 = vmatprep.mubr.bf16.mxu0 0
        %1501 = vmatmul.mubr.bf16.gmra.mrb[0].mxu0 %v532
        %v1502 = vpop.f32.mrb[0].mxu0
        %v1503 = vadd.f32 %v1278, %v1502
        %v1504 = vpop.f32.mrb[0].mxu0
        %v1505 = vpop.f32.mrb[0].mxu0
        %v1506 = vadd.f32 %v1281, %v1505
        %v1507 = vpop.f32.mrb[0].mxu0
        %1508 = vmatprep.mubr.bf16.mxu0 0
        %1509 = vmatmul.mubr.bf16.gmra.mrb[0].mxu0 %v1404
        %v1510 = vpop.f32.mrb[0].mxu0
        %v1511 = vadd.f32 %v1286, %v1510
        %v1512 = vpop.f32.mrb[0].mxu0
        %v1513 = vpop.f32.mrb[0].mxu0
        %v1514 = vadd.f32 %v1289, %v1513
        %v1515 = vpop.f32.mrb[0].mxu0
        %1516 = vmatprep.mubr.bf16.mxu0 0
        %1517 = vmatmul.mubr.bf16.gmra.mrb[0].mxu0 %v535
        %v1518 = vpop.f32.mrb[0].mxu0
        %v1519 = vadd.f32 %v1294, %v1518
        %v1520 = vpop.f32.mrb[0].mxu0
        %v1521 = vpop.f32.mrb[0].mxu0
        %v1522 = vadd.f32 %v1297, %v1521
        %v1523 = vpop.f32.mrb[0].mxu0
        %1524 = vmatprep.mubr.bf16.mxu0 0
        %1525 = vmatmul.mubr.bf16.gmra.mrb[0].mxu0 %v1405
        %v1526 = vpop.f32.mrb[0].mxu0
        %v1527 = vadd.f32 %v1302, %v1526
        %v1528 = vpop.f32.mrb[0].mxu0
        %v1529 = vpop.f32.mrb[0].mxu0
        %v1530 = vadd.f32 %v1305, %v1529
        %v1531 = vpop.f32.mrb[0].mxu0
        %1532 = vmatprep.mubr.bf16.mxu0 0
        %1533 = vmatmul.mubr.bf16.gmra.mrb[0].mxu0 %v538
        %v1534 = vpop.f32.mrb[0].mxu0
        %v1535 = vadd.f32 %v1310, %v1534
        %v1536 = vpop.f32.mrb[0].mxu0
        %v1537 = vpop.f32.mrb[0].mxu0
        %v1538 = vadd.f32 %v1313, %v1537
        %v1539 = vpop.f32.mrb[0].mxu0
        %1540 = vmatprep.mubr.bf16.mxu0 0
        %1541 = vmatmul.mubr.bf16.gmra.mrb[0].mxu0 %v1406
        %v1542 = vpop.f32.mrb[0].mxu0
        %v1543 = vadd.f32 %v1318, %v1542
        %v1544 = vpop.f32.mrb[0].mxu0
        %v1545 = vpop.f32.mrb[0].mxu0
        %v1546 = vadd.f32 %v1321, %v1545
        %v1547 = vpop.f32.mrb[0].mxu0
        %1548 = vmatprep.mubr.bf16.mxu0 0
        %1549 = vmatmul.mubr.bf16.gmra.mrb[0].mxu0 %v541
        %v1550 = vpop.f32.mrb[0].mxu0
        %v1551 = vadd.f32 %v1326, %v1550
        %v1552 = vpop.f32.mrb[0].mxu0
        %v1553 = vpop.f32.mrb[0].mxu0
        %v1554 = vadd.f32 %v1329, %v1553
        %v1555 = vpop.f32.mrb[0].mxu0
        %1556 = vmatprep.mubr.bf16.mxu0 0
        %1557 = vmatmul.mubr.bf16.gmra.mrb[0].mxu0 %v1407
        %v1558 = vpop.f32.mrb[0].mxu0
        %v1559 = vadd.f32 %v1334, %v1558
        %v1560 = vpop.f32.mrb[0].mxu0
        %v1561 = vpop.f32.mrb[0].mxu0
        %v1562 = vadd.f32 %v1337, %v1561
        %v1563 = vpop.f32.mrb[0].mxu0
        %1564 = vmatprep.mubr.bf16.mxu0 0
        %1565 = vmatmul.mubr.bf16.gmra.mrb[0].mxu0 %v544
        %v1566 = vpop.f32.mrb[0].mxu0
        %v1567 = vadd.f32 %v1342, %v1566
        %v1568 = vpop.f32.mrb[0].mxu0
        %v1569 = vpop.f32.mrb[0].mxu0
        %v1570 = vadd.f32 %v1345, %v1569
        %v1571 = vpop.f32.mrb[0].mxu0
        %1572 = vmatprep.mubr.bf16.mxu0 0
        %1573 = vmatmul.mubr.bf16.gmra.mrb[0].mxu0 %v1408
        %v1574 = vpop.f32.mrb[0].mxu0
        %v1575 = vadd.f32 %v1350, %v1574
        %v1576 = vpop.f32.mrb[0].mxu0
        %v1577 = vpop.f32.mrb[0].mxu0
        %v1578 = vadd.f32 %v1353, %v1577
        %v1579 = vpop.f32.mrb[0].mxu0
        %1580 = vmatprep.mubr.bf16.mxu0 0
        %1581 = vmatmul.mubr.bf16.gmra.mrb[0].mxu0 %v547
        %v1582 = vpop.f32.mrb[0].mxu0
        %v1583 = vadd.f32 %v1358, %v1582
        %v1584 = vpop.f32.mrb[0].mxu0
        %v1585 = vpop.f32.mrb[0].mxu0
        %v1586 = vadd.f32 %v1361, %v1585
        %v1587 = vpop.f32.mrb[0].mxu0
        %1588 = vmatprep.mubr.bf16.mxu0 0
        %1589 = vmatmul.mubr.bf16.gmra.mrb[0].mxu0 %v1409
        %v1590 = vpop.f32.mrb[0].mxu0
        %v1591 = vadd.f32 %v1366, %v1590
        %v1592 = vpop.f32.mrb[0].mxu0
        %v1593 = vpop.f32.mrb[0].mxu0
        %v1594 = vadd.f32 %v1369, %v1593
        %v1595 = vpop.f32.mrb[0].mxu0
        %1596 = vmatprep.mubr.bf16.mxu0 0
        %1597 = vmatmul.mubr.bf16.gmra.mrb[0].mxu0 %v550
        %v1598 = vpop.f32.mrb[0].mxu0
        %v1599 = vadd.f32 %v1374, %v1598
        %v1600 = vpop.f32.mrb[0].mxu0
        %v1601 = vpop.f32.mrb[0].mxu0
        %v1602 = vadd.f32 %v1377, %v1601
        %v1603 = vpop.f32.mrb[0].mxu0
        %1604 = vmatprep.mubr.bf16.mxu0 0
        %1605 = vmatmul.mubr.bf16.gmra.mrb[0].mxu0 %v1410
        %v1606 = vpop.f32.mrb[0].mxu0
        %v1607 = vadd.f32 %v1382, %v1606
        %v1608 = vpop.f32.mrb[0].mxu0
        %v1609 = vpop.f32.mrb[0].mxu0
        %v1610 = vadd.f32 %v1385, %v1609
        %v1611 = vpop.f32.mrb[0].mxu0
        %1612 = vmatprep.mubr.bf16.mxu0 0
        %1613 = vmatmul.mubr.bf16.gmra.mrb[0].mxu0 %v553
        %v1614 = vpop.f32.mrb[0].mxu0
        %v1615 = vadd.f32 %v1390, %v1614
        %v1616 = vpop.f32.mrb[0].mxu0
        %v1617 = vpop.f32.mrb[0].mxu0
        %v1618 = vadd.f32 %v1393, %v1617
        %v1619 = vpop.f32.mrb[0].mxu0
        %1620 = vmatprep.mubr.bf16.mxu0 0
        %1621 = vmatmul.mubr.bf16.gmra.mrb[0].mxu0 %v1411
        %v1622 = vpop.f32.mrb[0].mxu0
        %v1623 = vadd.f32 %v1398, %v1622
        %v1624 = vpop.f32.mrb[0].mxu0
        %v1625 = vpop.f32.mrb[0].mxu0
        %v1626 = vadd.f32 %v1401, %v1625
        %v1627 = vpop.f32.mrb[0].mxu0
        %1628 = vdwg.mxu0
        %v1629 = vadd.f32 %v701, 0.0
        %v1630 = vadd.f32 %v705, 0.0
        %v1631 = vadd.f32 %v715, 0.0
        %v1632 = vadd.f32 %v721, 0.0
        %v1633 = vadd.f32 %v731, 0.0
        %v1634 = vadd.f32 %v735, 0.0
        %v1635 = vadd.f32 %v745, 0.0
        %v1636 = vadd.f32 %v751, 0.0
        %v1637 = vadd.f32 %v761, 0.0
        %v1638 = vadd.f32 %v765, 0.0
        %v1639 = vadd.f32 %v775, 0.0
        %v1640 = vadd.f32 %v781, 0.0
        %v1641 = vadd.f32 %v791, 0.0
        %v1642 = vadd.f32 %v795, 0.0
        %v1643 = vadd.f32 %v805, 0.0
        %v1644 = vadd.f32 %v811, 0.0
        %v1645 = vadd.f32 %v821, 0.0
        %v1646 = vadd.f32 %v825, 0.0
        %v1647 = vadd.f32 %v835, 0.0
        %v1648 = vadd.f32 %v841, 0.0
        %v1649 = vadd.f32 %v851, 0.0
        %v1650 = vadd.f32 %v855, 0.0
        %v1651 = vadd.f32 %v865, 0.0
        %v1652 = vadd.f32 %v871, 0.0
        %v1653 = vadd.f32 %v881, 0.0
        %v1654 = vadd.f32 %v885, 0.0
        %v1655 = vadd.f32 %v895, 0.0
        %v1656 = vadd.f32 %v901, 0.0
        %v1657 = vadd.f32 %v911, 0.0
        %v1658 = vadd.f32 %v915, 0.0
        %v1659 = vadd.f32 %v925, 0.0
        %v1660 = vadd.f32 %v931, 0.0
        %vm1661 = vsmask.f32 3328
        %vm1662 = vsmask.f32 7440
        %vm1663 = vmor %vm1661, %vm1662
        %v1665 = vshrl.u32 %v342, 16
        %v1667 = vrot.slane %v1665, 4
        %v1668 = vshll.u32 %v342, 16
        %v1670 = vrot.slane %v1668, 5
        %v1671 = vor.u32 %v1667, %v1670
        %v1672 = vrot.slane %v1671, 4
        %v1674 = vshll.u32 %v343, 16
        %v1676 = vrot.slane %v1674, 5
        %v1677 = vsel %vm1663, %v1672, %v1676
        %v1678 = vshrl.u32 %v343, 16
        %v1680 = vrot.slane %v1678, 4
        %v1681 = vor.u32 %v1680, %v1676
        %v1682 = vrot.slane %v1681, 4
        %v1684 = vshll.u32 %v344, 16
        %v1686 = vrot.slane %v1684, 5
        %v1687 = vsel %vm1663, %v1682, %v1686
        %v1689 = vshrl.u32 %v345, 16
        %v1691 = vrot.slane %v1689, 4
        %v1692 = vshll.u32 %v345, 16
        %v1694 = vrot.slane %v1692, 5
        %v1695 = vor.u32 %v1691, %v1694
        %v1696 = vrot.slane %v1695, 4
        %v1698 = vshll.u32 %v346, 16
        %v1700 = vrot.slane %v1698, 5
        %v1701 = vsel %vm1663, %v1696, %v1700
        %v1702 = vshrl.u32 %v346, 16
        %v1704 = vrot.slane %v1702, 4
        %v1705 = vor.u32 %v1704, %v1700
        %v1706 = vrot.slane %v1705, 4
        %v1708 = vshll.u32 %v347, 16
        %v1710 = vrot.slane %v1708, 5
        %v1711 = vsel %vm1663, %v1706, %v1710
        %v1713 = vshrl.u32 %v348, 16
        %v1715 = vrot.slane %v1713, 4
        %v1716 = vshll.u32 %v348, 16
        %v1718 = vrot.slane %v1716, 5
        %v1719 = vor.u32 %v1715, %v1718
        %v1720 = vrot.slane %v1719, 4
        %v1722 = vshll.u32 %v349, 16
        %v1724 = vrot.slane %v1722, 5
        %v1725 = vsel %vm1663, %v1720, %v1724
        %v1726 = vshrl.u32 %v349, 16
        %v1728 = vrot.slane %v1726, 4
        %v1729 = vor.u32 %v1728, %v1724
        %v1730 = vrot.slane %v1729, 4
        %v1732 = vshll.u32 %v350, 16
        %v1734 = vrot.slane %v1732, 5
        %v1735 = vsel %vm1663, %v1730, %v1734
        %v1737 = vshrl.u32 %v351, 16
        %v1739 = vrot.slane %v1737, 4
        %v1740 = vshll.u32 %v351, 16
        %v1742 = vrot.slane %v1740, 5
        %v1743 = vor.u32 %v1739, %v1742
        %v1744 = vrot.slane %v1743, 4
        %v1746 = vshll.u32 %v352, 16
        %v1748 = vrot.slane %v1746, 5
        %v1749 = vsel %vm1663, %v1744, %v1748
        %v1750 = vshrl.u32 %v352, 16
        %v1752 = vrot.slane %v1750, 4
        %v1753 = vor.u32 %v1752, %v1748
        %v1754 = vrot.slane %v1753, 4
        %v1756 = vshll.u32 %v353, 16
        %v1758 = vrot.slane %v1756, 5
        %v1759 = vsel %vm1663, %v1754, %v1758
        %v1761 = vshrl.u32 %v354, 16
        %v1763 = vrot.slane %v1761, 4
        %v1764 = vshll.u32 %v354, 16
        %v1766 = vrot.slane %v1764, 5
        %v1767 = vor.u32 %v1763, %v1766
        %v1768 = vrot.slane %v1767, 4
        %v1770 = vshll.u32 %v355, 16
        %v1772 = vrot.slane %v1770, 5
        %v1773 = vsel %vm1663, %v1768, %v1772
        %v1774 = vshrl.u32 %v355, 16
        %v1776 = vrot.slane %v1774, 4
        %v1777 = vor.u32 %v1776, %v1772
        %v1778 = vrot.slane %v1777, 4
        %v1780 = vshll.u32 %v356, 16
        %v1782 = vrot.slane %v1780, 5
        %v1783 = vsel %vm1663, %v1778, %v1782
        %v1785 = vshrl.u32 %v357, 16
        %v1787 = vrot.slane %v1785, 4
        %v1788 = vshll.u32 %v357, 16
        %v1790 = vrot.slane %v1788, 5
        %v1791 = vor.u32 %v1787, %v1790
        %v1792 = vrot.slane %v1791, 4
        %v1794 = vshll.u32 %v358, 16
        %v1796 = vrot.slane %v1794, 5
        %v1797 = vsel %vm1663, %v1792, %v1796
        %v1798 = vshrl.u32 %v358, 16
        %v1800 = vrot.slane %v1798, 4
        %v1801 = vor.u32 %v1800, %v1796
        %v1802 = vrot.slane %v1801, 4
        %v1804 = vshll.u32 %v359, 16
        %v1806 = vrot.slane %v1804, 5
        %v1807 = vsel %vm1663, %v1802, %v1806
        %v1809 = vshrl.u32 %v360, 16
        %v1811 = vrot.slane %v1809, 4
        %v1812 = vshll.u32 %v360, 16
        %v1814 = vrot.slane %v1812, 5
        %v1815 = vor.u32 %v1811, %v1814
        %v1816 = vrot.slane %v1815, 4
        %v1818 = vshll.u32 %v361, 16
        %v1820 = vrot.slane %v1818, 5
        %v1821 = vsel %vm1663, %v1816, %v1820
        %v1822 = vshrl.u32 %v361, 16
        %v1824 = vrot.slane %v1822, 4
        %v1825 = vor.u32 %v1824, %v1820
        %v1826 = vrot.slane %v1825, 4
        %v1828 = vshll.u32 %v362, 16
        %v1830 = vrot.slane %v1828, 5
        %v1831 = vsel %vm1663, %v1826, %v1830
        %v1833 = vshrl.u32 %v363, 16
        %v1835 = vrot.slane %v1833, 4
        %v1836 = vshll.u32 %v363, 16
        %v1838 = vrot.slane %v1836, 5
        %v1839 = vor.u32 %v1835, %v1838
        %v1840 = vrot.slane %v1839, 4
        %v1842 = vshll.u32 %v364, 16
        %v1844 = vrot.slane %v1842, 5
        %v1845 = vsel %vm1663, %v1840, %v1844
        %v1846 = vshrl.u32 %v364, 16
        %v1848 = vrot.slane %v1846, 4
        %v1849 = vor.u32 %v1848, %v1844
        %v1850 = vrot.slane %v1849, 4
        %v1852 = vshll.u32 %v365, 16
        %v1854 = vrot.slane %v1852, 5
        %v1855 = vsel %vm1663, %v1850, %v1854
        %v1857 = vshrl.u32 %v366, 16
        %v1859 = vrot.slane %v1857, 4
        %v1860 = vshll.u32 %v366, 16
        %v1862 = vrot.slane %v1860, 5
        %v1863 = vor.u32 %v1859, %v1862
        %v1864 = vrot.slane %v1863, 4
        %v1866 = vshll.u32 %v367, 16
        %v1868 = vrot.slane %v1866, 5
        %v1869 = vsel %vm1663, %v1864, %v1868
        %v1870 = vshrl.u32 %v367, 16
        %v1872 = vrot.slane %v1870, 4
        %v1873 = vor.u32 %v1872, %v1868
        %v1874 = vrot.slane %v1873, 4
        %v1876 = vshll.u32 %v368, 16
        %v1878 = vrot.slane %v1876, 5
        %v1879 = vsel %vm1663, %v1874, %v1878
        %v1881 = vshrl.u32 %v369, 16
        %v1883 = vrot.slane %v1881, 4
        %v1884 = vshll.u32 %v369, 16
        %v1886 = vrot.slane %v1884, 5
        %v1887 = vor.u32 %v1883, %v1886
        %v1888 = vrot.slane %v1887, 4
        %v1890 = vshll.u32 %v370, 16
        %v1892 = vrot.slane %v1890, 5
        %v1893 = vsel %vm1663, %v1888, %v1892
        %v1894 = vshrl.u32 %v370, 16
        %v1896 = vrot.slane %v1894, 4
        %v1897 = vor.u32 %v1896, %v1892
        %v1898 = vrot.slane %v1897, 4
        %v1900 = vshll.u32 %v371, 16
        %v1902 = vrot.slane %v1900, 5
        %v1903 = vsel %vm1663, %v1898, %v1902
        %v1905 = vshrl.u32 %v372, 16
        %v1907 = vrot.slane %v1905, 4
        %v1908 = vshll.u32 %v372, 16
        %v1910 = vrot.slane %v1908, 5
        %v1911 = vor.u32 %v1907, %v1910
        %v1912 = vrot.slane %v1911, 4
        %v1914 = vshll.u32 %v373, 16
        %v1916 = vrot.slane %v1914, 5
        %v1917 = vsel %vm1663, %v1912, %v1916
        %v1918 = vshrl.u32 %v373, 16
        %v1920 = vrot.slane %v1918, 4
        %v1921 = vor.u32 %v1920, %v1916
        %v1922 = vrot.slane %v1921, 4
        %v1924 = vshll.u32 %v374, 16
        %v1926 = vrot.slane %v1924, 5
        %v1927 = vsel %vm1663, %v1922, %v1926
        %v1929 = vshrl.u32 %v375, 16
        %v1931 = vrot.slane %v1929, 4
        %v1932 = vshll.u32 %v375, 16
        %v1934 = vrot.slane %v1932, 5
        %v1935 = vor.u32 %v1931, %v1934
        %v1936 = vrot.slane %v1935, 4
        %v1938 = vshll.u32 %v376, 16
        %v1940 = vrot.slane %v1938, 5
        %v1941 = vsel %vm1663, %v1936, %v1940
        %v1942 = vshrl.u32 %v376, 16
        %v1944 = vrot.slane %v1942, 4
        %v1945 = vor.u32 %v1944, %v1940
        %v1946 = vrot.slane %v1945, 4
        %v1948 = vshll.u32 %v377, 16
        %v1950 = vrot.slane %v1948, 5
        %v1951 = vsel %vm1663, %v1946, %v1950
        %v1953 = vshrl.u32 %v378, 16
        %v1955 = vrot.slane %v1953, 4
        %v1956 = vshll.u32 %v378, 16
        %v1958 = vrot.slane %v1956, 5
        %v1959 = vor.u32 %v1955, %v1958
        %v1960 = vrot.slane %v1959, 4
        %v1962 = vshll.u32 %v379, 16
        %v1964 = vrot.slane %v1962, 5
        %v1965 = vsel %vm1663, %v1960, %v1964
        %v1966 = vshrl.u32 %v379, 16
        %v1968 = vrot.slane %v1966, 4
        %v1969 = vor.u32 %v1968, %v1964
        %v1970 = vrot.slane %v1969, 4
        %v1972 = vshll.u32 %v380, 16
        %v1974 = vrot.slane %v1972, 5
        %v1975 = vsel %vm1663, %v1970, %v1974
        %v1977 = vshrl.u32 %v381, 16
        %v1979 = vrot.slane %v1977, 4
        %v1980 = vshll.u32 %v381, 16
        %v1982 = vrot.slane %v1980, 5
        %v1983 = vor.u32 %v1979, %v1982
        %v1984 = vrot.slane %v1983, 4
        %v1986 = vshll.u32 %v382, 16
        %v1988 = vrot.slane %v1986, 5
        %v1989 = vsel %vm1663, %v1984, %v1988
        %v1990 = vshrl.u32 %v382, 16
        %v1992 = vrot.slane %v1990, 4
        %v1993 = vor.u32 %v1992, %v1988
        %v1994 = vrot.slane %v1993, 4
        %v1996 = vshll.u32 %v383, 16
        %v1998 = vrot.slane %v1996, 5
        %v1999 = vsel %vm1663, %v1994, %v1998
        %v2001 = vshrl.u32 %v384, 16
        %v2003 = vrot.slane %v2001, 4
        %v2004 = vshll.u32 %v384, 16
        %v2006 = vrot.slane %v2004, 5
        %v2007 = vor.u32 %v2003, %v2006
        %v2008 = vrot.slane %v2007, 4
        %v2010 = vshll.u32 %v385, 16
        %v2012 = vrot.slane %v2010, 5
        %v2013 = vsel %vm1663, %v2008, %v2012
        %v2014 = vshrl.u32 %v385, 16
        %v2016 = vrot.slane %v2014, 4
        %v2017 = vor.u32 %v2016, %v2012
        %v2018 = vrot.slane %v2017, 4
        %v2020 = vshll.u32 %v386, 16
        %v2022 = vrot.slane %v2020, 5
        %v2023 = vsel %vm1663, %v2018, %v2022
        %v2025 = vshrl.u32 %v387, 16
        %v2027 = vrot.slane %v2025, 4
        %v2028 = vshll.u32 %v387, 16
        %v2030 = vrot.slane %v2028, 5
        %v2031 = vor.u32 %v2027, %v2030
        %v2032 = vrot.slane %v2031, 4
        %v2034 = vshll.u32 %v388, 16
        %v2036 = vrot.slane %v2034, 5
        %v2037 = vsel %vm1663, %v2032, %v2036
        %v2038 = vshrl.u32 %v388, 16
        %v2040 = vrot.slane %v2038, 4
        %v2041 = vor.u32 %v2040, %v2036
        %v2042 = vrot.slane %v2041, 4
        %v2044 = vshll.u32 %v389, 16
        %v2046 = vrot.slane %v2044, 5
        %v2047 = vsel %vm1663, %v2042, %v2046
        %s2048 = scalar_lea.vmem [#allocation7], 64
        %v2049 = vld [vmem:[%s2048] sm:$0xf]
        %v2050 = vld [vmem:[%s2048 + $0x4] sm:$0xf]
        %v2051 = vld [vmem:[%s2048 + $0x8] sm:$0xf]
        %v2052 = vld [vmem:[%s2048 + $0xc] sm:$0xf]
        %v2053 = vld [vmem:[%s2048 + $0x10] sm:$0xf]
        %v2054 = vld [vmem:[%s2048 + $0x14] sm:$0xf]
        %v2055 = vld [vmem:[%s2048 + $0x18] sm:$0xf]
        %v2056 = vld [vmem:[%s2048 + $0x1c] sm:$0xf]
        %v2057 = vld [vmem:[%s2048 + $0x20] sm:$0xf]
        %v2058 = vld [vmem:[%s2048 + $0x24] sm:$0xf]
        %v2059 = vld [vmem:[%s2048 + $0x28] sm:$0xf]
        %v2060 = vld [vmem:[%s2048 + $0x2c] sm:$0xf]
        %v2061 = vld [vmem:[%s2048 + $0x30] sm:$0xf]
        %v2062 = vld [vmem:[%s2048 + $0x34] sm:$0xf]
        %v2063 = vld [vmem:[%s2048 + $0x38] sm:$0xf]
        %v2064 = vld [vmem:[%s2048 + $0x3c] sm:$0xf]
        %v2065 = vunpack.c.l.b16 %v1677
        %v2066 = vunpack.c.l.b16 %v1687
        %v2067 = vunpack.c.l.b16 %v1701
        %v2068 = vunpack.c.l.b16 %v1711
        %v2069 = vunpack.c.l.b16 %v1725
        %v2070 = vunpack.c.l.b16 %v1735
        %v2071 = vunpack.c.l.b16 %v1749
        %v2072 = vunpack.c.l.b16 %v1759
        %v2073 = vunpack.c.l.b16 %v1773
        %v2074 = vunpack.c.l.b16 %v1783
        %v2075 = vunpack.c.l.b16 %v1797
        %v2076 = vunpack.c.l.b16 %v1807
        %v2077 = vunpack.c.l.b16 %v1821
        %v2078 = vunpack.c.l.b16 %v1831
        %v2079 = vunpack.c.l.b16 %v1845
        %v2080 = vunpack.c.l.b16 %v1855
        %v2081 = vunpack.c.l.b16 %v1869
        %v2082 = vunpack.c.l.b16 %v1879
        %v2083 = vunpack.c.l.b16 %v1893
        %v2084 = vunpack.c.l.b16 %v1903
        %v2085 = vunpack.c.l.b16 %v1917
        %v2086 = vunpack.c.l.b16 %v1927
        %v2087 = vunpack.c.l.b16 %v1941
        %v2088 = vunpack.c.l.b16 %v1951
        %v2089 = vunpack.c.l.b16 %v1965
        %v2090 = vunpack.c.l.b16 %v1975
        %v2091 = vunpack.c.l.b16 %v1989
        %v2092 = vunpack.c.l.b16 %v1999
        %v2093 = vunpack.c.l.b16 %v2013
        %v2094 = vunpack.c.l.b16 %v2023
        %v2095 = vunpack.c.l.b16 %v2037
        %v2096 = vunpack.c.l.b16 %v2047
        %v2097 = vpack.c.b16 %v2066, %v2065
        %v2098 = vpack.c.b16 %v2068, %v2067
        %v2099 = vpack.c.b16 %v2070, %v2069
        %v2100 = vpack.c.b16 %v2072, %v2071
        %v2101 = vpack.c.b16 %v2074, %v2073
        %v2102 = vpack.c.b16 %v2076, %v2075
        %v2103 = vpack.c.b16 %v2078, %v2077
        %v2104 = vpack.c.b16 %v2080, %v2079
        %v2105 = vpack.c.b16 %v2082, %v2081
        %v2106 = vpack.c.b16 %v2084, %v2083
        %v2107 = vpack.c.b16 %v2086, %v2085
        %v2108 = vpack.c.b16 %v2088, %v2087
        %v2109 = vpack.c.b16 %v2090, %v2089
        %v2110 = vpack.c.b16 %v2092, %v2091
        %v2111 = vpack.c.b16 %v2094, %v2093
        %v2112 = vpack.c.b16 %v2096, %v2095
        %v2145 = vunpack.c.l.b16 %v2049
        %v2146 = vunpack.c.l.b16 %v2050
        %v2147 = vunpack.c.l.b16 %v2051
        %v2148 = vunpack.c.l.b16 %v2052
        %v2149 = vunpack.c.l.b16 %v2053
        %v2150 = vunpack.c.l.b16 %v2054
        %v2151 = vunpack.c.l.b16 %v2055
        %v2152 = vunpack.c.l.b16 %v2056
        %v2153 = vunpack.c.l.b16 %v2057
        %v2154 = vunpack.c.l.b16 %v2058
        %v2155 = vunpack.c.l.b16 %v2059
        %v2156 = vunpack.c.l.b16 %v2060
        %v2157 = vunpack.c.l.b16 %v2061
        %v2158 = vunpack.c.l.b16 %v2062
        %v2159 = vunpack.c.l.b16 %v2063
        %v2160 = vunpack.c.l.b16 %v2064
        %v2161 = vpack.c.b16 %v2146, %v2145
        %v2162 = vpack.c.b16 %v2148, %v2147
        %v2163 = vpack.c.b16 %v2150, %v2149
        %v2164 = vpack.c.b16 %v2152, %v2151
        %v2165 = vpack.c.b16 %v2154, %v2153
        %v2166 = vpack.c.b16 %v2156, %v2155
        %v2167 = vpack.c.b16 %v2158, %v2157
        %v2168 = vpack.c.b16 %v2160, %v2159
        %2177 = vmatprep.subr.bf16.mxu0 0
        %2178 = vmatpush1.bf16.msra.mxu0 %v2161
        %2179 = vmatprep.subr.bf16.mxu0 0
        %2180 = vmatpush1.bf16.msra.mxu0 %v2162
        %2181 = vmatprep.subr.bf16.mxu0 0
        %2182 = vmatpush1.bf16.msra.mxu0 %v2163
        %2183 = vmatprep.subr.bf16.mxu0 0
        %2184 = vmatpush1.bf16.msra.mxu0 %v2164
        %2185 = vmatprep.subr.bf16.mxu0 0
        %2186 = vmatpush1.bf16.msra.mxu0 %v2165
        %2187 = vmatprep.subr.bf16.mxu0 0
        %2188 = vmatpush1.bf16.msra.mxu0 %v2166
        %2189 = vmatprep.subr.bf16.mxu0 0
        %2190 = vmatpush1.bf16.msra.mxu0 %v2167
        %2191 = vmatprep.subr.bf16.mxu0 0
        %2192 = vmatpush1.bf16.msra.mxu0 %v2168
        %2193 = vmatprep.subr.bf16.mxu0 0
        %2194 = vmatpush1.bf16.msra.mxu0 0
        %2195 = vmatprep.subr.bf16.mxu0 0
        %2196 = vmatpush1.bf16.msra.mxu0 0
        %2197 = vmatprep.subr.bf16.mxu0 0
        %2198 = vmatpush1.bf16.msra.mxu0 0
        %2199 = vmatprep.subr.bf16.mxu0 0
        %2200 = vmatpush1.bf16.msra.mxu0 0
        %2201 = vmatprep.subr.bf16.mxu0 0
        %2202 = vmatpush1.bf16.msra.mxu0 0
        %2203 = vmatprep.subr.bf16.mxu0 0
        %2204 = vmatpush1.bf16.msra.mxu0 0
        %2205 = vmatprep.subr.bf16.mxu0 0
        %2206 = vmatpush1.bf16.msra.mxu0 0
        %2207 = vmatprep.subr.bf16.mxu0 0
        %2208 = vmatpush1.bf16.msra.mxu0 0
        %2209 = vmatprep.mubr.bf16.mxu0 0
        %2210 = vmatmul.mubr.bf16.gmra.mrb[0].mxu0 %v2097
        %v2211 = vpop.f32.mrb[0].mxu0
        %v2212 = vadd.f32 0.0, %v2211
        %v2213 = vpop.f32.mrb[0].mxu0
        %v2214 = vpop.f32.mrb[0].mxu0
        %v2215 = vadd.f32 0.0, %v2214
        %v2216 = vpop.f32.mrb[0].mxu0
        %2217 = vmatprep.mubr.bf16.mxu0 0
        %2218 = vmatmul.mubr.bf16.gmra.mrb[0].mxu0 %v2098
        %v2219 = vpop.f32.mrb[0].mxu0
        %v2220 = vadd.f32 0.0, %v2219
        %v2221 = vpop.f32.mrb[0].mxu0
        %v2222 = vpop.f32.mrb[0].mxu0
        %v2223 = vadd.f32 0.0, %v2222
        %v2224 = vpop.f32.mrb[0].mxu0
        %2225 = vmatprep.mubr.bf16.mxu0 0
        %2226 = vmatmul.mubr.bf16.gmra.mrb[0].mxu0 %v2099
        %v2227 = vpop.f32.mrb[0].mxu0
        %v2228 = vadd.f32 0.0, %v2227
        %v2229 = vpop.f32.mrb[0].mxu0
        %v2230 = vpop.f32.mrb[0].mxu0
        %v2231 = vadd.f32 0.0, %v2230
        %v2232 = vpop.f32.mrb[0].mxu0
        %2233 = vmatprep.mubr.bf16.mxu0 0
        %2234 = vmatmul.mubr.bf16.gmra.mrb[0].mxu0 %v2100
        %v2235 = vpop.f32.mrb[0].mxu0
        %v2236 = vadd.f32 0.0, %v2235
        %v2237 = vpop.f32.mrb[0].mxu0
        %v2238 = vpop.f32.mrb[0].mxu0
        %v2239 = vadd.f32 0.0, %v2238
        %v2240 = vpop.f32.mrb[0].mxu0
        %2241 = vmatprep.mubr.bf16.mxu0 0
        %2242 = vmatmul.mubr.bf16.gmra.mrb[0].mxu0 %v2101
        %v2243 = vpop.f32.mrb[0].mxu0
        %v2244 = vadd.f32 0.0, %v2243
        %v2245 = vpop.f32.mrb[0].mxu0
        %v2246 = vpop.f32.mrb[0].mxu0
        %v2247 = vadd.f32 0.0, %v2246
        %v2248 = vpop.f32.mrb[0].mxu0
        %2249 = vmatprep.mubr.bf16.mxu0 0
        %2250 = vmatmul.mubr.bf16.gmra.mrb[0].mxu0 %v2102
        %v2251 = vpop.f32.mrb[0].mxu0
        %v2252 = vadd.f32 0.0, %v2251
        %v2253 = vpop.f32.mrb[0].mxu0
        %v2254 = vpop.f32.mrb[0].mxu0
        %v2255 = vadd.f32 0.0, %v2254
        %v2256 = vpop.f32.mrb[0].mxu0
        %2257 = vmatprep.mubr.bf16.mxu0 0
        %2258 = vmatmul.mubr.bf16.gmra.mrb[0].mxu0 %v2103
        %v2259 = vpop.f32.mrb[0].mxu0
        %v2260 = vadd.f32 0.0, %v2259
        %v2261 = vpop.f32.mrb[0].mxu0
        %v2262 = vpop.f32.mrb[0].mxu0
        %v2263 = vadd.f32 0.0, %v2262
        %v2264 = vpop.f32.mrb[0].mxu0
        %2265 = vmatprep.mubr.bf16.mxu0 0
        %2266 = vmatmul.mubr.bf16.gmra.mrb[0].mxu0 %v2104
        %v2267 = vpop.f32.mrb[0].mxu0
        %v2268 = vadd.f32 0.0, %v2267
        %v2269 = vpop.f32.mrb[0].mxu0
        %v2270 = vpop.f32.mrb[0].mxu0
        %v2271 = vadd.f32 0.0, %v2270
        %v2272 = vpop.f32.mrb[0].mxu0
        %2273 = vmatprep.mubr.bf16.mxu0 0
        %2274 = vmatmul.mubr.bf16.gmra.mrb[0].mxu0 %v2105
        %v2275 = vpop.f32.mrb[0].mxu0
        %v2276 = vadd.f32 0.0, %v2275
        %v2277 = vpop.f32.mrb[0].mxu0
        %v2278 = vpop.f32.mrb[0].mxu0
        %v2279 = vadd.f32 0.0, %v2278
        %v2280 = vpop.f32.mrb[0].mxu0
        %2281 = vmatprep.mubr.bf16.mxu0 0
        %2282 = vmatmul.mubr.bf16.gmra.mrb[0].mxu0 %v2106
        %v2283 = vpop.f32.mrb[0].mxu0
        %v2284 = vadd.f32 0.0, %v2283
        %v2285 = vpop.f32.mrb[0].mxu0
        %v2286 = vpop.f32.mrb[0].mxu0
        %v2287 = vadd.f32 0.0, %v2286
        %v2288 = vpop.f32.mrb[0].mxu0
        %2289 = vmatprep.mubr.bf16.mxu0 0
        %2290 = vmatmul.mubr.bf16.gmra.mrb[0].mxu0 %v2107
        %v2291 = vpop.f32.mrb[0].mxu0
        %v2292 = vadd.f32 0.0, %v2291
        %v2293 = vpop.f32.mrb[0].mxu0
        %v2294 = vpop.f32.mrb[0].mxu0
        %v2295 = vadd.f32 0.0, %v2294
        %v2296 = vpop.f32.mrb[0].mxu0
        %2297 = vmatprep.mubr.bf16.mxu0 0
        %2298 = vmatmul.mubr.bf16.gmra.mrb[0].mxu0 %v2108
        %v2299 = vpop.f32.mrb[0].mxu0
        %v2300 = vadd.f32 0.0, %v2299
        %v2301 = vpop.f32.mrb[0].mxu0
        %v2302 = vpop.f32.mrb[0].mxu0
        %v2303 = vadd.f32 0.0, %v2302
        %v2304 = vpop.f32.mrb[0].mxu0
        %2305 = vmatprep.mubr.bf16.mxu0 0
        %2306 = vmatmul.mubr.bf16.gmra.mrb[0].mxu0 %v2109
        %v2307 = vpop.f32.mrb[0].mxu0
        %v2308 = vadd.f32 0.0, %v2307
        %v2309 = vpop.f32.mrb[0].mxu0
        %v2310 = vpop.f32.mrb[0].mxu0
        %v2311 = vadd.f32 0.0, %v2310
        %v2312 = vpop.f32.mrb[0].mxu0
        %2313 = vmatprep.mubr.bf16.mxu0 0
        %2314 = vmatmul.mubr.bf16.gmra.mrb[0].mxu0 %v2110
        %v2315 = vpop.f32.mrb[0].mxu0
        %v2316 = vadd.f32 0.0, %v2315
        %v2317 = vpop.f32.mrb[0].mxu0
        %v2318 = vpop.f32.mrb[0].mxu0
        %v2319 = vadd.f32 0.0, %v2318
        %v2320 = vpop.f32.mrb[0].mxu0
        %2321 = vmatprep.mubr.bf16.mxu0 0
        %2322 = vmatmul.mubr.bf16.gmra.mrb[0].mxu0 %v2111
        %v2323 = vpop.f32.mrb[0].mxu0
        %v2324 = vadd.f32 0.0, %v2323
        %v2325 = vpop.f32.mrb[0].mxu0
        %v2326 = vpop.f32.mrb[0].mxu0
        %v2327 = vadd.f32 0.0, %v2326
        %v2328 = vpop.f32.mrb[0].mxu0
        %2329 = vmatprep.mubr.bf16.mxu0 0
        %2330 = vmatmul.mubr.bf16.gmra.mrb[0].mxu0 %v2112
        %v2331 = vpop.f32.mrb[0].mxu0
        %v2332 = vadd.f32 0.0, %v2331
        %v2333 = vpop.f32.mrb[0].mxu0
        %v2334 = vpop.f32.mrb[0].mxu0
        %v2335 = vadd.f32 0.0, %v2334
        %v2336 = vpop.f32.mrb[0].mxu0
        %2337 = vdwg.mxu0
        %v2338 = vadd.f32 %v1503, %v2212
        %v2339 = vadd.f32 %v1506, %v2215
        %v2340 = vadd.f32 %v1511, %v2220
        %v2341 = vadd.f32 %v1514, %v2223
        %v2342 = vadd.f32 %v1519, %v2228
        %v2343 = vadd.f32 %v1522, %v2231
        %v2344 = vadd.f32 %v1527, %v2236
        %v2345 = vadd.f32 %v1530, %v2239
        %v2346 = vadd.f32 %v1535, %v2244
        %v2347 = vadd.f32 %v1538, %v2247
        %v2348 = vadd.f32 %v1543, %v2252
        %v2349 = vadd.f32 %v1546, %v2255
        %v2350 = vadd.f32 %v1551, %v2260
        %v2351 = vadd.f32 %v1554, %v2263
        %v2352 = vadd.f32 %v1559, %v2268
        %v2353 = vadd.f32 %v1562, %v2271
        %v2354 = vadd.f32 %v1567, %v2276
        %v2355 = vadd.f32 %v1570, %v2279
        %v2356 = vadd.f32 %v1575, %v2284
        %v2357 = vadd.f32 %v1578, %v2287
        %v2358 = vadd.f32 %v1583, %v2292
        %v2359 = vadd.f32 %v1586, %v2295
        %v2360 = vadd.f32 %v1591, %v2300
        %v2361 = vadd.f32 %v1594, %v2303
        %v2362 = vadd.f32 %v1599, %v2308
        %v2363 = vadd.f32 %v1602, %v2311
        %v2364 = vadd.f32 %v1607, %v2316
        %v2365 = vadd.f32 %v1610, %v2319
        %v2366 = vadd.f32 %v1615, %v2324
        %v2367 = vadd.f32 %v1618, %v2327
        %v2368 = vadd.f32 %v1623, %v2332
        %v2369 = vadd.f32 %v1626, %v2335
        %v2371 = vshrl.u32 %v1077, 16
        %v2373 = vrot.slane %v2371, 4
        %v2374 = vshll.u32 %v1077, 16
        %v2376 = vrot.slane %v2374, 5
        %v2377 = vor.u32 %v2373, %v2376
        %v2378 = vrot.slane %v2377, 4
        %v2380 = vshll.u32 %v1078, 16
        %v2382 = vrot.slane %v2380, 5
        %v2383 = vsel %vm1663, %v2378, %v2382
        %v2384 = vshrl.u32 %v1078, 16
        %v2386 = vrot.slane %v2384, 4
        %v2387 = vor.u32 %v2386, %v2382
        %v2388 = vrot.slane %v2387, 4
        %v2390 = vshll.u32 %v1079, 16
        %v2392 = vrot.slane %v2390, 5
        %v2393 = vsel %vm1663, %v2388, %v2392
        %v2395 = vshrl.u32 %v1080, 16
        %v2397 = vrot.slane %v2395, 4
        %v2398 = vshll.u32 %v1080, 16
        %v2400 = vrot.slane %v2398, 5
        %v2401 = vor.u32 %v2397, %v2400
        %v2402 = vrot.slane %v2401, 4
        %v2404 = vshll.u32 %v1081, 16
        %v2406 = vrot.slane %v2404, 5
        %v2407 = vsel %vm1663, %v2402, %v2406
        %v2408 = vshrl.u32 %v1081, 16
        %v2410 = vrot.slane %v2408, 4
        %v2411 = vor.u32 %v2410, %v2406
        %v2412 = vrot.slane %v2411, 4
        %v2414 = vshll.u32 %v1082, 16
        %v2416 = vrot.slane %v2414, 5
        %v2417 = vsel %vm1663, %v2412, %v2416
        %v2419 = vshrl.u32 %v1083, 16
        %v2421 = vrot.slane %v2419, 4
        %v2422 = vshll.u32 %v1083, 16
        %v2424 = vrot.slane %v2422, 5
        %v2425 = vor.u32 %v2421, %v2424
        %v2426 = vrot.slane %v2425, 4
        %v2428 = vshll.u32 %v1084, 16
        %v2430 = vrot.slane %v2428, 5
        %v2431 = vsel %vm1663, %v2426, %v2430
        %v2432 = vshrl.u32 %v1084, 16
        %v2434 = vrot.slane %v2432, 4
        %v2435 = vor.u32 %v2434, %v2430
        %v2436 = vrot.slane %v2435, 4
        %v2438 = vshll.u32 %v1085, 16
        %v2440 = vrot.slane %v2438, 5
        %v2441 = vsel %vm1663, %v2436, %v2440
        %v2443 = vshrl.u32 %v1086, 16
        %v2445 = vrot.slane %v2443, 4
        %v2446 = vshll.u32 %v1086, 16
        %v2448 = vrot.slane %v2446, 5
        %v2449 = vor.u32 %v2445, %v2448
        %v2450 = vrot.slane %v2449, 4
        %v2452 = vshll.u32 %v1087, 16
        %v2454 = vrot.slane %v2452, 5
        %v2455 = vsel %vm1663, %v2450, %v2454
        %v2456 = vshrl.u32 %v1087, 16
        %v2458 = vrot.slane %v2456, 4
        %v2459 = vor.u32 %v2458, %v2454
        %v2460 = vrot.slane %v2459, 4
        %v2462 = vshll.u32 %v1088, 16
        %v2464 = vrot.slane %v2462, 5
        %v2465 = vsel %vm1663, %v2460, %v2464
        %v2467 = vshrl.u32 %v1089, 16
        %v2469 = vrot.slane %v2467, 4
        %v2470 = vshll.u32 %v1089, 16
        %v2472 = vrot.slane %v2470, 5
        %v2473 = vor.u32 %v2469, %v2472
        %v2474 = vrot.slane %v2473, 4
        %v2476 = vshll.u32 %v1090, 16
        %v2478 = vrot.slane %v2476, 5
        %v2479 = vsel %vm1663, %v2474, %v2478
        %v2480 = vshrl.u32 %v1090, 16
        %v2482 = vrot.slane %v2480, 4
        %v2483 = vor.u32 %v2482, %v2478
        %v2484 = vrot.slane %v2483, 4
        %v2486 = vshll.u32 %v1091, 16
        %v2488 = vrot.slane %v2486, 5
        %v2489 = vsel %vm1663, %v2484, %v2488
        %v2491 = vshrl.u32 %v1092, 16
        %v2493 = vrot.slane %v2491, 4
        %v2494 = vshll.u32 %v1092, 16
        %v2496 = vrot.slane %v2494, 5
        %v2497 = vor.u32 %v2493, %v2496
        %v2498 = vrot.slane %v2497, 4
        %v2500 = vshll.u32 %v1093, 16
        %v2502 = vrot.slane %v2500, 5
        %v2503 = vsel %vm1663, %v2498, %v2502
        %v2504 = vshrl.u32 %v1093, 16
        %v2506 = vrot.slane %v2504, 4
        %v2507 = vor.u32 %v2506, %v2502
        %v2508 = vrot.slane %v2507, 4
        %v2510 = vshll.u32 %v1094, 16
        %v2512 = vrot.slane %v2510, 5
        %v2513 = vsel %vm1663, %v2508, %v2512
        %v2515 = vshrl.u32 %v1095, 16
        %v2517 = vrot.slane %v2515, 4
        %v2518 = vshll.u32 %v1095, 16
        %v2520 = vrot.slane %v2518, 5
        %v2521 = vor.u32 %v2517, %v2520
        %v2522 = vrot.slane %v2521, 4
        %v2524 = vshll.u32 %v1096, 16
        %v2526 = vrot.slane %v2524, 5
        %v2527 = vsel %vm1663, %v2522, %v2526
        %v2528 = vshrl.u32 %v1096, 16
        %v2530 = vrot.slane %v2528, 4
        %v2531 = vor.u32 %v2530, %v2526
        %v2532 = vrot.slane %v2531, 4
        %v2534 = vshll.u32 %v1097, 16
        %v2536 = vrot.slane %v2534, 5
        %v2537 = vsel %vm1663, %v2532, %v2536
        %v2539 = vshrl.u32 %v1098, 16
        %v2541 = vrot.slane %v2539, 4
        %v2542 = vshll.u32 %v1098, 16
        %v2544 = vrot.slane %v2542, 5
        %v2545 = vor.u32 %v2541, %v2544
        %v2546 = vrot.slane %v2545, 4
        %v2548 = vshll.u32 %v1099, 16
        %v2550 = vrot.slane %v2548, 5
        %v2551 = vsel %vm1663, %v2546, %v2550
        %v2552 = vshrl.u32 %v1099, 16
        %v2554 = vrot.slane %v2552, 4
        %v2555 = vor.u32 %v2554, %v2550
        %v2556 = vrot.slane %v2555, 4
        %v2558 = vshll.u32 %v1100, 16
        %v2560 = vrot.slane %v2558, 5
        %v2561 = vsel %vm1663, %v2556, %v2560
        %v2563 = vshrl.u32 %v1101, 16
        %v2565 = vrot.slane %v2563, 4
        %v2566 = vshll.u32 %v1101, 16
        %v2568 = vrot.slane %v2566, 5
        %v2569 = vor.u32 %v2565, %v2568
        %v2570 = vrot.slane %v2569, 4
        %v2572 = vshll.u32 %v1102, 16
        %v2574 = vrot.slane %v2572, 5
        %v2575 = vsel %vm1663, %v2570, %v2574
        %v2576 = vshrl.u32 %v1102, 16
        %v2578 = vrot.slane %v2576, 4
        %v2579 = vor.u32 %v2578, %v2574
        %v2580 = vrot.slane %v2579, 4
        %v2582 = vshll.u32 %v1103, 16
        %v2584 = vrot.slane %v2582, 5
        %v2585 = vsel %vm1663, %v2580, %v2584
        %v2587 = vshrl.u32 %v1104, 16
        %v2589 = vrot.slane %v2587, 4
        %v2590 = vshll.u32 %v1104, 16
        %v2592 = vrot.slane %v2590, 5
        %v2593 = vor.u32 %v2589, %v2592
        %v2594 = vrot.slane %v2593, 4
        %v2596 = vshll.u32 %v1105, 16
        %v2598 = vrot.slane %v2596, 5
        %v2599 = vsel %vm1663, %v2594, %v2598
        %v2600 = vshrl.u32 %v1105, 16
        %v2602 = vrot.slane %v2600, 4
        %v2603 = vor.u32 %v2602, %v2598
        %v2604 = vrot.slane %v2603, 4
        %v2606 = vshll.u32 %v1106, 16
        %v2608 = vrot.slane %v2606, 5
        %v2609 = vsel %vm1663, %v2604, %v2608
        %v2611 = vshrl.u32 %v1107, 16
        %v2613 = vrot.slane %v2611, 4
        %v2614 = vshll.u32 %v1107, 16
        %v2616 = vrot.slane %v2614, 5
        %v2617 = vor.u32 %v2613, %v2616
        %v2618 = vrot.slane %v2617, 4
        %v2620 = vshll.u32 %v1108, 16
        %v2622 = vrot.slane %v2620, 5
        %v2623 = vsel %vm1663, %v2618, %v2622
        %v2624 = vshrl.u32 %v1108, 16
        %v2626 = vrot.slane %v2624, 4
        %v2627 = vor.u32 %v2626, %v2622
        %v2628 = vrot.slane %v2627, 4
        %v2630 = vshll.u32 %v1109, 16
        %v2632 = vrot.slane %v2630, 5
        %v2633 = vsel %vm1663, %v2628, %v2632
        %v2635 = vshrl.u32 %v1110, 16
        %v2637 = vrot.slane %v2635, 4
        %v2638 = vshll.u32 %v1110, 16
        %v2640 = vrot.slane %v2638, 5
        %v2641 = vor.u32 %v2637, %v2640
        %v2642 = vrot.slane %v2641, 4
        %v2644 = vshll.u32 %v1111, 16
        %v2646 = vrot.slane %v2644, 5
        %v2647 = vsel %vm1663, %v2642, %v2646
        %v2648 = vshrl.u32 %v1111, 16
        %v2650 = vrot.slane %v2648, 4
        %v2651 = vor.u32 %v2650, %v2646
        %v2652 = vrot.slane %v2651, 4
        %v2654 = vshll.u32 %v1112, 16
        %v2656 = vrot.slane %v2654, 5
        %v2657 = vsel %vm1663, %v2652, %v2656
        %v2659 = vshrl.u32 %v1113, 16
        %v2661 = vrot.slane %v2659, 4
        %v2662 = vshll.u32 %v1113, 16
        %v2664 = vrot.slane %v2662, 5
        %v2665 = vor.u32 %v2661, %v2664
        %v2666 = vrot.slane %v2665, 4
        %v2668 = vshll.u32 %v1114, 16
        %v2670 = vrot.slane %v2668, 5
        %v2671 = vsel %vm1663, %v2666, %v2670
        %v2672 = vshrl.u32 %v1114, 16
        %v2674 = vrot.slane %v2672, 4
        %v2675 = vor.u32 %v2674, %v2670
        %v2676 = vrot.slane %v2675, 4
        %v2678 = vshll.u32 %v1115, 16
        %v2680 = vrot.slane %v2678, 5
        %v2681 = vsel %vm1663, %v2676, %v2680
        %v2683 = vshrl.u32 %v1116, 16
        %v2685 = vrot.slane %v2683, 4
        %v2686 = vshll.u32 %v1116, 16
        %v2688 = vrot.slane %v2686, 5
        %v2689 = vor.u32 %v2685, %v2688
        %v2690 = vrot.slane %v2689, 4
        %v2692 = vshll.u32 %v1117, 16
        %v2694 = vrot.slane %v2692, 5
        %v2695 = vsel %vm1663, %v2690, %v2694
        %v2696 = vshrl.u32 %v1117, 16
        %v2698 = vrot.slane %v2696, 4
        %v2699 = vor.u32 %v2698, %v2694
        %v2700 = vrot.slane %v2699, 4
        %v2702 = vshll.u32 %v1118, 16
        %v2704 = vrot.slane %v2702, 5
        %v2705 = vsel %vm1663, %v2700, %v2704
        %v2707 = vshrl.u32 %v1119, 16
        %v2709 = vrot.slane %v2707, 4
        %v2710 = vshll.u32 %v1119, 16
        %v2712 = vrot.slane %v2710, 5
        %v2713 = vor.u32 %v2709, %v2712
        %v2714 = vrot.slane %v2713, 4
        %v2716 = vshll.u32 %v1120, 16
        %v2718 = vrot.slane %v2716, 5
        %v2719 = vsel %vm1663, %v2714, %v2718
        %v2720 = vshrl.u32 %v1120, 16
        %v2722 = vrot.slane %v2720, 4
        %v2723 = vor.u32 %v2722, %v2718
        %v2724 = vrot.slane %v2723, 4
        %v2726 = vshll.u32 %v1121, 16
        %v2728 = vrot.slane %v2726, 5
        %v2729 = vsel %vm1663, %v2724, %v2728
        %v2731 = vshrl.u32 %v1122, 16
        %v2733 = vrot.slane %v2731, 4
        %v2734 = vshll.u32 %v1122, 16
        %v2736 = vrot.slane %v2734, 5
        %v2737 = vor.u32 %v2733, %v2736
        %v2738 = vrot.slane %v2737, 4
        %v2740 = vshll.u32 %v1123, 16
        %v2742 = vrot.slane %v2740, 5
        %v2743 = vsel %vm1663, %v2738, %v2742
        %v2744 = vshrl.u32 %v1123, 16
        %v2746 = vrot.slane %v2744, 4
        %v2747 = vor.u32 %v2746, %v2742
        %v2748 = vrot.slane %v2747, 4
        %v2750 = vshll.u32 %v1124, 16
        %v2752 = vrot.slane %v2750, 5
        %v2753 = vsel %vm1663, %v2748, %v2752
        %s2754 = scalar_lea.vmem [#allocation8], 64
        %v2755 = vld [vmem:[%s2754] sm:$0xf]
        %v2756 = vld [vmem:[%s2754 + $0x4] sm:$0xf]
        %v2757 = vld [vmem:[%s2754 + $0x8] sm:$0xf]
        %v2758 = vld [vmem:[%s2754 + $0xc] sm:$0xf]
        %v2759 = vld [vmem:[%s2754 + $0x10] sm:$0xf]
        %v2760 = vld [vmem:[%s2754 + $0x14] sm:$0xf]
        %v2761 = vld [vmem:[%s2754 + $0x18] sm:$0xf]
        %v2762 = vld [vmem:[%s2754 + $0x1c] sm:$0xf]
        %v2763 = vld [vmem:[%s2754 + $0x20] sm:$0xf]
        %v2764 = vld [vmem:[%s2754 + $0x24] sm:$0xf]
        %v2765 = vld [vmem:[%s2754 + $0x28] sm:$0xf]
        %v2766 = vld [vmem:[%s2754 + $0x2c] sm:$0xf]
        %v2767 = vld [vmem:[%s2754 + $0x30] sm:$0xf]
        %v2768 = vld [vmem:[%s2754 + $0x34] sm:$0xf]
        %v2769 = vld [vmem:[%s2754 + $0x38] sm:$0xf]
        %v2770 = vld [vmem:[%s2754 + $0x3c] sm:$0xf]
        %v2771 = vunpack.c.l.b16 %v2383
        %v2772 = vunpack.c.l.b16 %v2393
        %v2773 = vunpack.c.l.b16 %v2407
        %v2774 = vunpack.c.l.b16 %v2417
        %v2775 = vunpack.c.l.b16 %v2431
        %v2776 = vunpack.c.l.b16 %v2441
        %v2777 = vunpack.c.l.b16 %v2455
        %v2778 = vunpack.c.l.b16 %v2465
        %v2779 = vunpack.c.l.b16 %v2479
        %v2780 = vunpack.c.l.b16 %v2489
        %v2781 = vunpack.c.l.b16 %v2503
        %v2782 = vunpack.c.l.b16 %v2513
        %v2783 = vunpack.c.l.b16 %v2527
        %v2784 = vunpack.c.l.b16 %v2537
        %v2785 = vunpack.c.l.b16 %v2551
        %v2786 = vunpack.c.l.b16 %v2561
        %v2787 = vunpack.c.l.b16 %v2575
        %v2788 = vunpack.c.l.b16 %v2585
        %v2789 = vunpack.c.l.b16 %v2599
        %v2790 = vunpack.c.l.b16 %v2609
        %v2791 = vunpack.c.l.b16 %v2623
        %v2792 = vunpack.c.l.b16 %v2633
        %v2793 = vunpack.c.l.b16 %v2647
        %v2794 = vunpack.c.l.b16 %v2657
        %v2795 = vunpack.c.l.b16 %v2671
        %v2796 = vunpack.c.l.b16 %v2681
        %v2797 = vunpack.c.l.b16 %v2695
        %v2798 = vunpack.c.l.b16 %v2705
        %v2799 = vunpack.c.l.b16 %v2719
        %v2800 = vunpack.c.l.b16 %v2729
        %v2801 = vunpack.c.l.b16 %v2743
        %v2802 = vunpack.c.l.b16 %v2753
        %v2803 = vpack.c.b16 %v2772, %v2771
        %v2804 = vpack.c.b16 %v2774, %v2773
        %v2805 = vpack.c.b16 %v2776, %v2775
        %v2806 = vpack.c.b16 %v2778, %v2777
        %v2807 = vpack.c.b16 %v2780, %v2779
        %v2808 = vpack.c.b16 %v2782, %v2781
        %v2809 = vpack.c.b16 %v2784, %v2783
        %v2810 = vpack.c.b16 %v2786, %v2785
        %v2811 = vpack.c.b16 %v2788, %v2787
        %v2812 = vpack.c.b16 %v2790, %v2789
        %v2813 = vpack.c.b16 %v2792, %v2791
        %v2814 = vpack.c.b16 %v2794, %v2793
        %v2815 = vpack.c.b16 %v2796, %v2795
        %v2816 = vpack.c.b16 %v2798, %v2797
        %v2817 = vpack.c.b16 %v2800, %v2799
        %v2818 = vpack.c.b16 %v2802, %v2801
        %v2851 = vunpack.c.l.b16 %v2755
        %v2852 = vunpack.c.l.b16 %v2756
        %v2853 = vunpack.c.l.b16 %v2757
        %v2854 = vunpack.c.l.b16 %v2758
        %v2855 = vunpack.c.l.b16 %v2759
        %v2856 = vunpack.c.l.b16 %v2760
        %v2857 = vunpack.c.l.b16 %v2761
        %v2858 = vunpack.c.l.b16 %v2762
        %v2859 = vunpack.c.l.b16 %v2763
        %v2860 = vunpack.c.l.b16 %v2764
        %v2861 = vunpack.c.l.b16 %v2765
        %v2862 = vunpack.c.l.b16 %v2766
        %v2863 = vunpack.c.l.b16 %v2767
        %v2864 = vunpack.c.l.b16 %v2768
        %v2865 = vunpack.c.l.b16 %v2769
        %v2866 = vunpack.c.l.b16 %v2770
        %v2867 = vpack.c.b16 %v2852, %v2851
        %v2868 = vpack.c.b16 %v2854, %v2853
        %v2869 = vpack.c.b16 %v2856, %v2855
        %v2870 = vpack.c.b16 %v2858, %v2857
        %v2871 = vpack.c.b16 %v2860, %v2859
        %v2872 = vpack.c.b16 %v2862, %v2861
        %v2873 = vpack.c.b16 %v2864, %v2863
        %v2874 = vpack.c.b16 %v2866, %v2865
        %2883 = vmatprep.subr.bf16.mxu0 0
        %2884 = vmatpush1.bf16.msra.mxu0 %v2867
        %2885 = vmatprep.subr.bf16.mxu0 0
        %2886 = vmatpush1.bf16.msra.mxu0 %v2868
        %2887 = vmatprep.subr.bf16.mxu0 0
        %2888 = vmatpush1.bf16.msra.mxu0 %v2869
        %2889 = vmatprep.subr.bf16.mxu0 0
        %2890 = vmatpush1.bf16.msra.mxu0 %v2870
        %2891 = vmatprep.subr.bf16.mxu0 0
        %2892 = vmatpush1.bf16.msra.mxu0 %v2871
        %2893 = vmatprep.subr.bf16.mxu0 0
        %2894 = vmatpush1.bf16.msra.mxu0 %v2872
        %2895 = vmatprep.subr.bf16.mxu0 0
        %2896 = vmatpush1.bf16.msra.mxu0 %v2873
        %2897 = vmatprep.subr.bf16.mxu0 0
        %2898 = vmatpush1.bf16.msra.mxu0 %v2874
        %2899 = vmatprep.subr.bf16.mxu0 0
        %2900 = vmatpush1.bf16.msra.mxu0 0
        %2901 = vmatprep.subr.bf16.mxu0 0
        %2902 = vmatpush1.bf16.msra.mxu0 0
        %2903 = vmatprep.subr.bf16.mxu0 0
        %2904 = vmatpush1.bf16.msra.mxu0 0
        %2905 = vmatprep.subr.bf16.mxu0 0
        %2906 = vmatpush1.bf16.msra.mxu0 0
        %2907 = vmatprep.subr.bf16.mxu0 0
        %2908 = vmatpush1.bf16.msra.mxu0 0
        %2909 = vmatprep.subr.bf16.mxu0 0
        %2910 = vmatpush1.bf16.msra.mxu0 0
        %2911 = vmatprep.subr.bf16.mxu0 0
        %2912 = vmatpush1.bf16.msra.mxu0 0
        %2913 = vmatprep.subr.bf16.mxu0 0
        %2914 = vmatpush1.bf16.msra.mxu0 0
        %2915 = vmatprep.mubr.bf16.mxu0 0
        %2916 = vmatmul.mubr.bf16.gmra.mrb[0].mxu0 %v2803
        %v2917 = vpop.f32.mrb[0].mxu0
        %v2918 = vadd.f32 0.0, %v2917
        %v2919 = vpop.f32.mrb[0].mxu0
        %v2920 = vpop.f32.mrb[0].mxu0
        %v2921 = vadd.f32 0.0, %v2920
        %v2922 = vpop.f32.mrb[0].mxu0
        %2923 = vmatprep.mubr.bf16.mxu0 0
        %2924 = vmatmul.mubr.bf16.gmra.mrb[0].mxu0 %v2804
        %v2925 = vpop.f32.mrb[0].mxu0
        %v2926 = vadd.f32 0.0, %v2925
        %v2927 = vpop.f32.mrb[0].mxu0
        %v2928 = vpop.f32.mrb[0].mxu0
        %v2929 = vadd.f32 0.0, %v2928
        %v2930 = vpop.f32.mrb[0].mxu0
        %2931 = vmatprep.mubr.bf16.mxu0 0
        %2932 = vmatmul.mubr.bf16.gmra.mrb[0].mxu0 %v2805
        %v2933 = vpop.f32.mrb[0].mxu0
        %v2934 = vadd.f32 0.0, %v2933
        %v2935 = vpop.f32.mrb[0].mxu0
        %v2936 = vpop.f32.mrb[0].mxu0
        %v2937 = vadd.f32 0.0, %v2936
        %v2938 = vpop.f32.mrb[0].mxu0
        %2939 = vmatprep.mubr.bf16.mxu0 0
        %2940 = vmatmul.mubr.bf16.gmra.mrb[0].mxu0 %v2806
        %v2941 = vpop.f32.mrb[0].mxu0
        %v2942 = vadd.f32 0.0, %v2941
        %v2943 = vpop.f32.mrb[0].mxu0
        %v2944 = vpop.f32.mrb[0].mxu0
        %v2945 = vadd.f32 0.0, %v2944
        %v2946 = vpop.f32.mrb[0].mxu0
        %2947 = vmatprep.mubr.bf16.mxu0 0
        %2948 = vmatmul.mubr.bf16.gmra.mrb[0].mxu0 %v2807
        %v2949 = vpop.f32.mrb[0].mxu0
        %v2950 = vadd.f32 0.0, %v2949
        %v2951 = vpop.f32.mrb[0].mxu0
        %v2952 = vpop.f32.mrb[0].mxu0
        %v2953 = vadd.f32 0.0, %v2952
        %v2954 = vpop.f32.mrb[0].mxu0
        %2955 = vmatprep.mubr.bf16.mxu0 0
        %2956 = vmatmul.mubr.bf16.gmra.mrb[0].mxu0 %v2808
        %v2957 = vpop.f32.mrb[0].mxu0
        %v2958 = vadd.f32 0.0, %v2957
        %v2959 = vpop.f32.mrb[0].mxu0
        %v2960 = vpop.f32.mrb[0].mxu0
        %v2961 = vadd.f32 0.0, %v2960
        %v2962 = vpop.f32.mrb[0].mxu0
        %2963 = vmatprep.mubr.bf16.mxu0 0
        %2964 = vmatmul.mubr.bf16.gmra.mrb[0].mxu0 %v2809
        %v2965 = vpop.f32.mrb[0].mxu0
        %v2966 = vadd.f32 0.0, %v2965
        %v2967 = vpop.f32.mrb[0].mxu0
        %v2968 = vpop.f32.mrb[0].mxu0
        %v2969 = vadd.f32 0.0, %v2968
        %v2970 = vpop.f32.mrb[0].mxu0
        %2971 = vmatprep.mubr.bf16.mxu0 0
        %2972 = vmatmul.mubr.bf16.gmra.mrb[0].mxu0 %v2810
        %v2973 = vpop.f32.mrb[0].mxu0
        %v2974 = vadd.f32 0.0, %v2973
        %v2975 = vpop.f32.mrb[0].mxu0
        %v2976 = vpop.f32.mrb[0].mxu0
        %v2977 = vadd.f32 0.0, %v2976
        %v2978 = vpop.f32.mrb[0].mxu0
        %2979 = vmatprep.mubr.bf16.mxu0 0
        %2980 = vmatmul.mubr.bf16.gmra.mrb[0].mxu0 %v2811
        %v2981 = vpop.f32.mrb[0].mxu0
        %v2982 = vadd.f32 0.0, %v2981
        %v2983 = vpop.f32.mrb[0].mxu0
        %v2984 = vpop.f32.mrb[0].mxu0
        %v2985 = vadd.f32 0.0, %v2984
        %v2986 = vpop.f32.mrb[0].mxu0
        %2987 = vmatprep.mubr.bf16.mxu0 0
        %2988 = vmatmul.mubr.bf16.gmra.mrb[0].mxu0 %v2812
        %v2989 = vpop.f32.mrb[0].mxu0
        %v2990 = vadd.f32 0.0, %v2989
        %v2991 = vpop.f32.mrb[0].mxu0
        %v2992 = vpop.f32.mrb[0].mxu0
        %v2993 = vadd.f32 0.0, %v2992
        %v2994 = vpop.f32.mrb[0].mxu0
        %2995 = vmatprep.mubr.bf16.mxu0 0
        %2996 = vmatmul.mubr.bf16.gmra.mrb[0].mxu0 %v2813
        %v2997 = vpop.f32.mrb[0].mxu0
        %v2998 = vadd.f32 0.0, %v2997
        %v2999 = vpop.f32.mrb[0].mxu0
        %v3000 = vpop.f32.mrb[0].mxu0
        %v3001 = vadd.f32 0.0, %v3000
        %v3002 = vpop.f32.mrb[0].mxu0
        %3003 = vmatprep.mubr.bf16.mxu0 0
        %3004 = vmatmul.mubr.bf16.gmra.mrb[0].mxu0 %v2814
        %v3005 = vpop.f32.mrb[0].mxu0
        %v3006 = vadd.f32 0.0, %v3005
        %v3007 = vpop.f32.mrb[0].mxu0
        %v3008 = vpop.f32.mrb[0].mxu0
        %v3009 = vadd.f32 0.0, %v3008
        %v3010 = vpop.f32.mrb[0].mxu0
        %3011 = vmatprep.mubr.bf16.mxu0 0
        %3012 = vmatmul.mubr.bf16.gmra.mrb[0].mxu0 %v2815
        %v3013 = vpop.f32.mrb[0].mxu0
        %v3014 = vadd.f32 0.0, %v3013
        %v3015 = vpop.f32.mrb[0].mxu0
        %v3016 = vpop.f32.mrb[0].mxu0
        %v3017 = vadd.f32 0.0, %v3016
        %v3018 = vpop.f32.mrb[0].mxu0
        %3019 = vmatprep.mubr.bf16.mxu0 0
        %3020 = vmatmul.mubr.bf16.gmra.mrb[0].mxu0 %v2816
        %v3021 = vpop.f32.mrb[0].mxu0
        %v3022 = vadd.f32 0.0, %v3021
        %v3023 = vpop.f32.mrb[0].mxu0
        %v3024 = vpop.f32.mrb[0].mxu0
        %v3025 = vadd.f32 0.0, %v3024
        %v3026 = vpop.f32.mrb[0].mxu0
        %3027 = vmatprep.mubr.bf16.mxu0 0
        %3028 = vmatmul.mubr.bf16.gmra.mrb[0].mxu0 %v2817
        %v3029 = vpop.f32.mrb[0].mxu0
        %v3030 = vadd.f32 0.0, %v3029
        %v3031 = vpop.f32.mrb[0].mxu0
        %v3032 = vpop.f32.mrb[0].mxu0
        %v3033 = vadd.f32 0.0, %v3032
        %v3034 = vpop.f32.mrb[0].mxu0
        %3035 = vmatprep.mubr.bf16.mxu0 0
        %3036 = vmatmul.mubr.bf16.gmra.mrb[0].mxu0 %v2818
        %v3037 = vpop.f32.mrb[0].mxu0
        %v3038 = vadd.f32 0.0, %v3037
        %v3039 = vpop.f32.mrb[0].mxu0
        %v3040 = vpop.f32.mrb[0].mxu0
        %v3041 = vadd.f32 0.0, %v3040
        %v3042 = vpop.f32.mrb[0].mxu0
        %3043 = vdwg.mxu0
        %v3044 = vadd.f32 %v2338, %v2918
        %v3045 = vadd.f32 %v2339, %v2921
        %v3046 = vadd.f32 %v2340, %v2926
        %v3047 = vadd.f32 %v2341, %v2929
        %v3048 = vadd.f32 %v2342, %v2934
        %v3049 = vadd.f32 %v2343, %v2937
        %v3050 = vadd.f32 %v2344, %v2942
        %v3051 = vadd.f32 %v2345, %v2945
        %v3052 = vadd.f32 %v2346, %v2950
        %v3053 = vadd.f32 %v2347, %v2953
        %v3054 = vadd.f32 %v2348, %v2958
        %v3055 = vadd.f32 %v2349, %v2961
        %v3056 = vadd.f32 %v2350, %v2966
        %v3057 = vadd.f32 %v2351, %v2969
        %v3058 = vadd.f32 %v2352, %v2974
        %v3059 = vadd.f32 %v2353, %v2977
        %v3060 = vadd.f32 %v2354, %v2982
        %v3061 = vadd.f32 %v2355, %v2985
        %v3062 = vadd.f32 %v2356, %v2990
        %v3063 = vadd.f32 %v2357, %v2993
        %v3064 = vadd.f32 %v2358, %v2998
        %v3065 = vadd.f32 %v2359, %v3001
        %v3066 = vadd.f32 %v2360, %v3006
        %v3067 = vadd.f32 %v2361, %v3009
        %v3068 = vadd.f32 %v2362, %v3014
        %v3069 = vadd.f32 %v2363, %v3017
        %v3070 = vadd.f32 %v2364, %v3022
        %v3071 = vadd.f32 %v2365, %v3025
        %v3072 = vadd.f32 %v2366, %v3030
        %v3073 = vadd.f32 %v2367, %v3033
        %v3074 = vadd.f32 %v2368, %v3038
        %v3075 = vadd.f32 %v2369, %v3041
        %vm3124 = vcmask 1046528
        %v3125 = vrot.slane %v701, 1
        %v3126 = vrot.slane %v705, 1
        %v3127 = vsel %vm3124, %v3125, %v3126
        %v3128 = vrot.slane %v711, 1
        %v3129 = vsel %vm3124, %v3126, %v3128
        %v3130 = vrot.slane %v715, 1
        %v3131 = vrot.slane %v721, 1
        %v3132 = vsel %vm3124, %v3130, %v3131
        %v3133 = vrot.slane %v725, 1
        %v3134 = vsel %vm3124, %v3131, %v3133
        %v3135 = vrot.slane %v731, 1
        %v3136 = vrot.slane %v735, 1
        %v3137 = vsel %vm3124, %v3135, %v3136
        %v3138 = vrot.slane %v741, 1
        %v3139 = vsel %vm3124, %v3136, %v3138
        %v3140 = vrot.slane %v745, 1
        %v3141 = vrot.slane %v751, 1
        %v3142 = vsel %vm3124, %v3140, %v3141
        %v3143 = vrot.slane %v755, 1
        %v3144 = vsel %vm3124, %v3141, %v3143
        %v3145 = vrot.slane %v761, 1
        %v3146 = vrot.slane %v765, 1
        %v3147 = vsel %vm3124, %v3145, %v3146
        %v3148 = vrot.slane %v771, 1
        %v3149 = vsel %vm3124, %v3146, %v3148
        %v3150 = vrot.slane %v775, 1
        %v3151 = vrot.slane %v781, 1
        %v3152 = vsel %vm3124, %v3150, %v3151
        %v3153 = vrot.slane %v785, 1
        %v3154 = vsel %vm3124, %v3151, %v3153
        %v3155 = vrot.slane %v791, 1
        %v3156 = vrot.slane %v795, 1
        %v3157 = vsel %vm3124, %v3155, %v3156
        %v3158 = vrot.slane %v801, 1
        %v3159 = vsel %vm3124, %v3156, %v3158
        %v3160 = vrot.slane %v805, 1
        %v3161 = vrot.slane %v811, 1
        %v3162 = vsel %vm3124, %v3160, %v3161
        %v3163 = vrot.slane %v815, 1
        %v3164 = vsel %vm3124, %v3161, %v3163
        %v3165 = vrot.slane %v821, 1
        %v3166 = vrot.slane %v825, 1
        %v3167 = vsel %vm3124, %v3165, %v3166
        %v3168 = vrot.slane %v831, 1
        %v3169 = vsel %vm3124, %v3166, %v3168
        %v3170 = vrot.slane %v835, 1
        %v3171 = vrot.slane %v841, 1
        %v3172 = vsel %vm3124, %v3170, %v3171
        %v3173 = vrot.slane %v845, 1
        %v3174 = vsel %vm3124, %v3171, %v3173
        %v3175 = vrot.slane %v851, 1
        %v3176 = vrot.slane %v855, 1
        %v3177 = vsel %vm3124, %v3175, %v3176
        %v3178 = vrot.slane %v861, 1
        %v3179 = vsel %vm3124, %v3176, %v3178
        %v3180 = vrot.slane %v865, 1
        %v3181 = vrot.slane %v871, 1
        %v3182 = vsel %vm3124, %v3180, %v3181
        %v3183 = vrot.slane %v875, 1
        %v3184 = vsel %vm3124, %v3181, %v3183
        %v3185 = vrot.slane %v881, 1
        %v3186 = vrot.slane %v885, 1
        %v3187 = vsel %vm3124, %v3185, %v3186
        %v3188 = vrot.slane %v891, 1
        %v3189 = vsel %vm3124, %v3186, %v3188
        %v3190 = vrot.slane %v895, 1
        %v3191 = vrot.slane %v901, 1
        %v3192 = vsel %vm3124, %v3190, %v3191
        %v3193 = vrot.slane %v905, 1
        %v3194 = vsel %vm3124, %v3191, %v3193
        %v3195 = vrot.slane %v911, 1
        %v3196 = vrot.slane %v915, 1
        %v3197 = vsel %vm3124, %v3195, %v3196
        %v3198 = vrot.slane %v921, 1
        %v3199 = vsel %vm3124, %v3196, %v3198
        %v3200 = vrot.slane %v925, 1
        %v3201 = vrot.slane %v931, 1
        %v3202 = vsel %vm3124, %v3200, %v3201
        %v3203 = vrot.slane %v935, 1
        %v3204 = vsel %vm3124, %v3201, %v3203
        %v3237 = vadd.f32 %v1629, %v3127
        %v3238 = vadd.f32 %v1630, %v3129
        %v3239 = vadd.f32 %v1631, %v3132
        %v3240 = vadd.f32 %v1632, %v3134
        %v3241 = vadd.f32 %v1633, %v3137
        %v3242 = vadd.f32 %v1634, %v3139
        %v3243 = vadd.f32 %v1635, %v3142
        %v3244 = vadd.f32 %v1636, %v3144
        %v3245 = vadd.f32 %v1637, %v3147
        %v3246 = vadd.f32 %v1638, %v3149
        %v3247 = vadd.f32 %v1639, %v3152
        %v3248 = vadd.f32 %v1640, %v3154
        %v3249 = vadd.f32 %v1641, %v3157
        %v3250 = vadd.f32 %v1642, %v3159
        %v3251 = vadd.f32 %v1643, %v3162
        %v3252 = vadd.f32 %v1644, %v3164
        %v3253 = vadd.f32 %v1645, %v3167
        %v3254 = vadd.f32 %v1646, %v3169
        %v3255 = vadd.f32 %v1647, %v3172
        %v3256 = vadd.f32 %v1648, %v3174
        %v3257 = vadd.f32 %v1649, %v3177
        %v3258 = vadd.f32 %v1650, %v3179
        %v3259 = vadd.f32 %v1651, %v3182
        %v3260 = vadd.f32 %v1652, %v3184
        %v3261 = vadd.f32 %v1653, %v3187
        %v3262 = vadd.f32 %v1654, %v3189
        %v3263 = vadd.f32 %v1655, %v3192
        %v3264 = vadd.f32 %v1656, %v3194
        %v3265 = vadd.f32 %v1657, %v3197
        %v3266 = vadd.f32 %v1658, %v3199
        %v3267 = vadd.f32 %v1659, %v3202
        %v3268 = vadd.f32 %v1660, %v3204
        %vm3269 = vcmask 1042432
        %vm3270 = vcmask 1046532
        %vm3271 = vmor %vm3269, %vm3270
        %v3272 = vrot.slane %v342, 5
        %v3273 = vrot.slane %v3272, 4
        %v3274 = vrot.slane %v343, 5
        %v3275 = vsel %vm3271, %v3273, %v3274
        %v3276 = vrot.slane %v3274, 4
        %v3277 = vrot.slane %v344, 5
        %v3278 = vsel %vm3271, %v3276, %v3277
        %v3279 = vrot.slane %v345, 5
        %v3280 = vrot.slane %v3279, 4
        %v3281 = vrot.slane %v346, 5
        %v3282 = vsel %vm3271, %v3280, %v3281
        %v3283 = vrot.slane %v3281, 4
        %v3284 = vrot.slane %v347, 5
        %v3285 = vsel %vm3271, %v3283, %v3284
        %v3286 = vrot.slane %v348, 5
        %v3287 = vrot.slane %v3286, 4
        %v3288 = vrot.slane %v349, 5
        %v3289 = vsel %vm3271, %v3287, %v3288
        %v3290 = vrot.slane %v3288, 4
        %v3291 = vrot.slane %v350, 5
        %v3292 = vsel %vm3271, %v3290, %v3291
        %v3293 = vrot.slane %v351, 5
        %v3294 = vrot.slane %v3293, 4
        %v3295 = vrot.slane %v352, 5
        %v3296 = vsel %vm3271, %v3294, %v3295
        %v3297 = vrot.slane %v3295, 4
        %v3298 = vrot.slane %v353, 5
        %v3299 = vsel %vm3271, %v3297, %v3298
        %v3300 = vrot.slane %v354, 5
        %v3301 = vrot.slane %v3300, 4
        %v3302 = vrot.slane %v355, 5
        %v3303 = vsel %vm3271, %v3301, %v3302
        %v3304 = vrot.slane %v3302, 4
        %v3305 = vrot.slane %v356, 5
        %v3306 = vsel %vm3271, %v3304, %v3305
        %v3307 = vrot.slane %v357, 5
        %v3308 = vrot.slane %v3307, 4
        %v3309 = vrot.slane %v358, 5
        %v3310 = vsel %vm3271, %v3308, %v3309
        %v3311 = vrot.slane %v3309, 4
        %v3312 = vrot.slane %v359, 5
        %v3313 = vsel %vm3271, %v3311, %v3312
        %v3314 = vrot.slane %v360, 5
        %v3315 = vrot.slane %v3314, 4
        %v3316 = vrot.slane %v361, 5
        %v3317 = vsel %vm3271, %v3315, %v3316
        %v3318 = vrot.slane %v3316, 4
        %v3319 = vrot.slane %v362, 5
        %v3320 = vsel %vm3271, %v3318, %v3319
        %v3321 = vrot.slane %v363, 5
        %v3322 = vrot.slane %v3321, 4
        %v3323 = vrot.slane %v364, 5
        %v3324 = vsel %vm3271, %v3322, %v3323
        %v3325 = vrot.slane %v3323, 4
        %v3326 = vrot.slane %v365, 5
        %v3327 = vsel %vm3271, %v3325, %v3326
        %v3328 = vrot.slane %v366, 5
        %v3329 = vrot.slane %v3328, 4
        %v3330 = vrot.slane %v367, 5
        %v3331 = vsel %vm3271, %v3329, %v3330
        %v3332 = vrot.slane %v3330, 4
        %v3333 = vrot.slane %v368, 5
        %v3334 = vsel %vm3271, %v3332, %v3333
        %v3335 = vrot.slane %v369, 5
        %v3336 = vrot.slane %v3335, 4
        %v3337 = vrot.slane %v370, 5
        %v3338 = vsel %vm3271, %v3336, %v3337
        %v3339 = vrot.slane %v3337, 4
        %v3340 = vrot.slane %v371, 5
        %v3341 = vsel %vm3271, %v3339, %v3340
        %v3342 = vrot.slane %v372, 5
        %v3343 = vrot.slane %v3342, 4
        %v3344 = vrot.slane %v373, 5
        %v3345 = vsel %vm3271, %v3343, %v3344
        %v3346 = vrot.slane %v3344, 4
        %v3347 = vrot.slane %v374, 5
        %v3348 = vsel %vm3271, %v3346, %v3347
        %v3349 = vrot.slane %v375, 5
        %v3350 = vrot.slane %v3349, 4
        %v3351 = vrot.slane %v376, 5
        %v3352 = vsel %vm3271, %v3350, %v3351
        %v3353 = vrot.slane %v3351, 4
        %v3354 = vrot.slane %v377, 5
        %v3355 = vsel %vm3271, %v3353, %v3354
        %v3356 = vrot.slane %v378, 5
        %v3357 = vrot.slane %v3356, 4
        %v3358 = vrot.slane %v379, 5
        %v3359 = vsel %vm3271, %v3357, %v3358
        %v3360 = vrot.slane %v3358, 4
        %v3361 = vrot.slane %v380, 5
        %v3362 = vsel %vm3271, %v3360, %v3361
        %v3363 = vrot.slane %v381, 5
        %v3364 = vrot.slane %v3363, 4
        %v3365 = vrot.slane %v382, 5
        %v3366 = vsel %vm3271, %v3364, %v3365
        %v3367 = vrot.slane %v3365, 4
        %v3368 = vrot.slane %v383, 5
        %v3369 = vsel %vm3271, %v3367, %v3368
        %v3370 = vrot.slane %v384, 5
        %v3371 = vrot.slane %v3370, 4
        %v3372 = vrot.slane %v385, 5
        %v3373 = vsel %vm3271, %v3371, %v3372
        %v3374 = vrot.slane %v3372, 4
        %v3375 = vrot.slane %v386, 5
        %v3376 = vsel %vm3271, %v3374, %v3375
        %v3377 = vrot.slane %v387, 5
        %v3378 = vrot.slane %v3377, 4
        %v3379 = vrot.slane %v388, 5
        %v3380 = vsel %vm3271, %v3378, %v3379
        %v3381 = vrot.slane %v3379, 4
        %v3382 = vrot.slane %v389, 5
        %v3383 = vsel %vm3271, %v3381, %v3382
        %s3384 = scalar_lea.vmem [#allocation7], 128
        %v3385 = vld [vmem:[%s3384] sm:$0xf]
        %v3386 = vld [vmem:[%s3384 + $0x4] sm:$0xf]
        %v3387 = vld [vmem:[%s3384 + $0x8] sm:$0xf]
        %v3388 = vld [vmem:[%s3384 + $0xc] sm:$0xf]
        %v3389 = vld [vmem:[%s3384 + $0x10] sm:$0xf]
        %v3390 = vld [vmem:[%s3384 + $0x14] sm:$0xf]
        %v3391 = vld [vmem:[%s3384 + $0x18] sm:$0xf]
        %v3392 = vld [vmem:[%s3384 + $0x1c] sm:$0xf]
        %v3393 = vld [vmem:[%s3384 + $0x20] sm:$0xf]
        %v3394 = vld [vmem:[%s3384 + $0x24] sm:$0xf]
        %v3395 = vld [vmem:[%s3384 + $0x28] sm:$0xf]
        %v3396 = vld [vmem:[%s3384 + $0x2c] sm:$0xf]
        %v3397 = vld [vmem:[%s3384 + $0x30] sm:$0xf]
        %v3398 = vld [vmem:[%s3384 + $0x34] sm:$0xf]
        %v3399 = vld [vmem:[%s3384 + $0x38] sm:$0xf]
        %v3400 = vld [vmem:[%s3384 + $0x3c] sm:$0xf]
        %v3401 = vunpack.c.l.b16 %v3275
        %v3402 = vunpack.c.l.b16 %v3278
        %v3403 = vunpack.c.l.b16 %v3282
        %v3404 = vunpack.c.l.b16 %v3285
        %v3405 = vunpack.c.l.b16 %v3289
        %v3406 = vunpack.c.l.b16 %v3292
        %v3407 = vunpack.c.l.b16 %v3296
        %v3408 = vunpack.c.l.b16 %v3299
        %v3409 = vunpack.c.l.b16 %v3303
        %v3410 = vunpack.c.l.b16 %v3306
        %v3411 = vunpack.c.l.b16 %v3310
        %v3412 = vunpack.c.l.b16 %v3313
        %v3413 = vunpack.c.l.b16 %v3317
        %v3414 = vunpack.c.l.b16 %v3320
        %v3415 = vunpack.c.l.b16 %v3324
        %v3416 = vunpack.c.l.b16 %v3327
        %v3417 = vunpack.c.l.b16 %v3331
        %v3418 = vunpack.c.l.b16 %v3334
        %v3419 = vunpack.c.l.b16 %v3338
        %v3420 = vunpack.c.l.b16 %v3341
        %v3421 = vunpack.c.l.b16 %v3345
        %v3422 = vunpack.c.l.b16 %v3348
        %v3423 = vunpack.c.l.b16 %v3352
        %v3424 = vunpack.c.l.b16 %v3355
        %v3425 = vunpack.c.l.b16 %v3359
        %v3426 = vunpack.c.l.b16 %v3362
        %v3427 = vunpack.c.l.b16 %v3366
        %v3428 = vunpack.c.l.b16 %v3369
        %v3429 = vunpack.c.l.b16 %v3373
        %v3430 = vunpack.c.l.b16 %v3376
        %v3431 = vunpack.c.l.b16 %v3380
        %v3432 = vunpack.c.l.b16 %v3383
        %v3433 = vpack.c.b16 %v3402, %v3401
        %v3434 = vpack.c.b16 %v3404, %v3403
        %v3435 = vpack.c.b16 %v3406, %v3405
        %v3436 = vpack.c.b16 %v3408, %v3407
        %v3437 = vpack.c.b16 %v3410, %v3409
        %v3438 = vpack.c.b16 %v3412, %v3411
        %v3439 = vpack.c.b16 %v3414, %v3413
        %v3440 = vpack.c.b16 %v3416, %v3415
        %v3441 = vpack.c.b16 %v3418, %v3417
        %v3442 = vpack.c.b16 %v3420, %v3419
        %v3443 = vpack.c.b16 %v3422, %v3421
        %v3444 = vpack.c.b16 %v3424, %v3423
        %v3445 = vpack.c.b16 %v3426, %v3425
        %v3446 = vpack.c.b16 %v3428, %v3427
        %v3447 = vpack.c.b16 %v3430, %v3429
        %v3448 = vpack.c.b16 %v3432, %v3431
        %v3481 = vunpack.c.l.b16 %v3385
        %v3482 = vunpack.c.l.b16 %v3386
        %v3483 = vunpack.c.l.b16 %v3387
        %v3484 = vunpack.c.l.b16 %v3388
        %v3485 = vunpack.c.l.b16 %v3389
        %v3486 = vunpack.c.l.b16 %v3390
        %v3487 = vunpack.c.l.b16 %v3391
        %v3488 = vunpack.c.l.b16 %v3392
        %v3489 = vunpack.c.l.b16 %v3393
        %v3490 = vunpack.c.l.b16 %v3394
        %v3491 = vunpack.c.l.b16 %v3395
        %v3492 = vunpack.c.l.b16 %v3396
        %v3493 = vunpack.c.l.b16 %v3397
        %v3494 = vunpack.c.l.b16 %v3398
        %v3495 = vunpack.c.l.b16 %v3399
        %v3496 = vunpack.c.l.b16 %v3400
        %v3497 = vpack.c.b16 %v3482, %v3481
        %v3498 = vpack.c.b16 %v3484, %v3483
        %v3499 = vpack.c.b16 %v3486, %v3485
        %v3500 = vpack.c.b16 %v3488, %v3487
        %v3501 = vpack.c.b16 %v3490, %v3489
        %v3502 = vpack.c.b16 %v3492, %v3491
        %v3503 = vpack.c.b16 %v3494, %v3493
        %v3504 = vpack.c.b16 %v3496, %v3495
        %3513 = vmatprep.subr.bf16.mxu0 0
        %3514 = vmatpush1.bf16.msra.mxu0 %v3497
        %3515 = vmatprep.subr.bf16.mxu0 0
        %3516 = vmatpush1.bf16.msra.mxu0 %v3498
        %3517 = vmatprep.subr.bf16.mxu0 0
        %3518 = vmatpush1.bf16.msra.mxu0 %v3499
        %3519 = vmatprep.subr.bf16.mxu0 0
        %3520 = vmatpush1.bf16.msra.mxu0 %v3500
        %3521 = vmatprep.subr.bf16.mxu0 0
        %3522 = vmatpush1.bf16.msra.mxu0 %v3501
        %3523 = vmatprep.subr.bf16.mxu0 0
        %3524 = vmatpush1.bf16.msra.mxu0 %v3502
        %3525 = vmatprep.subr.bf16.mxu0 0
        %3526 = vmatpush1.bf16.msra.mxu0 %v3503
        %3527 = vmatprep.subr.bf16.mxu0 0
        %3528 = vmatpush1.bf16.msra.mxu0 %v3504
        %3529 = vmatprep.subr.bf16.mxu0 0
        %3530 = vmatpush1.bf16.msra.mxu0 0
        %3531 = vmatprep.subr.bf16.mxu0 0
        %3532 = vmatpush1.bf16.msra.mxu0 0
        %3533 = vmatprep.subr.bf16.mxu0 0
        %3534 = vmatpush1.bf16.msra.mxu0 0
        %3535 = vmatprep.subr.bf16.mxu0 0
        %3536 = vmatpush1.bf16.msra.mxu0 0
        %3537 = vmatprep.subr.bf16.mxu0 0
        %3538 = vmatpush1.bf16.msra.mxu0 0
        %3539 = vmatprep.subr.bf16.mxu0 0
        %3540 = vmatpush1.bf16.msra.mxu0 0
        %3541 = vmatprep.subr.bf16.mxu0 0
        %3542 = vmatpush1.bf16.msra.mxu0 0
        %3543 = vmatprep.subr.bf16.mxu0 0
        %3544 = vmatpush1.bf16.msra.mxu0 0
        %3545 = vmatprep.mubr.bf16.mxu0 0
        %3546 = vmatmul.mubr.bf16.gmra.mrb[0].mxu0 %v3433
        %v3547 = vpop.f32.mrb[0].mxu0
        %v3548 = vadd.f32 0.0, %v3547
        %v3549 = vpop.f32.mrb[0].mxu0
        %v3550 = vpop.f32.mrb[0].mxu0
        %v3551 = vadd.f32 0.0, %v3550
        %v3552 = vpop.f32.mrb[0].mxu0
        %3553 = vmatprep.mubr.bf16.mxu0 0
        %3554 = vmatmul.mubr.bf16.gmra.mrb[0].mxu0 %v3434
        %v3555 = vpop.f32.mrb[0].mxu0
        %v3556 = vadd.f32 0.0, %v3555
        %v3557 = vpop.f32.mrb[0].mxu0
        %v3558 = vpop.f32.mrb[0].mxu0
        %v3559 = vadd.f32 0.0, %v3558
        %v3560 = vpop.f32.mrb[0].mxu0
        %3561 = vmatprep.mubr.bf16.mxu0 0
        %3562 = vmatmul.mubr.bf16.gmra.mrb[0].mxu0 %v3435
        %v3563 = vpop.f32.mrb[0].mxu0
        %v3564 = vadd.f32 0.0, %v3563
        %v3565 = vpop.f32.mrb[0].mxu0
        %v3566 = vpop.f32.mrb[0].mxu0
        %v3567 = vadd.f32 0.0, %v3566
        %v3568 = vpop.f32.mrb[0].mxu0
        %3569 = vmatprep.mubr.bf16.mxu0 0
        %3570 = vmatmul.mubr.bf16.gmra.mrb[0].mxu0 %v3436
        %v3571 = vpop.f32.mrb[0].mxu0
        %v3572 = vadd.f32 0.0, %v3571
        %v3573 = vpop.f32.mrb[0].mxu0
        %v3574 = vpop.f32.mrb[0].mxu0
        %v3575 = vadd.f32 0.0, %v3574
        %v3576 = vpop.f32.mrb[0].mxu0
        %3577 = vmatprep.mubr.bf16.mxu0 0
        %3578 = vmatmul.mubr.bf16.gmra.mrb[0].mxu0 %v3437
        %v3579 = vpop.f32.mrb[0].mxu0
        %v3580 = vadd.f32 0.0, %v3579
        %v3581 = vpop.f32.mrb[0].mxu0
        %v3582 = vpop.f32.mrb[0].mxu0
        %v3583 = vadd.f32 0.0, %v3582
        %v3584 = vpop.f32.mrb[0].mxu0
        %3585 = vmatprep.mubr.bf16.mxu0 0
        %3586 = vmatmul.mubr.bf16.gmra.mrb[0].mxu0 %v3438
        %v3587 = vpop.f32.mrb[0].mxu0
        %v3588 = vadd.f32 0.0, %v3587
        %v3589 = vpop.f32.mrb[0].mxu0
        %v3590 = vpop.f32.mrb[0].mxu0
        %v3591 = vadd.f32 0.0, %v3590
        %v3592 = vpop.f32.mrb[0].mxu0
        %3593 = vmatprep.mubr.bf16.mxu0 0
        %3594 = vmatmul.mubr.bf16.gmra.mrb[0].mxu0 %v3439
        %v3595 = vpop.f32.mrb[0].mxu0
        %v3596 = vadd.f32 0.0, %v3595
        %v3597 = vpop.f32.mrb[0].mxu0
        %v3598 = vpop.f32.mrb[0].mxu0
        %v3599 = vadd.f32 0.0, %v3598
        %v3600 = vpop.f32.mrb[0].mxu0
        %3601 = vmatprep.mubr.bf16.mxu0 0
        %3602 = vmatmul.mubr.bf16.gmra.mrb[0].mxu0 %v3440
        %v3603 = vpop.f32.mrb[0].mxu0
        %v3604 = vadd.f32 0.0, %v3603
        %v3605 = vpop.f32.mrb[0].mxu0
        %v3606 = vpop.f32.mrb[0].mxu0
        %v3607 = vadd.f32 0.0, %v3606
        %v3608 = vpop.f32.mrb[0].mxu0
        %3609 = vmatprep.mubr.bf16.mxu0 0
        %3610 = vmatmul.mubr.bf16.gmra.mrb[0].mxu0 %v3441
        %v3611 = vpop.f32.mrb[0].mxu0
        %v3612 = vadd.f32 0.0, %v3611
        %v3613 = vpop.f32.mrb[0].mxu0
        %v3614 = vpop.f32.mrb[0].mxu0
        %v3615 = vadd.f32 0.0, %v3614
        %v3616 = vpop.f32.mrb[0].mxu0
        %3617 = vmatprep.mubr.bf16.mxu0 0
        %3618 = vmatmul.mubr.bf16.gmra.mrb[0].mxu0 %v3442
        %v3619 = vpop.f32.mrb[0].mxu0
        %v3620 = vadd.f32 0.0, %v3619
        %v3621 = vpop.f32.mrb[0].mxu0
        %v3622 = vpop.f32.mrb[0].mxu0
        %v3623 = vadd.f32 0.0, %v3622
        %v3624 = vpop.f32.mrb[0].mxu0
        %3625 = vmatprep.mubr.bf16.mxu0 0
        %3626 = vmatmul.mubr.bf16.gmra.mrb[0].mxu0 %v3443
        %v3627 = vpop.f32.mrb[0].mxu0
        %v3628 = vadd.f32 0.0, %v3627
        %v3629 = vpop.f32.mrb[0].mxu0
        %v3630 = vpop.f32.mrb[0].mxu0
        %v3631 = vadd.f32 0.0, %v3630
        %v3632 = vpop.f32.mrb[0].mxu0
        %3633 = vmatprep.mubr.bf16.mxu0 0
        %3634 = vmatmul.mubr.bf16.gmra.mrb[0].mxu0 %v3444
        %v3635 = vpop.f32.mrb[0].mxu0
        %v3636 = vadd.f32 0.0, %v3635
        %v3637 = vpop.f32.mrb[0].mxu0
        %v3638 = vpop.f32.mrb[0].mxu0
        %v3639 = vadd.f32 0.0, %v3638
        %v3640 = vpop.f32.mrb[0].mxu0
        %3641 = vmatprep.mubr.bf16.mxu0 0
        %3642 = vmatmul.mubr.bf16.gmra.mrb[0].mxu0 %v3445
        %v3643 = vpop.f32.mrb[0].mxu0
        %v3644 = vadd.f32 0.0, %v3643
        %v3645 = vpop.f32.mrb[0].mxu0
        %v3646 = vpop.f32.mrb[0].mxu0
        %v3647 = vadd.f32 0.0, %v3646
        %v3648 = vpop.f32.mrb[0].mxu0
        %3649 = vmatprep.mubr.bf16.mxu0 0
        %3650 = vmatmul.mubr.bf16.gmra.mrb[0].mxu0 %v3446
        %v3651 = vpop.f32.mrb[0].mxu0
        %v3652 = vadd.f32 0.0, %v3651
        %v3653 = vpop.f32.mrb[0].mxu0
        %v3654 = vpop.f32.mrb[0].mxu0
        %v3655 = vadd.f32 0.0, %v3654
        %v3656 = vpop.f32.mrb[0].mxu0
        %3657 = vmatprep.mubr.bf16.mxu0 0
        %3658 = vmatmul.mubr.bf16.gmra.mrb[0].mxu0 %v3447
        %v3659 = vpop.f32.mrb[0].mxu0
        %v3660 = vadd.f32 0.0, %v3659
        %v3661 = vpop.f32.mrb[0].mxu0
        %v3662 = vpop.f32.mrb[0].mxu0
        %v3663 = vadd.f32 0.0, %v3662
        %v3664 = vpop.f32.mrb[0].mxu0
        %3665 = vmatprep.mubr.bf16.mxu0 0
        %3666 = vmatmul.mubr.bf16.gmra.mrb[0].mxu0 %v3448
        %v3667 = vpop.f32.mrb[0].mxu0
        %v3668 = vadd.f32 0.0, %v3667
        %v3669 = vpop.f32.mrb[0].mxu0
        %v3670 = vpop.f32.mrb[0].mxu0
        %v3671 = vadd.f32 0.0, %v3670
        %v3672 = vpop.f32.mrb[0].mxu0
        %3673 = vdwg.mxu0
        %v3674 = vadd.f32 %v3044, %v3548
        %v3675 = vadd.f32 %v3045, %v3551
        %v3676 = vadd.f32 %v3046, %v3556
        %v3677 = vadd.f32 %v3047, %v3559
        %v3678 = vadd.f32 %v3048, %v3564
        %v3679 = vadd.f32 %v3049, %v3567
        %v3680 = vadd.f32 %v3050, %v3572
        %v3681 = vadd.f32 %v3051, %v3575
        %v3682 = vadd.f32 %v3052, %v3580
        %v3683 = vadd.f32 %v3053, %v3583
        %v3684 = vadd.f32 %v3054, %v3588
        %v3685 = vadd.f32 %v3055, %v3591
        %v3686 = vadd.f32 %v3056, %v3596
        %v3687 = vadd.f32 %v3057, %v3599
        %v3688 = vadd.f32 %v3058, %v3604
        %v3689 = vadd.f32 %v3059, %v3607
        %v3690 = vadd.f32 %v3060, %v3612
        %v3691 = vadd.f32 %v3061, %v3615
        %v3692 = vadd.f32 %v3062, %v3620
        %v3693 = vadd.f32 %v3063, %v3623
        %v3694 = vadd.f32 %v3064, %v3628
        %v3695 = vadd.f32 %v3065, %v3631
        %v3696 = vadd.f32 %v3066, %v3636
        %v3697 = vadd.f32 %v3067, %v3639
        %v3698 = vadd.f32 %v3068, %v3644
        %v3699 = vadd.f32 %v3069, %v3647
        %v3700 = vadd.f32 %v3070, %v3652
        %v3701 = vadd.f32 %v3071, %v3655
        %v3702 = vadd.f32 %v3072, %v3660
        %v3703 = vadd.f32 %v3073, %v3663
        %v3704 = vadd.f32 %v3074, %v3668
        %v3705 = vadd.f32 %v3075, %v3671
        %v3706 = vrot.slane %v1077, 5
        %v3707 = vrot.slane %v3706, 4
        %v3708 = vrot.slane %v1078, 5
        %v3709 = vsel %vm3271, %v3707, %v3708
        %v3710 = vrot.slane %v3708, 4
        %v3711 = vrot.slane %v1079, 5
        %v3712 = vsel %vm3271, %v3710, %v3711
        %v3713 = vrot.slane %v1080, 5
        %v3714 = vrot.slane %v3713, 4
        %v3715 = vrot.slane %v1081, 5
        %v3716 = vsel %vm3271, %v3714, %v3715
        %v3717 = vrot.slane %v3715, 4
        %v3718 = vrot.slane %v1082, 5
        %v3719 = vsel %vm3271, %v3717, %v3718
        %v3720 = vrot.slane %v1083, 5
        %v3721 = vrot.slane %v3720, 4
        %v3722 = vrot.slane %v1084, 5
        %v3723 = vsel %vm3271, %v3721, %v3722
        %v3724 = vrot.slane %v3722, 4
        %v3725 = vrot.slane %v1085, 5
        %v3726 = vsel %vm3271, %v3724, %v3725
        %v3727 = vrot.slane %v1086, 5
        %v3728 = vrot.slane %v3727, 4
        %v3729 = vrot.slane %v1087, 5
        %v3730 = vsel %vm3271, %v3728, %v3729
        %v3731 = vrot.slane %v3729, 4
        %v3732 = vrot.slane %v1088, 5
        %v3733 = vsel %vm3271, %v3731, %v3732
        %v3734 = vrot.slane %v1089, 5
        %v3735 = vrot.slane %v3734, 4
        %v3736 = vrot.slane %v1090, 5
        %v3737 = vsel %vm3271, %v3735, %v3736
        %v3738 = vrot.slane %v3736, 4
        %v3739 = vrot.slane %v1091, 5
        %v3740 = vsel %vm3271, %v3738, %v3739
        %v3741 = vrot.slane %v1092, 5
        %v3742 = vrot.slane %v3741, 4
        %v3743 = vrot.slane %v1093, 5
        %v3744 = vsel %vm3271, %v3742, %v3743
        %v3745 = vrot.slane %v3743, 4
        %v3746 = vrot.slane %v1094, 5
        %v3747 = vsel %vm3271, %v3745, %v3746
        %v3748 = vrot.slane %v1095, 5
        %v3749 = vrot.slane %v3748, 4
        %v3750 = vrot.slane %v1096, 5
        %v3751 = vsel %vm3271, %v3749, %v3750
        %v3752 = vrot.slane %v3750, 4
        %v3753 = vrot.slane %v1097, 5
        %v3754 = vsel %vm3271, %v3752, %v3753
        %v3755 = vrot.slane %v1098, 5
        %v3756 = vrot.slane %v3755, 4
        %v3757 = vrot.slane %v1099, 5
        %v3758 = vsel %vm3271, %v3756, %v3757
        %v3759 = vrot.slane %v3757, 4
        %v3760 = vrot.slane %v1100, 5
        %v3761 = vsel %vm3271, %v3759, %v3760
        %v3762 = vrot.slane %v1101, 5
        %v3763 = vrot.slane %v3762, 4
        %v3764 = vrot.slane %v1102, 5
        %v3765 = vsel %vm3271, %v3763, %v3764
        %v3766 = vrot.slane %v3764, 4
        %v3767 = vrot.slane %v1103, 5
        %v3768 = vsel %vm3271, %v3766, %v3767
        %v3769 = vrot.slane %v1104, 5
        %v3770 = vrot.slane %v3769, 4
        %v3771 = vrot.slane %v1105, 5
        %v3772 = vsel %vm3271, %v3770, %v3771
        %v3773 = vrot.slane %v3771, 4
        %v3774 = vrot.slane %v1106, 5
        %v3775 = vsel %vm3271, %v3773, %v3774
        %v3776 = vrot.slane %v1107, 5
        %v3777 = vrot.slane %v3776, 4
        %v3778 = vrot.slane %v1108, 5
        %v3779 = vsel %vm3271, %v3777, %v3778
        %v3780 = vrot.slane %v3778, 4
        %v3781 = vrot.slane %v1109, 5
        %v3782 = vsel %vm3271, %v3780, %v3781
        %v3783 = vrot.slane %v1110, 5
        %v3784 = vrot.slane %v3783, 4
        %v3785 = vrot.slane %v1111, 5
        %v3786 = vsel %vm3271, %v3784, %v3785
        %v3787 = vrot.slane %v3785, 4
        %v3788 = vrot.slane %v1112, 5
        %v3789 = vsel %vm3271, %v3787, %v3788
        %v3790 = vrot.slane %v1113, 5
        %v3791 = vrot.slane %v3790, 4
        %v3792 = vrot.slane %v1114, 5
        %v3793 = vsel %vm3271, %v3791, %v3792
        %v3794 = vrot.slane %v3792, 4
        %v3795 = vrot.slane %v1115, 5
        %v3796 = vsel %vm3271, %v3794, %v3795
        %v3797 = vrot.slane %v1116, 5
        %v3798 = vrot.slane %v3797, 4
        %v3799 = vrot.slane %v1117, 5
        %v3800 = vsel %vm3271, %v3798, %v3799
        %v3801 = vrot.slane %v3799, 4
        %v3802 = vrot.slane %v1118, 5
        %v3803 = vsel %vm3271, %v3801, %v3802
        %v3804 = vrot.slane %v1119, 5
        %v3805 = vrot.slane %v3804, 4
        %v3806 = vrot.slane %v1120, 5
        %v3807 = vsel %vm3271, %v3805, %v3806
        %v3808 = vrot.slane %v3806, 4
        %v3809 = vrot.slane %v1121, 5
        %v3810 = vsel %vm3271, %v3808, %v3809
        %v3811 = vrot.slane %v1122, 5
        %v3812 = vrot.slane %v3811, 4
        %v3813 = vrot.slane %v1123, 5
        %v3814 = vsel %vm3271, %v3812, %v3813
        %v3815 = vrot.slane %v3813, 4
        %v3816 = vrot.slane %v1124, 5
        %v3817 = vsel %vm3271, %v3815, %v3816
        %s3818 = scalar_lea.vmem [#allocation8], 128
        %v3819 = vld [vmem:[%s3818] sm:$0xf]
        %v3820 = vld [vmem:[%s3818 + $0x4] sm:$0xf]
        %v3821 = vld [vmem:[%s3818 + $0x8] sm:$0xf]
        %v3822 = vld [vmem:[%s3818 + $0xc] sm:$0xf]
        %v3823 = vld [vmem:[%s3818 + $0x10] sm:$0xf]
        %v3824 = vld [vmem:[%s3818 + $0x14] sm:$0xf]
        %v3825 = vld [vmem:[%s3818 + $0x18] sm:$0xf]
        %v3826 = vld [vmem:[%s3818 + $0x1c] sm:$0xf]
        %v3827 = vld [vmem:[%s3818 + $0x20] sm:$0xf]
        %v3828 = vld [vmem:[%s3818 + $0x24] sm:$0xf]
        %v3829 = vld [vmem:[%s3818 + $0x28] sm:$0xf]
        %v3830 = vld [vmem:[%s3818 + $0x2c] sm:$0xf]
        %v3831 = vld [vmem:[%s3818 + $0x30] sm:$0xf]
        %v3832 = vld [vmem:[%s3818 + $0x34] sm:$0xf]
        %v3833 = vld [vmem:[%s3818 + $0x38] sm:$0xf]
        %v3834 = vld [vmem:[%s3818 + $0x3c] sm:$0xf]
        %v3835 = vunpack.c.l.b16 %v3709
        %v3836 = vunpack.c.l.b16 %v3712
        %v3837 = vunpack.c.l.b16 %v3716
        %v3838 = vunpack.c.l.b16 %v3719
        %v3839 = vunpack.c.l.b16 %v3723
        %v3840 = vunpack.c.l.b16 %v3726
        %v3841 = vunpack.c.l.b16 %v3730
        %v3842 = vunpack.c.l.b16 %v3733
        %v3843 = vunpack.c.l.b16 %v3737
        %v3844 = vunpack.c.l.b16 %v3740
        %v3845 = vunpack.c.l.b16 %v3744
        %v3846 = vunpack.c.l.b16 %v3747
        %v3847 = vunpack.c.l.b16 %v3751
        %v3848 = vunpack.c.l.b16 %v3754
        %v3849 = vunpack.c.l.b16 %v3758
        %v3850 = vunpack.c.l.b16 %v3761
        %v3851 = vunpack.c.l.b16 %v3765
        %v3852 = vunpack.c.l.b16 %v3768
        %v3853 = vunpack.c.l.b16 %v3772
        %v3854 = vunpack.c.l.b16 %v3775
        %v3855 = vunpack.c.l.b16 %v3779
        %v3856 = vunpack.c.l.b16 %v3782
        %v3857 = vunpack.c.l.b16 %v3786
        %v3858 = vunpack.c.l.b16 %v3789
        %v3859 = vunpack.c.l.b16 %v3793
        %v3860 = vunpack.c.l.b16 %v3796
        %v3861 = vunpack.c.l.b16 %v3800
        %v3862 = vunpack.c.l.b16 %v3803
        %v3863 = vunpack.c.l.b16 %v3807
        %v3864 = vunpack.c.l.b16 %v3810
        %v3865 = vunpack.c.l.b16 %v3814
        %v3866 = vunpack.c.l.b16 %v3817
        %v3867 = vpack.c.b16 %v3836, %v3835
        %v3868 = vpack.c.b16 %v3838, %v3837
        %v3869 = vpack.c.b16 %v3840, %v3839
        %v3870 = vpack.c.b16 %v3842, %v3841
        %v3871 = vpack.c.b16 %v3844, %v3843
        %v3872 = vpack.c.b16 %v3846, %v3845
        %v3873 = vpack.c.b16 %v3848, %v3847
        %v3874 = vpack.c.b16 %v3850, %v3849
        %v3875 = vpack.c.b16 %v3852, %v3851
        %v3876 = vpack.c.b16 %v3854, %v3853
        %v3877 = vpack.c.b16 %v3856, %v3855
        %v3878 = vpack.c.b16 %v3858, %v3857
        %v3879 = vpack.c.b16 %v3860, %v3859
        %v3880 = vpack.c.b16 %v3862, %v3861
        %v3881 = vpack.c.b16 %v3864, %v3863
        %v3882 = vpack.c.b16 %v3866, %v3865
        %v3915 = vunpack.c.l.b16 %v3819
        %v3916 = vunpack.c.l.b16 %v3820
        %v3917 = vunpack.c.l.b16 %v3821
        %v3918 = vunpack.c.l.b16 %v3822
        %v3919 = vunpack.c.l.b16 %v3823
        %v3920 = vunpack.c.l.b16 %v3824
        %v3921 = vunpack.c.l.b16 %v3825
        %v3922 = vunpack.c.l.b16 %v3826
        %v3923 = vunpack.c.l.b16 %v3827
        %v3924 = vunpack.c.l.b16 %v3828
        %v3925 = vunpack.c.l.b16 %v3829
        %v3926 = vunpack.c.l.b16 %v3830
        %v3927 = vunpack.c.l.b16 %v3831
        %v3928 = vunpack.c.l.b16 %v3832
        %v3929 = vunpack.c.l.b16 %v3833
        %v3930 = vunpack.c.l.b16 %v3834
        %v3931 = vpack.c.b16 %v3916, %v3915
        %v3932 = vpack.c.b16 %v3918, %v3917
        %v3933 = vpack.c.b16 %v3920, %v3919
        %v3934 = vpack.c.b16 %v3922, %v3921
        %v3935 = vpack.c.b16 %v3924, %v3923
        %v3936 = vpack.c.b16 %v3926, %v3925
        %v3937 = vpack.c.b16 %v3928, %v3927
        %v3938 = vpack.c.b16 %v3930, %v3929
        %3947 = vmatprep.subr.bf16.mxu0 0
        %3948 = vmatpush1.bf16.msra.mxu0 %v3931
        %3949 = vmatprep.subr.bf16.mxu0 0
        %3950 = vmatpush1.bf16.msra.mxu0 %v3932
        %3951 = vmatprep.subr.bf16.mxu0 0
        %3952 = vmatpush1.bf16.msra.mxu0 %v3933
        %3953 = vmatprep.subr.bf16.mxu0 0
        %3954 = vmatpush1.bf16.msra.mxu0 %v3934
        %3955 = vmatprep.subr.bf16.mxu0 0
        %3956 = vmatpush1.bf16.msra.mxu0 %v3935
        %3957 = vmatprep.subr.bf16.mxu0 0
        %3958 = vmatpush1.bf16.msra.mxu0 %v3936
        %3959 = vmatprep.subr.bf16.mxu0 0
        %3960 = vmatpush1.bf16.msra.mxu0 %v3937
        %3961 = vmatprep.subr.bf16.mxu0 0
        %3962 = vmatpush1.bf16.msra.mxu0 %v3938
        %3963 = vmatprep.subr.bf16.mxu0 0
        %3964 = vmatpush1.bf16.msra.mxu0 0
        %3965 = vmatprep.subr.bf16.mxu0 0
        %3966 = vmatpush1.bf16.msra.mxu0 0
        %3967 = vmatprep.subr.bf16.mxu0 0
        %3968 = vmatpush1.bf16.msra.mxu0 0
        %3969 = vmatprep.subr.bf16.mxu0 0
        %3970 = vmatpush1.bf16.msra.mxu0 0
        %3971 = vmatprep.subr.bf16.mxu0 0
        %3972 = vmatpush1.bf16.msra.mxu0 0
        %3973 = vmatprep.subr.bf16.mxu0 0
        %3974 = vmatpush1.bf16.msra.mxu0 0
        %3975 = vmatprep.subr.bf16.mxu0 0
        %3976 = vmatpush1.bf16.msra.mxu0 0
        %3977 = vmatprep.subr.bf16.mxu0 0
        %3978 = vmatpush1.bf16.msra.mxu0 0
        %3979 = vmatprep.mubr.bf16.mxu0 0
        %3980 = vmatmul.mubr.bf16.gmra.mrb[0].mxu0 %v3867
        %v3981 = vpop.f32.mrb[0].mxu0
        %v3982 = vadd.f32 0.0, %v3981
        %v3983 = vpop.f32.mrb[0].mxu0
        %v3984 = vpop.f32.mrb[0].mxu0
        %v3985 = vadd.f32 0.0, %v3984
        %v3986 = vpop.f32.mrb[0].mxu0
        %3987 = vmatprep.mubr.bf16.mxu0 0
        %3988 = vmatmul.mubr.bf16.gmra.mrb[0].mxu0 %v3868
        %v3989 = vpop.f32.mrb[0].mxu0
        %v3990 = vadd.f32 0.0, %v3989
        %v3991 = vpop.f32.mrb[0].mxu0
        %v3992 = vpop.f32.mrb[0].mxu0
        %v3993 = vadd.f32 0.0, %v3992
        %v3994 = vpop.f32.mrb[0].mxu0
        %3995 = vmatprep.mubr.bf16.mxu0 0
        %3996 = vmatmul.mubr.bf16.gmra.mrb[0].mxu0 %v3869
        %v3997 = vpop.f32.mrb[0].mxu0
        %v3998 = vadd.f32 0.0, %v3997
        %v3999 = vpop.f32.mrb[0].mxu0
        %v4000 = vpop.f32.mrb[0].mxu0
        %v4001 = vadd.f32 0.0, %v4000
        %v4002 = vpop.f32.mrb[0].mxu0
        %4003 = vmatprep.mubr.bf16.mxu0 0
        %4004 = vmatmul.mubr.bf16.gmra.mrb[0].mxu0 %v3870
        %v4005 = vpop.f32.mrb[0].mxu0
        %v4006 = vadd.f32 0.0, %v4005
        %v4007 = vpop.f32.mrb[0].mxu0
        %v4008 = vpop.f32.mrb[0].mxu0
        %v4009 = vadd.f32 0.0, %v4008
        %v4010 = vpop.f32.mrb[0].mxu0
        %4011 = vmatprep.mubr.bf16.mxu0 0
        %4012 = vmatmul.mubr.bf16.gmra.mrb[0].mxu0 %v3871
        %v4013 = vpop.f32.mrb[0].mxu0
        %v4014 = vadd.f32 0.0, %v4013
        %v4015 = vpop.f32.mrb[0].mxu0
        %v4016 = vpop.f32.mrb[0].mxu0
        %v4017 = vadd.f32 0.0, %v4016
        %v4018 = vpop.f32.mrb[0].mxu0
        %4019 = vmatprep.mubr.bf16.mxu0 0
        %4020 = vmatmul.mubr.bf16.gmra.mrb[0].mxu0 %v3872
        %v4021 = vpop.f32.mrb[0].mxu0
        %v4022 = vadd.f32 0.0, %v4021
        %v4023 = vpop.f32.mrb[0].mxu0
        %v4024 = vpop.f32.mrb[0].mxu0
        %v4025 = vadd.f32 0.0, %v4024
        %v4026 = vpop.f32.mrb[0].mxu0
        %4027 = vmatprep.mubr.bf16.mxu0 0
        %4028 = vmatmul.mubr.bf16.gmra.mrb[0].mxu0 %v3873
        %v4029 = vpop.f32.mrb[0].mxu0
        %v4030 = vadd.f32 0.0, %v4029
        %v4031 = vpop.f32.mrb[0].mxu0
        %v4032 = vpop.f32.mrb[0].mxu0
        %v4033 = vadd.f32 0.0, %v4032
        %v4034 = vpop.f32.mrb[0].mxu0
        %4035 = vmatprep.mubr.bf16.mxu0 0
        %4036 = vmatmul.mubr.bf16.gmra.mrb[0].mxu0 %v3874
        %v4037 = vpop.f32.mrb[0].mxu0
        %v4038 = vadd.f32 0.0, %v4037
        %v4039 = vpop.f32.mrb[0].mxu0
        %v4040 = vpop.f32.mrb[0].mxu0
        %v4041 = vadd.f32 0.0, %v4040
        %v4042 = vpop.f32.mrb[0].mxu0
        %4043 = vmatprep.mubr.bf16.mxu0 0
        %4044 = vmatmul.mubr.bf16.gmra.mrb[0].mxu0 %v3875
        %v4045 = vpop.f32.mrb[0].mxu0
        %v4046 = vadd.f32 0.0, %v4045
        %v4047 = vpop.f32.mrb[0].mxu0
        %v4048 = vpop.f32.mrb[0].mxu0
        %v4049 = vadd.f32 0.0, %v4048
        %v4050 = vpop.f32.mrb[0].mxu0
        %4051 = vmatprep.mubr.bf16.mxu0 0
        %4052 = vmatmul.mubr.bf16.gmra.mrb[0].mxu0 %v3876
        %v4053 = vpop.f32.mrb[0].mxu0
        %v4054 = vadd.f32 0.0, %v4053
        %v4055 = vpop.f32.mrb[0].mxu0
        %v4056 = vpop.f32.mrb[0].mxu0
        %v4057 = vadd.f32 0.0, %v4056
        %v4058 = vpop.f32.mrb[0].mxu0
        %4059 = vmatprep.mubr.bf16.mxu0 0
        %4060 = vmatmul.mubr.bf16.gmra.mrb[0].mxu0 %v3877
        %v4061 = vpop.f32.mrb[0].mxu0
        %v4062 = vadd.f32 0.0, %v4061
        %v4063 = vpop.f32.mrb[0].mxu0
        %v4064 = vpop.f32.mrb[0].mxu0
        %v4065 = vadd.f32 0.0, %v4064
        %v4066 = vpop.f32.mrb[0].mxu0
        %4067 = vmatprep.mubr.bf16.mxu0 0
        %4068 = vmatmul.mubr.bf16.gmra.mrb[0].mxu0 %v3878
        %v4069 = vpop.f32.mrb[0].mxu0
        %v4070 = vadd.f32 0.0, %v4069
        %v4071 = vpop.f32.mrb[0].mxu0
        %v4072 = vpop.f32.mrb[0].mxu0
        %v4073 = vadd.f32 0.0, %v4072
        %v4074 = vpop.f32.mrb[0].mxu0
        %4075 = vmatprep.mubr.bf16.mxu0 0
        %4076 = vmatmul.mubr.bf16.gmra.mrb[0].mxu0 %v3879
        %v4077 = vpop.f32.mrb[0].mxu0
        %v4078 = vadd.f32 0.0, %v4077
        %v4079 = vpop.f32.mrb[0].mxu0
        %v4080 = vpop.f32.mrb[0].mxu0
        %v4081 = vadd.f32 0.0, %v4080
        %v4082 = vpop.f32.mrb[0].mxu0
        %4083 = vmatprep.mubr.bf16.mxu0 0
        %4084 = vmatmul.mubr.bf16.gmra.mrb[0].mxu0 %v3880
        %v4085 = vpop.f32.mrb[0].mxu0
        %v4086 = vadd.f32 0.0, %v4085
        %v4087 = vpop.f32.mrb[0].mxu0
        %v4088 = vpop.f32.mrb[0].mxu0
        %v4089 = vadd.f32 0.0, %v4088
        %v4090 = vpop.f32.mrb[0].mxu0
        %4091 = vmatprep.mubr.bf16.mxu0 0
        %4092 = vmatmul.mubr.bf16.gmra.mrb[0].mxu0 %v3881
        %v4093 = vpop.f32.mrb[0].mxu0
        %v4094 = vadd.f32 0.0, %v4093
        %v4095 = vpop.f32.mrb[0].mxu0
        %v4096 = vpop.f32.mrb[0].mxu0
        %v4097 = vadd.f32 0.0, %v4096
        %v4098 = vpop.f32.mrb[0].mxu0
        %4099 = vmatprep.mubr.bf16.mxu0 0
        %4100 = vmatmul.mubr.bf16.gmra.mrb[0].mxu0 %v3882
        %v4101 = vpop.f32.mrb[0].mxu0
        %v4102 = vadd.f32 0.0, %v4101
        %v4103 = vpop.f32.mrb[0].mxu0
        %v4104 = vpop.f32.mrb[0].mxu0
        %v4105 = vadd.f32 0.0, %v4104
        %v4106 = vpop.f32.mrb[0].mxu0
        %4107 = vdwg.mxu0
        %v4108 = vadd.f32 %v3674, %v3982
        %v4109 = vadd.f32 %v3675, %v3985
        %v4110 = vadd.f32 %v3676, %v3990
        %v4111 = vadd.f32 %v3677, %v3993
        %v4112 = vadd.f32 %v3678, %v3998
        %v4113 = vadd.f32 %v3679, %v4001
        %v4114 = vadd.f32 %v3680, %v4006
        %v4115 = vadd.f32 %v3681, %v4009
        %v4116 = vadd.f32 %v3682, %v4014
        %v4117 = vadd.f32 %v3683, %v4017
        %v4118 = vadd.f32 %v3684, %v4022
        %v4119 = vadd.f32 %v3685, %v4025
        %v4120 = vadd.f32 %v3686, %v4030
        %v4121 = vadd.f32 %v3687, %v4033
        %v4122 = vadd.f32 %v3688, %v4038
        %v4123 = vadd.f32 %v3689, %v4041
        %v4124 = vadd.f32 %v3690, %v4046
        %v4125 = vadd.f32 %v3691, %v4049
        %v4126 = vadd.f32 %v3692, %v4054
        %v4127 = vadd.f32 %v3693, %v4057
        %v4128 = vadd.f32 %v3694, %v4062
        %v4129 = vadd.f32 %v3695, %v4065
        %v4130 = vadd.f32 %v3696, %v4070
        %v4131 = vadd.f32 %v3697, %v4073
        %v4132 = vadd.f32 %v3698, %v4078
        %v4133 = vadd.f32 %v3699, %v4081
        %v4134 = vadd.f32 %v3700, %v4086
        %v4135 = vadd.f32 %v3701, %v4089
        %v4136 = vadd.f32 %v3702, %v4094
        %v4137 = vadd.f32 %v3703, %v4097
        %v4138 = vadd.f32 %v3704, %v4102
        %v4139 = vadd.f32 %v3705, %v4105
        %vm4140 = vcmask 1045504
        %v4141 = vrot.slane %v701, 2
        %v4142 = vrot.slane %v705, 2
        %v4143 = vsel %vm4140, %v4141, %v4142
        %v4144 = vrot.slane %v711, 2
        %v4145 = vsel %vm4140, %v4142, %v4144
        %v4146 = vrot.slane %v715, 2
        %v4147 = vrot.slane %v721, 2
        %v4148 = vsel %vm4140, %v4146, %v4147
        %v4149 = vrot.slane %v725, 2
        %v4150 = vsel %vm4140, %v4147, %v4149
        %v4151 = vrot.slane %v731, 2
        %v4152 = vrot.slane %v735, 2
        %v4153 = vsel %vm4140, %v4151, %v4152
        %v4154 = vrot.slane %v741, 2
        %v4155 = vsel %vm4140, %v4152, %v4154
        %v4156 = vrot.slane %v745, 2
        %v4157 = vrot.slane %v751, 2
        %v4158 = vsel %vm4140, %v4156, %v4157
        %v4159 = vrot.slane %v755, 2
        %v4160 = vsel %vm4140, %v4157, %v4159
        %v4161 = vrot.slane %v761, 2
        %v4162 = vrot.slane %v765, 2
        %v4163 = vsel %vm4140, %v4161, %v4162
        %v4164 = vrot.slane %v771, 2
        %v4165 = vsel %vm4140, %v4162, %v4164
        %v4166 = vrot.slane %v775, 2
        %v4167 = vrot.slane %v781, 2
        %v4168 = vsel %vm4140, %v4166, %v4167
        %v4169 = vrot.slane %v785, 2
        %v4170 = vsel %vm4140, %v4167, %v4169
        %v4171 = vrot.slane %v791, 2
        %v4172 = vrot.slane %v795, 2
        %v4173 = vsel %vm4140, %v4171, %v4172
        %v4174 = vrot.slane %v801, 2
        %v4175 = vsel %vm4140, %v4172, %v4174
        %v4176 = vrot.slane %v805, 2
        %v4177 = vrot.slane %v811, 2
        %v4178 = vsel %vm4140, %v4176, %v4177
        %v4179 = vrot.slane %v815, 2
        %v4180 = vsel %vm4140, %v4177, %v4179
        %v4181 = vrot.slane %v821, 2
        %v4182 = vrot.slane %v825, 2
        %v4183 = vsel %vm4140, %v4181, %v4182
        %v4184 = vrot.slane %v831, 2
        %v4185 = vsel %vm4140, %v4182, %v4184
        %v4186 = vrot.slane %v835, 2
        %v4187 = vrot.slane %v841, 2
        %v4188 = vsel %vm4140, %v4186, %v4187
        %v4189 = vrot.slane %v845, 2
        %v4190 = vsel %vm4140, %v4187, %v4189
        %v4191 = vrot.slane %v851, 2
        %v4192 = vrot.slane %v855, 2
        %v4193 = vsel %vm4140, %v4191, %v4192
        %v4194 = vrot.slane %v861, 2
        %v4195 = vsel %vm4140, %v4192, %v4194
        %v4196 = vrot.slane %v865, 2
        %v4197 = vrot.slane %v871, 2
        %v4198 = vsel %vm4140, %v4196, %v4197
        %v4199 = vrot.slane %v875, 2
        %v4200 = vsel %vm4140, %v4197, %v4199
        %v4201 = vrot.slane %v881, 2
        %v4202 = vrot.slane %v885, 2
        %v4203 = vsel %vm4140, %v4201, %v4202
        %v4204 = vrot.slane %v891, 2
        %v4205 = vsel %vm4140, %v4202, %v4204
        %v4206 = vrot.slane %v895, 2
        %v4207 = vrot.slane %v901, 2
        %v4208 = vsel %vm4140, %v4206, %v4207
        %v4209 = vrot.slane %v905, 2
        %v4210 = vsel %vm4140, %v4207, %v4209
        %v4211 = vrot.slane %v911, 2
        %v4212 = vrot.slane %v915, 2
        %v4213 = vsel %vm4140, %v4211, %v4212
        %v4214 = vrot.slane %v921, 2
        %v4215 = vsel %vm4140, %v4212, %v4214
        %v4216 = vrot.slane %v925, 2
        %v4217 = vrot.slane %v931, 2
        %v4218 = vsel %vm4140, %v4216, %v4217
        %v4219 = vrot.slane %v935, 2
        %v4220 = vsel %vm4140, %v4217, %v4219
        %v4253 = vadd.f32 %v3237, %v4143
        %v4254 = vadd.f32 %v3238, %v4145
        %v4255 = vadd.f32 %v3239, %v4148
        %v4256 = vadd.f32 %v3240, %v4150
        %v4257 = vadd.f32 %v3241, %v4153
        %v4258 = vadd.f32 %v3242, %v4155
        %v4259 = vadd.f32 %v3243, %v4158
        %v4260 = vadd.f32 %v3244, %v4160
        %v4261 = vadd.f32 %v3245, %v4163
        %v4262 = vadd.f32 %v3246, %v4165
        %v4263 = vadd.f32 %v3247, %v4168
        %v4264 = vadd.f32 %v3248, %v4170
        %v4265 = vadd.f32 %v3249, %v4173
        %v4266 = vadd.f32 %v3250, %v4175
        %v4267 = vadd.f32 %v3251, %v4178
        %v4268 = vadd.f32 %v3252, %v4180
        %v4269 = vadd.f32 %v3253, %v4183
        %v4270 = vadd.f32 %v3254, %v4185
        %v4271 = vadd.f32 %v3255, %v4188
        %v4272 = vadd.f32 %v3256, %v4190
        %v4273 = vadd.f32 %v3257, %v4193
        %v4274 = vadd.f32 %v3258, %v4195
        %v4275 = vadd.f32 %v3259, %v4198
        %v4276 = vadd.f32 %v3260, %v4200
        %v4277 = vadd.f32 %v3261, %v4203
        %v4278 = vadd.f32 %v3262, %v4205
        %v4279 = vadd.f32 %v3263, %v4208
        %v4280 = vadd.f32 %v3264, %v4210
        %v4281 = vadd.f32 %v3265, %v4213
        %v4282 = vadd.f32 %v3266, %v4215
        %v4283 = vadd.f32 %v3267, %v4218
        %v4284 = vadd.f32 %v3268, %v4220
        %s4285 = scalar_lea.vmem [#allocation7], 192
        %v4286 = vld [vmem:[%s4285] sm:$0xf]
        %v4287 = vld [vmem:[%s4285 + $0x4] sm:$0xf]
        %v4288 = vld [vmem:[%s4285 + $0x8] sm:$0xf]
        %v4289 = vld [vmem:[%s4285 + $0xc] sm:$0xf]
        %v4290 = vld [vmem:[%s4285 + $0x10] sm:$0xf]
        %v4291 = vld [vmem:[%s4285 + $0x14] sm:$0xf]
        %v4292 = vld [vmem:[%s4285 + $0x18] sm:$0xf]
        %v4293 = vld [vmem:[%s4285 + $0x1c] sm:$0xf]
        %v4294 = vld [vmem:[%s4285 + $0x20] sm:$0xf]
        %v4295 = vld [vmem:[%s4285 + $0x24] sm:$0xf]
        %v4296 = vld [vmem:[%s4285 + $0x28] sm:$0xf]
        %v4297 = vld [vmem:[%s4285 + $0x2c] sm:$0xf]
        %v4298 = vld [vmem:[%s4285 + $0x30] sm:$0xf]
        %v4299 = vld [vmem:[%s4285 + $0x34] sm:$0xf]
        %v4300 = vld [vmem:[%s4285 + $0x38] sm:$0xf]
        %v4301 = vld [vmem:[%s4285 + $0x3c] sm:$0xf]
        %v4318 = vunpack.c.l.b16 %v4286
        %v4319 = vunpack.c.l.b16 %v4287
        %v4320 = vunpack.c.l.b16 %v4288
        %v4321 = vunpack.c.l.b16 %v4289
        %v4322 = vunpack.c.l.b16 %v4290
        %v4323 = vunpack.c.l.b16 %v4291
        %v4324 = vunpack.c.l.b16 %v4292
        %v4325 = vunpack.c.l.b16 %v4293
        %v4326 = vunpack.c.l.b16 %v4294
        %v4327 = vunpack.c.l.b16 %v4295
        %v4328 = vunpack.c.l.b16 %v4296
        %v4329 = vunpack.c.l.b16 %v4297
        %v4330 = vunpack.c.l.b16 %v4298
        %v4331 = vunpack.c.l.b16 %v4299
        %v4332 = vunpack.c.l.b16 %v4300
        %v4333 = vunpack.c.l.b16 %v4301
        %v4334 = vpack.c.b16 %v4319, %v4318
        %v4335 = vpack.c.b16 %v4321, %v4320
        %v4336 = vpack.c.b16 %v4323, %v4322
        %v4337 = vpack.c.b16 %v4325, %v4324
        %v4338 = vpack.c.b16 %v4327, %v4326
        %v4339 = vpack.c.b16 %v4329, %v4328
        %v4340 = vpack.c.b16 %v4331, %v4330
        %v4341 = vpack.c.b16 %v4333, %v4332
        %4350 = vmatprep.subr.bf16.mxu0 0
        %4351 = vmatpush1.bf16.msra.mxu0 %v4334
        %4352 = vmatprep.subr.bf16.mxu0 0
        %4353 = vmatpush1.bf16.msra.mxu0 %v4335
        %4354 = vmatprep.subr.bf16.mxu0 0
        %4355 = vmatpush1.bf16.msra.mxu0 %v4336
        %4356 = vmatprep.subr.bf16.mxu0 0
        %4357 = vmatpush1.bf16.msra.mxu0 %v4337
        %4358 = vmatprep.subr.bf16.mxu0 0
        %4359 = vmatpush1.bf16.msra.mxu0 %v4338
        %4360 = vmatprep.subr.bf16.mxu0 0
        %4361 = vmatpush1.bf16.msra.mxu0 %v4339
        %4362 = vmatprep.subr.bf16.mxu0 0
        %4363 = vmatpush1.bf16.msra.mxu0 %v4340
        %4364 = vmatprep.subr.bf16.mxu0 0
        %4365 = vmatpush1.bf16.msra.mxu0 %v4341
        %4366 = vmatprep.subr.bf16.mxu0 0
        %4367 = vmatpush1.bf16.msra.mxu0 0
        %4368 = vmatprep.subr.bf16.mxu0 0
        %4369 = vmatpush1.bf16.msra.mxu0 0
        %4370 = vmatprep.subr.bf16.mxu0 0
        %4371 = vmatpush1.bf16.msra.mxu0 0
        %4372 = vmatprep.subr.bf16.mxu0 0
        %4373 = vmatpush1.bf16.msra.mxu0 0
        %4374 = vmatprep.subr.bf16.mxu0 0
        %4375 = vmatpush1.bf16.msra.mxu0 0
        %4376 = vmatprep.subr.bf16.mxu0 0
        %4377 = vmatpush1.bf16.msra.mxu0 0
        %4378 = vmatprep.subr.bf16.mxu0 0
        %4379 = vmatpush1.bf16.msra.mxu0 0
        %4380 = vmatprep.subr.bf16.mxu0 0
        %4381 = vmatpush1.bf16.msra.mxu0 0
        %4382 = vmatprep.mubr.bf16.mxu0 0
        %4383 = vmatmul.mubr.bf16.gmra.mrb[0].mxu0 %v1404
        %v4384 = vpop.f32.mrb[0].mxu0
        %v4385 = vadd.f32 0.0, %v4384
        %v4386 = vpop.f32.mrb[0].mxu0
        %v4387 = vpop.f32.mrb[0].mxu0
        %v4388 = vadd.f32 0.0, %v4387
        %v4389 = vpop.f32.mrb[0].mxu0
        %4390 = vmatprep.mubr.bf16.mxu0 0
        %4391 = vmatmul.mubr.bf16.gmra.mrb[0].mxu0 %v535
        %v4392 = vpop.f32.mrb[0].mxu0
        %v4393 = vadd.f32 0.0, %v4392
        %v4394 = vpop.f32.mrb[0].mxu0
        %v4395 = vpop.f32.mrb[0].mxu0
        %v4396 = vadd.f32 0.0, %v4395
        %v4397 = vpop.f32.mrb[0].mxu0
        %4398 = vmatprep.mubr.bf16.mxu0 0
        %4399 = vmatmul.mubr.bf16.gmra.mrb[0].mxu0 %v1405
        %v4400 = vpop.f32.mrb[0].mxu0
        %v4401 = vadd.f32 0.0, %v4400
        %v4402 = vpop.f32.mrb[0].mxu0
        %v4403 = vpop.f32.mrb[0].mxu0
        %v4404 = vadd.f32 0.0, %v4403
        %v4405 = vpop.f32.mrb[0].mxu0
        %4406 = vmatprep.mubr.bf16.mxu0 0
        %4407 = vmatmul.mubr.bf16.gmra.mrb[0].mxu0 %v538
        %v4408 = vpop.f32.mrb[0].mxu0
        %v4409 = vadd.f32 0.0, %v4408
        %v4410 = vpop.f32.mrb[0].mxu0
        %v4411 = vpop.f32.mrb[0].mxu0
        %v4412 = vadd.f32 0.0, %v4411
        %v4413 = vpop.f32.mrb[0].mxu0
        %4414 = vmatprep.mubr.bf16.mxu0 0
        %4415 = vmatmul.mubr.bf16.gmra.mrb[0].mxu0 %v1406
        %v4416 = vpop.f32.mrb[0].mxu0
        %v4417 = vadd.f32 0.0, %v4416
        %v4418 = vpop.f32.mrb[0].mxu0
        %v4419 = vpop.f32.mrb[0].mxu0
        %v4420 = vadd.f32 0.0, %v4419
        %v4421 = vpop.f32.mrb[0].mxu0
        %4422 = vmatprep.mubr.bf16.mxu0 0
        %4423 = vmatmul.mubr.bf16.gmra.mrb[0].mxu0 %v541
        %v4424 = vpop.f32.mrb[0].mxu0
        %v4425 = vadd.f32 0.0, %v4424
        %v4426 = vpop.f32.mrb[0].mxu0
        %v4427 = vpop.f32.mrb[0].mxu0
        %v4428 = vadd.f32 0.0, %v4427
        %v4429 = vpop.f32.mrb[0].mxu0
        %4430 = vmatprep.mubr.bf16.mxu0 0
        %4431 = vmatmul.mubr.bf16.gmra.mrb[0].mxu0 %v1407
        %v4432 = vpop.f32.mrb[0].mxu0
        %v4433 = vadd.f32 0.0, %v4432
        %v4434 = vpop.f32.mrb[0].mxu0
        %v4435 = vpop.f32.mrb[0].mxu0
        %v4436 = vadd.f32 0.0, %v4435
        %v4437 = vpop.f32.mrb[0].mxu0
        %4438 = vmatprep.mubr.bf16.mxu0 0
        %4439 = vmatmul.mubr.bf16.gmra.mrb[0].mxu0 %v544
        %v4440 = vpop.f32.mrb[0].mxu0
        %v4441 = vadd.f32 0.0, %v4440
        %v4442 = vpop.f32.mrb[0].mxu0
        %v4443 = vpop.f32.mrb[0].mxu0
        %v4444 = vadd.f32 0.0, %v4443
        %v4445 = vpop.f32.mrb[0].mxu0
        %4446 = vmatprep.mubr.bf16.mxu0 0
        %4447 = vmatmul.mubr.bf16.gmra.mrb[0].mxu0 %v1408
        %v4448 = vpop.f32.mrb[0].mxu0
        %v4449 = vadd.f32 0.0, %v4448
        %v4450 = vpop.f32.mrb[0].mxu0
        %v4451 = vpop.f32.mrb[0].mxu0
        %v4452 = vadd.f32 0.0, %v4451
        %v4453 = vpop.f32.mrb[0].mxu0
        %4454 = vmatprep.mubr.bf16.mxu0 0
        %4455 = vmatmul.mubr.bf16.gmra.mrb[0].mxu0 %v547
        %v4456 = vpop.f32.mrb[0].mxu0
        %v4457 = vadd.f32 0.0, %v4456
        %v4458 = vpop.f32.mrb[0].mxu0
        %v4459 = vpop.f32.mrb[0].mxu0
        %v4460 = vadd.f32 0.0, %v4459
        %v4461 = vpop.f32.mrb[0].mxu0
        %4462 = vmatprep.mubr.bf16.mxu0 0
        %4463 = vmatmul.mubr.bf16.gmra.mrb[0].mxu0 %v1409
        %v4464 = vpop.f32.mrb[0].mxu0
        %v4465 = vadd.f32 0.0, %v4464
        %v4466 = vpop.f32.mrb[0].mxu0
        %v4467 = vpop.f32.mrb[0].mxu0
        %v4468 = vadd.f32 0.0, %v4467
        %v4469 = vpop.f32.mrb[0].mxu0
        %4470 = vmatprep.mubr.bf16.mxu0 0
        %4471 = vmatmul.mubr.bf16.gmra.mrb[0].mxu0 %v550
        %v4472 = vpop.f32.mrb[0].mxu0
        %v4473 = vadd.f32 0.0, %v4472
        %v4474 = vpop.f32.mrb[0].mxu0
        %v4475 = vpop.f32.mrb[0].mxu0
        %v4476 = vadd.f32 0.0, %v4475
        %v4477 = vpop.f32.mrb[0].mxu0
        %4478 = vmatprep.mubr.bf16.mxu0 0
        %4479 = vmatmul.mubr.bf16.gmra.mrb[0].mxu0 %v1410
        %v4480 = vpop.f32.mrb[0].mxu0
        %v4481 = vadd.f32 0.0, %v4480
        %v4482 = vpop.f32.mrb[0].mxu0
        %v4483 = vpop.f32.mrb[0].mxu0
        %v4484 = vadd.f32 0.0, %v4483
        %v4485 = vpop.f32.mrb[0].mxu0
        %4486 = vmatprep.mubr.bf16.mxu0 0
        %4487 = vmatmul.mubr.bf16.gmra.mrb[0].mxu0 %v553
        %v4488 = vpop.f32.mrb[0].mxu0
        %v4489 = vadd.f32 0.0, %v4488
        %v4490 = vpop.f32.mrb[0].mxu0
        %v4491 = vpop.f32.mrb[0].mxu0
        %v4492 = vadd.f32 0.0, %v4491
        %v4493 = vpop.f32.mrb[0].mxu0
        %4494 = vmatprep.mubr.bf16.mxu0 0
        %4495 = vmatmul.mubr.bf16.gmra.mrb[0].mxu0 %v1411
        %v4496 = vpop.f32.mrb[0].mxu0
        %v4497 = vadd.f32 0.0, %v4496
        %v4498 = vpop.f32.mrb[0].mxu0
        %v4499 = vpop.f32.mrb[0].mxu0
        %v4500 = vadd.f32 0.0, %v4499
        %v4501 = vpop.f32.mrb[0].mxu0
        %4502 = vmatprep.mubr.bf16.mxu0 0
        %4503 = vmatmul.mubr.bf16.gmra.mrb[0].mxu0 %v556
        %v4504 = vpop.f32.mrb[0].mxu0
        %v4505 = vadd.f32 0.0, %v4504
        %v4506 = vpop.f32.mrb[0].mxu0
        %v4507 = vpop.f32.mrb[0].mxu0
        %v4508 = vadd.f32 0.0, %v4507
        %v4509 = vpop.f32.mrb[0].mxu0
        %4510 = vdwg.mxu0
        %v4511 = vadd.f32 %v4108, %v4385
        %v4512 = vadd.f32 %v4109, %v4388
        %v4513 = vadd.f32 %v4110, %v4393
        %v4514 = vadd.f32 %v4111, %v4396
        %v4515 = vadd.f32 %v4112, %v4401
        %v4516 = vadd.f32 %v4113, %v4404
        %v4517 = vadd.f32 %v4114, %v4409
        %v4518 = vadd.f32 %v4115, %v4412
        %v4519 = vadd.f32 %v4116, %v4417
        %v4520 = vadd.f32 %v4117, %v4420
        %v4521 = vadd.f32 %v4118, %v4425
        %v4522 = vadd.f32 %v4119, %v4428
        %v4523 = vadd.f32 %v4120, %v4433
        %v4524 = vadd.f32 %v4121, %v4436
        %v4525 = vadd.f32 %v4122, %v4441
        %v4526 = vadd.f32 %v4123, %v4444
        %v4527 = vadd.f32 %v4124, %v4449
        %v4528 = vadd.f32 %v4125, %v4452
        %v4529 = vadd.f32 %v4126, %v4457
        %v4530 = vadd.f32 %v4127, %v4460
        %v4531 = vadd.f32 %v4128, %v4465
        %v4532 = vadd.f32 %v4129, %v4468
        %v4533 = vadd.f32 %v4130, %v4473
        %v4534 = vadd.f32 %v4131, %v4476
        %v4535 = vadd.f32 %v4132, %v4481
        %v4536 = vadd.f32 %v4133, %v4484
        %v4537 = vadd.f32 %v4134, %v4489
        %v4538 = vadd.f32 %v4135, %v4492
        %v4539 = vadd.f32 %v4136, %v4497
        %v4540 = vadd.f32 %v4137, %v4500
        %v4541 = vadd.f32 %v4138, %v4505
        %v4542 = vadd.f32 %v4139, %v4508
        %s4543 = scalar_lea.vmem [#allocation8], 192
        %v4544 = vld [vmem:[%s4543] sm:$0xf]
        %v4545 = vld [vmem:[%s4543 + $0x4] sm:$0xf]
        %v4546 = vld [vmem:[%s4543 + $0x8] sm:$0xf]
        %v4547 = vld [vmem:[%s4543 + $0xc] sm:$0xf]
        %v4548 = vld [vmem:[%s4543 + $0x10] sm:$0xf]
        %v4549 = vld [vmem:[%s4543 + $0x14] sm:$0xf]
        %v4550 = vld [vmem:[%s4543 + $0x18] sm:$0xf]
        %v4551 = vld [vmem:[%s4543 + $0x1c] sm:$0xf]
        %v4552 = vld [vmem:[%s4543 + $0x20] sm:$0xf]
        %v4553 = vld [vmem:[%s4543 + $0x24] sm:$0xf]
        %v4554 = vld [vmem:[%s4543 + $0x28] sm:$0xf]
        %v4555 = vld [vmem:[%s4543 + $0x2c] sm:$0xf]
        %v4556 = vld [vmem:[%s4543 + $0x30] sm:$0xf]
        %v4557 = vld [vmem:[%s4543 + $0x34] sm:$0xf]
        %v4558 = vld [vmem:[%s4543 + $0x38] sm:$0xf]
        %v4559 = vld [vmem:[%s4543 + $0x3c] sm:$0xf]
        %v4560 = vpack.c.b16 %v1072, %v1071
        %v4578 = vunpack.c.l.b16 %v4544
        %v4579 = vunpack.c.l.b16 %v4545
        %v4580 = vunpack.c.l.b16 %v4546
        %v4581 = vunpack.c.l.b16 %v4547
        %v4582 = vunpack.c.l.b16 %v4548
        %v4583 = vunpack.c.l.b16 %v4549
        %v4584 = vunpack.c.l.b16 %v4550
        %v4585 = vunpack.c.l.b16 %v4551
        %v4586 = vunpack.c.l.b16 %v4552
        %v4587 = vunpack.c.l.b16 %v4553
        %v4588 = vunpack.c.l.b16 %v4554
        %v4589 = vunpack.c.l.b16 %v4555
        %v4590 = vunpack.c.l.b16 %v4556
        %v4591 = vunpack.c.l.b16 %v4557
        %v4592 = vunpack.c.l.b16 %v4558
        %v4593 = vunpack.c.l.b16 %v4559
        %v4594 = vpack.c.b16 %v4579, %v4578
        %v4595 = vpack.c.b16 %v4581, %v4580
        %v4596 = vpack.c.b16 %v4583, %v4582
        %v4597 = vpack.c.b16 %v4585, %v4584
        %v4598 = vpack.c.b16 %v4587, %v4586
        %v4599 = vpack.c.b16 %v4589, %v4588
        %v4600 = vpack.c.b16 %v4591, %v4590
        %v4601 = vpack.c.b16 %v4593, %v4592
        %4610 = vmatprep.subr.bf16.mxu0 0
        %4611 = vmatpush1.bf16.msra.mxu0 %v4594
        %4612 = vmatprep.subr.bf16.mxu0 0
        %4613 = vmatpush1.bf16.msra.mxu0 %v4595
        %4614 = vmatprep.subr.bf16.mxu0 0
        %4615 = vmatpush1.bf16.msra.mxu0 %v4596
        %4616 = vmatprep.subr.bf16.mxu0 0
        %4617 = vmatpush1.bf16.msra.mxu0 %v4597
        %4618 = vmatprep.subr.bf16.mxu0 0
        %4619 = vmatpush1.bf16.msra.mxu0 %v4598
        %4620 = vmatprep.subr.bf16.mxu0 0
        %4621 = vmatpush1.bf16.msra.mxu0 %v4599
        %4622 = vmatprep.subr.bf16.mxu0 0
        %4623 = vmatpush1.bf16.msra.mxu0 %v4600
        %4624 = vmatprep.subr.bf16.mxu0 0
        %4625 = vmatpush1.bf16.msra.mxu0 %v4601
        %4626 = vmatprep.subr.bf16.mxu0 0
        %4627 = vmatpush1.bf16.msra.mxu0 0
        %4628 = vmatprep.subr.bf16.mxu0 0
        %4629 = vmatpush1.bf16.msra.mxu0 0
        %4630 = vmatprep.subr.bf16.mxu0 0
        %4631 = vmatpush1.bf16.msra.mxu0 0
        %4632 = vmatprep.subr.bf16.mxu0 0
        %4633 = vmatpush1.bf16.msra.mxu0 0
        %4634 = vmatprep.subr.bf16.mxu0 0
        %4635 = vmatpush1.bf16.msra.mxu0 0
        %4636 = vmatprep.subr.bf16.mxu0 0
        %4637 = vmatpush1.bf16.msra.mxu0 0
        %4638 = vmatprep.subr.bf16.mxu0 0
        %4639 = vmatpush1.bf16.msra.mxu0 0
        %4640 = vmatprep.subr.bf16.mxu0 0
        %4641 = vmatpush1.bf16.msra.mxu0 0
        %4642 = vmatprep.mubr.bf16.mxu0 0
        %4643 = vmatmul.mubr.bf16.gmra.mrb[0].mxu0 %v1164
        %v4644 = vpop.f32.mrb[0].mxu0
        %v4645 = vadd.f32 0.0, %v4644
        %v4646 = vpop.f32.mrb[0].mxu0
        %v4647 = vpop.f32.mrb[0].mxu0
        %v4648 = vadd.f32 0.0, %v4647
        %v4649 = vpop.f32.mrb[0].mxu0
        %4650 = vmatprep.mubr.bf16.mxu0 0
        %4651 = vmatmul.mubr.bf16.gmra.mrb[0].mxu0 %v1165
        %v4652 = vpop.f32.mrb[0].mxu0
        %v4653 = vadd.f32 0.0, %v4652
        %v4654 = vpop.f32.mrb[0].mxu0
        %v4655 = vpop.f32.mrb[0].mxu0
        %v4656 = vadd.f32 0.0, %v4655
        %v4657 = vpop.f32.mrb[0].mxu0
        %4658 = vmatprep.mubr.bf16.mxu0 0
        %4659 = vmatmul.mubr.bf16.gmra.mrb[0].mxu0 %v1166
        %v4660 = vpop.f32.mrb[0].mxu0
        %v4661 = vadd.f32 0.0, %v4660
        %v4662 = vpop.f32.mrb[0].mxu0
        %v4663 = vpop.f32.mrb[0].mxu0
        %v4664 = vadd.f32 0.0, %v4663
        %v4665 = vpop.f32.mrb[0].mxu0
        %4666 = vmatprep.mubr.bf16.mxu0 0
        %4667 = vmatmul.mubr.bf16.gmra.mrb[0].mxu0 %v1167
        %v4668 = vpop.f32.mrb[0].mxu0
        %v4669 = vadd.f32 0.0, %v4668
        %v4670 = vpop.f32.mrb[0].mxu0
        %v4671 = vpop.f32.mrb[0].mxu0
        %v4672 = vadd.f32 0.0, %v4671
        %v4673 = vpop.f32.mrb[0].mxu0
        %4674 = vmatprep.mubr.bf16.mxu0 0
        %4675 = vmatmul.mubr.bf16.gmra.mrb[0].mxu0 %v1168
        %v4676 = vpop.f32.mrb[0].mxu0
        %v4677 = vadd.f32 0.0, %v4676
        %v4678 = vpop.f32.mrb[0].mxu0
        %v4679 = vpop.f32.mrb[0].mxu0
        %v4680 = vadd.f32 0.0, %v4679
        %v4681 = vpop.f32.mrb[0].mxu0
        %4682 = vmatprep.mubr.bf16.mxu0 0
        %4683 = vmatmul.mubr.bf16.gmra.mrb[0].mxu0 %v1169
        %v4684 = vpop.f32.mrb[0].mxu0
        %v4685 = vadd.f32 0.0, %v4684
        %v4686 = vpop.f32.mrb[0].mxu0
        %v4687 = vpop.f32.mrb[0].mxu0
        %v4688 = vadd.f32 0.0, %v4687
        %v4689 = vpop.f32.mrb[0].mxu0
        %4690 = vmatprep.mubr.bf16.mxu0 0
        %4691 = vmatmul.mubr.bf16.gmra.mrb[0].mxu0 %v1170
        %v4692 = vpop.f32.mrb[0].mxu0
        %v4693 = vadd.f32 0.0, %v4692
        %v4694 = vpop.f32.mrb[0].mxu0
        %v4695 = vpop.f32.mrb[0].mxu0
        %v4696 = vadd.f32 0.0, %v4695
        %v4697 = vpop.f32.mrb[0].mxu0
        %4698 = vmatprep.mubr.bf16.mxu0 0
        %4699 = vmatmul.mubr.bf16.gmra.mrb[0].mxu0 %v1171
        %v4700 = vpop.f32.mrb[0].mxu0
        %v4701 = vadd.f32 0.0, %v4700
        %v4702 = vpop.f32.mrb[0].mxu0
        %v4703 = vpop.f32.mrb[0].mxu0
        %v4704 = vadd.f32 0.0, %v4703
        %v4705 = vpop.f32.mrb[0].mxu0
        %4706 = vmatprep.mubr.bf16.mxu0 0
        %4707 = vmatmul.mubr.bf16.gmra.mrb[0].mxu0 %v1172
        %v4708 = vpop.f32.mrb[0].mxu0
        %v4709 = vadd.f32 0.0, %v4708
        %v4710 = vpop.f32.mrb[0].mxu0
        %v4711 = vpop.f32.mrb[0].mxu0
        %v4712 = vadd.f32 0.0, %v4711
        %v4713 = vpop.f32.mrb[0].mxu0
        %4714 = vmatprep.mubr.bf16.mxu0 0
        %4715 = vmatmul.mubr.bf16.gmra.mrb[0].mxu0 %v1173
        %v4716 = vpop.f32.mrb[0].mxu0
        %v4717 = vadd.f32 0.0, %v4716
        %v4718 = vpop.f32.mrb[0].mxu0
        %v4719 = vpop.f32.mrb[0].mxu0
        %v4720 = vadd.f32 0.0, %v4719
        %v4721 = vpop.f32.mrb[0].mxu0
        %4722 = vmatprep.mubr.bf16.mxu0 0
        %4723 = vmatmul.mubr.bf16.gmra.mrb[0].mxu0 %v1174
        %v4724 = vpop.f32.mrb[0].mxu0
        %v4725 = vadd.f32 0.0, %v4724
        %v4726 = vpop.f32.mrb[0].mxu0
        %v4727 = vpop.f32.mrb[0].mxu0
        %v4728 = vadd.f32 0.0, %v4727
        %v4729 = vpop.f32.mrb[0].mxu0
        %4730 = vmatprep.mubr.bf16.mxu0 0
        %4731 = vmatmul.mubr.bf16.gmra.mrb[0].mxu0 %v1175
        %v4732 = vpop.f32.mrb[0].mxu0
        %v4733 = vadd.f32 0.0, %v4732
        %v4734 = vpop.f32.mrb[0].mxu0
        %v4735 = vpop.f32.mrb[0].mxu0
        %v4736 = vadd.f32 0.0, %v4735
        %v4737 = vpop.f32.mrb[0].mxu0
        %4738 = vmatprep.mubr.bf16.mxu0 0
        %4739 = vmatmul.mubr.bf16.gmra.mrb[0].mxu0 %v1176
        %v4740 = vpop.f32.mrb[0].mxu0
        %v4741 = vadd.f32 0.0, %v4740
        %v4742 = vpop.f32.mrb[0].mxu0
        %v4743 = vpop.f32.mrb[0].mxu0
        %v4744 = vadd.f32 0.0, %v4743
        %v4745 = vpop.f32.mrb[0].mxu0
        %4746 = vmatprep.mubr.bf16.mxu0 0
        %4747 = vmatmul.mubr.bf16.gmra.mrb[0].mxu0 %v1177
        %v4748 = vpop.f32.mrb[0].mxu0
        %v4749 = vadd.f32 0.0, %v4748
        %v4750 = vpop.f32.mrb[0].mxu0
        %v4751 = vpop.f32.mrb[0].mxu0
        %v4752 = vadd.f32 0.0, %v4751
        %v4753 = vpop.f32.mrb[0].mxu0
        %4754 = vmatprep.mubr.bf16.mxu0 0
        %4755 = vmatmul.mubr.bf16.gmra.mrb[0].mxu0 %v1178
        %v4756 = vpop.f32.mrb[0].mxu0
        %v4757 = vadd.f32 0.0, %v4756
        %v4758 = vpop.f32.mrb[0].mxu0
        %v4759 = vpop.f32.mrb[0].mxu0
        %v4760 = vadd.f32 0.0, %v4759
        %v4761 = vpop.f32.mrb[0].mxu0
        %4762 = vmatprep.mubr.bf16.mxu0 0
        %4763 = vmatmul.mubr.bf16.gmra.mrb[0].mxu0 %v4560
        %v4764 = vpop.f32.mrb[0].mxu0
        %v4765 = vadd.f32 0.0, %v4764
        %v4766 = vpop.f32.mrb[0].mxu0
        %v4767 = vpop.f32.mrb[0].mxu0
        %v4768 = vadd.f32 0.0, %v4767
        %v4769 = vpop.f32.mrb[0].mxu0
        %4770 = vdwg.mxu0
        %v4771 = vadd.f32 %v4511, %v4645
        %v4772 = vadd.f32 %v4512, %v4648
        %v4773 = vadd.f32 %v4513, %v4653
        %v4774 = vadd.f32 %v4514, %v4656
        %v4775 = vadd.f32 %v4515, %v4661
        %v4776 = vadd.f32 %v4516, %v4664
        %v4777 = vadd.f32 %v4517, %v4669
        %v4778 = vadd.f32 %v4518, %v4672
        %v4779 = vadd.f32 %v4519, %v4677
        %v4780 = vadd.f32 %v4520, %v4680
        %v4781 = vadd.f32 %v4521, %v4685
        %v4782 = vadd.f32 %v4522, %v4688
        %v4783 = vadd.f32 %v4523, %v4693
        %v4784 = vadd.f32 %v4524, %v4696
        %v4785 = vadd.f32 %v4525, %v4701
        %v4786 = vadd.f32 %v4526, %v4704
        %v4787 = vadd.f32 %v4527, %v4709
        %v4788 = vadd.f32 %v4528, %v4712
        %v4789 = vadd.f32 %v4529, %v4717
        %v4790 = vadd.f32 %v4530, %v4720
        %v4791 = vadd.f32 %v4531, %v4725
        %v4792 = vadd.f32 %v4532, %v4728
        %v4793 = vadd.f32 %v4533, %v4733
        %v4794 = vadd.f32 %v4534, %v4736
        %v4795 = vadd.f32 %v4535, %v4741
        %v4796 = vadd.f32 %v4536, %v4744
        %v4797 = vadd.f32 %v4537, %v4749
        %v4798 = vadd.f32 %v4538, %v4752
        %v4799 = vadd.f32 %v4539, %v4757
        %v4800 = vadd.f32 %v4540, %v4760
        %v4801 = vadd.f32 %v4541, %v4765
        %v4802 = vadd.f32 %v4542, %v4768
        %v4803 = vadd.f32 %v4253, %v715
        %v4804 = vadd.f32 %v4254, %v721
        %v4805 = vadd.f32 %v4255, %v731
        %v4806 = vadd.f32 %v4256, %v735
        %v4807 = vadd.f32 %v4257, %v745
        %v4808 = vadd.f32 %v4258, %v751
        %v4809 = vadd.f32 %v4259, %v761
        %v4810 = vadd.f32 %v4260, %v765
        %v4811 = vadd.f32 %v4261, %v775
        %v4812 = vadd.f32 %v4262, %v781
        %v4813 = vadd.f32 %v4263, %v791
        %v4814 = vadd.f32 %v4264, %v795
        %v4815 = vadd.f32 %v4265, %v805
        %v4816 = vadd.f32 %v4266, %v811
        %v4817 = vadd.f32 %v4267, %v821
        %v4818 = vadd.f32 %v4268, %v825
        %v4819 = vadd.f32 %v4269, %v835
        %v4820 = vadd.f32 %v4270, %v841
        %v4821 = vadd.f32 %v4271, %v851
        %v4822 = vadd.f32 %v4272, %v855
        %v4823 = vadd.f32 %v4273, %v865
        %v4824 = vadd.f32 %v4274, %v871
        %v4825 = vadd.f32 %v4275, %v881
        %v4826 = vadd.f32 %v4276, %v885
        %v4827 = vadd.f32 %v4277, %v895
        %v4828 = vadd.f32 %v4278, %v901
        %v4829 = vadd.f32 %v4279, %v911
        %v4830 = vadd.f32 %v4280, %v915
        %v4831 = vadd.f32 %v4281, %v925
        %v4832 = vadd.f32 %v4282, %v931
        %v4833 = vadd.f32 %v4283, %v941
        %v4834 = vadd.f32 %v4284, %v945
        %v4836 = vshrl.u32 %v390, 16
        %v4838 = vrot.slane %v4836, 4
        %v4839 = vshll.u32 %v390, 16
        %v4841 = vrot.slane %v4839, 5
        %v4842 = vor.u32 %v4838, %v4841
        %v4843 = vrot.slane %v4842, 4
        %v4845 = vshll.u32 %v391, 16
        %v4847 = vrot.slane %v4845, 5
        %v4848 = vsel %vm1663, %v4843, %v4847
        %v4849 = vshrl.u32 %v391, 16
        %v4851 = vrot.slane %v4849, 4
        %v4852 = vor.u32 %v4851, %v4847
        %v4853 = vrot.slane %v4852, 4
        %v4855 = vshll.u32 %v392, 16
        %v4857 = vrot.slane %v4855, 5
        %v4858 = vsel %vm1663, %v4853, %v4857
        %s4859 = scalar_lea.vmem [#allocation7], 256
        %v4860 = vld [vmem:[%s4859] sm:$0xf]
        %v4861 = vld [vmem:[%s4859 + $0x4] sm:$0xf]
        %v4862 = vld [vmem:[%s4859 + $0x8] sm:$0xf]
        %v4863 = vld [vmem:[%s4859 + $0xc] sm:$0xf]
        %v4864 = vld [vmem:[%s4859 + $0x10] sm:$0xf]
        %v4865 = vld [vmem:[%s4859 + $0x14] sm:$0xf]
        %v4866 = vld [vmem:[%s4859 + $0x18] sm:$0xf]
        %v4867 = vld [vmem:[%s4859 + $0x1c] sm:$0xf]
        %v4868 = vld [vmem:[%s4859 + $0x20] sm:$0xf]
        %v4869 = vld [vmem:[%s4859 + $0x24] sm:$0xf]
        %v4870 = vld [vmem:[%s4859 + $0x28] sm:$0xf]
        %v4871 = vld [vmem:[%s4859 + $0x2c] sm:$0xf]
        %v4872 = vld [vmem:[%s4859 + $0x30] sm:$0xf]
        %v4873 = vld [vmem:[%s4859 + $0x34] sm:$0xf]
        %v4874 = vld [vmem:[%s4859 + $0x38] sm:$0xf]
        %v4875 = vld [vmem:[%s4859 + $0x3c] sm:$0xf]
        %v4876 = vunpack.c.l.b16 %v4848
        %v4877 = vunpack.c.l.b16 %v4858
        %v4878 = vpack.c.b16 %v4877, %v4876
        %v4896 = vunpack.c.l.b16 %v4860
        %v4897 = vunpack.c.l.b16 %v4861
        %v4898 = vunpack.c.l.b16 %v4862
        %v4899 = vunpack.c.l.b16 %v4863
        %v4900 = vunpack.c.l.b16 %v4864
        %v4901 = vunpack.c.l.b16 %v4865
        %v4902 = vunpack.c.l.b16 %v4866
        %v4903 = vunpack.c.l.b16 %v4867
        %v4904 = vunpack.c.l.b16 %v4868
        %v4905 = vunpack.c.l.b16 %v4869
        %v4906 = vunpack.c.l.b16 %v4870
        %v4907 = vunpack.c.l.b16 %v4871
        %v4908 = vunpack.c.l.b16 %v4872
        %v4909 = vunpack.c.l.b16 %v4873
        %v4910 = vunpack.c.l.b16 %v4874
        %v4911 = vunpack.c.l.b16 %v4875
        %v4912 = vpack.c.b16 %v4897, %v4896
        %v4913 = vpack.c.b16 %v4899, %v4898
        %v4914 = vpack.c.b16 %v4901, %v4900
        %v4915 = vpack.c.b16 %v4903, %v4902
        %v4916 = vpack.c.b16 %v4905, %v4904
        %v4917 = vpack.c.b16 %v4907, %v4906
        %v4918 = vpack.c.b16 %v4909, %v4908
        %v4919 = vpack.c.b16 %v4911, %v4910
        %4928 = vmatprep.subr.bf16.mxu0 0
        %4929 = vmatpush1.bf16.msra.mxu0 %v4912
        %4930 = vmatprep.subr.bf16.mxu0 0
        %4931 = vmatpush1.bf16.msra.mxu0 %v4913
        %4932 = vmatprep.subr.bf16.mxu0 0
        %4933 = vmatpush1.bf16.msra.mxu0 %v4914
        %4934 = vmatprep.subr.bf16.mxu0 0
        %4935 = vmatpush1.bf16.msra.mxu0 %v4915
        %4936 = vmatprep.subr.bf16.mxu0 0
        %4937 = vmatpush1.bf16.msra.mxu0 %v4916
        %4938 = vmatprep.subr.bf16.mxu0 0
        %4939 = vmatpush1.bf16.msra.mxu0 %v4917
        %4940 = vmatprep.subr.bf16.mxu0 0
        %4941 = vmatpush1.bf16.msra.mxu0 %v4918
        %4942 = vmatprep.subr.bf16.mxu0 0
        %4943 = vmatpush1.bf16.msra.mxu0 %v4919
        %4944 = vmatprep.subr.bf16.mxu0 0
        %4945 = vmatpush1.bf16.msra.mxu0 0
        %4946 = vmatprep.subr.bf16.mxu0 0
        %4947 = vmatpush1.bf16.msra.mxu0 0
        %4948 = vmatprep.subr.bf16.mxu0 0
        %4949 = vmatpush1.bf16.msra.mxu0 0
        %4950 = vmatprep.subr.bf16.mxu0 0
        %4951 = vmatpush1.bf16.msra.mxu0 0
        %4952 = vmatprep.subr.bf16.mxu0 0
        %4953 = vmatpush1.bf16.msra.mxu0 0
        %4954 = vmatprep.subr.bf16.mxu0 0
        %4955 = vmatpush1.bf16.msra.mxu0 0
        %4956 = vmatprep.subr.bf16.mxu0 0
        %4957 = vmatpush1.bf16.msra.mxu0 0
        %4958 = vmatprep.subr.bf16.mxu0 0
        %4959 = vmatpush1.bf16.msra.mxu0 0
        %4960 = vmatprep.mubr.bf16.mxu0 0
        %4961 = vmatmul.mubr.bf16.gmra.mrb[0].mxu0 %v2098
        %v4962 = vpop.f32.mrb[0].mxu0
        %v4963 = vadd.f32 0.0, %v4962
        %v4964 = vpop.f32.mrb[0].mxu0
        %v4965 = vpop.f32.mrb[0].mxu0
        %v4966 = vadd.f32 0.0, %v4965
        %v4967 = vpop.f32.mrb[0].mxu0
        %4968 = vmatprep.mubr.bf16.mxu0 0
        %4969 = vmatmul.mubr.bf16.gmra.mrb[0].mxu0 %v2099
        %v4970 = vpop.f32.mrb[0].mxu0
        %v4971 = vadd.f32 0.0, %v4970
        %v4972 = vpop.f32.mrb[0].mxu0
        %v4973 = vpop.f32.mrb[0].mxu0
        %v4974 = vadd.f32 0.0, %v4973
        %v4975 = vpop.f32.mrb[0].mxu0
        %4976 = vmatprep.mubr.bf16.mxu0 0
        %4977 = vmatmul.mubr.bf16.gmra.mrb[0].mxu0 %v2100
        %v4978 = vpop.f32.mrb[0].mxu0
        %v4979 = vadd.f32 0.0, %v4978
        %v4980 = vpop.f32.mrb[0].mxu0
        %v4981 = vpop.f32.mrb[0].mxu0
        %v4982 = vadd.f32 0.0, %v4981
        %v4983 = vpop.f32.mrb[0].mxu0
        %4984 = vmatprep.mubr.bf16.mxu0 0
        %4985 = vmatmul.mubr.bf16.gmra.mrb[0].mxu0 %v2101
        %v4986 = vpop.f32.mrb[0].mxu0
        %v4987 = vadd.f32 0.0, %v4986
        %v4988 = vpop.f32.mrb[0].mxu0
        %v4989 = vpop.f32.mrb[0].mxu0
        %v4990 = vadd.f32 0.0, %v4989
        %v4991 = vpop.f32.mrb[0].mxu0
        %4992 = vmatprep.mubr.bf16.mxu0 0
        %4993 = vmatmul.mubr.bf16.gmra.mrb[0].mxu0 %v2102
        %v4994 = vpop.f32.mrb[0].mxu0
        %v4995 = vadd.f32 0.0, %v4994
        %v4996 = vpop.f32.mrb[0].mxu0
        %v4997 = vpop.f32.mrb[0].mxu0
        %v4998 = vadd.f32 0.0, %v4997
        %v4999 = vpop.f32.mrb[0].mxu0
        %5000 = vmatprep.mubr.bf16.mxu0 0
        %5001 = vmatmul.mubr.bf16.gmra.mrb[0].mxu0 %v2103
        %v5002 = vpop.f32.mrb[0].mxu0
        %v5003 = vadd.f32 0.0, %v5002
        %v5004 = vpop.f32.mrb[0].mxu0
        %v5005 = vpop.f32.mrb[0].mxu0
        %v5006 = vadd.f32 0.0, %v5005
        %v5007 = vpop.f32.mrb[0].mxu0
        %5008 = vmatprep.mubr.bf16.mxu0 0
        %5009 = vmatmul.mubr.bf16.gmra.mrb[0].mxu0 %v2104
        %v5010 = vpop.f32.mrb[0].mxu0
        %v5011 = vadd.f32 0.0, %v5010
        %v5012 = vpop.f32.mrb[0].mxu0
        %v5013 = vpop.f32.mrb[0].mxu0
        %v5014 = vadd.f32 0.0, %v5013
        %v5015 = vpop.f32.mrb[0].mxu0
        %5016 = vmatprep.mubr.bf16.mxu0 0
        %5017 = vmatmul.mubr.bf16.gmra.mrb[0].mxu0 %v2105
        %v5018 = vpop.f32.mrb[0].mxu0
        %v5019 = vadd.f32 0.0, %v5018
        %v5020 = vpop.f32.mrb[0].mxu0
        %v5021 = vpop.f32.mrb[0].mxu0
        %v5022 = vadd.f32 0.0, %v5021
        %v5023 = vpop.f32.mrb[0].mxu0
        %5024 = vmatprep.mubr.bf16.mxu0 0
        %5025 = vmatmul.mubr.bf16.gmra.mrb[0].mxu0 %v2106
        %v5026 = vpop.f32.mrb[0].mxu0
        %v5027 = vadd.f32 0.0, %v5026
        %v5028 = vpop.f32.mrb[0].mxu0
        %v5029 = vpop.f32.mrb[0].mxu0
        %v5030 = vadd.f32 0.0, %v5029
        %v5031 = vpop.f32.mrb[0].mxu0
        %5032 = vmatprep.mubr.bf16.mxu0 0
        %5033 = vmatmul.mubr.bf16.gmra.mrb[0].mxu0 %v2107
        %v5034 = vpop.f32.mrb[0].mxu0
        %v5035 = vadd.f32 0.0, %v5034
        %v5036 = vpop.f32.mrb[0].mxu0
        %v5037 = vpop.f32.mrb[0].mxu0
        %v5038 = vadd.f32 0.0, %v5037
        %v5039 = vpop.f32.mrb[0].mxu0
        %5040 = vmatprep.mubr.bf16.mxu0 0
        %5041 = vmatmul.mubr.bf16.gmra.mrb[0].mxu0 %v2108
        %v5042 = vpop.f32.mrb[0].mxu0
        %v5043 = vadd.f32 0.0, %v5042
        %v5044 = vpop.f32.mrb[0].mxu0
        %v5045 = vpop.f32.mrb[0].mxu0
        %v5046 = vadd.f32 0.0, %v5045
        %v5047 = vpop.f32.mrb[0].mxu0
        %5048 = vmatprep.mubr.bf16.mxu0 0
        %5049 = vmatmul.mubr.bf16.gmra.mrb[0].mxu0 %v2109
        %v5050 = vpop.f32.mrb[0].mxu0
        %v5051 = vadd.f32 0.0, %v5050
        %v5052 = vpop.f32.mrb[0].mxu0
        %v5053 = vpop.f32.mrb[0].mxu0
        %v5054 = vadd.f32 0.0, %v5053
        %v5055 = vpop.f32.mrb[0].mxu0
        %5056 = vmatprep.mubr.bf16.mxu0 0
        %5057 = vmatmul.mubr.bf16.gmra.mrb[0].mxu0 %v2110
        %v5058 = vpop.f32.mrb[0].mxu0
        %v5059 = vadd.f32 0.0, %v5058
        %v5060 = vpop.f32.mrb[0].mxu0
        %v5061 = vpop.f32.mrb[0].mxu0
        %v5062 = vadd.f32 0.0, %v5061
        %v5063 = vpop.f32.mrb[0].mxu0
        %5064 = vmatprep.mubr.bf16.mxu0 0
        %5065 = vmatmul.mubr.bf16.gmra.mrb[0].mxu0 %v2111
        %v5066 = vpop.f32.mrb[0].mxu0
        %v5067 = vadd.f32 0.0, %v5066
        %v5068 = vpop.f32.mrb[0].mxu0
        %v5069 = vpop.f32.mrb[0].mxu0
        %v5070 = vadd.f32 0.0, %v5069
        %v5071 = vpop.f32.mrb[0].mxu0
        %5072 = vmatprep.mubr.bf16.mxu0 0
        %5073 = vmatmul.mubr.bf16.gmra.mrb[0].mxu0 %v2112
        %v5074 = vpop.f32.mrb[0].mxu0
        %v5075 = vadd.f32 0.0, %v5074
        %v5076 = vpop.f32.mrb[0].mxu0
        %v5077 = vpop.f32.mrb[0].mxu0
        %v5078 = vadd.f32 0.0, %v5077
        %v5079 = vpop.f32.mrb[0].mxu0
        %5080 = vmatprep.mubr.bf16.mxu0 0
        %5081 = vmatmul.mubr.bf16.gmra.mrb[0].mxu0 %v4878
        %v5082 = vpop.f32.mrb[0].mxu0
        %v5083 = vadd.f32 0.0, %v5082
        %v5084 = vpop.f32.mrb[0].mxu0
        %v5085 = vpop.f32.mrb[0].mxu0
        %v5086 = vadd.f32 0.0, %v5085
        %v5087 = vpop.f32.mrb[0].mxu0
        %5088 = vdwg.mxu0
        %v5089 = vadd.f32 %v4771, %v4963
        %v5090 = vadd.f32 %v4772, %v4966
        %v5091 = vadd.f32 %v4773, %v4971
        %v5092 = vadd.f32 %v4774, %v4974
        %v5093 = vadd.f32 %v4775, %v4979
        %v5094 = vadd.f32 %v4776, %v4982
        %v5095 = vadd.f32 %v4777, %v4987
        %v5096 = vadd.f32 %v4778, %v4990
        %v5097 = vadd.f32 %v4779, %v4995
        %v5098 = vadd.f32 %v4780, %v4998
        %v5099 = vadd.f32 %v4781, %v5003
        %v5100 = vadd.f32 %v4782, %v5006
        %v5101 = vadd.f32 %v4783, %v5011
        %v5102 = vadd.f32 %v4784, %v5014
        %v5103 = vadd.f32 %v4785, %v5019
        %v5104 = vadd.f32 %v4786, %v5022
        %v5105 = vadd.f32 %v4787, %v5027
        %v5106 = vadd.f32 %v4788, %v5030
        %v5107 = vadd.f32 %v4789, %v5035
        %v5108 = vadd.f32 %v4790, %v5038
        %v5109 = vadd.f32 %v4791, %v5043
        %v5110 = vadd.f32 %v4792, %v5046
        %v5111 = vadd.f32 %v4793, %v5051
        %v5112 = vadd.f32 %v4794, %v5054
        %v5113 = vadd.f32 %v4795, %v5059
        %v5114 = vadd.f32 %v4796, %v5062
        %v5115 = vadd.f32 %v4797, %v5067
        %v5116 = vadd.f32 %v4798, %v5070
        %v5117 = vadd.f32 %v4799, %v5075
        %v5118 = vadd.f32 %v4800, %v5078
        %v5119 = vadd.f32 %v4801, %v5083
        %v5120 = vadd.f32 %v4802, %v5086
        %v5122 = vshrl.u32 %v1125, 16
        %v5124 = vrot.slane %v5122, 4
        %v5125 = vshll.u32 %v1125, 16
        %v5127 = vrot.slane %v5125, 5
        %v5128 = vor.u32 %v5124, %v5127
        %v5129 = vrot.slane %v5128, 4
        %v5131 = vshll.u32 %v1126, 16
        %v5133 = vrot.slane %v5131, 5
        %v5134 = vsel %vm1663, %v5129, %v5133
        %v5135 = vshrl.u32 %v1126, 16
        %v5137 = vrot.slane %v5135, 4
        %v5138 = vor.u32 %v5137, %v5133
        %v5139 = vrot.slane %v5138, 4
        %v5141 = vshll.u32 %v1127, 16
        %v5143 = vrot.slane %v5141, 5
        %v5144 = vsel %vm1663, %v5139, %v5143
        %s5145 = scalar_lea.vmem [#allocation8], 256
        %v5146 = vld [vmem:[%s5145] sm:$0xf]
        %v5147 = vld [vmem:[%s5145 + $0x4] sm:$0xf]
        %v5148 = vld [vmem:[%s5145 + $0x8] sm:$0xf]
        %v5149 = vld [vmem:[%s5145 + $0xc] sm:$0xf]
        %v5150 = vld [vmem:[%s5145 + $0x10] sm:$0xf]
        %v5151 = vld [vmem:[%s5145 + $0x14] sm:$0xf]
        %v5152 = vld [vmem:[%s5145 + $0x18] sm:$0xf]
        %v5153 = vld [vmem:[%s5145 + $0x1c] sm:$0xf]
        %v5154 = vld [vmem:[%s5145 + $0x20] sm:$0xf]
        %v5155 = vld [vmem:[%s5145 + $0x24] sm:$0xf]
        %v5156 = vld [vmem:[%s5145 + $0x28] sm:$0xf]
        %v5157 = vld [vmem:[%s5145 + $0x2c] sm:$0xf]
        %v5158 = vld [vmem:[%s5145 + $0x30] sm:$0xf]
        %v5159 = vld [vmem:[%s5145 + $0x34] sm:$0xf]
        %v5160 = vld [vmem:[%s5145 + $0x38] sm:$0xf]
        %v5161 = vld [vmem:[%s5145 + $0x3c] sm:$0xf]
        %v5162 = vunpack.c.l.b16 %v5134
        %v5163 = vunpack.c.l.b16 %v5144
        %v5164 = vpack.c.b16 %v5163, %v5162
        %v5182 = vunpack.c.l.b16 %v5146
        %v5183 = vunpack.c.l.b16 %v5147
        %v5184 = vunpack.c.l.b16 %v5148
        %v5185 = vunpack.c.l.b16 %v5149
        %v5186 = vunpack.c.l.b16 %v5150
        %v5187 = vunpack.c.l.b16 %v5151
        %v5188 = vunpack.c.l.b16 %v5152
        %v5189 = vunpack.c.l.b16 %v5153
        %v5190 = vunpack.c.l.b16 %v5154
        %v5191 = vunpack.c.l.b16 %v5155
        %v5192 = vunpack.c.l.b16 %v5156
        %v5193 = vunpack.c.l.b16 %v5157
        %v5194 = vunpack.c.l.b16 %v5158
        %v5195 = vunpack.c.l.b16 %v5159
        %v5196 = vunpack.c.l.b16 %v5160
        %v5197 = vunpack.c.l.b16 %v5161
        %v5198 = vpack.c.b16 %v5183, %v5182
        %v5199 = vpack.c.b16 %v5185, %v5184
        %v5200 = vpack.c.b16 %v5187, %v5186
        %v5201 = vpack.c.b16 %v5189, %v5188
        %v5202 = vpack.c.b16 %v5191, %v5190
        %v5203 = vpack.c.b16 %v5193, %v5192
        %v5204 = vpack.c.b16 %v5195, %v5194
        %v5205 = vpack.c.b16 %v5197, %v5196
        %5214 = vmatprep.subr.bf16.mxu0 0
        %5215 = vmatpush1.bf16.msra.mxu0 %v5198
        %5216 = vmatprep.subr.bf16.mxu0 0
        %5217 = vmatpush1.bf16.msra.mxu0 %v5199
        %5218 = vmatprep.subr.bf16.mxu0 0
        %5219 = vmatpush1.bf16.msra.mxu0 %v5200
        %5220 = vmatprep.subr.bf16.mxu0 0
        %5221 = vmatpush1.bf16.msra.mxu0 %v5201
        %5222 = vmatprep.subr.bf16.mxu0 0
        %5223 = vmatpush1.bf16.msra.mxu0 %v5202
        %5224 = vmatprep.subr.bf16.mxu0 0
        %5225 = vmatpush1.bf16.msra.mxu0 %v5203
        %5226 = vmatprep.subr.bf16.mxu0 0
        %5227 = vmatpush1.bf16.msra.mxu0 %v5204
        %5228 = vmatprep.subr.bf16.mxu0 0
        %5229 = vmatpush1.bf16.msra.mxu0 %v5205
        %5230 = vmatprep.subr.bf16.mxu0 0
        %5231 = vmatpush1.bf16.msra.mxu0 0
        %5232 = vmatprep.subr.bf16.mxu0 0
        %5233 = vmatpush1.bf16.msra.mxu0 0
        %5234 = vmatprep.subr.bf16.mxu0 0
        %5235 = vmatpush1.bf16.msra.mxu0 0
        %5236 = vmatprep.subr.bf16.mxu0 0
        %5237 = vmatpush1.bf16.msra.mxu0 0
        %5238 = vmatprep.subr.bf16.mxu0 0
        %5239 = vmatpush1.bf16.msra.mxu0 0
        %5240 = vmatprep.subr.bf16.mxu0 0
        %5241 = vmatpush1.bf16.msra.mxu0 0
        %5242 = vmatprep.subr.bf16.mxu0 0
        %5243 = vmatpush1.bf16.msra.mxu0 0
        %5244 = vmatprep.subr.bf16.mxu0 0
        %5245 = vmatpush1.bf16.msra.mxu0 0
        %5246 = vmatprep.mubr.bf16.mxu0 0
        %5247 = vmatmul.mubr.bf16.gmra.mrb[0].mxu0 %v2804
        %v5248 = vpop.f32.mrb[0].mxu0
        %v5249 = vadd.f32 0.0, %v5248
        %v5250 = vpop.f32.mrb[0].mxu0
        %v5251 = vpop.f32.mrb[0].mxu0
        %v5252 = vadd.f32 0.0, %v5251
        %v5253 = vpop.f32.mrb[0].mxu0
        %5254 = vmatprep.mubr.bf16.mxu0 0
        %5255 = vmatmul.mubr.bf16.gmra.mrb[0].mxu0 %v2805
        %v5256 = vpop.f32.mrb[0].mxu0
        %v5257 = vadd.f32 0.0, %v5256
        %v5258 = vpop.f32.mrb[0].mxu0
        %v5259 = vpop.f32.mrb[0].mxu0
        %v5260 = vadd.f32 0.0, %v5259
        %v5261 = vpop.f32.mrb[0].mxu0
        %5262 = vmatprep.mubr.bf16.mxu0 0
        %5263 = vmatmul.mubr.bf16.gmra.mrb[0].mxu0 %v2806
        %v5264 = vpop.f32.mrb[0].mxu0
        %v5265 = vadd.f32 0.0, %v5264
        %v5266 = vpop.f32.mrb[0].mxu0
        %v5267 = vpop.f32.mrb[0].mxu0
        %v5268 = vadd.f32 0.0, %v5267
        %v5269 = vpop.f32.mrb[0].mxu0
        %5270 = vmatprep.mubr.bf16.mxu0 0
        %5271 = vmatmul.mubr.bf16.gmra.mrb[0].mxu0 %v2807
        %v5272 = vpop.f32.mrb[0].mxu0
        %v5273 = vadd.f32 0.0, %v5272
        %v5274 = vpop.f32.mrb[0].mxu0
        %v5275 = vpop.f32.mrb[0].mxu0
        %v5276 = vadd.f32 0.0, %v5275
        %v5277 = vpop.f32.mrb[0].mxu0
        %5278 = vmatprep.mubr.bf16.mxu0 0
        %5279 = vmatmul.mubr.bf16.gmra.mrb[0].mxu0 %v2808
        %v5280 = vpop.f32.mrb[0].mxu0
        %v5281 = vadd.f32 0.0, %v5280
        %v5282 = vpop.f32.mrb[0].mxu0
        %v5283 = vpop.f32.mrb[0].mxu0
        %v5284 = vadd.f32 0.0, %v5283
        %v5285 = vpop.f32.mrb[0].mxu0
        %5286 = vmatprep.mubr.bf16.mxu0 0
        %5287 = vmatmul.mubr.bf16.gmra.mrb[0].mxu0 %v2809
        %v5288 = vpop.f32.mrb[0].mxu0
        %v5289 = vadd.f32 0.0, %v5288
        %v5290 = vpop.f32.mrb[0].mxu0
        %v5291 = vpop.f32.mrb[0].mxu0
        %v5292 = vadd.f32 0.0, %v5291
        %v5293 = vpop.f32.mrb[0].mxu0
        %5294 = vmatprep.mubr.bf16.mxu0 0
        %5295 = vmatmul.mubr.bf16.gmra.mrb[0].mxu0 %v2810
        %v5296 = vpop.f32.mrb[0].mxu0
        %v5297 = vadd.f32 0.0, %v5296
        %v5298 = vpop.f32.mrb[0].mxu0
        %v5299 = vpop.f32.mrb[0].mxu0
        %v5300 = vadd.f32 0.0, %v5299
        %v5301 = vpop.f32.mrb[0].mxu0
        %5302 = vmatprep.mubr.bf16.mxu0 0
        %5303 = vmatmul.mubr.bf16.gmra.mrb[0].mxu0 %v2811
        %v5304 = vpop.f32.mrb[0].mxu0
        %v5305 = vadd.f32 0.0, %v5304
        %v5306 = vpop.f32.mrb[0].mxu0
        %v5307 = vpop.f32.mrb[0].mxu0
        %v5308 = vadd.f32 0.0, %v5307
        %v5309 = vpop.f32.mrb[0].mxu0
        %5310 = vmatprep.mubr.bf16.mxu0 0
        %5311 = vmatmul.mubr.bf16.gmra.mrb[0].mxu0 %v2812
        %v5312 = vpop.f32.mrb[0].mxu0
        %v5313 = vadd.f32 0.0, %v5312
        %v5314 = vpop.f32.mrb[0].mxu0
        %v5315 = vpop.f32.mrb[0].mxu0
        %v5316 = vadd.f32 0.0, %v5315
        %v5317 = vpop.f32.mrb[0].mxu0
        %5318 = vmatprep.mubr.bf16.mxu0 0
        %5319 = vmatmul.mubr.bf16.gmra.mrb[0].mxu0 %v2813
        %v5320 = vpop.f32.mrb[0].mxu0
        %v5321 = vadd.f32 0.0, %v5320
        %v5322 = vpop.f32.mrb[0].mxu0
        %v5323 = vpop.f32.mrb[0].mxu0
        %v5324 = vadd.f32 0.0, %v5323
        %v5325 = vpop.f32.mrb[0].mxu0
        %5326 = vmatprep.mubr.bf16.mxu0 0
        %5327 = vmatmul.mubr.bf16.gmra.mrb[0].mxu0 %v2814
        %v5328 = vpop.f32.mrb[0].mxu0
        %v5329 = vadd.f32 0.0, %v5328
        %v5330 = vpop.f32.mrb[0].mxu0
        %v5331 = vpop.f32.mrb[0].mxu0
        %v5332 = vadd.f32 0.0, %v5331
        %v5333 = vpop.f32.mrb[0].mxu0
        %5334 = vmatprep.mubr.bf16.mxu0 0
        %5335 = vmatmul.mubr.bf16.gmra.mrb[0].mxu0 %v2815
        %v5336 = vpop.f32.mrb[0].mxu0
        %v5337 = vadd.f32 0.0, %v5336
        %v5338 = vpop.f32.mrb[0].mxu0
        %v5339 = vpop.f32.mrb[0].mxu0
        %v5340 = vadd.f32 0.0, %v5339
        %v5341 = vpop.f32.mrb[0].mxu0
        %5342 = vmatprep.mubr.bf16.mxu0 0
        %5343 = vmatmul.mubr.bf16.gmra.mrb[0].mxu0 %v2816
        %v5344 = vpop.f32.mrb[0].mxu0
        %v5345 = vadd.f32 0.0, %v5344
        %v5346 = vpop.f32.mrb[0].mxu0
        %v5347 = vpop.f32.mrb[0].mxu0
        %v5348 = vadd.f32 0.0, %v5347
        %v5349 = vpop.f32.mrb[0].mxu0
        %5350 = vmatprep.mubr.bf16.mxu0 0
        %5351 = vmatmul.mubr.bf16.gmra.mrb[0].mxu0 %v2817
        %v5352 = vpop.f32.mrb[0].mxu0
        %v5353 = vadd.f32 0.0, %v5352
        %v5354 = vpop.f32.mrb[0].mxu0
        %v5355 = vpop.f32.mrb[0].mxu0
        %v5356 = vadd.f32 0.0, %v5355
        %v5357 = vpop.f32.mrb[0].mxu0
        %5358 = vmatprep.mubr.bf16.mxu0 0
        %5359 = vmatmul.mubr.bf16.gmra.mrb[0].mxu0 %v2818
        %v5360 = vpop.f32.mrb[0].mxu0
        %v5361 = vadd.f32 0.0, %v5360
        %v5362 = vpop.f32.mrb[0].mxu0
        %v5363 = vpop.f32.mrb[0].mxu0
        %v5364 = vadd.f32 0.0, %v5363
        %v5365 = vpop.f32.mrb[0].mxu0
        %5366 = vmatprep.mubr.bf16.mxu0 0
        %5367 = vmatmul.mubr.bf16.gmra.mrb[0].mxu0 %v5164
        %v5368 = vpop.f32.mrb[0].mxu0
        %v5369 = vadd.f32 0.0, %v5368
        %v5370 = vpop.f32.mrb[0].mxu0
        %v5371 = vpop.f32.mrb[0].mxu0
        %v5372 = vadd.f32 0.0, %v5371
        %v5373 = vpop.f32.mrb[0].mxu0
        %5374 = vdwg.mxu0
        %v5375 = vadd.f32 %v5089, %v5249
        %v5376 = vadd.f32 %v5090, %v5252
        %v5377 = vadd.f32 %v5091, %v5257
        %v5378 = vadd.f32 %v5092, %v5260
        %v5379 = vadd.f32 %v5093, %v5265
        %v5380 = vadd.f32 %v5094, %v5268
        %v5381 = vadd.f32 %v5095, %v5273
        %v5382 = vadd.f32 %v5096, %v5276
        %v5383 = vadd.f32 %v5097, %v5281
        %v5384 = vadd.f32 %v5098, %v5284
        %v5385 = vadd.f32 %v5099, %v5289
        %v5386 = vadd.f32 %v5100, %v5292
        %v5387 = vadd.f32 %v5101, %v5297
        %v5388 = vadd.f32 %v5102, %v5300
        %v5389 = vadd.f32 %v5103, %v5305
        %v5390 = vadd.f32 %v5104, %v5308
        %v5391 = vadd.f32 %v5105, %v5313
        %v5392 = vadd.f32 %v5106, %v5316
        %v5393 = vadd.f32 %v5107, %v5321
        %v5394 = vadd.f32 %v5108, %v5324
        %v5395 = vadd.f32 %v5109, %v5329
        %v5396 = vadd.f32 %v5110, %v5332
        %v5397 = vadd.f32 %v5111, %v5337
        %v5398 = vadd.f32 %v5112, %v5340
        %v5399 = vadd.f32 %v5113, %v5345
        %v5400 = vadd.f32 %v5114, %v5348
        %v5401 = vadd.f32 %v5115, %v5353
        %v5402 = vadd.f32 %v5116, %v5356
        %v5403 = vadd.f32 %v5117, %v5361
        %v5404 = vadd.f32 %v5118, %v5364
        %v5405 = vadd.f32 %v5119, %v5369
        %v5406 = vadd.f32 %v5120, %v5372
        %v5410 = vrot.slane %v941, 1
        %v5411 = vrot.slane %v945, 1
        %v5412 = vsel %vm3124, %v5410, %v5411
        %v5413 = vrot.slane %v951, 1
        %v5414 = vsel %vm3124, %v5411, %v5413
        %v5417 = vadd.f32 %v4803, %v3132
        %v5418 = vadd.f32 %v4804, %v3134
        %v5419 = vadd.f32 %v4805, %v3137
        %v5420 = vadd.f32 %v4806, %v3139
        %v5421 = vadd.f32 %v4807, %v3142
        %v5422 = vadd.f32 %v4808, %v3144
        %v5423 = vadd.f32 %v4809, %v3147
        %v5424 = vadd.f32 %v4810, %v3149
        %v5425 = vadd.f32 %v4811, %v3152
        %v5426 = vadd.f32 %v4812, %v3154
        %v5427 = vadd.f32 %v4813, %v3157
        %v5428 = vadd.f32 %v4814, %v3159
        %v5429 = vadd.f32 %v4815, %v3162
        %v5430 = vadd.f32 %v4816, %v3164
        %v5431 = vadd.f32 %v4817, %v3167
        %v5432 = vadd.f32 %v4818, %v3169
        %v5433 = vadd.f32 %v4819, %v3172
        %v5434 = vadd.f32 %v4820, %v3174
        %v5435 = vadd.f32 %v4821, %v3177
        %v5436 = vadd.f32 %v4822, %v3179
        %v5437 = vadd.f32 %v4823, %v3182
        %v5438 = vadd.f32 %v4824, %v3184
        %v5439 = vadd.f32 %v4825, %v3187
        %v5440 = vadd.f32 %v4826, %v3189
        %v5441 = vadd.f32 %v4827, %v3192
        %v5442 = vadd.f32 %v4828, %v3194
        %v5443 = vadd.f32 %v4829, %v3197
        %v5444 = vadd.f32 %v4830, %v3199
        %v5445 = vadd.f32 %v4831, %v3202
        %v5446 = vadd.f32 %v4832, %v3204
        %v5447 = vadd.f32 %v4833, %v5412
        %v5448 = vadd.f32 %v4834, %v5414
        %v5449 = vrot.slane %v390, 5
        %v5450 = vrot.slane %v5449, 4
        %v5451 = vrot.slane %v391, 5
        %v5452 = vsel %vm3271, %v5450, %v5451
        %v5453 = vrot.slane %v5451, 4
        %v5454 = vrot.slane %v392, 5
        %v5455 = vsel %vm3271, %v5453, %v5454
        %s5456 = scalar_lea.vmem [#allocation7], 320
        %v5457 = vld [vmem:[%s5456] sm:$0xf]
        %v5458 = vld [vmem:[%s5456 + $0x4] sm:$0xf]
        %v5459 = vld [vmem:[%s5456 + $0x8] sm:$0xf]
        %v5460 = vld [vmem:[%s5456 + $0xc] sm:$0xf]
        %v5461 = vld [vmem:[%s5456 + $0x10] sm:$0xf]
        %v5462 = vld [vmem:[%s5456 + $0x14] sm:$0xf]
        %v5463 = vld [vmem:[%s5456 + $0x18] sm:$0xf]
        %v5464 = vld [vmem:[%s5456 + $0x1c] sm:$0xf]
        %v5465 = vld [vmem:[%s5456 + $0x20] sm:$0xf]
        %v5466 = vld [vmem:[%s5456 + $0x24] sm:$0xf]
        %v5467 = vld [vmem:[%s5456 + $0x28] sm:$0xf]
        %v5468 = vld [vmem:[%s5456 + $0x2c] sm:$0xf]
        %v5469 = vld [vmem:[%s5456 + $0x30] sm:$0xf]
        %v5470 = vld [vmem:[%s5456 + $0x34] sm:$0xf]
        %v5471 = vld [vmem:[%s5456 + $0x38] sm:$0xf]
        %v5472 = vld [vmem:[%s5456 + $0x3c] sm:$0xf]
        %v5473 = vunpack.c.l.b16 %v5452
        %v5474 = vunpack.c.l.b16 %v5455
        %v5475 = vpack.c.b16 %v5474, %v5473
        %v5493 = vunpack.c.l.b16 %v5457
        %v5494 = vunpack.c.l.b16 %v5458
        %v5495 = vunpack.c.l.b16 %v5459
        %v5496 = vunpack.c.l.b16 %v5460
        %v5497 = vunpack.c.l.b16 %v5461
        %v5498 = vunpack.c.l.b16 %v5462
        %v5499 = vunpack.c.l.b16 %v5463
        %v5500 = vunpack.c.l.b16 %v5464
        %v5501 = vunpack.c.l.b16 %v5465
        %v5502 = vunpack.c.l.b16 %v5466
        %v5503 = vunpack.c.l.b16 %v5467
        %v5504 = vunpack.c.l.b16 %v5468
        %v5505 = vunpack.c.l.b16 %v5469
        %v5506 = vunpack.c.l.b16 %v5470
        %v5507 = vunpack.c.l.b16 %v5471
        %v5508 = vunpack.c.l.b16 %v5472
        %v5509 = vpack.c.b16 %v5494, %v5493
        %v5510 = vpack.c.b16 %v5496, %v5495
        %v5511 = vpack.c.b16 %v5498, %v5497
        %v5512 = vpack.c.b16 %v5500, %v5499
        %v5513 = vpack.c.b16 %v5502, %v5501
        %v5514 = vpack.c.b16 %v5504, %v5503
        %v5515 = vpack.c.b16 %v5506, %v5505
        %v5516 = vpack.c.b16 %v5508, %v5507
        %5525 = vmatprep.subr.bf16.mxu0 0
        %5526 = vmatpush1.bf16.msra.mxu0 %v5509
        %5527 = vmatprep.subr.bf16.mxu0 0
        %5528 = vmatpush1.bf16.msra.mxu0 %v5510
        %5529 = vmatprep.subr.bf16.mxu0 0
        %5530 = vmatpush1.bf16.msra.mxu0 %v5511
        %5531 = vmatprep.subr.bf16.mxu0 0
        %5532 = vmatpush1.bf16.msra.mxu0 %v5512
        %5533 = vmatprep.subr.bf16.mxu0 0
        %5534 = vmatpush1.bf16.msra.mxu0 %v5513
        %5535 = vmatprep.subr.bf16.mxu0 0
        %5536 = vmatpush1.bf16.msra.mxu0 %v5514
        %5537 = vmatprep.subr.bf16.mxu0 0
        %5538 = vmatpush1.bf16.msra.mxu0 %v5515
        %5539 = vmatprep.subr.bf16.mxu0 0
        %5540 = vmatpush1.bf16.msra.mxu0 %v5516
        %5541 = vmatprep.subr.bf16.mxu0 0
        %5542 = vmatpush1.bf16.msra.mxu0 0
        %5543 = vmatprep.subr.bf16.mxu0 0
        %5544 = vmatpush1.bf16.msra.mxu0 0
        %5545 = vmatprep.subr.bf16.mxu0 0
        %5546 = vmatpush1.bf16.msra.mxu0 0
        %5547 = vmatprep.subr.bf16.mxu0 0
        %5548 = vmatpush1.bf16.msra.mxu0 0
        %5549 = vmatprep.subr.bf16.mxu0 0
        %5550 = vmatpush1.bf16.msra.mxu0 0
        %5551 = vmatprep.subr.bf16.mxu0 0
        %5552 = vmatpush1.bf16.msra.mxu0 0
        %5553 = vmatprep.subr.bf16.mxu0 0
        %5554 = vmatpush1.bf16.msra.mxu0 0
        %5555 = vmatprep.subr.bf16.mxu0 0
        %5556 = vmatpush1.bf16.msra.mxu0 0
        %5557 = vmatprep.mubr.bf16.mxu0 0
        %5558 = vmatmul.mubr.bf16.gmra.mrb[0].mxu0 %v3434
        %v5559 = vpop.f32.mrb[0].mxu0
        %v5560 = vadd.f32 0.0, %v5559
        %v5561 = vpop.f32.mrb[0].mxu0
        %v5562 = vpop.f32.mrb[0].mxu0
        %v5563 = vadd.f32 0.0, %v5562
        %v5564 = vpop.f32.mrb[0].mxu0
        %5565 = vmatprep.mubr.bf16.mxu0 0
        %5566 = vmatmul.mubr.bf16.gmra.mrb[0].mxu0 %v3435
        %v5567 = vpop.f32.mrb[0].mxu0
        %v5568 = vadd.f32 0.0, %v5567
        %v5569 = vpop.f32.mrb[0].mxu0
        %v5570 = vpop.f32.mrb[0].mxu0
        %v5571 = vadd.f32 0.0, %v5570
        %v5572 = vpop.f32.mrb[0].mxu0
        %5573 = vmatprep.mubr.bf16.mxu0 0
        %5574 = vmatmul.mubr.bf16.gmra.mrb[0].mxu0 %v3436
        %v5575 = vpop.f32.mrb[0].mxu0
        %v5576 = vadd.f32 0.0, %v5575
        %v5577 = vpop.f32.mrb[0].mxu0
        %v5578 = vpop.f32.mrb[0].mxu0
        %v5579 = vadd.f32 0.0, %v5578
        %v5580 = vpop.f32.mrb[0].mxu0
        %5581 = vmatprep.mubr.bf16.mxu0 0
        %5582 = vmatmul.mubr.bf16.gmra.mrb[0].mxu0 %v3437
        %v5583 = vpop.f32.mrb[0].mxu0
        %v5584 = vadd.f32 0.0, %v5583
        %v5585 = vpop.f32.mrb[0].mxu0
        %v5586 = vpop.f32.mrb[0].mxu0
        %v5587 = vadd.f32 0.0, %v5586
        %v5588 = vpop.f32.mrb[0].mxu0
        %5589 = vmatprep.mubr.bf16.mxu0 0
        %5590 = vmatmul.mubr.bf16.gmra.mrb[0].mxu0 %v3438
        %v5591 = vpop.f32.mrb[0].mxu0
        %v5592 = vadd.f32 0.0, %v5591
        %v5593 = vpop.f32.mrb[0].mxu0
        %v5594 = vpop.f32.mrb[0].mxu0
        %v5595 = vadd.f32 0.0, %v5594
        %v5596 = vpop.f32.mrb[0].mxu0
        %5597 = vmatprep.mubr.bf16.mxu0 0
        %5598 = vmatmul.mubr.bf16.gmra.mrb[0].mxu0 %v3439
        %v5599 = vpop.f32.mrb[0].mxu0
        %v5600 = vadd.f32 0.0, %v5599
        %v5601 = vpop.f32.mrb[0].mxu0
        %v5602 = vpop.f32.mrb[0].mxu0
        %v5603 = vadd.f32 0.0, %v5602
        %v5604 = vpop.f32.mrb[0].mxu0
        %5605 = vmatprep.mubr.bf16.mxu0 0
        %5606 = vmatmul.mubr.bf16.gmra.mrb[0].mxu0 %v3440
        %v5607 = vpop.f32.mrb[0].mxu0
        %v5608 = vadd.f32 0.0, %v5607
        %v5609 = vpop.f32.mrb[0].mxu0
        %v5610 = vpop.f32.mrb[0].mxu0
        %v5611 = vadd.f32 0.0, %v5610
        %v5612 = vpop.f32.mrb[0].mxu0
        %5613 = vmatprep.mubr.bf16.mxu0 0
        %5614 = vmatmul.mubr.bf16.gmra.mrb[0].mxu0 %v3441
        %v5615 = vpop.f32.mrb[0].mxu0
        %v5616 = vadd.f32 0.0, %v5615
        %v5617 = vpop.f32.mrb[0].mxu0
        %v5618 = vpop.f32.mrb[0].mxu0
        %v5619 = vadd.f32 0.0, %v5618
        %v5620 = vpop.f32.mrb[0].mxu0
        %5621 = vmatprep.mubr.bf16.mxu0 0
        %5622 = vmatmul.mubr.bf16.gmra.mrb[0].mxu0 %v3442
        %v5623 = vpop.f32.mrb[0].mxu0
        %v5624 = vadd.f32 0.0, %v5623
        %v5625 = vpop.f32.mrb[0].mxu0
        %v5626 = vpop.f32.mrb[0].mxu0
        %v5627 = vadd.f32 0.0, %v5626
        %v5628 = vpop.f32.mrb[0].mxu0
        %5629 = vmatprep.mubr.bf16.mxu0 0
        %5630 = vmatmul.mubr.bf16.gmra.mrb[0].mxu0 %v3443
        %v5631 = vpop.f32.mrb[0].mxu0
        %v5632 = vadd.f32 0.0, %v5631
        %v5633 = vpop.f32.mrb[0].mxu0
        %v5634 = vpop.f32.mrb[0].mxu0
        %v5635 = vadd.f32 0.0, %v5634
        %v5636 = vpop.f32.mrb[0].mxu0
        %5637 = vmatprep.mubr.bf16.mxu0 0
        %5638 = vmatmul.mubr.bf16.gmra.mrb[0].mxu0 %v3444
        %v5639 = vpop.f32.mrb[0].mxu0
        %v5640 = vadd.f32 0.0, %v5639
        %v5641 = vpop.f32.mrb[0].mxu0
        %v5642 = vpop.f32.mrb[0].mxu0
        %v5643 = vadd.f32 0.0, %v5642
        %v5644 = vpop.f32.mrb[0].mxu0
        %5645 = vmatprep.mubr.bf16.mxu0 0
        %5646 = vmatmul.mubr.bf16.gmra.mrb[0].mxu0 %v3445
        %v5647 = vpop.f32.mrb[0].mxu0
        %v5648 = vadd.f32 0.0, %v5647
        %v5649 = vpop.f32.mrb[0].mxu0
        %v5650 = vpop.f32.mrb[0].mxu0
        %v5651 = vadd.f32 0.0, %v5650
        %v5652 = vpop.f32.mrb[0].mxu0
        %5653 = vmatprep.mubr.bf16.mxu0 0
        %5654 = vmatmul.mubr.bf16.gmra.mrb[0].mxu0 %v3446
        %v5655 = vpop.f32.mrb[0].mxu0
        %v5656 = vadd.f32 0.0, %v5655
        %v5657 = vpop.f32.mrb[0].mxu0
        %v5658 = vpop.f32.mrb[0].mxu0
        %v5659 = vadd.f32 0.0, %v5658
        %v5660 = vpop.f32.mrb[0].mxu0
        %5661 = vmatprep.mubr.bf16.mxu0 0
        %5662 = vmatmul.mubr.bf16.gmra.mrb[0].mxu0 %v3447
        %v5663 = vpop.f32.mrb[0].mxu0
        %v5664 = vadd.f32 0.0, %v5663
        %v5665 = vpop.f32.mrb[0].mxu0
        %v5666 = vpop.f32.mrb[0].mxu0
        %v5667 = vadd.f32 0.0, %v5666
        %v5668 = vpop.f32.mrb[0].mxu0
        %5669 = vmatprep.mubr.bf16.mxu0 0
        %5670 = vmatmul.mubr.bf16.gmra.mrb[0].mxu0 %v3448
        %v5671 = vpop.f32.mrb[0].mxu0
        %v5672 = vadd.f32 0.0, %v5671
        %v5673 = vpop.f32.mrb[0].mxu0
        %v5674 = vpop.f32.mrb[0].mxu0
        %v5675 = vadd.f32 0.0, %v5674
        %v5676 = vpop.f32.mrb[0].mxu0
        %5677 = vmatprep.mubr.bf16.mxu0 0
        %5678 = vmatmul.mubr.bf16.gmra.mrb[0].mxu0 %v5475
        %v5679 = vpop.f32.mrb[0].mxu0
        %v5680 = vadd.f32 0.0, %v5679
        %v5681 = vpop.f32.mrb[0].mxu0
        %v5682 = vpop.f32.mrb[0].mxu0
        %v5683 = vadd.f32 0.0, %v5682
        %v5684 = vpop.f32.mrb[0].mxu0
        %5685 = vdwg.mxu0
        %v5686 = vadd.f32 %v5375, %v5560
        %v5687 = vadd.f32 %v5376, %v5563
        %v5688 = vadd.f32 %v5377, %v5568
        %v5689 = vadd.f32 %v5378, %v5571
        %v5690 = vadd.f32 %v5379, %v5576
        %v5691 = vadd.f32 %v5380, %v5579
        %v5692 = vadd.f32 %v5381, %v5584
        %v5693 = vadd.f32 %v5382, %v5587
        %v5694 = vadd.f32 %v5383, %v5592
        %v5695 = vadd.f32 %v5384, %v5595
        %v5696 = vadd.f32 %v5385, %v5600
        %v5697 = vadd.f32 %v5386, %v5603
        %v5698 = vadd.f32 %v5387, %v5608
        %v5699 = vadd.f32 %v5388, %v5611
        %v5700 = vadd.f32 %v5389, %v5616
        %v5701 = vadd.f32 %v5390, %v5619
        %v5702 = vadd.f32 %v5391, %v5624
        %v5703 = vadd.f32 %v5392, %v5627
        %v5704 = vadd.f32 %v5393, %v5632
        %v5705 = vadd.f32 %v5394, %v5635
        %v5706 = vadd.f32 %v5395, %v5640
        %v5707 = vadd.f32 %v5396, %v5643
        %v5708 = vadd.f32 %v5397, %v5648
        %v5709 = vadd.f32 %v5398, %v5651
        %v5710 = vadd.f32 %v5399, %v5656
        %v5711 = vadd.f32 %v5400, %v5659
        %v5712 = vadd.f32 %v5401, %v5664
        %v5713 = vadd.f32 %v5402, %v5667
        %v5714 = vadd.f32 %v5403, %v5672
        %v5715 = vadd.f32 %v5404, %v5675
        %v5716 = vadd.f32 %v5405, %v5680
        %v5717 = vadd.f32 %v5406, %v5683
        %v5718 = vrot.slane %v1125, 5
        %v5719 = vrot.slane %v5718, 4
        %v5720 = vrot.slane %v1126, 5
        %v5721 = vsel %vm3271, %v5719, %v5720
        %v5722 = vrot.slane %v5720, 4
        %v5723 = vrot.slane %v1127, 5
        %v5724 = vsel %vm3271, %v5722, %v5723
        %s5725 = scalar_lea.vmem [#allocation8], 320
        %v5726 = vld [vmem:[%s5725] sm:$0xf]
        %v5727 = vld [vmem:[%s5725 + $0x4] sm:$0xf]
        %v5728 = vld [vmem:[%s5725 + $0x8] sm:$0xf]
        %v5729 = vld [vmem:[%s5725 + $0xc] sm:$0xf]
        %v5730 = vld [vmem:[%s5725 + $0x10] sm:$0xf]
        %v5731 = vld [vmem:[%s5725 + $0x14] sm:$0xf]
        %v5732 = vld [vmem:[%s5725 + $0x18] sm:$0xf]
        %v5733 = vld [vmem:[%s5725 + $0x1c] sm:$0xf]
        %v5734 = vld [vmem:[%s5725 + $0x20] sm:$0xf]
        %v5735 = vld [vmem:[%s5725 + $0x24] sm:$0xf]
        %v5736 = vld [vmem:[%s5725 + $0x28] sm:$0xf]
        %v5737 = vld [vmem:[%s5725 + $0x2c] sm:$0xf]
        %v5738 = vld [vmem:[%s5725 + $0x30] sm:$0xf]
        %v5739 = vld [vmem:[%s5725 + $0x34] sm:$0xf]
        %v5740 = vld [vmem:[%s5725 + $0x38] sm:$0xf]
        %v5741 = vld [vmem:[%s5725 + $0x3c] sm:$0xf]
        %v5742 = vunpack.c.l.b16 %v5721
        %v5743 = vunpack.c.l.b16 %v5724
        %v5744 = vpack.c.b16 %v5743, %v5742
        %v5762 = vunpack.c.l.b16 %v5726
        %v5763 = vunpack.c.l.b16 %v5727
        %v5764 = vunpack.c.l.b16 %v5728
        %v5765 = vunpack.c.l.b16 %v5729
        %v5766 = vunpack.c.l.b16 %v5730
        %v5767 = vunpack.c.l.b16 %v5731
        %v5768 = vunpack.c.l.b16 %v5732
        %v5769 = vunpack.c.l.b16 %v5733
        %v5770 = vunpack.c.l.b16 %v5734
        %v5771 = vunpack.c.l.b16 %v5735
        %v5772 = vunpack.c.l.b16 %v5736
        %v5773 = vunpack.c.l.b16 %v5737
        %v5774 = vunpack.c.l.b16 %v5738
        %v5775 = vunpack.c.l.b16 %v5739
        %v5776 = vunpack.c.l.b16 %v5740
        %v5777 = vunpack.c.l.b16 %v5741
        %v5778 = vpack.c.b16 %v5763, %v5762
        %v5779 = vpack.c.b16 %v5765, %v5764
        %v5780 = vpack.c.b16 %v5767, %v5766
        %v5781 = vpack.c.b16 %v5769, %v5768
        %v5782 = vpack.c.b16 %v5771, %v5770
        %v5783 = vpack.c.b16 %v5773, %v5772
        %v5784 = vpack.c.b16 %v5775, %v5774
        %v5785 = vpack.c.b16 %v5777, %v5776
        %5794 = vmatprep.subr.bf16.mxu0 0
        %5795 = vmatpush1.bf16.msra.mxu0 %v5778
        %5796 = vmatprep.subr.bf16.mxu0 0
        %5797 = vmatpush1.bf16.msra.mxu0 %v5779
        %5798 = vmatprep.subr.bf16.mxu0 0
        %5799 = vmatpush1.bf16.msra.mxu0 %v5780
        %5800 = vmatprep.subr.bf16.mxu0 0
        %5801 = vmatpush1.bf16.msra.mxu0 %v5781
        %5802 = vmatprep.subr.bf16.mxu0 0
        %5803 = vmatpush1.bf16.msra.mxu0 %v5782
        %5804 = vmatprep.subr.bf16.mxu0 0
        %5805 = vmatpush1.bf16.msra.mxu0 %v5783
        %5806 = vmatprep.subr.bf16.mxu0 0
        %5807 = vmatpush1.bf16.msra.mxu0 %v5784
        %5808 = vmatprep.subr.bf16.mxu0 0
        %5809 = vmatpush1.bf16.msra.mxu0 %v5785
        %5810 = vmatprep.subr.bf16.mxu0 0
        %5811 = vmatpush1.bf16.msra.mxu0 0
        %5812 = vmatprep.subr.bf16.mxu0 0
        %5813 = vmatpush1.bf16.msra.mxu0 0
        %5814 = vmatprep.subr.bf16.mxu0 0
        %5815 = vmatpush1.bf16.msra.mxu0 0
        %5816 = vmatprep.subr.bf16.mxu0 0
        %5817 = vmatpush1.bf16.msra.mxu0 0
        %5818 = vmatprep.subr.bf16.mxu0 0
        %5819 = vmatpush1.bf16.msra.mxu0 0
        %5820 = vmatprep.subr.bf16.mxu0 0
        %5821 = vmatpush1.bf16.msra.mxu0 0
        %5822 = vmatprep.subr.bf16.mxu0 0
        %5823 = vmatpush1.bf16.msra.mxu0 0
        %5824 = vmatprep.subr.bf16.mxu0 0
        %5825 = vmatpush1.bf16.msra.mxu0 0
        %5826 = vmatprep.mubr.bf16.mxu0 0
        %5827 = vmatmul.mubr.bf16.gmra.mrb[0].mxu0 %v3868
        %v5828 = vpop.f32.mrb[0].mxu0
        %v5829 = vadd.f32 0.0, %v5828
        %v5830 = vpop.f32.mrb[0].mxu0
        %v5831 = vpop.f32.mrb[0].mxu0
        %v5832 = vadd.f32 0.0, %v5831
        %v5833 = vpop.f32.mrb[0].mxu0
        %5834 = vmatprep.mubr.bf16.mxu0 0
        %5835 = vmatmul.mubr.bf16.gmra.mrb[0].mxu0 %v3869
        %v5836 = vpop.f32.mrb[0].mxu0
        %v5837 = vadd.f32 0.0, %v5836
        %v5838 = vpop.f32.mrb[0].mxu0
        %v5839 = vpop.f32.mrb[0].mxu0
        %v5840 = vadd.f32 0.0, %v5839
        %v5841 = vpop.f32.mrb[0].mxu0
        %5842 = vmatprep.mubr.bf16.mxu0 0
        %5843 = vmatmul.mubr.bf16.gmra.mrb[0].mxu0 %v3870
        %v5844 = vpop.f32.mrb[0].mxu0
        %v5845 = vadd.f32 0.0, %v5844
        %v5846 = vpop.f32.mrb[0].mxu0
        %v5847 = vpop.f32.mrb[0].mxu0
        %v5848 = vadd.f32 0.0, %v5847
        %v5849 = vpop.f32.mrb[0].mxu0
        %5850 = vmatprep.mubr.bf16.mxu0 0
        %5851 = vmatmul.mubr.bf16.gmra.mrb[0].mxu0 %v3871
        %v5852 = vpop.f32.mrb[0].mxu0
        %v5853 = vadd.f32 0.0, %v5852
        %v5854 = vpop.f32.mrb[0].mxu0
        %v5855 = vpop.f32.mrb[0].mxu0
        %v5856 = vadd.f32 0.0, %v5855
        %v5857 = vpop.f32.mrb[0].mxu0
        %5858 = vmatprep.mubr.bf16.mxu0 0
        %5859 = vmatmul.mubr.bf16.gmra.mrb[0].mxu0 %v3872
        %v5860 = vpop.f32.mrb[0].mxu0
        %v5861 = vadd.f32 0.0, %v5860
        %v5862 = vpop.f32.mrb[0].mxu0
        %v5863 = vpop.f32.mrb[0].mxu0
        %v5864 = vadd.f32 0.0, %v5863
        %v5865 = vpop.f32.mrb[0].mxu0
        %5866 = vmatprep.mubr.bf16.mxu0 0
        %5867 = vmatmul.mubr.bf16.gmra.mrb[0].mxu0 %v3873
        %v5868 = vpop.f32.mrb[0].mxu0
        %v5869 = vadd.f32 0.0, %v5868
        %v5870 = vpop.f32.mrb[0].mxu0
        %v5871 = vpop.f32.mrb[0].mxu0
        %v5872 = vadd.f32 0.0, %v5871
        %v5873 = vpop.f32.mrb[0].mxu0
        %5874 = vmatprep.mubr.bf16.mxu0 0
        %5875 = vmatmul.mubr.bf16.gmra.mrb[0].mxu0 %v3874
        %v5876 = vpop.f32.mrb[0].mxu0
        %v5877 = vadd.f32 0.0, %v5876
        %v5878 = vpop.f32.mrb[0].mxu0
        %v5879 = vpop.f32.mrb[0].mxu0
        %v5880 = vadd.f32 0.0, %v5879
        %v5881 = vpop.f32.mrb[0].mxu0
        %5882 = vmatprep.mubr.bf16.mxu0 0
        %5883 = vmatmul.mubr.bf16.gmra.mrb[0].mxu0 %v3875
        %v5884 = vpop.f32.mrb[0].mxu0
        %v5885 = vadd.f32 0.0, %v5884
        %v5886 = vpop.f32.mrb[0].mxu0
        %v5887 = vpop.f32.mrb[0].mxu0
        %v5888 = vadd.f32 0.0, %v5887
        %v5889 = vpop.f32.mrb[0].mxu0
        %5890 = vmatprep.mubr.bf16.mxu0 0
        %5891 = vmatmul.mubr.bf16.gmra.mrb[0].mxu0 %v3876
        %v5892 = vpop.f32.mrb[0].mxu0
        %v5893 = vadd.f32 0.0, %v5892
        %v5894 = vpop.f32.mrb[0].mxu0
        %v5895 = vpop.f32.mrb[0].mxu0
        %v5896 = vadd.f32 0.0, %v5895
        %v5897 = vpop.f32.mrb[0].mxu0
        %5898 = vmatprep.mubr.bf16.mxu0 0
        %5899 = vmatmul.mubr.bf16.gmra.mrb[0].mxu0 %v3877
        %v5900 = vpop.f32.mrb[0].mxu0
        %v5901 = vadd.f32 0.0, %v5900
        %v5902 = vpop.f32.mrb[0].mxu0
        %v5903 = vpop.f32.mrb[0].mxu0
        %v5904 = vadd.f32 0.0, %v5903
        %v5905 = vpop.f32.mrb[0].mxu0
        %5906 = vmatprep.mubr.bf16.mxu0 0
        %5907 = vmatmul.mubr.bf16.gmra.mrb[0].mxu0 %v3878
        %v5908 = vpop.f32.mrb[0].mxu0
        %v5909 = vadd.f32 0.0, %v5908
        %v5910 = vpop.f32.mrb[0].mxu0
        %v5911 = vpop.f32.mrb[0].mxu0
        %v5912 = vadd.f32 0.0, %v5911
        %v5913 = vpop.f32.mrb[0].mxu0
        %5914 = vmatprep.mubr.bf16.mxu0 0
        %5915 = vmatmul.mubr.bf16.gmra.mrb[0].mxu0 %v3879
        %v5916 = vpop.f32.mrb[0].mxu0
        %v5917 = vadd.f32 0.0, %v5916
        %v5918 = vpop.f32.mrb[0].mxu0
        %v5919 = vpop.f32.mrb[0].mxu0
        %v5920 = vadd.f32 0.0, %v5919
        %v5921 = vpop.f32.mrb[0].mxu0
        %5922 = vmatprep.mubr.bf16.mxu0 0
        %5923 = vmatmul.mubr.bf16.gmra.mrb[0].mxu0 %v3880
        %v5924 = vpop.f32.mrb[0].mxu0
        %v5925 = vadd.f32 0.0, %v5924
        %v5926 = vpop.f32.mrb[0].mxu0
        %v5927 = vpop.f32.mrb[0].mxu0
        %v5928 = vadd.f32 0.0, %v5927
        %v5929 = vpop.f32.mrb[0].mxu0
        %5930 = vmatprep.mubr.bf16.mxu0 0
        %5931 = vmatmul.mubr.bf16.gmra.mrb[0].mxu0 %v3881
        %v5932 = vpop.f32.mrb[0].mxu0
        %v5933 = vadd.f32 0.0, %v5932
        %v5934 = vpop.f32.mrb[0].mxu0
        %v5935 = vpop.f32.mrb[0].mxu0
        %v5936 = vadd.f32 0.0, %v5935
        %v5937 = vpop.f32.mrb[0].mxu0
        %5938 = vmatprep.mubr.bf16.mxu0 0
        %5939 = vmatmul.mubr.bf16.gmra.mrb[0].mxu0 %v3882
        %v5940 = vpop.f32.mrb[0].mxu0
        %v5941 = vadd.f32 0.0, %v5940
        %v5942 = vpop.f32.mrb[0].mxu0
        %v5943 = vpop.f32.mrb[0].mxu0
        %v5944 = vadd.f32 0.0, %v5943
        %v5945 = vpop.f32.mrb[0].mxu0
        %5946 = vmatprep.mubr.bf16.mxu0 0
        %5947 = vmatmul.mubr.bf16.gmra.mrb[0].mxu0 %v5744
        %v5948 = vpop.f32.mrb[0].mxu0
        %v5949 = vadd.f32 0.0, %v5948
        %v5950 = vpop.f32.mrb[0].mxu0
        %v5951 = vpop.f32.mrb[0].mxu0
        %v5952 = vadd.f32 0.0, %v5951
        %v5953 = vpop.f32.mrb[0].mxu0
        %5954 = vdwg.mxu0
        %v5955 = vadd.f32 %v5686, %v5829
        %v5956 = vadd.f32 %v5687, %v5832
        %v5957 = vadd.f32 %v5688, %v5837
        %v5958 = vadd.f32 %v5689, %v5840
        %v5959 = vadd.f32 %v5690, %v5845
        %v5960 = vadd.f32 %v5691, %v5848
        %v5961 = vadd.f32 %v5692, %v5853
        %v5962 = vadd.f32 %v5693, %v5856
        %v5963 = vadd.f32 %v5694, %v5861
        %v5964 = vadd.f32 %v5695, %v5864
        %v5965 = vadd.f32 %v5696, %v5869
        %v5966 = vadd.f32 %v5697, %v5872
        %v5967 = vadd.f32 %v5698, %v5877
        %v5968 = vadd.f32 %v5699, %v5880
        %v5969 = vadd.f32 %v5700, %v5885
        %v5970 = vadd.f32 %v5701, %v5888
        %v5971 = vadd.f32 %v5702, %v5893
        %v5972 = vadd.f32 %v5703, %v5896
        %v5973 = vadd.f32 %v5704, %v5901
        %v5974 = vadd.f32 %v5705, %v5904
        %v5975 = vadd.f32 %v5706, %v5909
        %v5976 = vadd.f32 %v5707, %v5912
        %v5977 = vadd.f32 %v5708, %v5917
        %v5978 = vadd.f32 %v5709, %v5920
        %v5979 = vadd.f32 %v5710, %v5925
        %v5980 = vadd.f32 %v5711, %v5928
        %v5981 = vadd.f32 %v5712, %v5933
        %v5982 = vadd.f32 %v5713, %v5936
        %v5983 = vadd.f32 %v5714, %v5941
        %v5984 = vadd.f32 %v5715, %v5944
        %v5985 = vadd.f32 %v5716, %v5949
        %v5986 = vadd.f32 %v5717, %v5952
        %v5987 = vrot.slane %v941, 2
        %v5988 = vrot.slane %v945, 2
        %v5989 = vsel %vm4140, %v5987, %v5988
        %v5990 = vrot.slane %v951, 2
        %v5991 = vsel %vm4140, %v5988, %v5990
        %v5994 = vadd.f32 %v5417, %v4148
        %v5995 = vadd.f32 %v5418, %v4150
        %v5996 = vadd.f32 %v5419, %v4153
        %v5997 = vadd.f32 %v5420, %v4155
        %v5998 = vadd.f32 %v5421, %v4158
        %v5999 = vadd.f32 %v5422, %v4160
        %v6000 = vadd.f32 %v5423, %v4163
        %v6001 = vadd.f32 %v5424, %v4165
        %v6002 = vadd.f32 %v5425, %v4168
        %v6003 = vadd.f32 %v5426, %v4170
        %v6004 = vadd.f32 %v5427, %v4173
        %v6005 = vadd.f32 %v5428, %v4175
        %v6006 = vadd.f32 %v5429, %v4178
        %v6007 = vadd.f32 %v5430, %v4180
        %v6008 = vadd.f32 %v5431, %v4183
        %v6009 = vadd.f32 %v5432, %v4185
        %v6010 = vadd.f32 %v5433, %v4188
        %v6011 = vadd.f32 %v5434, %v4190
        %v6012 = vadd.f32 %v5435, %v4193
        %v6013 = vadd.f32 %v5436, %v4195
        %v6014 = vadd.f32 %v5437, %v4198
        %v6015 = vadd.f32 %v5438, %v4200
        %v6016 = vadd.f32 %v5439, %v4203
        %v6017 = vadd.f32 %v5440, %v4205
        %v6018 = vadd.f32 %v5441, %v4208
        %v6019 = vadd.f32 %v5442, %v4210
        %v6020 = vadd.f32 %v5443, %v4213
        %v6021 = vadd.f32 %v5444, %v4215
        %v6022 = vadd.f32 %v5445, %v4218
        %v6023 = vadd.f32 %v5446, %v4220
        %v6024 = vadd.f32 %v5447, %v5989
        %v6025 = vadd.f32 %v5448, %v5991
        %s6026 = scalar_lea.vmem [#allocation7], 384
        %v6027 = vld [vmem:[%s6026] sm:$0xf]
        %v6028 = vld [vmem:[%s6026 + $0x4] sm:$0xf]
        %v6029 = vld [vmem:[%s6026 + $0x8] sm:$0xf]
        %v6030 = vld [vmem:[%s6026 + $0xc] sm:$0xf]
        %v6031 = vld [vmem:[%s6026 + $0x10] sm:$0xf]
        %v6032 = vld [vmem:[%s6026 + $0x14] sm:$0xf]
        %v6033 = vld [vmem:[%s6026 + $0x18] sm:$0xf]
        %v6034 = vld [vmem:[%s6026 + $0x1c] sm:$0xf]
        %v6035 = vld [vmem:[%s6026 + $0x20] sm:$0xf]
        %v6036 = vld [vmem:[%s6026 + $0x24] sm:$0xf]
        %v6037 = vld [vmem:[%s6026 + $0x28] sm:$0xf]
        %v6038 = vld [vmem:[%s6026 + $0x2c] sm:$0xf]
        %v6039 = vld [vmem:[%s6026 + $0x30] sm:$0xf]
        %v6040 = vld [vmem:[%s6026 + $0x34] sm:$0xf]
        %v6041 = vld [vmem:[%s6026 + $0x38] sm:$0xf]
        %v6042 = vld [vmem:[%s6026 + $0x3c] sm:$0xf]
        %v6043 = vpack.c.b16 %v530, %v529
        %v6061 = vunpack.c.l.b16 %v6027
        %v6062 = vunpack.c.l.b16 %v6028
        %v6063 = vunpack.c.l.b16 %v6029
        %v6064 = vunpack.c.l.b16 %v6030
        %v6065 = vunpack.c.l.b16 %v6031
        %v6066 = vunpack.c.l.b16 %v6032
        %v6067 = vunpack.c.l.b16 %v6033
        %v6068 = vunpack.c.l.b16 %v6034
        %v6069 = vunpack.c.l.b16 %v6035
        %v6070 = vunpack.c.l.b16 %v6036
        %v6071 = vunpack.c.l.b16 %v6037
        %v6072 = vunpack.c.l.b16 %v6038
        %v6073 = vunpack.c.l.b16 %v6039
        %v6074 = vunpack.c.l.b16 %v6040
        %v6075 = vunpack.c.l.b16 %v6041
        %v6076 = vunpack.c.l.b16 %v6042
        %v6077 = vpack.c.b16 %v6062, %v6061
        %v6078 = vpack.c.b16 %v6064, %v6063
        %v6079 = vpack.c.b16 %v6066, %v6065
        %v6080 = vpack.c.b16 %v6068, %v6067
        %v6081 = vpack.c.b16 %v6070, %v6069
        %v6082 = vpack.c.b16 %v6072, %v6071
        %v6083 = vpack.c.b16 %v6074, %v6073
        %v6084 = vpack.c.b16 %v6076, %v6075
        %6093 = vmatprep.subr.bf16.mxu0 0
        %6094 = vmatpush1.bf16.msra.mxu0 %v6077
        %6095 = vmatprep.subr.bf16.mxu0 0
        %6096 = vmatpush1.bf16.msra.mxu0 %v6078
        %6097 = vmatprep.subr.bf16.mxu0 0
        %6098 = vmatpush1.bf16.msra.mxu0 %v6079
        %6099 = vmatprep.subr.bf16.mxu0 0
        %6100 = vmatpush1.bf16.msra.mxu0 %v6080
        %6101 = vmatprep.subr.bf16.mxu0 0
        %6102 = vmatpush1.bf16.msra.mxu0 %v6081
        %6103 = vmatprep.subr.bf16.mxu0 0
        %6104 = vmatpush1.bf16.msra.mxu0 %v6082
        %6105 = vmatprep.subr.bf16.mxu0 0
        %6106 = vmatpush1.bf16.msra.mxu0 %v6083
        %6107 = vmatprep.subr.bf16.mxu0 0
        %6108 = vmatpush1.bf16.msra.mxu0 %v6084
        %6109 = vmatprep.subr.bf16.mxu0 0
        %6110 = vmatpush1.bf16.msra.mxu0 0
        %6111 = vmatprep.subr.bf16.mxu0 0
        %6112 = vmatpush1.bf16.msra.mxu0 0
        %6113 = vmatprep.subr.bf16.mxu0 0
        %6114 = vmatpush1.bf16.msra.mxu0 0
        %6115 = vmatprep.subr.bf16.mxu0 0
        %6116 = vmatpush1.bf16.msra.mxu0 0
        %6117 = vmatprep.subr.bf16.mxu0 0
        %6118 = vmatpush1.bf16.msra.mxu0 0
        %6119 = vmatprep.subr.bf16.mxu0 0
        %6120 = vmatpush1.bf16.msra.mxu0 0
        %6121 = vmatprep.subr.bf16.mxu0 0
        %6122 = vmatpush1.bf16.msra.mxu0 0
        %6123 = vmatprep.subr.bf16.mxu0 0
        %6124 = vmatpush1.bf16.msra.mxu0 0
        %6125 = vmatprep.mubr.bf16.mxu0 0
        %6126 = vmatmul.mubr.bf16.gmra.mrb[0].mxu0 %v535
        %v6127 = vpop.f32.mrb[0].mxu0
        %v6128 = vadd.f32 0.0, %v6127
        %v6129 = vpop.f32.mrb[0].mxu0
        %v6130 = vpop.f32.mrb[0].mxu0
        %v6131 = vadd.f32 0.0, %v6130
        %v6132 = vpop.f32.mrb[0].mxu0
        %6133 = vmatprep.mubr.bf16.mxu0 0
        %6134 = vmatmul.mubr.bf16.gmra.mrb[0].mxu0 %v1405
        %v6135 = vpop.f32.mrb[0].mxu0
        %v6136 = vadd.f32 0.0, %v6135
        %v6137 = vpop.f32.mrb[0].mxu0
        %v6138 = vpop.f32.mrb[0].mxu0
        %v6139 = vadd.f32 0.0, %v6138
        %v6140 = vpop.f32.mrb[0].mxu0
        %6141 = vmatprep.mubr.bf16.mxu0 0
        %6142 = vmatmul.mubr.bf16.gmra.mrb[0].mxu0 %v538
        %v6143 = vpop.f32.mrb[0].mxu0
        %v6144 = vadd.f32 0.0, %v6143
        %v6145 = vpop.f32.mrb[0].mxu0
        %v6146 = vpop.f32.mrb[0].mxu0
        %v6147 = vadd.f32 0.0, %v6146
        %v6148 = vpop.f32.mrb[0].mxu0
        %6149 = vmatprep.mubr.bf16.mxu0 0
        %6150 = vmatmul.mubr.bf16.gmra.mrb[0].mxu0 %v1406
        %v6151 = vpop.f32.mrb[0].mxu0
        %v6152 = vadd.f32 0.0, %v6151
        %v6153 = vpop.f32.mrb[0].mxu0
        %v6154 = vpop.f32.mrb[0].mxu0
        %v6155 = vadd.f32 0.0, %v6154
        %v6156 = vpop.f32.mrb[0].mxu0
        %6157 = vmatprep.mubr.bf16.mxu0 0
        %6158 = vmatmul.mubr.bf16.gmra.mrb[0].mxu0 %v541
        %v6159 = vpop.f32.mrb[0].mxu0
        %v6160 = vadd.f32 0.0, %v6159
        %v6161 = vpop.f32.mrb[0].mxu0
        %v6162 = vpop.f32.mrb[0].mxu0
        %v6163 = vadd.f32 0.0, %v6162
        %v6164 = vpop.f32.mrb[0].mxu0
        %6165 = vmatprep.mubr.bf16.mxu0 0
        %6166 = vmatmul.mubr.bf16.gmra.mrb[0].mxu0 %v1407
        %v6167 = vpop.f32.mrb[0].mxu0
        %v6168 = vadd.f32 0.0, %v6167
        %v6169 = vpop.f32.mrb[0].mxu0
        %v6170 = vpop.f32.mrb[0].mxu0
        %v6171 = vadd.f32 0.0, %v6170
        %v6172 = vpop.f32.mrb[0].mxu0
        %6173 = vmatprep.mubr.bf16.mxu0 0
        %6174 = vmatmul.mubr.bf16.gmra.mrb[0].mxu0 %v544
        %v6175 = vpop.f32.mrb[0].mxu0
        %v6176 = vadd.f32 0.0, %v6175
        %v6177 = vpop.f32.mrb[0].mxu0
        %v6178 = vpop.f32.mrb[0].mxu0
        %v6179 = vadd.f32 0.0, %v6178
        %v6180 = vpop.f32.mrb[0].mxu0
        %6181 = vmatprep.mubr.bf16.mxu0 0
        %6182 = vmatmul.mubr.bf16.gmra.mrb[0].mxu0 %v1408
        %v6183 = vpop.f32.mrb[0].mxu0
        %v6184 = vadd.f32 0.0, %v6183
        %v6185 = vpop.f32.mrb[0].mxu0
        %v6186 = vpop.f32.mrb[0].mxu0
        %v6187 = vadd.f32 0.0, %v6186
        %v6188 = vpop.f32.mrb[0].mxu0
        %6189 = vmatprep.mubr.bf16.mxu0 0
        %6190 = vmatmul.mubr.bf16.gmra.mrb[0].mxu0 %v547
        %v6191 = vpop.f32.mrb[0].mxu0
        %v6192 = vadd.f32 0.0, %v6191
        %v6193 = vpop.f32.mrb[0].mxu0
        %v6194 = vpop.f32.mrb[0].mxu0
        %v6195 = vadd.f32 0.0, %v6194
        %v6196 = vpop.f32.mrb[0].mxu0
        %6197 = vmatprep.mubr.bf16.mxu0 0
        %6198 = vmatmul.mubr.bf16.gmra.mrb[0].mxu0 %v1409
        %v6199 = vpop.f32.mrb[0].mxu0
        %v6200 = vadd.f32 0.0, %v6199
        %v6201 = vpop.f32.mrb[0].mxu0
        %v6202 = vpop.f32.mrb[0].mxu0
        %v6203 = vadd.f32 0.0, %v6202
        %v6204 = vpop.f32.mrb[0].mxu0
        %6205 = vmatprep.mubr.bf16.mxu0 0
        %6206 = vmatmul.mubr.bf16.gmra.mrb[0].mxu0 %v550
        %v6207 = vpop.f32.mrb[0].mxu0
        %v6208 = vadd.f32 0.0, %v6207
        %v6209 = vpop.f32.mrb[0].mxu0
        %v6210 = vpop.f32.mrb[0].mxu0
        %v6211 = vadd.f32 0.0, %v6210
        %v6212 = vpop.f32.mrb[0].mxu0
        %6213 = vmatprep.mubr.bf16.mxu0 0
        %6214 = vmatmul.mubr.bf16.gmra.mrb[0].mxu0 %v1410
        %v6215 = vpop.f32.mrb[0].mxu0
        %v6216 = vadd.f32 0.0, %v6215
        %v6217 = vpop.f32.mrb[0].mxu0
        %v6218 = vpop.f32.mrb[0].mxu0
        %v6219 = vadd.f32 0.0, %v6218
        %v6220 = vpop.f32.mrb[0].mxu0
        %6221 = vmatprep.mubr.bf16.mxu0 0
        %6222 = vmatmul.mubr.bf16.gmra.mrb[0].mxu0 %v553
        %v6223 = vpop.f32.mrb[0].mxu0
        %v6224 = vadd.f32 0.0, %v6223
        %v6225 = vpop.f32.mrb[0].mxu0
        %v6226 = vpop.f32.mrb[0].mxu0
        %v6227 = vadd.f32 0.0, %v6226
        %v6228 = vpop.f32.mrb[0].mxu0
        %6229 = vmatprep.mubr.bf16.mxu0 0
        %6230 = vmatmul.mubr.bf16.gmra.mrb[0].mxu0 %v1411
        %v6231 = vpop.f32.mrb[0].mxu0
        %v6232 = vadd.f32 0.0, %v6231
        %v6233 = vpop.f32.mrb[0].mxu0
        %v6234 = vpop.f32.mrb[0].mxu0
        %v6235 = vadd.f32 0.0, %v6234
        %v6236 = vpop.f32.mrb[0].mxu0
        %6237 = vmatprep.mubr.bf16.mxu0 0
        %6238 = vmatmul.mubr.bf16.gmra.mrb[0].mxu0 %v556
        %v6239 = vpop.f32.mrb[0].mxu0
        %v6240 = vadd.f32 0.0, %v6239
        %v6241 = vpop.f32.mrb[0].mxu0
        %v6242 = vpop.f32.mrb[0].mxu0
        %v6243 = vadd.f32 0.0, %v6242
        %v6244 = vpop.f32.mrb[0].mxu0
        %6245 = vmatprep.mubr.bf16.mxu0 0
        %6246 = vmatmul.mubr.bf16.gmra.mrb[0].mxu0 %v6043
        %v6247 = vpop.f32.mrb[0].mxu0
        %v6248 = vadd.f32 0.0, %v6247
        %v6249 = vpop.f32.mrb[0].mxu0
        %v6250 = vpop.f32.mrb[0].mxu0
        %v6251 = vadd.f32 0.0, %v6250
        %v6252 = vpop.f32.mrb[0].mxu0
        %6253 = vdwg.mxu0
        %v6254 = vadd.f32 %v5955, %v6128
        %v6255 = vadd.f32 %v5956, %v6131
        %v6256 = vadd.f32 %v5957, %v6136
        %v6257 = vadd.f32 %v5958, %v6139
        %v6258 = vadd.f32 %v5959, %v6144
        %v6259 = vadd.f32 %v5960, %v6147
        %v6260 = vadd.f32 %v5961, %v6152
        %v6261 = vadd.f32 %v5962, %v6155
        %v6262 = vadd.f32 %v5963, %v6160
        %v6263 = vadd.f32 %v5964, %v6163
        %v6264 = vadd.f32 %v5965, %v6168
        %v6265 = vadd.f32 %v5966, %v6171
        %v6266 = vadd.f32 %v5967, %v6176
        %v6267 = vadd.f32 %v5968, %v6179
        %v6268 = vadd.f32 %v5969, %v6184
        %v6269 = vadd.f32 %v5970, %v6187
        %v6270 = vadd.f32 %v5971, %v6192
        %v6271 = vadd.f32 %v5972, %v6195
        %v6272 = vadd.f32 %v5973, %v6200
        %v6273 = vadd.f32 %v5974, %v6203
        %v6274 = vadd.f32 %v5975, %v6208
        %v6275 = vadd.f32 %v5976, %v6211
        %v6276 = vadd.f32 %v5977, %v6216
        %v6277 = vadd.f32 %v5978, %v6219
        %v6278 = vadd.f32 %v5979, %v6224
        %v6279 = vadd.f32 %v5980, %v6227
        %v6280 = vadd.f32 %v5981, %v6232
        %v6281 = vadd.f32 %v5982, %v6235
        %v6282 = vadd.f32 %v5983, %v6240
        %v6283 = vadd.f32 %v5984, %v6243
        %v6284 = vadd.f32 %v5985, %v6248
        %v6285 = vadd.f32 %v5986, %v6251
        %s6286 = scalar_lea.vmem [#allocation8], 384
        %v6287 = vld [vmem:[%s6286] sm:$0xf]
        %v6288 = vld [vmem:[%s6286 + $0x4] sm:$0xf]
        %v6289 = vld [vmem:[%s6286 + $0x8] sm:$0xf]
        %v6290 = vld [vmem:[%s6286 + $0xc] sm:$0xf]
        %v6291 = vld [vmem:[%s6286 + $0x10] sm:$0xf]
        %v6292 = vld [vmem:[%s6286 + $0x14] sm:$0xf]
        %v6293 = vld [vmem:[%s6286 + $0x18] sm:$0xf]
        %v6294 = vld [vmem:[%s6286 + $0x1c] sm:$0xf]
        %v6295 = vld [vmem:[%s6286 + $0x20] sm:$0xf]
        %v6296 = vld [vmem:[%s6286 + $0x24] sm:$0xf]
        %v6297 = vld [vmem:[%s6286 + $0x28] sm:$0xf]
        %v6298 = vld [vmem:[%s6286 + $0x2c] sm:$0xf]
        %v6299 = vld [vmem:[%s6286 + $0x30] sm:$0xf]
        %v6300 = vld [vmem:[%s6286 + $0x34] sm:$0xf]
        %v6301 = vld [vmem:[%s6286 + $0x38] sm:$0xf]
        %v6302 = vld [vmem:[%s6286 + $0x3c] sm:$0xf]
        %v6303 = vpack.c.b16 %v1075, %v1074
        %v6321 = vunpack.c.l.b16 %v6287
        %v6322 = vunpack.c.l.b16 %v6288
        %v6323 = vunpack.c.l.b16 %v6289
        %v6324 = vunpack.c.l.b16 %v6290
        %v6325 = vunpack.c.l.b16 %v6291
        %v6326 = vunpack.c.l.b16 %v6292
        %v6327 = vunpack.c.l.b16 %v6293
        %v6328 = vunpack.c.l.b16 %v6294
        %v6329 = vunpack.c.l.b16 %v6295
        %v6330 = vunpack.c.l.b16 %v6296
        %v6331 = vunpack.c.l.b16 %v6297
        %v6332 = vunpack.c.l.b16 %v6298
        %v6333 = vunpack.c.l.b16 %v6299
        %v6334 = vunpack.c.l.b16 %v6300
        %v6335 = vunpack.c.l.b16 %v6301
        %v6336 = vunpack.c.l.b16 %v6302
        %v6337 = vpack.c.b16 %v6322, %v6321
        %v6338 = vpack.c.b16 %v6324, %v6323
        %v6339 = vpack.c.b16 %v6326, %v6325
        %v6340 = vpack.c.b16 %v6328, %v6327
        %v6341 = vpack.c.b16 %v6330, %v6329
        %v6342 = vpack.c.b16 %v6332, %v6331
        %v6343 = vpack.c.b16 %v6334, %v6333
        %v6344 = vpack.c.b16 %v6336, %v6335
        %6353 = vmatprep.subr.bf16.mxu0 0
        %6354 = vmatpush1.bf16.msra.mxu0 %v6337
        %6355 = vmatprep.subr.bf16.mxu0 0
        %6356 = vmatpush1.bf16.msra.mxu0 %v6338
        %6357 = vmatprep.subr.bf16.mxu0 0
        %6358 = vmatpush1.bf16.msra.mxu0 %v6339
        %6359 = vmatprep.subr.bf16.mxu0 0
        %6360 = vmatpush1.bf16.msra.mxu0 %v6340
        %6361 = vmatprep.subr.bf16.mxu0 0
        %6362 = vmatpush1.bf16.msra.mxu0 %v6341
        %6363 = vmatprep.subr.bf16.mxu0 0
        %6364 = vmatpush1.bf16.msra.mxu0 %v6342
        %6365 = vmatprep.subr.bf16.mxu0 0
        %6366 = vmatpush1.bf16.msra.mxu0 %v6343
        %6367 = vmatprep.subr.bf16.mxu0 0
        %6368 = vmatpush1.bf16.msra.mxu0 %v6344
        %6369 = vmatprep.subr.bf16.mxu0 0
        %6370 = vmatpush1.bf16.msra.mxu0 0
        %6371 = vmatprep.subr.bf16.mxu0 0
        %6372 = vmatpush1.bf16.msra.mxu0 0
        %6373 = vmatprep.subr.bf16.mxu0 0
        %6374 = vmatpush1.bf16.msra.mxu0 0
        %6375 = vmatprep.subr.bf16.mxu0 0
        %6376 = vmatpush1.bf16.msra.mxu0 0
        %6377 = vmatprep.subr.bf16.mxu0 0
        %6378 = vmatpush1.bf16.msra.mxu0 0
        %6379 = vmatprep.subr.bf16.mxu0 0
        %6380 = vmatpush1.bf16.msra.mxu0 0
        %6381 = vmatprep.subr.bf16.mxu0 0
        %6382 = vmatpush1.bf16.msra.mxu0 0
        %6383 = vmatprep.subr.bf16.mxu0 0
        %6384 = vmatpush1.bf16.msra.mxu0 0
        %6385 = vmatprep.mubr.bf16.mxu0 0
        %6386 = vmatmul.mubr.bf16.gmra.mrb[0].mxu0 %v1165
        %v6387 = vpop.f32.mrb[0].mxu0
        %v6388 = vadd.f32 0.0, %v6387
        %v6389 = vpop.f32.mrb[0].mxu0
        %v6390 = vpop.f32.mrb[0].mxu0
        %v6391 = vadd.f32 0.0, %v6390
        %v6392 = vpop.f32.mrb[0].mxu0
        %6393 = vmatprep.mubr.bf16.mxu0 0
        %6394 = vmatmul.mubr.bf16.gmra.mrb[0].mxu0 %v1166
        %v6395 = vpop.f32.mrb[0].mxu0
        %v6396 = vadd.f32 0.0, %v6395
        %v6397 = vpop.f32.mrb[0].mxu0
        %v6398 = vpop.f32.mrb[0].mxu0
        %v6399 = vadd.f32 0.0, %v6398
        %v6400 = vpop.f32.mrb[0].mxu0
        %6401 = vmatprep.mubr.bf16.mxu0 0
        %6402 = vmatmul.mubr.bf16.gmra.mrb[0].mxu0 %v1167
        %v6403 = vpop.f32.mrb[0].mxu0
        %v6404 = vadd.f32 0.0, %v6403
        %v6405 = vpop.f32.mrb[0].mxu0
        %v6406 = vpop.f32.mrb[0].mxu0
        %v6407 = vadd.f32 0.0, %v6406
        %v6408 = vpop.f32.mrb[0].mxu0
        %6409 = vmatprep.mubr.bf16.mxu0 0
        %6410 = vmatmul.mubr.bf16.gmra.mrb[0].mxu0 %v1168
        %v6411 = vpop.f32.mrb[0].mxu0
        %v6412 = vadd.f32 0.0, %v6411
        %v6413 = vpop.f32.mrb[0].mxu0
        %v6414 = vpop.f32.mrb[0].mxu0
        %v6415 = vadd.f32 0.0, %v6414
        %v6416 = vpop.f32.mrb[0].mxu0
        %6417 = vmatprep.mubr.bf16.mxu0 0
        %6418 = vmatmul.mubr.bf16.gmra.mrb[0].mxu0 %v1169
        %v6419 = vpop.f32.mrb[0].mxu0
        %v6420 = vadd.f32 0.0, %v6419
        %v6421 = vpop.f32.mrb[0].mxu0
        %v6422 = vpop.f32.mrb[0].mxu0
        %v6423 = vadd.f32 0.0, %v6422
        %v6424 = vpop.f32.mrb[0].mxu0
        %6425 = vmatprep.mubr.bf16.mxu0 0
        %6426 = vmatmul.mubr.bf16.gmra.mrb[0].mxu0 %v1170
        %v6427 = vpop.f32.mrb[0].mxu0
        %v6428 = vadd.f32 0.0, %v6427
        %v6429 = vpop.f32.mrb[0].mxu0
        %v6430 = vpop.f32.mrb[0].mxu0
        %v6431 = vadd.f32 0.0, %v6430
        %v6432 = vpop.f32.mrb[0].mxu0
        %6433 = vmatprep.mubr.bf16.mxu0 0
        %6434 = vmatmul.mubr.bf16.gmra.mrb[0].mxu0 %v1171
        %v6435 = vpop.f32.mrb[0].mxu0
        %v6436 = vadd.f32 0.0, %v6435
        %v6437 = vpop.f32.mrb[0].mxu0
        %v6438 = vpop.f32.mrb[0].mxu0
        %v6439 = vadd.f32 0.0, %v6438
        %v6440 = vpop.f32.mrb[0].mxu0
        %6441 = vmatprep.mubr.bf16.mxu0 0
        %6442 = vmatmul.mubr.bf16.gmra.mrb[0].mxu0 %v1172
        %v6443 = vpop.f32.mrb[0].mxu0
        %v6444 = vadd.f32 0.0, %v6443
        %v6445 = vpop.f32.mrb[0].mxu0
        %v6446 = vpop.f32.mrb[0].mxu0
        %v6447 = vadd.f32 0.0, %v6446
        %v6448 = vpop.f32.mrb[0].mxu0
        %6449 = vmatprep.mubr.bf16.mxu0 0
        %6450 = vmatmul.mubr.bf16.gmra.mrb[0].mxu0 %v1173
        %v6451 = vpop.f32.mrb[0].mxu0
        %v6452 = vadd.f32 0.0, %v6451
        %v6453 = vpop.f32.mrb[0].mxu0
        %v6454 = vpop.f32.mrb[0].mxu0
        %v6455 = vadd.f32 0.0, %v6454
        %v6456 = vpop.f32.mrb[0].mxu0
        %6457 = vmatprep.mubr.bf16.mxu0 0
        %6458 = vmatmul.mubr.bf16.gmra.mrb[0].mxu0 %v1174
        %v6459 = vpop.f32.mrb[0].mxu0
        %v6460 = vadd.f32 0.0, %v6459
        %v6461 = vpop.f32.mrb[0].mxu0
        %v6462 = vpop.f32.mrb[0].mxu0
        %v6463 = vadd.f32 0.0, %v6462
        %v6464 = vpop.f32.mrb[0].mxu0
        %6465 = vmatprep.mubr.bf16.mxu0 0
        %6466 = vmatmul.mubr.bf16.gmra.mrb[0].mxu0 %v1175
        %v6467 = vpop.f32.mrb[0].mxu0
        %v6468 = vadd.f32 0.0, %v6467
        %v6469 = vpop.f32.mrb[0].mxu0
        %v6470 = vpop.f32.mrb[0].mxu0
        %v6471 = vadd.f32 0.0, %v6470
        %v6472 = vpop.f32.mrb[0].mxu0
        %6473 = vmatprep.mubr.bf16.mxu0 0
        %6474 = vmatmul.mubr.bf16.gmra.mrb[0].mxu0 %v1176
        %v6475 = vpop.f32.mrb[0].mxu0
        %v6476 = vadd.f32 0.0, %v6475
        %v6477 = vpop.f32.mrb[0].mxu0
        %v6478 = vpop.f32.mrb[0].mxu0
        %v6479 = vadd.f32 0.0, %v6478
        %v6480 = vpop.f32.mrb[0].mxu0
        %6481 = vmatprep.mubr.bf16.mxu0 0
        %6482 = vmatmul.mubr.bf16.gmra.mrb[0].mxu0 %v1177
        %v6483 = vpop.f32.mrb[0].mxu0
        %v6484 = vadd.f32 0.0, %v6483
        %v6485 = vpop.f32.mrb[0].mxu0
        %v6486 = vpop.f32.mrb[0].mxu0
        %v6487 = vadd.f32 0.0, %v6486
        %v6488 = vpop.f32.mrb[0].mxu0
        %6489 = vmatprep.mubr.bf16.mxu0 0
        %6490 = vmatmul.mubr.bf16.gmra.mrb[0].mxu0 %v1178
        %v6491 = vpop.f32.mrb[0].mxu0
        %v6492 = vadd.f32 0.0, %v6491
        %v6493 = vpop.f32.mrb[0].mxu0
        %v6494 = vpop.f32.mrb[0].mxu0
        %v6495 = vadd.f32 0.0, %v6494
        %v6496 = vpop.f32.mrb[0].mxu0
        %6497 = vmatprep.mubr.bf16.mxu0 0
        %6498 = vmatmul.mubr.bf16.gmra.mrb[0].mxu0 %v4560
        %v6499 = vpop.f32.mrb[0].mxu0
        %v6500 = vadd.f32 0.0, %v6499
        %v6501 = vpop.f32.mrb[0].mxu0
        %v6502 = vpop.f32.mrb[0].mxu0
        %v6503 = vadd.f32 0.0, %v6502
        %v6504 = vpop.f32.mrb[0].mxu0
        %6505 = vmatprep.mubr.bf16.mxu0 0
        %6506 = vmatmul.mubr.bf16.gmra.mrb[0].mxu0 %v6303
        %v6507 = vpop.f32.mrb[0].mxu0
        %v6508 = vadd.f32 0.0, %v6507
        %v6509 = vpop.f32.mrb[0].mxu0
        %v6510 = vpop.f32.mrb[0].mxu0
        %v6511 = vadd.f32 0.0, %v6510
        %v6512 = vpop.f32.mrb[0].mxu0
        %6513 = vdwg.mxu0
        %v6514 = vadd.f32 %v6254, %v6388
        %v6515 = vadd.f32 %v6255, %v6391
        %v6516 = vadd.f32 %v6256, %v6396
        %v6517 = vadd.f32 %v6257, %v6399
        %v6518 = vadd.f32 %v6258, %v6404
        %v6519 = vadd.f32 %v6259, %v6407
        %v6520 = vadd.f32 %v6260, %v6412
        %v6521 = vadd.f32 %v6261, %v6415
        %v6522 = vadd.f32 %v6262, %v6420
        %v6523 = vadd.f32 %v6263, %v6423
        %v6524 = vadd.f32 %v6264, %v6428
        %v6525 = vadd.f32 %v6265, %v6431
        %v6526 = vadd.f32 %v6266, %v6436
        %v6527 = vadd.f32 %v6267, %v6439
        %v6528 = vadd.f32 %v6268, %v6444
        %v6529 = vadd.f32 %v6269, %v6447
        %v6530 = vadd.f32 %v6270, %v6452
        %v6531 = vadd.f32 %v6271, %v6455
        %v6532 = vadd.f32 %v6272, %v6460
        %v6533 = vadd.f32 %v6273, %v6463
        %v6534 = vadd.f32 %v6274, %v6468
        %v6535 = vadd.f32 %v6275, %v6471
        %v6536 = vadd.f32 %v6276, %v6476
        %v6537 = vadd.f32 %v6277, %v6479
        %v6538 = vadd.f32 %v6278, %v6484
        %v6539 = vadd.f32 %v6279, %v6487
        %v6540 = vadd.f32 %v6280, %v6492
        %v6541 = vadd.f32 %v6281, %v6495
        %v6542 = vadd.f32 %v6282, %v6500
        %v6543 = vadd.f32 %v6283, %v6503
        %v6544 = vadd.f32 %v6284, %v6508
        %v6545 = vadd.f32 %v6285, %v6511
        %v6546 = vadd.f32 %v5994, %v731
        %v6547 = vadd.f32 %v5995, %v735
        %v6548 = vadd.f32 %v5996, %v745
        %v6549 = vadd.f32 %v5997, %v751
        %v6550 = vadd.f32 %v5998, %v761
        %v6551 = vadd.f32 %v5999, %v765
        %v6552 = vadd.f32 %v6000, %v775
        %v6553 = vadd.f32 %v6001, %v781
        %v6554 = vadd.f32 %v6002, %v791
        %v6555 = vadd.f32 %v6003, %v795
        %v6556 = vadd.f32 %v6004, %v805
        %v6557 = vadd.f32 %v6005, %v811
        %v6558 = vadd.f32 %v6006, %v821
        %v6559 = vadd.f32 %v6007, %v825
        %v6560 = vadd.f32 %v6008, %v835
        %v6561 = vadd.f32 %v6009, %v841
        %v6562 = vadd.f32 %v6010, %v851
        %v6563 = vadd.f32 %v6011, %v855
        %v6564 = vadd.f32 %v6012, %v865
        %v6565 = vadd.f32 %v6013, %v871
        %v6566 = vadd.f32 %v6014, %v881
        %v6567 = vadd.f32 %v6015, %v885
        %v6568 = vadd.f32 %v6016, %v895
        %v6569 = vadd.f32 %v6017, %v901
        %v6570 = vadd.f32 %v6018, %v911
        %v6571 = vadd.f32 %v6019, %v915
        %v6572 = vadd.f32 %v6020, %v925
        %v6573 = vadd.f32 %v6021, %v931
        %v6574 = vadd.f32 %v6022, %v941
        %v6575 = vadd.f32 %v6023, %v945
        %v6576 = vadd.f32 %v6024, %v955
        %v6577 = vadd.f32 %v6025, %v961
        %v6579 = vshrl.u32 %v393, 16
        %v6581 = vrot.slane %v6579, 4
        %v6582 = vshll.u32 %v393, 16
        %v6584 = vrot.slane %v6582, 5
        %v6585 = vor.u32 %v6581, %v6584
        %v6586 = vrot.slane %v6585, 4
        %v6588 = vshll.u32 %v394, 16
        %v6590 = vrot.slane %v6588, 5
        %v6591 = vsel %vm1663, %v6586, %v6590
        %v6592 = vshrl.u32 %v394, 16
        %v6594 = vrot.slane %v6592, 4
        %v6595 = vor.u32 %v6594, %v6590
        %v6596 = vrot.slane %v6595, 4
        %v6598 = vshll.u32 %v395, 16
        %v6600 = vrot.slane %v6598, 5
        %v6601 = vsel %vm1663, %v6596, %v6600
        %s6602 = scalar_lea.vmem [#allocation7], 448
        %v6603 = vld [vmem:[%s6602] sm:$0xf]
        %v6604 = vld [vmem:[%s6602 + $0x4] sm:$0xf]
        %v6605 = vld [vmem:[%s6602 + $0x8] sm:$0xf]
        %v6606 = vld [vmem:[%s6602 + $0xc] sm:$0xf]
        %v6607 = vld [vmem:[%s6602 + $0x10] sm:$0xf]
        %v6608 = vld [vmem:[%s6602 + $0x14] sm:$0xf]
        %v6609 = vld [vmem:[%s6602 + $0x18] sm:$0xf]
        %v6610 = vld [vmem:[%s6602 + $0x1c] sm:$0xf]
        %v6611 = vld [vmem:[%s6602 + $0x20] sm:$0xf]
        %v6612 = vld [vmem:[%s6602 + $0x24] sm:$0xf]
        %v6613 = vld [vmem:[%s6602 + $0x28] sm:$0xf]
        %v6614 = vld [vmem:[%s6602 + $0x2c] sm:$0xf]
        %v6615 = vld [vmem:[%s6602 + $0x30] sm:$0xf]
        %v6616 = vld [vmem:[%s6602 + $0x34] sm:$0xf]
        %v6617 = vld [vmem:[%s6602 + $0x38] sm:$0xf]
        %v6618 = vld [vmem:[%s6602 + $0x3c] sm:$0xf]
        %v6619 = vunpack.c.l.b16 %v6591
        %v6620 = vunpack.c.l.b16 %v6601
        %v6621 = vpack.c.b16 %v6620, %v6619
        %v6639 = vunpack.c.l.b16 %v6603
        %v6640 = vunpack.c.l.b16 %v6604
        %v6641 = vunpack.c.l.b16 %v6605
        %v6642 = vunpack.c.l.b16 %v6606
        %v6643 = vunpack.c.l.b16 %v6607
        %v6644 = vunpack.c.l.b16 %v6608
        %v6645 = vunpack.c.l.b16 %v6609
        %v6646 = vunpack.c.l.b16 %v6610
        %v6647 = vunpack.c.l.b16 %v6611
        %v6648 = vunpack.c.l.b16 %v6612
        %v6649 = vunpack.c.l.b16 %v6613
        %v6650 = vunpack.c.l.b16 %v6614
        %v6651 = vunpack.c.l.b16 %v6615
        %v6652 = vunpack.c.l.b16 %v6616
        %v6653 = vunpack.c.l.b16 %v6617
        %v6654 = vunpack.c.l.b16 %v6618
        %v6655 = vpack.c.b16 %v6640, %v6639
        %v6656 = vpack.c.b16 %v6642, %v6641
        %v6657 = vpack.c.b16 %v6644, %v6643
        %v6658 = vpack.c.b16 %v6646, %v6645
        %v6659 = vpack.c.b16 %v6648, %v6647
        %v6660 = vpack.c.b16 %v6650, %v6649
        %v6661 = vpack.c.b16 %v6652, %v6651
        %v6662 = vpack.c.b16 %v6654, %v6653
        %6671 = vmatprep.subr.bf16.mxu0 0
        %6672 = vmatpush1.bf16.msra.mxu0 %v6655
        %6673 = vmatprep.subr.bf16.mxu0 0
        %6674 = vmatpush1.bf16.msra.mxu0 %v6656
        %6675 = vmatprep.subr.bf16.mxu0 0
        %6676 = vmatpush1.bf16.msra.mxu0 %v6657
        %6677 = vmatprep.subr.bf16.mxu0 0
        %6678 = vmatpush1.bf16.msra.mxu0 %v6658
        %6679 = vmatprep.subr.bf16.mxu0 0
        %6680 = vmatpush1.bf16.msra.mxu0 %v6659
        %6681 = vmatprep.subr.bf16.mxu0 0
        %6682 = vmatpush1.bf16.msra.mxu0 %v6660
        %6683 = vmatprep.subr.bf16.mxu0 0
        %6684 = vmatpush1.bf16.msra.mxu0 %v6661
        %6685 = vmatprep.subr.bf16.mxu0 0
        %6686 = vmatpush1.bf16.msra.mxu0 %v6662
        %6687 = vmatprep.subr.bf16.mxu0 0
        %6688 = vmatpush1.bf16.msra.mxu0 0
        %6689 = vmatprep.subr.bf16.mxu0 0
        %6690 = vmatpush1.bf16.msra.mxu0 0
        %6691 = vmatprep.subr.bf16.mxu0 0
        %6692 = vmatpush1.bf16.msra.mxu0 0
        %6693 = vmatprep.subr.bf16.mxu0 0
        %6694 = vmatpush1.bf16.msra.mxu0 0
        %6695 = vmatprep.subr.bf16.mxu0 0
        %6696 = vmatpush1.bf16.msra.mxu0 0
        %6697 = vmatprep.subr.bf16.mxu0 0
        %6698 = vmatpush1.bf16.msra.mxu0 0
        %6699 = vmatprep.subr.bf16.mxu0 0
        %6700 = vmatpush1.bf16.msra.mxu0 0
        %6701 = vmatprep.subr.bf16.mxu0 0
        %6702 = vmatpush1.bf16.msra.mxu0 0
        %6703 = vmatprep.mubr.bf16.mxu0 0
        %6704 = vmatmul.mubr.bf16.gmra.mrb[0].mxu0 %v2099
        %v6705 = vpop.f32.mrb[0].mxu0
        %v6706 = vadd.f32 0.0, %v6705
        %v6707 = vpop.f32.mrb[0].mxu0
        %v6708 = vpop.f32.mrb[0].mxu0
        %v6709 = vadd.f32 0.0, %v6708
        %v6710 = vpop.f32.mrb[0].mxu0
        %6711 = vmatprep.mubr.bf16.mxu0 0
        %6712 = vmatmul.mubr.bf16.gmra.mrb[0].mxu0 %v2100
        %v6713 = vpop.f32.mrb[0].mxu0
        %v6714 = vadd.f32 0.0, %v6713
        %v6715 = vpop.f32.mrb[0].mxu0
        %v6716 = vpop.f32.mrb[0].mxu0
        %v6717 = vadd.f32 0.0, %v6716
        %v6718 = vpop.f32.mrb[0].mxu0
        %6719 = vmatprep.mubr.bf16.mxu0 0
        %6720 = vmatmul.mubr.bf16.gmra.mrb[0].mxu0 %v2101
        %v6721 = vpop.f32.mrb[0].mxu0
        %v6722 = vadd.f32 0.0, %v6721
        %v6723 = vpop.f32.mrb[0].mxu0
        %v6724 = vpop.f32.mrb[0].mxu0
        %v6725 = vadd.f32 0.0, %v6724
        %v6726 = vpop.f32.mrb[0].mxu0
        %6727 = vmatprep.mubr.bf16.mxu0 0
        %6728 = vmatmul.mubr.bf16.gmra.mrb[0].mxu0 %v2102
        %v6729 = vpop.f32.mrb[0].mxu0
        %v6730 = vadd.f32 0.0, %v6729
        %v6731 = vpop.f32.mrb[0].mxu0
        %v6732 = vpop.f32.mrb[0].mxu0
        %v6733 = vadd.f32 0.0, %v6732
        %v6734 = vpop.f32.mrb[0].mxu0
        %6735 = vmatprep.mubr.bf16.mxu0 0
        %6736 = vmatmul.mubr.bf16.gmra.mrb[0].mxu0 %v2103
        %v6737 = vpop.f32.mrb[0].mxu0
        %v6738 = vadd.f32 0.0, %v6737
        %v6739 = vpop.f32.mrb[0].mxu0
        %v6740 = vpop.f32.mrb[0].mxu0
        %v6741 = vadd.f32 0.0, %v6740
        %v6742 = vpop.f32.mrb[0].mxu0
        %6743 = vmatprep.mubr.bf16.mxu0 0
        %6744 = vmatmul.mubr.bf16.gmra.mrb[0].mxu0 %v2104
        %v6745 = vpop.f32.mrb[0].mxu0
        %v6746 = vadd.f32 0.0, %v6745
        %v6747 = vpop.f32.mrb[0].mxu0
        %v6748 = vpop.f32.mrb[0].mxu0
        %v6749 = vadd.f32 0.0, %v6748
        %v6750 = vpop.f32.mrb[0].mxu0
        %6751 = vmatprep.mubr.bf16.mxu0 0
        %6752 = vmatmul.mubr.bf16.gmra.mrb[0].mxu0 %v2105
        %v6753 = vpop.f32.mrb[0].mxu0
        %v6754 = vadd.f32 0.0, %v6753
        %v6755 = vpop.f32.mrb[0].mxu0
        %v6756 = vpop.f32.mrb[0].mxu0
        %v6757 = vadd.f32 0.0, %v6756
        %v6758 = vpop.f32.mrb[0].mxu0
        %6759 = vmatprep.mubr.bf16.mxu0 0
        %6760 = vmatmul.mubr.bf16.gmra.mrb[0].mxu0 %v2106
        %v6761 = vpop.f32.mrb[0].mxu0
        %v6762 = vadd.f32 0.0, %v6761
        %v6763 = vpop.f32.mrb[0].mxu0
        %v6764 = vpop.f32.mrb[0].mxu0
        %v6765 = vadd.f32 0.0, %v6764
        %v6766 = vpop.f32.mrb[0].mxu0
        %6767 = vmatprep.mubr.bf16.mxu0 0
        %6768 = vmatmul.mubr.bf16.gmra.mrb[0].mxu0 %v2107
        %v6769 = vpop.f32.mrb[0].mxu0
        %v6770 = vadd.f32 0.0, %v6769
        %v6771 = vpop.f32.mrb[0].mxu0
        %v6772 = vpop.f32.mrb[0].mxu0
        %v6773 = vadd.f32 0.0, %v6772
        %v6774 = vpop.f32.mrb[0].mxu0
        %6775 = vmatprep.mubr.bf16.mxu0 0
        %6776 = vmatmul.mubr.bf16.gmra.mrb[0].mxu0 %v2108
        %v6777 = vpop.f32.mrb[0].mxu0
        %v6778 = vadd.f32 0.0, %v6777
        %v6779 = vpop.f32.mrb[0].mxu0
        %v6780 = vpop.f32.mrb[0].mxu0
        %v6781 = vadd.f32 0.0, %v6780
        %v6782 = vpop.f32.mrb[0].mxu0
        %6783 = vmatprep.mubr.bf16.mxu0 0
        %6784 = vmatmul.mubr.bf16.gmra.mrb[0].mxu0 %v2109
        %v6785 = vpop.f32.mrb[0].mxu0
        %v6786 = vadd.f32 0.0, %v6785
        %v6787 = vpop.f32.mrb[0].mxu0
        %v6788 = vpop.f32.mrb[0].mxu0
        %v6789 = vadd.f32 0.0, %v6788
        %v6790 = vpop.f32.mrb[0].mxu0
        %6791 = vmatprep.mubr.bf16.mxu0 0
        %6792 = vmatmul.mubr.bf16.gmra.mrb[0].mxu0 %v2110
        %v6793 = vpop.f32.mrb[0].mxu0
        %v6794 = vadd.f32 0.0, %v6793
        %v6795 = vpop.f32.mrb[0].mxu0
        %v6796 = vpop.f32.mrb[0].mxu0
        %v6797 = vadd.f32 0.0, %v6796
        %v6798 = vpop.f32.mrb[0].mxu0
        %6799 = vmatprep.mubr.bf16.mxu0 0
        %6800 = vmatmul.mubr.bf16.gmra.mrb[0].mxu0 %v2111
        %v6801 = vpop.f32.mrb[0].mxu0
        %v6802 = vadd.f32 0.0, %v6801
        %v6803 = vpop.f32.mrb[0].mxu0
        %v6804 = vpop.f32.mrb[0].mxu0
        %v6805 = vadd.f32 0.0, %v6804
        %v6806 = vpop.f32.mrb[0].mxu0
        %6807 = vmatprep.mubr.bf16.mxu0 0
        %6808 = vmatmul.mubr.bf16.gmra.mrb[0].mxu0 %v2112
        %v6809 = vpop.f32.mrb[0].mxu0
        %v6810 = vadd.f32 0.0, %v6809
        %v6811 = vpop.f32.mrb[0].mxu0
        %v6812 = vpop.f32.mrb[0].mxu0
        %v6813 = vadd.f32 0.0, %v6812
        %v6814 = vpop.f32.mrb[0].mxu0
        %6815 = vmatprep.mubr.bf16.mxu0 0
        %6816 = vmatmul.mubr.bf16.gmra.mrb[0].mxu0 %v4878
        %v6817 = vpop.f32.mrb[0].mxu0
        %v6818 = vadd.f32 0.0, %v6817
        %v6819 = vpop.f32.mrb[0].mxu0
        %v6820 = vpop.f32.mrb[0].mxu0
        %v6821 = vadd.f32 0.0, %v6820
        %v6822 = vpop.f32.mrb[0].mxu0
        %6823 = vmatprep.mubr.bf16.mxu0 0
        %6824 = vmatmul.mubr.bf16.gmra.mrb[0].mxu0 %v6621
        %v6825 = vpop.f32.mrb[0].mxu0
        %v6826 = vadd.f32 0.0, %v6825
        %v6827 = vpop.f32.mrb[0].mxu0
        %v6828 = vpop.f32.mrb[0].mxu0
        %v6829 = vadd.f32 0.0, %v6828
        %v6830 = vpop.f32.mrb[0].mxu0
        %6831 = vdwg.mxu0
        %v6832 = vadd.f32 %v6514, %v6706
        %v6833 = vadd.f32 %v6515, %v6709
        %v6834 = vadd.f32 %v6516, %v6714
        %v6835 = vadd.f32 %v6517, %v6717
        %v6836 = vadd.f32 %v6518, %v6722
        %v6837 = vadd.f32 %v6519, %v6725
        %v6838 = vadd.f32 %v6520, %v6730
        %v6839 = vadd.f32 %v6521, %v6733
        %v6840 = vadd.f32 %v6522, %v6738
        %v6841 = vadd.f32 %v6523, %v6741
        %v6842 = vadd.f32 %v6524, %v6746
        %v6843 = vadd.f32 %v6525, %v6749
        %v6844 = vadd.f32 %v6526, %v6754
        %v6845 = vadd.f32 %v6527, %v6757
        %v6846 = vadd.f32 %v6528, %v6762
        %v6847 = vadd.f32 %v6529, %v6765
        %v6848 = vadd.f32 %v6530, %v6770
        %v6849 = vadd.f32 %v6531, %v6773
        %v6850 = vadd.f32 %v6532, %v6778
        %v6851 = vadd.f32 %v6533, %v6781
        %v6852 = vadd.f32 %v6534, %v6786
        %v6853 = vadd.f32 %v6535, %v6789
        %v6854 = vadd.f32 %v6536, %v6794
        %v6855 = vadd.f32 %v6537, %v6797
        %v6856 = vadd.f32 %v6538, %v6802
        %v6857 = vadd.f32 %v6539, %v6805
        %v6858 = vadd.f32 %v6540, %v6810
        %v6859 = vadd.f32 %v6541, %v6813
        %v6860 = vadd.f32 %v6542, %v6818
        %v6861 = vadd.f32 %v6543, %v6821
        %v6862 = vadd.f32 %v6544, %v6826
        %v6863 = vadd.f32 %v6545, %v6829
        %v6865 = vshrl.u32 %v1128, 16
        %v6867 = vrot.slane %v6865, 4
        %v6868 = vshll.u32 %v1128, 16
        %v6870 = vrot.slane %v6868, 5
        %v6871 = vor.u32 %v6867, %v6870
        %v6872 = vrot.slane %v6871, 4
        %v6874 = vshll.u32 %v1129, 16
        %v6876 = vrot.slane %v6874, 5
        %v6877 = vsel %vm1663, %v6872, %v6876
        %v6878 = vshrl.u32 %v1129, 16
        %v6880 = vrot.slane %v6878, 4
        %v6881 = vor.u32 %v6880, %v6876
        %v6882 = vrot.slane %v6881, 4
        %v6884 = vshll.u32 %v1130, 16
        %v6886 = vrot.slane %v6884, 5
        %v6887 = vsel %vm1663, %v6882, %v6886
        %s6888 = scalar_lea.vmem [#allocation8], 448
        %v6889 = vld [vmem:[%s6888] sm:$0xf]
        %v6890 = vld [vmem:[%s6888 + $0x4] sm:$0xf]
        %v6891 = vld [vmem:[%s6888 + $0x8] sm:$0xf]
        %v6892 = vld [vmem:[%s6888 + $0xc] sm:$0xf]
        %v6893 = vld [vmem:[%s6888 + $0x10] sm:$0xf]
        %v6894 = vld [vmem:[%s6888 + $0x14] sm:$0xf]
        %v6895 = vld [vmem:[%s6888 + $0x18] sm:$0xf]
        %v6896 = vld [vmem:[%s6888 + $0x1c] sm:$0xf]
        %v6897 = vld [vmem:[%s6888 + $0x20] sm:$0xf]
        %v6898 = vld [vmem:[%s6888 + $0x24] sm:$0xf]
        %v6899 = vld [vmem:[%s6888 + $0x28] sm:$0xf]
        %v6900 = vld [vmem:[%s6888 + $0x2c] sm:$0xf]
        %v6901 = vld [vmem:[%s6888 + $0x30] sm:$0xf]
        %v6902 = vld [vmem:[%s6888 + $0x34] sm:$0xf]
        %v6903 = vld [vmem:[%s6888 + $0x38] sm:$0xf]
        %v6904 = vld [vmem:[%s6888 + $0x3c] sm:$0xf]
        %v6905 = vunpack.c.l.b16 %v6877
        %v6906 = vunpack.c.l.b16 %v6887
        %v6907 = vpack.c.b16 %v6906, %v6905
        %v6925 = vunpack.c.l.b16 %v6889
        %v6926 = vunpack.c.l.b16 %v6890
        %v6927 = vunpack.c.l.b16 %v6891
        %v6928 = vunpack.c.l.b16 %v6892
        %v6929 = vunpack.c.l.b16 %v6893
        %v6930 = vunpack.c.l.b16 %v6894
        %v6931 = vunpack.c.l.b16 %v6895
        %v6932 = vunpack.c.l.b16 %v6896
        %v6933 = vunpack.c.l.b16 %v6897
        %v6934 = vunpack.c.l.b16 %v6898
        %v6935 = vunpack.c.l.b16 %v6899
        %v6936 = vunpack.c.l.b16 %v6900
        %v6937 = vunpack.c.l.b16 %v6901
        %v6938 = vunpack.c.l.b16 %v6902
        %v6939 = vunpack.c.l.b16 %v6903
        %v6940 = vunpack.c.l.b16 %v6904
        %v6941 = vpack.c.b16 %v6926, %v6925
        %v6942 = vpack.c.b16 %v6928, %v6927
        %v6943 = vpack.c.b16 %v6930, %v6929
        %v6944 = vpack.c.b16 %v6932, %v6931
        %v6945 = vpack.c.b16 %v6934, %v6933
        %v6946 = vpack.c.b16 %v6936, %v6935
        %v6947 = vpack.c.b16 %v6938, %v6937
        %v6948 = vpack.c.b16 %v6940, %v6939
        %6957 = vmatprep.subr.bf16.mxu0 0
        %6958 = vmatpush1.bf16.msra.mxu0 %v6941
        %6959 = vmatprep.subr.bf16.mxu0 0
        %6960 = vmatpush1.bf16.msra.mxu0 %v6942
        %6961 = vmatprep.subr.bf16.mxu0 0
        %6962 = vmatpush1.bf16.msra.mxu0 %v6943
        %6963 = vmatprep.subr.bf16.mxu0 0
        %6964 = vmatpush1.bf16.msra.mxu0 %v6944
        %6965 = vmatprep.subr.bf16.mxu0 0
        %6966 = vmatpush1.bf16.msra.mxu0 %v6945
        %6967 = vmatprep.subr.bf16.mxu0 0
        %6968 = vmatpush1.bf16.msra.mxu0 %v6946
        %6969 = vmatprep.subr.bf16.mxu0 0
        %6970 = vmatpush1.bf16.msra.mxu0 %v6947
        %6971 = vmatprep.subr.bf16.mxu0 0
        %6972 = vmatpush1.bf16.msra.mxu0 %v6948
        %6973 = vmatprep.subr.bf16.mxu0 0
        %6974 = vmatpush1.bf16.msra.mxu0 0
        %6975 = vmatprep.subr.bf16.mxu0 0
        %6976 = vmatpush1.bf16.msra.mxu0 0
        %6977 = vmatprep.subr.bf16.mxu0 0
        %6978 = vmatpush1.bf16.msra.mxu0 0
        %6979 = vmatprep.subr.bf16.mxu0 0
        %6980 = vmatpush1.bf16.msra.mxu0 0
        %6981 = vmatprep.subr.bf16.mxu0 0
        %6982 = vmatpush1.bf16.msra.mxu0 0
        %6983 = vmatprep.subr.bf16.mxu0 0
        %6984 = vmatpush1.bf16.msra.mxu0 0
        %6985 = vmatprep.subr.bf16.mxu0 0
        %6986 = vmatpush1.bf16.msra.mxu0 0
        %6987 = vmatprep.subr.bf16.mxu0 0
        %6988 = vmatpush1.bf16.msra.mxu0 0
        %6989 = vmatprep.mubr.bf16.mxu0 0
        %6990 = vmatmul.mubr.bf16.gmra.mrb[0].mxu0 %v2805
        %v6991 = vpop.f32.mrb[0].mxu0
        %v6992 = vadd.f32 0.0, %v6991
        %v6993 = vpop.f32.mrb[0].mxu0
        %v6994 = vpop.f32.mrb[0].mxu0
        %v6995 = vadd.f32 0.0, %v6994
        %v6996 = vpop.f32.mrb[0].mxu0
        %6997 = vmatprep.mubr.bf16.mxu0 0
        %6998 = vmatmul.mubr.bf16.gmra.mrb[0].mxu0 %v2806
        %v6999 = vpop.f32.mrb[0].mxu0
        %v7000 = vadd.f32 0.0, %v6999
        %v7001 = vpop.f32.mrb[0].mxu0
        %v7002 = vpop.f32.mrb[0].mxu0
        %v7003 = vadd.f32 0.0, %v7002
        %v7004 = vpop.f32.mrb[0].mxu0
        %7005 = vmatprep.mubr.bf16.mxu0 0
        %7006 = vmatmul.mubr.bf16.gmra.mrb[0].mxu0 %v2807
        %v7007 = vpop.f32.mrb[0].mxu0
        %v7008 = vadd.f32 0.0, %v7007
        %v7009 = vpop.f32.mrb[0].mxu0
        %v7010 = vpop.f32.mrb[0].mxu0
        %v7011 = vadd.f32 0.0, %v7010
        %v7012 = vpop.f32.mrb[0].mxu0
        %7013 = vmatprep.mubr.bf16.mxu0 0
        %7014 = vmatmul.mubr.bf16.gmra.mrb[0].mxu0 %v2808
        %v7015 = vpop.f32.mrb[0].mxu0
        %v7016 = vadd.f32 0.0, %v7015
        %v7017 = vpop.f32.mrb[0].mxu0
        %v7018 = vpop.f32.mrb[0].mxu0
        %v7019 = vadd.f32 0.0, %v7018
        %v7020 = vpop.f32.mrb[0].mxu0
        %7021 = vmatprep.mubr.bf16.mxu0 0
        %7022 = vmatmul.mubr.bf16.gmra.mrb[0].mxu0 %v2809
        %v7023 = vpop.f32.mrb[0].mxu0
        %v7024 = vadd.f32 0.0, %v7023
        %v7025 = vpop.f32.mrb[0].mxu0
        %v7026 = vpop.f32.mrb[0].mxu0
        %v7027 = vadd.f32 0.0, %v7026
        %v7028 = vpop.f32.mrb[0].mxu0
        %7029 = vmatprep.mubr.bf16.mxu0 0
        %7030 = vmatmul.mubr.bf16.gmra.mrb[0].mxu0 %v2810
        %v7031 = vpop.f32.mrb[0].mxu0
        %v7032 = vadd.f32 0.0, %v7031
        %v7033 = vpop.f32.mrb[0].mxu0
        %v7034 = vpop.f32.mrb[0].mxu0
        %v7035 = vadd.f32 0.0, %v7034
        %v7036 = vpop.f32.mrb[0].mxu0
        %7037 = vmatprep.mubr.bf16.mxu0 0
        %7038 = vmatmul.mubr.bf16.gmra.mrb[0].mxu0 %v2811
        %v7039 = vpop.f32.mrb[0].mxu0
        %v7040 = vadd.f32 0.0, %v7039
        %v7041 = vpop.f32.mrb[0].mxu0
        %v7042 = vpop.f32.mrb[0].mxu0
        %v7043 = vadd.f32 0.0, %v7042
        %v7044 = vpop.f32.mrb[0].mxu0
        %7045 = vmatprep.mubr.bf16.mxu0 0
        %7046 = vmatmul.mubr.bf16.gmra.mrb[0].mxu0 %v2812
        %v7047 = vpop.f32.mrb[0].mxu0
        %v7048 = vadd.f32 0.0, %v7047
        %v7049 = vpop.f32.mrb[0].mxu0
        %v7050 = vpop.f32.mrb[0].mxu0
        %v7051 = vadd.f32 0.0, %v7050
        %v7052 = vpop.f32.mrb[0].mxu0
        %7053 = vmatprep.mubr.bf16.mxu0 0
        %7054 = vmatmul.mubr.bf16.gmra.mrb[0].mxu0 %v2813
        %v7055 = vpop.f32.mrb[0].mxu0
        %v7056 = vadd.f32 0.0, %v7055
        %v7057 = vpop.f32.mrb[0].mxu0
        %v7058 = vpop.f32.mrb[0].mxu0
        %v7059 = vadd.f32 0.0, %v7058
        %v7060 = vpop.f32.mrb[0].mxu0
        %7061 = vmatprep.mubr.bf16.mxu0 0
        %7062 = vmatmul.mubr.bf16.gmra.mrb[0].mxu0 %v2814
        %v7063 = vpop.f32.mrb[0].mxu0
        %v7064 = vadd.f32 0.0, %v7063
        %v7065 = vpop.f32.mrb[0].mxu0
        %v7066 = vpop.f32.mrb[0].mxu0
        %v7067 = vadd.f32 0.0, %v7066
        %v7068 = vpop.f32.mrb[0].mxu0
        %7069 = vmatprep.mubr.bf16.mxu0 0
        %7070 = vmatmul.mubr.bf16.gmra.mrb[0].mxu0 %v2815
        %v7071 = vpop.f32.mrb[0].mxu0
        %v7072 = vadd.f32 0.0, %v7071
        %v7073 = vpop.f32.mrb[0].mxu0
        %v7074 = vpop.f32.mrb[0].mxu0
        %v7075 = vadd.f32 0.0, %v7074
        %v7076 = vpop.f32.mrb[0].mxu0
        %7077 = vmatprep.mubr.bf16.mxu0 0
        %7078 = vmatmul.mubr.bf16.gmra.mrb[0].mxu0 %v2816
        %v7079 = vpop.f32.mrb[0].mxu0
        %v7080 = vadd.f32 0.0, %v7079
        %v7081 = vpop.f32.mrb[0].mxu0
        %v7082 = vpop.f32.mrb[0].mxu0
        %v7083 = vadd.f32 0.0, %v7082
        %v7084 = vpop.f32.mrb[0].mxu0
        %7085 = vmatprep.mubr.bf16.mxu0 0
        %7086 = vmatmul.mubr.bf16.gmra.mrb[0].mxu0 %v2817
        %v7087 = vpop.f32.mrb[0].mxu0
        %v7088 = vadd.f32 0.0, %v7087
        %v7089 = vpop.f32.mrb[0].mxu0
        %v7090 = vpop.f32.mrb[0].mxu0
        %v7091 = vadd.f32 0.0, %v7090
        %v7092 = vpop.f32.mrb[0].mxu0
        %7093 = vmatprep.mubr.bf16.mxu0 0
        %7094 = vmatmul.mubr.bf16.gmra.mrb[0].mxu0 %v2818
        %v7095 = vpop.f32.mrb[0].mxu0
        %v7096 = vadd.f32 0.0, %v7095
        %v7097 = vpop.f32.mrb[0].mxu0
        %v7098 = vpop.f32.mrb[0].mxu0
        %v7099 = vadd.f32 0.0, %v7098
        %v7100 = vpop.f32.mrb[0].mxu0
        %7101 = vmatprep.mubr.bf16.mxu0 0
        %7102 = vmatmul.mubr.bf16.gmra.mrb[0].mxu0 %v5164
        %v7103 = vpop.f32.mrb[0].mxu0
        %v7104 = vadd.f32 0.0, %v7103
        %v7105 = vpop.f32.mrb[0].mxu0
        %v7106 = vpop.f32.mrb[0].mxu0
        %v7107 = vadd.f32 0.0, %v7106
        %v7108 = vpop.f32.mrb[0].mxu0
        %7109 = vmatprep.mubr.bf16.mxu0 0
        %7110 = vmatmul.mubr.bf16.gmra.mrb[0].mxu0 %v6907
        %v7111 = vpop.f32.mrb[0].mxu0
        %v7112 = vadd.f32 0.0, %v7111
        %v7113 = vpop.f32.mrb[0].mxu0
        %v7114 = vpop.f32.mrb[0].mxu0
        %v7115 = vadd.f32 0.0, %v7114
        %v7116 = vpop.f32.mrb[0].mxu0
        %7117 = vdwg.mxu0
        %v7118 = vadd.f32 %v6832, %v6992
        %v7119 = vadd.f32 %v6833, %v6995
        %v7120 = vadd.f32 %v6834, %v7000
        %v7121 = vadd.f32 %v6835, %v7003
        %v7122 = vadd.f32 %v6836, %v7008
        %v7123 = vadd.f32 %v6837, %v7011
        %v7124 = vadd.f32 %v6838, %v7016
        %v7125 = vadd.f32 %v6839, %v7019
        %v7126 = vadd.f32 %v6840, %v7024
        %v7127 = vadd.f32 %v6841, %v7027
        %v7128 = vadd.f32 %v6842, %v7032
        %v7129 = vadd.f32 %v6843, %v7035
        %v7130 = vadd.f32 %v6844, %v7040
        %v7131 = vadd.f32 %v6845, %v7043
        %v7132 = vadd.f32 %v6846, %v7048
        %v7133 = vadd.f32 %v6847, %v7051
        %v7134 = vadd.f32 %v6848, %v7056
        %v7135 = vadd.f32 %v6849, %v7059
        %v7136 = vadd.f32 %v6850, %v7064
        %v7137 = vadd.f32 %v6851, %v7067
        %v7138 = vadd.f32 %v6852, %v7072
        %v7139 = vadd.f32 %v6853, %v7075
        %v7140 = vadd.f32 %v6854, %v7080
        %v7141 = vadd.f32 %v6855, %v7083
        %v7142 = vadd.f32 %v6856, %v7088
        %v7143 = vadd.f32 %v6857, %v7091
        %v7144 = vadd.f32 %v6858, %v7096
        %v7145 = vadd.f32 %v6859, %v7099
        %v7146 = vadd.f32 %v6860, %v7104
        %v7147 = vadd.f32 %v6861, %v7107
        %v7148 = vadd.f32 %v6862, %v7112
        %v7149 = vadd.f32 %v6863, %v7115
        %v7153 = vrot.slane %v955, 1
        %v7154 = vrot.slane %v961, 1
        %v7155 = vsel %vm3124, %v7153, %v7154
        %v7156 = vrot.slane %v965, 1
        %v7157 = vsel %vm3124, %v7154, %v7156
        %v7160 = vadd.f32 %v6546, %v3137
        %v7161 = vadd.f32 %v6547, %v3139
        %v7162 = vadd.f32 %v6548, %v3142
        %v7163 = vadd.f32 %v6549, %v3144
        %v7164 = vadd.f32 %v6550, %v3147
        %v7165 = vadd.f32 %v6551, %v3149
        %v7166 = vadd.f32 %v6552, %v3152
        %v7167 = vadd.f32 %v6553, %v3154
        %v7168 = vadd.f32 %v6554, %v3157
        %v7169 = vadd.f32 %v6555, %v3159
        %v7170 = vadd.f32 %v6556, %v3162
        %v7171 = vadd.f32 %v6557, %v3164
        %v7172 = vadd.f32 %v6558, %v3167
        %v7173 = vadd.f32 %v6559, %v3169
        %v7174 = vadd.f32 %v6560, %v3172
        %v7175 = vadd.f32 %v6561, %v3174
        %v7176 = vadd.f32 %v6562, %v3177
        %v7177 = vadd.f32 %v6563, %v3179
        %v7178 = vadd.f32 %v6564, %v3182
        %v7179 = vadd.f32 %v6565, %v3184
        %v7180 = vadd.f32 %v6566, %v3187
        %v7181 = vadd.f32 %v6567, %v3189
        %v7182 = vadd.f32 %v6568, %v3192
        %v7183 = vadd.f32 %v6569, %v3194
        %v7184 = vadd.f32 %v6570, %v3197
        %v7185 = vadd.f32 %v6571, %v3199
        %v7186 = vadd.f32 %v6572, %v3202
        %v7187 = vadd.f32 %v6573, %v3204
        %v7188 = vadd.f32 %v6574, %v5412
        %v7189 = vadd.f32 %v6575, %v5414
        %v7190 = vadd.f32 %v6576, %v7155
        %v7191 = vadd.f32 %v6577, %v7157
        %v7192 = vrot.slane %v393, 5
        %v7193 = vrot.slane %v7192, 4
        %v7194 = vrot.slane %v394, 5
        %v7195 = vsel %vm3271, %v7193, %v7194
        %v7196 = vrot.slane %v7194, 4
        %v7197 = vrot.slane %v395, 5
        %v7198 = vsel %vm3271, %v7196, %v7197
        %s7199 = scalar_lea.vmem [#allocation7], 512
        %v7200 = vld [vmem:[%s7199] sm:$0xf]
        %v7201 = vld [vmem:[%s7199 + $0x4] sm:$0xf]
        %v7202 = vld [vmem:[%s7199 + $0x8] sm:$0xf]
        %v7203 = vld [vmem:[%s7199 + $0xc] sm:$0xf]
        %v7204 = vld [vmem:[%s7199 + $0x10] sm:$0xf]
        %v7205 = vld [vmem:[%s7199 + $0x14] sm:$0xf]
        %v7206 = vld [vmem:[%s7199 + $0x18] sm:$0xf]
        %v7207 = vld [vmem:[%s7199 + $0x1c] sm:$0xf]
        %v7208 = vld [vmem:[%s7199 + $0x20] sm:$0xf]
        %v7209 = vld [vmem:[%s7199 + $0x24] sm:$0xf]
        %v7210 = vld [vmem:[%s7199 + $0x28] sm:$0xf]
        %v7211 = vld [vmem:[%s7199 + $0x2c] sm:$0xf]
        %v7212 = vld [vmem:[%s7199 + $0x30] sm:$0xf]
        %v7213 = vld [vmem:[%s7199 + $0x34] sm:$0xf]
        %v7214 = vld [vmem:[%s7199 + $0x38] sm:$0xf]
        %v7215 = vld [vmem:[%s7199 + $0x3c] sm:$0xf]
        %v7216 = vunpack.c.l.b16 %v7195
        %v7217 = vunpack.c.l.b16 %v7198
        %v7218 = vpack.c.b16 %v7217, %v7216
        %v7236 = vunpack.c.l.b16 %v7200
        %v7237 = vunpack.c.l.b16 %v7201
        %v7238 = vunpack.c.l.b16 %v7202
        %v7239 = vunpack.c.l.b16 %v7203
        %v7240 = vunpack.c.l.b16 %v7204
        %v7241 = vunpack.c.l.b16 %v7205
        %v7242 = vunpack.c.l.b16 %v7206
        %v7243 = vunpack.c.l.b16 %v7207
        %v7244 = vunpack.c.l.b16 %v7208
        %v7245 = vunpack.c.l.b16 %v7209
        %v7246 = vunpack.c.l.b16 %v7210
        %v7247 = vunpack.c.l.b16 %v7211
        %v7248 = vunpack.c.l.b16 %v7212
        %v7249 = vunpack.c.l.b16 %v7213
        %v7250 = vunpack.c.l.b16 %v7214
        %v7251 = vunpack.c.l.b16 %v7215
        %v7252 = vpack.c.b16 %v7237, %v7236
        %v7253 = vpack.c.b16 %v7239, %v7238
        %v7254 = vpack.c.b16 %v7241, %v7240
        %v7255 = vpack.c.b16 %v7243, %v7242
        %v7256 = vpack.c.b16 %v7245, %v7244
        %v7257 = vpack.c.b16 %v7247, %v7246
        %v7258 = vpack.c.b16 %v7249, %v7248
        %v7259 = vpack.c.b16 %v7251, %v7250
        %7268 = vmatprep.subr.bf16.mxu0 0
        %7269 = vmatpush1.bf16.msra.mxu0 %v7252
        %7270 = vmatprep.subr.bf16.mxu0 0
        %7271 = vmatpush1.bf16.msra.mxu0 %v7253
        %7272 = vmatprep.subr.bf16.mxu0 0
        %7273 = vmatpush1.bf16.msra.mxu0 %v7254
        %7274 = vmatprep.subr.bf16.mxu0 0
        %7275 = vmatpush1.bf16.msra.mxu0 %v7255
        %7276 = vmatprep.subr.bf16.mxu0 0
        %7277 = vmatpush1.bf16.msra.mxu0 %v7256
        %7278 = vmatprep.subr.bf16.mxu0 0
        %7279 = vmatpush1.bf16.msra.mxu0 %v7257
        %7280 = vmatprep.subr.bf16.mxu0 0
        %7281 = vmatpush1.bf16.msra.mxu0 %v7258
        %7282 = vmatprep.subr.bf16.mxu0 0
        %7283 = vmatpush1.bf16.msra.mxu0 %v7259
        %7284 = vmatprep.subr.bf16.mxu0 0
        %7285 = vmatpush1.bf16.msra.mxu0 0
        %7286 = vmatprep.subr.bf16.mxu0 0
        %7287 = vmatpush1.bf16.msra.mxu0 0
        %7288 = vmatprep.subr.bf16.mxu0 0
        %7289 = vmatpush1.bf16.msra.mxu0 0
        %7290 = vmatprep.subr.bf16.mxu0 0
        %7291 = vmatpush1.bf16.msra.mxu0 0
        %7292 = vmatprep.subr.bf16.mxu0 0
        %7293 = vmatpush1.bf16.msra.mxu0 0
        %7294 = vmatprep.subr.bf16.mxu0 0
        %7295 = vmatpush1.bf16.msra.mxu0 0
        %7296 = vmatprep.subr.bf16.mxu0 0
        %7297 = vmatpush1.bf16.msra.mxu0 0
        %7298 = vmatprep.subr.bf16.mxu0 0
        %7299 = vmatpush1.bf16.msra.mxu0 0
        %7300 = vmatprep.mubr.bf16.mxu0 0
        %7301 = vmatmul.mubr.bf16.gmra.mrb[0].mxu0 %v3435
        %v7302 = vpop.f32.mrb[0].mxu0
        %v7303 = vadd.f32 0.0, %v7302
        %v7304 = vpop.f32.mrb[0].mxu0
        %v7305 = vpop.f32.mrb[0].mxu0
        %v7306 = vadd.f32 0.0, %v7305
        %v7307 = vpop.f32.mrb[0].mxu0
        %7308 = vmatprep.mubr.bf16.mxu0 0
        %7309 = vmatmul.mubr.bf16.gmra.mrb[0].mxu0 %v3436
        %v7310 = vpop.f32.mrb[0].mxu0
        %v7311 = vadd.f32 0.0, %v7310
        %v7312 = vpop.f32.mrb[0].mxu0
        %v7313 = vpop.f32.mrb[0].mxu0
        %v7314 = vadd.f32 0.0, %v7313
        %v7315 = vpop.f32.mrb[0].mxu0
        %7316 = vmatprep.mubr.bf16.mxu0 0
        %7317 = vmatmul.mubr.bf16.gmra.mrb[0].mxu0 %v3437
        %v7318 = vpop.f32.mrb[0].mxu0
        %v7319 = vadd.f32 0.0, %v7318
        %v7320 = vpop.f32.mrb[0].mxu0
        %v7321 = vpop.f32.mrb[0].mxu0
        %v7322 = vadd.f32 0.0, %v7321
        %v7323 = vpop.f32.mrb[0].mxu0
        %7324 = vmatprep.mubr.bf16.mxu0 0
        %7325 = vmatmul.mubr.bf16.gmra.mrb[0].mxu0 %v3438
        %v7326 = vpop.f32.mrb[0].mxu0
        %v7327 = vadd.f32 0.0, %v7326
        %v7328 = vpop.f32.mrb[0].mxu0
        %v7329 = vpop.f32.mrb[0].mxu0
        %v7330 = vadd.f32 0.0, %v7329
        %v7331 = vpop.f32.mrb[0].mxu0
        %7332 = vmatprep.mubr.bf16.mxu0 0
        %7333 = vmatmul.mubr.bf16.gmra.mrb[0].mxu0 %v3439
        %v7334 = vpop.f32.mrb[0].mxu0
        %v7335 = vadd.f32 0.0, %v7334
        %v7336 = vpop.f32.mrb[0].mxu0
        %v7337 = vpop.f32.mrb[0].mxu0
        %v7338 = vadd.f32 0.0, %v7337
        %v7339 = vpop.f32.mrb[0].mxu0
        %7340 = vmatprep.mubr.bf16.mxu0 0
        %7341 = vmatmul.mubr.bf16.gmra.mrb[0].mxu0 %v3440
        %v7342 = vpop.f32.mrb[0].mxu0
        %v7343 = vadd.f32 0.0, %v7342
        %v7344 = vpop.f32.mrb[0].mxu0
        %v7345 = vpop.f32.mrb[0].mxu0
        %v7346 = vadd.f32 0.0, %v7345
        %v7347 = vpop.f32.mrb[0].mxu0
        %7348 = vmatprep.mubr.bf16.mxu0 0
        %7349 = vmatmul.mubr.bf16.gmra.mrb[0].mxu0 %v3441
        %v7350 = vpop.f32.mrb[0].mxu0
        %v7351 = vadd.f32 0.0, %v7350
        %v7352 = vpop.f32.mrb[0].mxu0
        %v7353 = vpop.f32.mrb[0].mxu0
        %v7354 = vadd.f32 0.0, %v7353
        %v7355 = vpop.f32.mrb[0].mxu0
        %7356 = vmatprep.mubr.bf16.mxu0 0
        %7357 = vmatmul.mubr.bf16.gmra.mrb[0].mxu0 %v3442
        %v7358 = vpop.f32.mrb[0].mxu0
        %v7359 = vadd.f32 0.0, %v7358
        %v7360 = vpop.f32.mrb[0].mxu0
        %v7361 = vpop.f32.mrb[0].mxu0
        %v7362 = vadd.f32 0.0, %v7361
        %v7363 = vpop.f32.mrb[0].mxu0
        %7364 = vmatprep.mubr.bf16.mxu0 0
        %7365 = vmatmul.mubr.bf16.gmra.mrb[0].mxu0 %v3443
        %v7366 = vpop.f32.mrb[0].mxu0
        %v7367 = vadd.f32 0.0, %v7366
        %v7368 = vpop.f32.mrb[0].mxu0
        %v7369 = vpop.f32.mrb[0].mxu0
        %v7370 = vadd.f32 0.0, %v7369
        %v7371 = vpop.f32.mrb[0].mxu0
        %7372 = vmatprep.mubr.bf16.mxu0 0
        %7373 = vmatmul.mubr.bf16.gmra.mrb[0].mxu0 %v3444
        %v7374 = vpop.f32.mrb[0].mxu0
        %v7375 = vadd.f32 0.0, %v7374
        %v7376 = vpop.f32.mrb[0].mxu0
        %v7377 = vpop.f32.mrb[0].mxu0
        %v7378 = vadd.f32 0.0, %v7377
        %v7379 = vpop.f32.mrb[0].mxu0
        %7380 = vmatprep.mubr.bf16.mxu0 0
        %7381 = vmatmul.mubr.bf16.gmra.mrb[0].mxu0 %v3445
        %v7382 = vpop.f32.mrb[0].mxu0
        %v7383 = vadd.f32 0.0, %v7382
        %v7384 = vpop.f32.mrb[0].mxu0
        %v7385 = vpop.f32.mrb[0].mxu0
        %v7386 = vadd.f32 0.0, %v7385
        %v7387 = vpop.f32.mrb[0].mxu0
        %7388 = vmatprep.mubr.bf16.mxu0 0
        %7389 = vmatmul.mubr.bf16.gmra.mrb[0].mxu0 %v3446
        %v7390 = vpop.f32.mrb[0].mxu0
        %v7391 = vadd.f32 0.0, %v7390
        %v7392 = vpop.f32.mrb[0].mxu0
        %v7393 = vpop.f32.mrb[0].mxu0
        %v7394 = vadd.f32 0.0, %v7393
        %v7395 = vpop.f32.mrb[0].mxu0
        %7396 = vmatprep.mubr.bf16.mxu0 0
        %7397 = vmatmul.mubr.bf16.gmra.mrb[0].mxu0 %v3447
        %v7398 = vpop.f32.mrb[0].mxu0
        %v7399 = vadd.f32 0.0, %v7398
        %v7400 = vpop.f32.mrb[0].mxu0
        %v7401 = vpop.f32.mrb[0].mxu0
        %v7402 = vadd.f32 0.0, %v7401
        %v7403 = vpop.f32.mrb[0].mxu0
        %7404 = vmatprep.mubr.bf16.mxu0 0
        %7405 = vmatmul.mubr.bf16.gmra.mrb[0].mxu0 %v3448
        %v7406 = vpop.f32.mrb[0].mxu0
        %v7407 = vadd.f32 0.0, %v7406
        %v7408 = vpop.f32.mrb[0].mxu0
        %v7409 = vpop.f32.mrb[0].mxu0
        %v7410 = vadd.f32 0.0, %v7409
        %v7411 = vpop.f32.mrb[0].mxu0
        %7412 = vmatprep.mubr.bf16.mxu0 0
        %7413 = vmatmul.mubr.bf16.gmra.mrb[0].mxu0 %v5475
        %v7414 = vpop.f32.mrb[0].mxu0
        %v7415 = vadd.f32 0.0, %v7414
        %v7416 = vpop.f32.mrb[0].mxu0
        %v7417 = vpop.f32.mrb[0].mxu0
        %v7418 = vadd.f32 0.0, %v7417
        %v7419 = vpop.f32.mrb[0].mxu0
        %7420 = vmatprep.mubr.bf16.mxu0 0
        %7421 = vmatmul.mubr.bf16.gmra.mrb[0].mxu0 %v7218
        %v7422 = vpop.f32.mrb[0].mxu0
        %v7423 = vadd.f32 0.0, %v7422
        %v7424 = vpop.f32.mrb[0].mxu0
        %v7425 = vpop.f32.mrb[0].mxu0
        %v7426 = vadd.f32 0.0, %v7425
        %v7427 = vpop.f32.mrb[0].mxu0
        %7428 = vdwg.mxu0
        %v7429 = vadd.f32 %v7118, %v7303
        %v7430 = vadd.f32 %v7119, %v7306
        %v7431 = vadd.f32 %v7120, %v7311
        %v7432 = vadd.f32 %v7121, %v7314
        %v7433 = vadd.f32 %v7122, %v7319
        %v7434 = vadd.f32 %v7123, %v7322
        %v7435 = vadd.f32 %v7124, %v7327
        %v7436 = vadd.f32 %v7125, %v7330
        %v7437 = vadd.f32 %v7126, %v7335
        %v7438 = vadd.f32 %v7127, %v7338
        %v7439 = vadd.f32 %v7128, %v7343
        %v7440 = vadd.f32 %v7129, %v7346
        %v7441 = vadd.f32 %v7130, %v7351
        %v7442 = vadd.f32 %v7131, %v7354
        %v7443 = vadd.f32 %v7132, %v7359
        %v7444 = vadd.f32 %v7133, %v7362
        %v7445 = vadd.f32 %v7134, %v7367
        %v7446 = vadd.f32 %v7135, %v7370
        %v7447 = vadd.f32 %v7136, %v7375
        %v7448 = vadd.f32 %v7137, %v7378
        %v7449 = vadd.f32 %v7138, %v7383
        %v7450 = vadd.f32 %v7139, %v7386
        %v7451 = vadd.f32 %v7140, %v7391
        %v7452 = vadd.f32 %v7141, %v7394
        %v7453 = vadd.f32 %v7142, %v7399
        %v7454 = vadd.f32 %v7143, %v7402
        %v7455 = vadd.f32 %v7144, %v7407
        %v7456 = vadd.f32 %v7145, %v7410
        %v7457 = vadd.f32 %v7146, %v7415
        %v7458 = vadd.f32 %v7147, %v7418
        %v7459 = vadd.f32 %v7148, %v7423
        %v7460 = vadd.f32 %v7149, %v7426
        %v7461 = vrot.slane %v1128, 5
        %v7462 = vrot.slane %v7461, 4
        %v7463 = vrot.slane %v1129, 5
        %v7464 = vsel %vm3271, %v7462, %v7463
        %v7465 = vrot.slane %v7463, 4
        %v7466 = vrot.slane %v1130, 5
        %v7467 = vsel %vm3271, %v7465, %v7466
        %s7468 = scalar_lea.vmem [#allocation8], 512
        %v7469 = vld [vmem:[%s7468] sm:$0xf]
        %v7470 = vld [vmem:[%s7468 + $0x4] sm:$0xf]
        %v7471 = vld [vmem:[%s7468 + $0x8] sm:$0xf]
        %v7472 = vld [vmem:[%s7468 + $0xc] sm:$0xf]
        %v7473 = vld [vmem:[%s7468 + $0x10] sm:$0xf]
        %v7474 = vld [vmem:[%s7468 + $0x14] sm:$0xf]
        %v7475 = vld [vmem:[%s7468 + $0x18] sm:$0xf]
        %v7476 = vld [vmem:[%s7468 + $0x1c] sm:$0xf]
        %v7477 = vld [vmem:[%s7468 + $0x20] sm:$0xf]
        %v7478 = vld [vmem:[%s7468 + $0x24] sm:$0xf]
        %v7479 = vld [vmem:[%s7468 + $0x28] sm:$0xf]
        %v7480 = vld [vmem:[%s7468 + $0x2c] sm:$0xf]
        %v7481 = vld [vmem:[%s7468 + $0x30] sm:$0xf]
        %v7482 = vld [vmem:[%s7468 + $0x34] sm:$0xf]
        %v7483 = vld [vmem:[%s7468 + $0x38] sm:$0xf]
        %v7484 = vld [vmem:[%s7468 + $0x3c] sm:$0xf]
        %v7485 = vunpack.c.l.b16 %v7464
        %v7486 = vunpack.c.l.b16 %v7467
        %v7487 = vpack.c.b16 %v7486, %v7485
        %v7505 = vunpack.c.l.b16 %v7469
        %v7506 = vunpack.c.l.b16 %v7470
        %v7507 = vunpack.c.l.b16 %v7471
        %v7508 = vunpack.c.l.b16 %v7472
        %v7509 = vunpack.c.l.b16 %v7473
        %v7510 = vunpack.c.l.b16 %v7474
        %v7511 = vunpack.c.l.b16 %v7475
        %v7512 = vunpack.c.l.b16 %v7476
        %v7513 = vunpack.c.l.b16 %v7477
        %v7514 = vunpack.c.l.b16 %v7478
        %v7515 = vunpack.c.l.b16 %v7479
        %v7516 = vunpack.c.l.b16 %v7480
        %v7517 = vunpack.c.l.b16 %v7481
        %v7518 = vunpack.c.l.b16 %v7482
        %v7519 = vunpack.c.l.b16 %v7483
        %v7520 = vunpack.c.l.b16 %v7484
        %v7521 = vpack.c.b16 %v7506, %v7505
        %v7522 = vpack.c.b16 %v7508, %v7507
        %v7523 = vpack.c.b16 %v7510, %v7509
        %v7524 = vpack.c.b16 %v7512, %v7511
        %v7525 = vpack.c.b16 %v7514, %v7513
        %v7526 = vpack.c.b16 %v7516, %v7515
        %v7527 = vpack.c.b16 %v7518, %v7517
        %v7528 = vpack.c.b16 %v7520, %v7519
        %7537 = vmatprep.subr.bf16.mxu0 0
        %7538 = vmatpush1.bf16.msra.mxu0 %v7521
        %7539 = vmatprep.subr.bf16.mxu0 0
        %7540 = vmatpush1.bf16.msra.mxu0 %v7522
        %7541 = vmatprep.subr.bf16.mxu0 0
        %7542 = vmatpush1.bf16.msra.mxu0 %v7523
        %7543 = vmatprep.subr.bf16.mxu0 0
        %7544 = vmatpush1.bf16.msra.mxu0 %v7524
        %7545 = vmatprep.subr.bf16.mxu0 0
        %7546 = vmatpush1.bf16.msra.mxu0 %v7525
        %7547 = vmatprep.subr.bf16.mxu0 0
        %7548 = vmatpush1.bf16.msra.mxu0 %v7526
        %7549 = vmatprep.subr.bf16.mxu0 0
        %7550 = vmatpush1.bf16.msra.mxu0 %v7527
        %7551 = vmatprep.subr.bf16.mxu0 0
        %7552 = vmatpush1.bf16.msra.mxu0 %v7528
        %7553 = vmatprep.subr.bf16.mxu0 0
        %7554 = vmatpush1.bf16.msra.mxu0 0
        %7555 = vmatprep.subr.bf16.mxu0 0
        %7556 = vmatpush1.bf16.msra.mxu0 0
        %7557 = vmatprep.subr.bf16.mxu0 0
        %7558 = vmatpush1.bf16.msra.mxu0 0
        %7559 = vmatprep.subr.bf16.mxu0 0
        %7560 = vmatpush1.bf16.msra.mxu0 0
        %7561 = vmatprep.subr.bf16.mxu0 0
        %7562 = vmatpush1.bf16.msra.mxu0 0
        %7563 = vmatprep.subr.bf16.mxu0 0
        %7564 = vmatpush1.bf16.msra.mxu0 0
        %7565 = vmatprep.subr.bf16.mxu0 0
        %7566 = vmatpush1.bf16.msra.mxu0 0
        %7567 = vmatprep.subr.bf16.mxu0 0
        %7568 = vmatpush1.bf16.msra.mxu0 0
        %7569 = vmatprep.mubr.bf16.mxu0 0
        %7570 = vmatmul.mubr.bf16.gmra.mrb[0].mxu0 %v3869
        %v7571 = vpop.f32.mrb[0].mxu0
        %v7572 = vadd.f32 0.0, %v7571
        %v7573 = vpop.f32.mrb[0].mxu0
        %v7574 = vpop.f32.mrb[0].mxu0
        %v7575 = vadd.f32 0.0, %v7574
        %v7576 = vpop.f32.mrb[0].mxu0
        %7577 = vmatprep.mubr.bf16.mxu0 0
        %7578 = vmatmul.mubr.bf16.gmra.mrb[0].mxu0 %v3870
        %v7579 = vpop.f32.mrb[0].mxu0
        %v7580 = vadd.f32 0.0, %v7579
        %v7581 = vpop.f32.mrb[0].mxu0
        %v7582 = vpop.f32.mrb[0].mxu0
        %v7583 = vadd.f32 0.0, %v7582
        %v7584 = vpop.f32.mrb[0].mxu0
        %7585 = vmatprep.mubr.bf16.mxu0 0
        %7586 = vmatmul.mubr.bf16.gmra.mrb[0].mxu0 %v3871
        %v7587 = vpop.f32.mrb[0].mxu0
        %v7588 = vadd.f32 0.0, %v7587
        %v7589 = vpop.f32.mrb[0].mxu0
        %v7590 = vpop.f32.mrb[0].mxu0
        %v7591 = vadd.f32 0.0, %v7590
        %v7592 = vpop.f32.mrb[0].mxu0
        %7593 = vmatprep.mubr.bf16.mxu0 0
        %7594 = vmatmul.mubr.bf16.gmra.mrb[0].mxu0 %v3872
        %v7595 = vpop.f32.mrb[0].mxu0
        %v7596 = vadd.f32 0.0, %v7595
        %v7597 = vpop.f32.mrb[0].mxu0
        %v7598 = vpop.f32.mrb[0].mxu0
        %v7599 = vadd.f32 0.0, %v7598
        %v7600 = vpop.f32.mrb[0].mxu0
        %7601 = vmatprep.mubr.bf16.mxu0 0
        %7602 = vmatmul.mubr.bf16.gmra.mrb[0].mxu0 %v3873
        %v7603 = vpop.f32.mrb[0].mxu0
        %v7604 = vadd.f32 0.0, %v7603
        %v7605 = vpop.f32.mrb[0].mxu0
        %v7606 = vpop.f32.mrb[0].mxu0
        %v7607 = vadd.f32 0.0, %v7606
        %v7608 = vpop.f32.mrb[0].mxu0
        %7609 = vmatprep.mubr.bf16.mxu0 0
        %7610 = vmatmul.mubr.bf16.gmra.mrb[0].mxu0 %v3874
        %v7611 = vpop.f32.mrb[0].mxu0
        %v7612 = vadd.f32 0.0, %v7611
        %v7613 = vpop.f32.mrb[0].mxu0
        %v7614 = vpop.f32.mrb[0].mxu0
        %v7615 = vadd.f32 0.0, %v7614
        %v7616 = vpop.f32.mrb[0].mxu0
        %7617 = vmatprep.mubr.bf16.mxu0 0
        %7618 = vmatmul.mubr.bf16.gmra.mrb[0].mxu0 %v3875
        %v7619 = vpop.f32.mrb[0].mxu0
        %v7620 = vadd.f32 0.0, %v7619
        %v7621 = vpop.f32.mrb[0].mxu0
        %v7622 = vpop.f32.mrb[0].mxu0
        %v7623 = vadd.f32 0.0, %v7622
        %v7624 = vpop.f32.mrb[0].mxu0
        %7625 = vmatprep.mubr.bf16.mxu0 0
        %7626 = vmatmul.mubr.bf16.gmra.mrb[0].mxu0 %v3876
        %v7627 = vpop.f32.mrb[0].mxu0
        %v7628 = vadd.f32 0.0, %v7627
        %v7629 = vpop.f32.mrb[0].mxu0
        %v7630 = vpop.f32.mrb[0].mxu0
        %v7631 = vadd.f32 0.0, %v7630
        %v7632 = vpop.f32.mrb[0].mxu0
        %7633 = vmatprep.mubr.bf16.mxu0 0
        %7634 = vmatmul.mubr.bf16.gmra.mrb[0].mxu0 %v3877
        %v7635 = vpop.f32.mrb[0].mxu0
        %v7636 = vadd.f32 0.0, %v7635
        %v7637 = vpop.f32.mrb[0].mxu0
        %v7638 = vpop.f32.mrb[0].mxu0
        %v7639 = vadd.f32 0.0, %v7638
        %v7640 = vpop.f32.mrb[0].mxu0
        %7641 = vmatprep.mubr.bf16.mxu0 0
        %7642 = vmatmul.mubr.bf16.gmra.mrb[0].mxu0 %v3878
        %v7643 = vpop.f32.mrb[0].mxu0
        %v7644 = vadd.f32 0.0, %v7643
        %v7645 = vpop.f32.mrb[0].mxu0
        %v7646 = vpop.f32.mrb[0].mxu0
        %v7647 = vadd.f32 0.0, %v7646
        %v7648 = vpop.f32.mrb[0].mxu0
        %7649 = vmatprep.mubr.bf16.mxu0 0
        %7650 = vmatmul.mubr.bf16.gmra.mrb[0].mxu0 %v3879
        %v7651 = vpop.f32.mrb[0].mxu0
        %v7652 = vadd.f32 0.0, %v7651
        %v7653 = vpop.f32.mrb[0].mxu0
        %v7654 = vpop.f32.mrb[0].mxu0
        %v7655 = vadd.f32 0.0, %v7654
        %v7656 = vpop.f32.mrb[0].mxu0
        %7657 = vmatprep.mubr.bf16.mxu0 0
        %7658 = vmatmul.mubr.bf16.gmra.mrb[0].mxu0 %v3880
        %v7659 = vpop.f32.mrb[0].mxu0
        %v7660 = vadd.f32 0.0, %v7659
        %v7661 = vpop.f32.mrb[0].mxu0
        %v7662 = vpop.f32.mrb[0].mxu0
        %v7663 = vadd.f32 0.0, %v7662
        %v7664 = vpop.f32.mrb[0].mxu0
        %7665 = vmatprep.mubr.bf16.mxu0 0
        %7666 = vmatmul.mubr.bf16.gmra.mrb[0].mxu0 %v3881
        %v7667 = vpop.f32.mrb[0].mxu0
        %v7668 = vadd.f32 0.0, %v7667
        %v7669 = vpop.f32.mrb[0].mxu0
        %v7670 = vpop.f32.mrb[0].mxu0
        %v7671 = vadd.f32 0.0, %v7670
        %v7672 = vpop.f32.mrb[0].mxu0
        %7673 = vmatprep.mubr.bf16.mxu0 0
        %7674 = vmatmul.mubr.bf16.gmra.mrb[0].mxu0 %v3882
        %v7675 = vpop.f32.mrb[0].mxu0
        %v7676 = vadd.f32 0.0, %v7675
        %v7677 = vpop.f32.mrb[0].mxu0
        %v7678 = vpop.f32.mrb[0].mxu0
        %v7679 = vadd.f32 0.0, %v7678
        %v7680 = vpop.f32.mrb[0].mxu0
        %7681 = vmatprep.mubr.bf16.mxu0 0
        %7682 = vmatmul.mubr.bf16.gmra.mrb[0].mxu0 %v5744
        %v7683 = vpop.f32.mrb[0].mxu0
        %v7684 = vadd.f32 0.0, %v7683
        %v7685 = vpop.f32.mrb[0].mxu0
        %v7686 = vpop.f32.mrb[0].mxu0
        %v7687 = vadd.f32 0.0, %v7686
        %v7688 = vpop.f32.mrb[0].mxu0
        %7689 = vmatprep.mubr.bf16.mxu0 0
        %7690 = vmatmul.mubr.bf16.gmra.mrb[0].mxu0 %v7487
        %v7691 = vpop.f32.mrb[0].mxu0
        %v7692 = vadd.f32 0.0, %v7691
        %v7693 = vpop.f32.mrb[0].mxu0
        %v7694 = vpop.f32.mrb[0].mxu0
        %v7695 = vadd.f32 0.0, %v7694
        %v7696 = vpop.f32.mrb[0].mxu0
        %7697 = vdwg.mxu0
        %v7698 = vadd.f32 %v7429, %v7572
        %v7699 = vadd.f32 %v7430, %v7575
        %v7700 = vadd.f32 %v7431, %v7580
        %v7701 = vadd.f32 %v7432, %v7583
        %v7702 = vadd.f32 %v7433, %v7588
        %v7703 = vadd.f32 %v7434, %v7591
        %v7704 = vadd.f32 %v7435, %v7596
        %v7705 = vadd.f32 %v7436, %v7599
        %v7706 = vadd.f32 %v7437, %v7604
        %v7707 = vadd.f32 %v7438, %v7607
        %v7708 = vadd.f32 %v7439, %v7612
        %v7709 = vadd.f32 %v7440, %v7615
        %v7710 = vadd.f32 %v7441, %v7620
        %v7711 = vadd.f32 %v7442, %v7623
        %v7712 = vadd.f32 %v7443, %v7628
        %v7713 = vadd.f32 %v7444, %v7631
        %v7714 = vadd.f32 %v7445, %v7636
        %v7715 = vadd.f32 %v7446, %v7639
        %v7716 = vadd.f32 %v7447, %v7644
        %v7717 = vadd.f32 %v7448, %v7647
        %v7718 = vadd.f32 %v7449, %v7652
        %v7719 = vadd.f32 %v7450, %v7655
        %v7720 = vadd.f32 %v7451, %v7660
        %v7721 = vadd.f32 %v7452, %v7663
        %v7722 = vadd.f32 %v7453, %v7668
        %v7723 = vadd.f32 %v7454, %v7671
        %v7724 = vadd.f32 %v7455, %v7676
        %v7725 = vadd.f32 %v7456, %v7679
        %v7726 = vadd.f32 %v7457, %v7684
        %v7727 = vadd.f32 %v7458, %v7687
        %v7728 = vadd.f32 %v7459, %v7692
        %v7729 = vadd.f32 %v7460, %v7695
        %v7730 = vrot.slane %v955, 2
        %v7731 = vrot.slane %v961, 2
        %v7732 = vsel %vm4140, %v7730, %v7731
        %v7733 = vrot.slane %v965, 2
        %v7734 = vsel %vm4140, %v7731, %v7733
        %v7737 = vadd.f32 %v7160, %v4153
        %v7738 = vadd.f32 %v7161, %v4155
        %v7739 = vadd.f32 %v7162, %v4158
        %v7740 = vadd.f32 %v7163, %v4160
        %v7741 = vadd.f32 %v7164, %v4163
        %v7742 = vadd.f32 %v7165, %v4165
        %v7743 = vadd.f32 %v7166, %v4168
        %v7744 = vadd.f32 %v7167, %v4170
        %v7745 = vadd.f32 %v7168, %v4173
        %v7746 = vadd.f32 %v7169, %v4175
        %v7747 = vadd.f32 %v7170, %v4178
        %v7748 = vadd.f32 %v7171, %v4180
        %v7749 = vadd.f32 %v7172, %v4183
        %v7750 = vadd.f32 %v7173, %v4185
        %v7751 = vadd.f32 %v7174, %v4188
        %v7752 = vadd.f32 %v7175, %v4190
        %v7753 = vadd.f32 %v7176, %v4193
        %v7754 = vadd.f32 %v7177, %v4195
        %v7755 = vadd.f32 %v7178, %v4198
        %v7756 = vadd.f32 %v7179, %v4200
        %v7757 = vadd.f32 %v7180, %v4203
        %v7758 = vadd.f32 %v7181, %v4205
        %v7759 = vadd.f32 %v7182, %v4208
        %v7760 = vadd.f32 %v7183, %v4210
        %v7761 = vadd.f32 %v7184, %v4213
        %v7762 = vadd.f32 %v7185, %v4215
        %v7763 = vadd.f32 %v7186, %v4218
        %v7764 = vadd.f32 %v7187, %v4220
        %v7765 = vadd.f32 %v7188, %v5989
        %v7766 = vadd.f32 %v7189, %v5991
        %v7767 = vadd.f32 %v7190, %v7732
        %v7768 = vadd.f32 %v7191, %v7734
        %v7769 = vld [vmem:[%s5] sm:$0x1]
        %v7771 = vlaneseq
        %v7772 = vshrl.u32 %v7771, 7
        %v7773 = vsub.s32 0, %v7772
        %v7774 = vrot.slane %v7769, %v7773
        %v7776 = vmul.f32 %v7737, %v7774
        %v7777 = vmul.f32 %v7738, %v7774
        %v7778 = vmul.f32 %v7739, %v7774
        %v7779 = vmul.f32 %v7740, %v7774
        %v7780 = vmul.f32 %v7741, %v7774
        %v7781 = vmul.f32 %v7742, %v7774
        %v7782 = vmul.f32 %v7743, %v7774
        %v7783 = vmul.f32 %v7744, %v7774
        %v7784 = vmul.f32 %v7745, %v7774
        %v7785 = vmul.f32 %v7746, %v7774
        %v7786 = vmul.f32 %v7747, %v7774
        %v7787 = vmul.f32 %v7748, %v7774
        %v7788 = vmul.f32 %v7749, %v7774
        %v7789 = vmul.f32 %v7750, %v7774
        %v7790 = vmul.f32 %v7751, %v7774
        %v7791 = vmul.f32 %v7752, %v7774
        %v7792 = vmul.f32 %v7753, %v7774
        %v7793 = vmul.f32 %v7754, %v7774
        %v7794 = vmul.f32 %v7755, %v7774
        %v7795 = vmul.f32 %v7756, %v7774
        %v7796 = vmul.f32 %v7757, %v7774
        %v7797 = vmul.f32 %v7758, %v7774
        %v7798 = vmul.f32 %v7759, %v7774
        %v7799 = vmul.f32 %v7760, %v7774
        %v7800 = vmul.f32 %v7761, %v7774
        %v7801 = vmul.f32 %v7762, %v7774
        %v7802 = vmul.f32 %v7763, %v7774
        %v7803 = vmul.f32 %v7764, %v7774
        %v7804 = vmul.f32 %v7765, %v7774
        %v7805 = vmul.f32 %v7766, %v7774
        %v7806 = vmul.f32 %v7767, %v7774
        %v7807 = vmul.f32 %v7768, %v7774
        %v7808 = vadd.f32 %v7698, %v7776
        %v7809 = vadd.f32 %v7699, %v7777
        %v7810 = vadd.f32 %v7700, %v7778
        %v7811 = vadd.f32 %v7701, %v7779
        %v7812 = vadd.f32 %v7702, %v7780
        %v7813 = vadd.f32 %v7703, %v7781
        %v7814 = vadd.f32 %v7704, %v7782
        %v7815 = vadd.f32 %v7705, %v7783
        %v7816 = vadd.f32 %v7706, %v7784
        %v7817 = vadd.f32 %v7707, %v7785
        %v7818 = vadd.f32 %v7708, %v7786
        %v7819 = vadd.f32 %v7709, %v7787
        %v7820 = vadd.f32 %v7710, %v7788
        %v7821 = vadd.f32 %v7711, %v7789
        %v7822 = vadd.f32 %v7712, %v7790
        %v7823 = vadd.f32 %v7713, %v7791
        %v7824 = vadd.f32 %v7714, %v7792
        %v7825 = vadd.f32 %v7715, %v7793
        %v7826 = vadd.f32 %v7716, %v7794
        %v7827 = vadd.f32 %v7717, %v7795
        %v7828 = vadd.f32 %v7718, %v7796
        %v7829 = vadd.f32 %v7719, %v7797
        %v7830 = vadd.f32 %v7720, %v7798
        %v7831 = vadd.f32 %v7721, %v7799
        %v7832 = vadd.f32 %v7722, %v7800
        %v7833 = vadd.f32 %v7723, %v7801
        %v7834 = vadd.f32 %v7724, %v7802
        %v7835 = vadd.f32 %v7725, %v7803
        %v7836 = vadd.f32 %v7726, %v7804
        %v7837 = vadd.f32 %v7727, %v7805
        %v7838 = vadd.f32 %v7728, %v7806
        %v7839 = vadd.f32 %v7729, %v7807
        %v7840 = vld [vmem:[%s6] sm:$0x1]
        %v7842 = vlaneseq
        %v7843 = vshrl.u32 %v7842, 7
        %v7844 = vsub.s32 0, %v7843
        %v7845 = vrot.slane %v7840, %v7844
        %v7847 = vadd.f32 %v7808, %v7845
        %v7848 = vadd.f32 %v7809, %v7845
        %v7849 = vadd.f32 %v7810, %v7845
        %v7850 = vadd.f32 %v7811, %v7845
        %v7851 = vadd.f32 %v7812, %v7845
        %v7852 = vadd.f32 %v7813, %v7845
        %v7853 = vadd.f32 %v7814, %v7845
        %v7854 = vadd.f32 %v7815, %v7845
        %v7855 = vadd.f32 %v7816, %v7845
        %v7856 = vadd.f32 %v7817, %v7845
        %v7857 = vadd.f32 %v7818, %v7845
        %v7858 = vadd.f32 %v7819, %v7845
        %v7859 = vadd.f32 %v7820, %v7845
        %v7860 = vadd.f32 %v7821, %v7845
        %v7861 = vadd.f32 %v7822, %v7845
        %v7862 = vadd.f32 %v7823, %v7845
        %v7863 = vadd.f32 %v7824, %v7845
        %v7864 = vadd.f32 %v7825, %v7845
        %v7865 = vadd.f32 %v7826, %v7845
        %v7866 = vadd.f32 %v7827, %v7845
        %v7867 = vadd.f32 %v7828, %v7845
        %v7868 = vadd.f32 %v7829, %v7845
        %v7869 = vadd.f32 %v7830, %v7845
        %v7870 = vadd.f32 %v7831, %v7845
        %v7871 = vadd.f32 %v7832, %v7845
        %v7872 = vadd.f32 %v7833, %v7845
        %v7873 = vadd.f32 %v7834, %v7845
        %v7874 = vadd.f32 %v7835, %v7845
        %v7875 = vadd.f32 %v7836, %v7845
        %v7876 = vadd.f32 %v7837, %v7845
        %v7877 = vadd.f32 %v7838, %v7845
        %v7878 = vadd.f32 %v7839, %v7845
        %7879 = vst [vmem:[%s340] sm:$0xff] %v7847
        %7880 = vst [vmem:[%s340 + $0x8] sm:$0xff] %v7848
        %7881 = vst [vmem:[%s340 + $0x10] sm:$0xff] %v7849
        %7882 = vst [vmem:[%s340 + $0x18] sm:$0xff] %v7850
        %7883 = vst [vmem:[%s340 + $0x20] sm:$0xff] %v7851
        %7884 = vst [vmem:[%s340 + $0x28] sm:$0xff] %v7852
        %7885 = vst [vmem:[%s340 + $0x30] sm:$0xff] %v7853
        %7886 = vst [vmem:[%s340 + $0x38] sm:$0xff] %v7854
        %7887 = vst [vmem:[%s340 + $0x40] sm:$0xff] %v7855
        %7888 = vst [vmem:[%s340 + $0x48] sm:$0xff] %v7856
        %7889 = vst [vmem:[%s340 + $0x50] sm:$0xff] %v7857
        %7890 = vst [vmem:[%s340 + $0x58] sm:$0xff] %v7858
        %7891 = vst [vmem:[%s340 + $0x60] sm:$0xff] %v7859
        %7892 = vst [vmem:[%s340 + $0x68] sm:$0xff] %v7860
        %7893 = vst [vmem:[%s340 + $0x70] sm:$0xff] %v7861
        %7894 = vst [vmem:[%s340 + $0x78] sm:$0xff] %v7862
        %7895 = vst [vmem:[%s340 + $0x80] sm:$0xff] %v7863
        %7896 = vst [vmem:[%s340 + $0x88] sm:$0xff] %v7864
        %7897 = vst [vmem:[%s340 + $0x90] sm:$0xff] %v7865
        %7898 = vst [vmem:[%s340 + $0x98] sm:$0xff] %v7866
        %7899 = vst [vmem:[%s340 + $0xa0] sm:$0xff] %v7867
        %7900 = vst [vmem:[%s340 + $0xa8] sm:$0xff] %v7868
        %7901 = vst [vmem:[%s340 + $0xb0] sm:$0xff] %v7869
        %7902 = vst [vmem:[%s340 + $0xb8] sm:$0xff] %v7870
        %7903 = vst [vmem:[%s340 + $0xc0] sm:$0xff] %v7871
        %7904 = vst [vmem:[%s340 + $0xc8] sm:$0xff] %v7872
        %7905 = vst [vmem:[%s340 + $0xd0] sm:$0xff] %v7873
        %7906 = vst [vmem:[%s340 + $0xd8] sm:$0xff] %v7874
        %7907 = vst [vmem:[%s340 + $0xe0] sm:$0xff] %v7875
        %7908 = vst [vmem:[%s340 + $0xe8] sm:$0xff] %v7876
        %7909 = vst [vmem:[%s340 + $0xf0] sm:$0xff] %v7877
        %7910 = vst [vmem:[%s340 + $0xf8] sm:$0xff] %v7878
        %s7911 = sand.u32 %s186, 1
        %s7912 = scalar_lea.sflag [#allocation4], %s7911
        %s7913 = sand.u32 %s186, 1
        %s7914 = smul.addr %s7913, 256
        %s7915 = scalar_lea.vmem [#allocation10], %s7914
        // Predicated region
        $region65: #{tpu_custom_call.1} parent=47 // pred_check
          %p7916 = pneg %p196
        $region66: #{tpu_custom_call.1} parent=47 // pred_check_branch
          %7918 = sbr.rel (%p7916) target = $region68
        $region67: #{tpu_custom_call.1} parent=47 // pred_region
          %s7920 = ssub.s32 4096, 4096
          %7921 = vsyncadd %s7912, %s7920
          %s7922 = smul.addr %s26, 32
          %s7923 = smul.addr %s7922, 128
          %s7924 = scalar_lea.hbm %s7, %s7923
          %s7925 = sshll.u32 %s7915, 4
          %s7926 = int_to_ptr.vmem [resolvable:$true] %s7925
          %7931 = dma.vmem_to_hbm [thread:$0]  %s7926, 4096, %s7924, %s7912, 128, 128, 8
        $region68: #{tpu_custom_call.1} parent=47 // pred_fallthru
          _
      $region48: #{tpu_custom_call.1} parent=5 // pred_fallthru
        _
      %p7932 = scmp.le.s32.totalorder 2, %s21
      // Predicated region
      $region69: #{tpu_custom_call.1} parent=5 // pred_check
        %p7933 = pneg %p7932
      $region70: #{tpu_custom_call.1} parent=5 // pred_check_branch
        %7935 = sbr.rel (%p7933) target = $region72
      $region71: #{tpu_custom_call.1} parent=5 // pred_region
        %s7936 = ssub.s32 %s21, 2
        // Predicated region
        $region73: #{tpu_custom_call.1} parent=71 // pred_check
          %p7937 = pneg %p202
        $region74: #{tpu_custom_call.1} parent=71 // pred_check_branch
          %7939 = sbr.rel (%p7937) target = $region76
        $region75: #{tpu_custom_call.1} parent=71 // pred_region
          %s7940 = sand.u32 %s187, 1
          %s7941 = scalar_lea.sflag [#allocation4], %s7940
          %s7942 = sand.u32 %s187, 1
          %s7943 = smul.addr %s7942, 256
          %s7944 = scalar_lea.vmem [#allocation10], %s7943
          %7945 = dma.done %s7941, 4096
        $region76: #{tpu_custom_call.1} parent=71 // pred_fallthru
          _
      $region72: #{tpu_custom_call.1} parent=5 // pred_fallthru
        _
    $region6: #{tpu_custom_call.1} parent=1 // loop_footer
      %s25 = sadd.s32 1, %s21
    $region7: #{tpu_custom_call.1} parent=1 // loop_footer_branch
      %20 = sbr.rel target = $region3
    $region8: #{tpu_custom_call.1} parent=1 // loop_exit
      _
    %7946 = vsyncpa [#allocation3], 1
    %s7947 = scalar_lea.sflag [#allocation3], 1
    %7948 = vsyncpa %s7947, 1
    %7949 = vsyncpa [#allocation6], 1
    %7950 = vsyncpa [#allocation9], 1
    %7951 = vsyncpa [#allocation4], 1
    %s7952 = scalar_lea.sflag [#allocation4], 1
    %7953 = vsyncpa %s7952, 1

</llo_original>
